<compile_context>
chip_gen: v6e
topology: v6e:2x2x1
jax: 0.10.0
libtpu: 0.0.40
codegen_flags: <defaults>
</compile_context>

<pallas_src>
import math
from functools import partial

import numpy as np
import jax
import jax.numpy as jnp
from jax import lax
from jax.experimental import pallas as pl
from jax.experimental.pallas import tpu as pltpu

F32 = jnp.float32
BF16 = jnp.bfloat16
LANE = 128  # padded d_model / lane width


# --------------------------------------------------------------------------- #
# Kernel bodies
# --------------------------------------------------------------------------- #
def _conv1_kernel(p_ref, w_ref, b_ref, o_ref):
    """conv1 as im2col matmul + bias + relu; lane-dense [rows,128] output."""
    acc = jnp.dot(p_ref[...].astype(BF16), w_ref[...],
                  preferred_element_type=F32) + b_ref[...]
    o_ref[...] = jnp.maximum(acc, 0.0).astype(o_ref.dtype)


def _detr_kernel(patches_ref, pos_ref, qpos_ref,
                 conv2w_ref, staticw_ref,
                 encw_ref, encb_ref, decw_ref, decb_ref, miscb_ref,
                 out_ref, *, nheads, dh, d_true, n_enc, n_dec, num_classes):
    """conv2 + input_proj + full encoder/decoder stack + prediction heads,
    one batch element per grid step, everything resident on-chip."""
    eps = 1e-5
    DP = LANE

    # hoisted lane iota / head masks / true-lane mask (shared by every layer)
    lane = lax.broadcasted_iota(jnp.int32, (1, DP), 1)
    head_masks = [((lane >= h * dh) & (lane < (h + 1) * dh)).astype(F32)
                  for h in range(nheads)]
    dmask = (lane < d_true).astype(F32)
    inv_d = 1.0 / float(d_true)

    def dotb(a_bf16, w_bf16):
        return jnp.dot(a_bf16, w_bf16, preferred_element_type=F32)

    def ln(x, g, b):
        # padded lanes are zero, so sum/inv_d gives the true-lane mean; variance
        # needs the explicit mask because (0 - mu)^2 != 0 in padded lanes.
        mu = jnp.sum(x, axis=-1, keepdims=True) * inv_d
        d = x - mu
        var = jnp.sum(d * d * dmask, axis=-1, keepdims=True) * inv_d
        return d * lax.rsqrt(var + eps) * g + b          # g,b zero in padded lanes

    def mha(q, k, v):
        # q is pre-scaled (1/sqrt(dh) folded into Wq/bq).  Mask only q (contraction)
        # and v (keeps each head's output in its own lanes); k mask is redundant.
        kb = k.astype(BF16)
        out = jnp.zeros((q.shape[0], DP), F32)
        for m in head_masks:
            s = lax.dot_general((q * m).astype(BF16), kb,
                                (((1,), (1,)), ((), ())),
                                preferred_element_type=F32)          # [Lq, Lk]
            s = s - jnp.max(s, axis=-1, keepdims=True)
            p = jnp.exp(s)
            p = p * pl.reciprocal(jnp.sum(p, axis=-1, keepdims=True), approx=True)
            out = out + dotb(p.astype(BF16), (v * m).astype(BF16))
        return out

    # ---- stem tail: conv2 (im2col matmul) + relu + 1x1 input projection ----
    conv2_b = miscb_ref[0:1, 0:DP]
    proj_b = miscb_ref[1:2, 0:DP]
    p2 = patches_ref[...].astype(BF16)                               # [L, 144]
    c2 = jnp.maximum(dotb(p2, conv2w_ref[...]) + conv2_b, 0.0)       # [L, 128]
    src = dotb(c2.astype(BF16), staticw_ref[0:DP, :]) + proj_b       # [L, 128]

    pos = pos_ref[...]                                               # [L, 128] f32
    x = src

    # ---- transformer encoder (statically unrolled over layer slabs) ----
    for l in range(n_enc):
        bqk = encb_ref[l, 0:1, :]
        bv = encb_ref[l, 1:2, 0:DP]
        bo = encb_ref[l, 2:3, 0:DP]
        ln1g = encb_ref[l, 3:4, 0:DP]
        ln1b = encb_ref[l, 4:5, 0:DP]
        b1 = encb_ref[l, 5:6, 0:DP]
        b2 = encb_ref[l, 6:7, 0:DP]
        ln2g = encb_ref[l, 7:8, 0:DP]
        ln2b = encb_ref[l, 8:9, 0:DP]

        xpb = (x + pos).astype(BF16)                                 # q,k input
        xb = x.astype(BF16)                                          # v input
        qk = dotb(xpb, encw_ref[l, :, 0:2 * DP]) + bqk               # fused Wq|Wk
        v = dotb(xb, encw_ref[l, :, 2 * DP:3 * DP]) + bv
        a = mha(qk[:, 0:DP], qk[:, DP:2 * DP], v)                    # vreg-boundary split
        a = dotb(a.astype(BF16), encw_ref[l, :, 3 * DP:4 * DP]) + bo
        x = ln(x + a, ln1g, ln1b)
        xb = x.astype(BF16)
        h = jnp.maximum(dotb(xb, encw_ref[l, :, 4 * DP:5 * DP]) + b1, 0.0)
        ff = dotb(h.astype(BF16), encw_ref[l, :, 5 * DP:6 * DP]) + b2
        x = ln(x + ff, ln2g, ln2b)

    mem = x
    memb = mem.astype(BF16)                                          # cross-attn v input
    mem_pos_b = (mem + pos).astype(BF16)                             # cross-attn k input

    # ---- transformer decoder ----
    qpos = qpos_ref[...]                                             # [Q, 128] f32
    nq = qpos.shape[0]
    t = jnp.zeros((nq, DP), F32)                                     # tgt = zeros (DETR)
    for l in range(n_dec):
        sa_bqk = decb_ref[l, 0:1, :]
        sa_bv = decb_ref[l, 1:2, 0:DP]
        sa_bo = decb_ref[l, 2:3, 0:DP]
        ln1g = decb_ref[l, 3:4, 0:DP]
        ln1b = decb_ref[l, 4:5, 0:DP]
        ca_bq = decb_ref[l, 5:6, 0:DP]
        ca_bk = decb_ref[l, 6:7, 0:DP]
        ca_bv = decb_ref[l, 7:8, 0:DP]
        ca_bo = decb_ref[l, 8:9, 0:DP]
        ln2g = decb_ref[l, 9:10, 0:DP]
        ln2b = decb_ref[l, 10:11, 0:DP]
        b1 = decb_ref[l, 11:12, 0:DP]
        b2 = decb_ref[l, 12:13, 0:DP]
        ln3g = decb_ref[l, 13:14, 0:DP]
        ln3b = decb_ref[l, 14:15, 0:DP]

        # --- self attention (q,k: t+qpos ; v: t) ---
        tqb = (t + qpos).astype(BF16)
        tb = t.astype(BF16)
        qk = dotb(tqb, decw_ref[l, :, 0:2 * DP]) + sa_bqk
        v = dotb(tb, decw_ref[l, :, 2 * DP:3 * DP]) + sa_bv
        a = mha(qk[:, 0:DP], qk[:, DP:2 * DP], v)
        a = dotb(a.astype(BF16), decw_ref[l, :, 3 * DP:4 * DP]) + sa_bo
        t = ln(t + a, ln1g, ln1b)

        # --- cross attention (q: t+qpos ; k: memory+pos ; v: memory) ---
        tqb = (t + qpos).astype(BF16)
        q = dotb(tqb, decw_ref[l, :, 4 * DP:5 * DP]) + ca_bq
        k = dotb(mem_pos_b, decw_ref[l, :, 5 * DP:6 * DP]) + ca_bk
        v = dotb(memb, decw_ref[l, :, 6 * DP:7 * DP]) + ca_bv
        a = mha(q, k, v)
        a = dotb(a.astype(BF16), decw_ref[l, :, 7 * DP:8 * DP]) + ca_bo
        t = ln(t + a, ln2g, ln2b)

        # --- FFN ---
        tb = t.astype(BF16)
        h = jnp.maximum(dotb(tb, decw_ref[l, :, 8 * DP:9 * DP]) + b1, 0.0)
        ff = dotb(h.astype(BF16), decw_ref[l, :, 9 * DP:10 * DP]) + b2
        t = ln(t + ff, ln3g, ln3b)

    # ---- decoder final norm + class_embed + 3-layer bbox MLP (packed, lane dense) ----
    lng = miscb_ref[2:3, 0:DP]
    lnb = miscb_ref[3:4, 0:DP]
    hb1 = miscb_ref[4:5, 0:DP]
    hb2 = miscb_ref[5:6, 0:DP]
    bfv = miscb_ref[6:7, 0:DP]
    xh = ln(t, lng, lnb)
    xhb = xh.astype(BF16)
    h = jnp.maximum(dotb(xhb, staticw_ref[DP:2 * DP, :]) + hb1, 0.0)     # bbox MLP 1
    h = jnp.maximum(dotb(h.astype(BF16), staticw_ref[2 * DP:3 * DP, :]) + hb2, 0.0)
    z = (dotb(xhb, staticw_ref[3 * DP:4 * DP, :])                        # class from x
         + dotb(h.astype(BF16), staticw_ref[4 * DP:5 * DP, :])           # bbox from h2
         + bfv)
    col = lax.broadcasted_iota(jnp.int32, z.shape, 1)
    is_box = (col >= num_classes) & (col < num_classes + 4)
    out_ref[...] = jnp.where(is_box, jax.nn.sigmoid(z), z).astype(out_ref.dtype)


# --------------------------------------------------------------------------- #
# pallas_call wrappers
# --------------------------------------------------------------------------- #
def _full_spec(a):
    nd = a.ndim
    return pl.BlockSpec(a.shape, lambda b: (0,) * nd)


def _parallel():
    return pltpu.CompilerParams(dimension_semantics=("parallel",))


def conv1_call(patches1, w, b):
    B, M, K = patches1.shape
    N = w.shape[1]
    return pl.pallas_call(
        _conv1_kernel,
        out_shape=jax.ShapeDtypeStruct((B, M, N), F32),
        grid=(B,),
        in_specs=[pl.BlockSpec((None, M, K), lambda i: (i, 0, 0)),
                  _full_spec(w), _full_spec(b)],
        out_specs=pl.BlockSpec((None, M, N), lambda i: (i, 0, 0)),
        compiler_params=_parallel(),
    )(patches1, w, b)


def detr_stack_call(patches2, pos, qpos, kp, cfg):
    B, L, CK = patches2.shape
    Q = qpos.shape[0]
    kernel = partial(
        _detr_kernel,
        nheads=cfg["nheads"],
        dh=cfg["d_model"] // cfg["nheads"],
        d_true=cfg["d_model"],
        n_enc=cfg["enc_layers"],
        n_dec=cfg["dec_layers"],
        num_classes=cfg["num_classes"])
    full_args = (pos, qpos, kp["conv2_w"], kp["static_w"],
                 kp["enc_w"], kp["enc_b"], kp["dec_w"], kp["dec_b"], kp["misc_b"])
    in_specs = ([pl.BlockSpec((None, L, CK), lambda b: (b, 0, 0))]
                + [_full_spec(a) for a in full_args])
    return pl.pallas_call(
        kernel,
        out_shape=jax.ShapeDtypeStruct((B, Q, LANE), F32),
        grid=(B,),
        in_specs=in_specs,
        out_specs=pl.BlockSpec((None, Q, LANE), lambda b: (b, 0, 0)),
        compiler_params=_parallel(),
    )(patches2, *full_args)


# --------------------------------------------------------------------------- #
# Glue (plain JAX / trace-time numpy): patches, positional encoding, assembly
# --------------------------------------------------------------------------- #
def sine_pos_embed(H, W, D):
    """DETR PositionEmbeddingSine (normalize=True), trace-time constant [H*W, D]."""
    num_pos_feats = D // 2
    temperature = 10000.0
    scale = 2.0 * math.pi
    eps = 1e-6
    y_embed = np.tile(np.arange(1, H + 1, dtype=np.float32)[:, None], (1, W))
    x_embed = np.tile(np.arange(1, W + 1, dtype=np.float32)[None, :], (H, 1))
    y_embed = y_embed / (y_embed[-1:, :] + eps) * scale
    x_embed = x_embed / (x_embed[:, -1:] + eps) * scale
    dim_t = np.arange(num_pos_feats, dtype=np.float32)
    dim_t = temperature ** (2.0 * np.floor(dim_t / 2.0) / num_pos_feats)
    pos_x = x_embed[..., None] / dim_t
    pos_y = y_embed[..., None] / dim_t
    pos_x = np.stack([np.sin(pos_x[..., 0::2]), np.cos(pos_x[..., 1::2])],
                     axis=3).reshape(H, W, num_pos_feats)
    pos_y = np.stack([np.sin(pos_y[..., 0::2]), np.cos(pos_y[..., 1::2])],
                     axis=3).reshape(H, W, num_pos_feats)
    pos = np.concatenate([pos_y, pos_x], axis=-1).reshape(H * W, D)
    return jnp.asarray(pos, F32)


def detr_forward(kp, images_nchw, cfg):
    B = images_nchw.shape[0]
    D = cfg["d_model"]
    C = cfg["num_classes"]

    x = jnp.transpose(images_nchw, (0, 2, 3, 1))                        # NCHW -> NHWC

    # --- backbone stem (reduced; see TODO at top) ---
    p1 = lax.conv_general_dilated_patches(
        x, (7, 7), (4, 4), ((3, 3), (3, 3)),
        dimension_numbers=("NHWC", "HWIO", "NHWC"))                     # [B,H1,W1,3*49]
    _, H1, W1, CK1 = p1.shape
    y1 = conv1_call(p1.reshape(B, H1 * W1, CK1), kp["conv1_w"], kp["conv1_b"])
    y1 = y1[:, :, :cfg["stem_ch"]].reshape(B, H1, W1, cfg["stem_ch"])   # drop pad lanes

    p2 = lax.conv_general_dilated_patches(
        y1, (3, 3), (2, 2), ((1, 1), (1, 1)),
        dimension_numbers=("NHWC", "HWIO", "NHWC"))                     # [B,H2,W2,C1*9]
    _, H2, W2, CK2 = p2.shape
    L = H2 * W2
    patches2 = p2.reshape(B, L, CK2)

    pos = sine_pos_embed(H2, W2, D)                                     # [L, D]
    pos = jnp.concatenate([pos, jnp.zeros((L, LANE - D), F32)], axis=1)  # lane pad

    # --- ONE fused kernel: conv2 + proj + encoder + decoder + heads ---
    packed = detr_stack_call(patches2, pos, kp["query_embed"], kp, cfg)  # [B,Q,128]
    logits = packed[:, :, :C]
    boxes = packed[:, :, C:C + 4]
    return {"pred_logits": logits, "pred_boxes": boxes}


# --------------------------------------------------------------------------- #
# Deterministic parameter init + kernel-layout preparation
# --------------------------------------------------------------------------- #
def init_params(key, cfg):
    keys = iter(jax.random.split(key, 64))

    def lin(d_in, d_out):
        kw, kb = jax.random.split(next(keys))
        lim = 1.0 / math.sqrt(d_in)
        return {"w": jax.random.uniform(kw, (d_in, d_out), F32, -lim, lim),
                "b": jax.random.uniform(kb, (d_out,), F32, -lim, lim)}

    def ln_p(d):
        return {"g": jnp.ones((d,), F32), "b": jnp.zeros((d,), F32)}

    def mha_p(d):
        return {"wq": lin(d, d), "wk": lin(d, d), "wv": lin(d, d), "wo": lin(d, d)}

    D, F = cfg["d_model"], cfg["dim_ff"]
    return {
        "conv1": lin(3 * 7 * 7, cfg["stem_ch"]),
        "conv2": lin(cfg["stem_ch"] * 3 * 3, cfg["backbone_ch"]),
        "input_proj": lin(cfg["backbone_ch"], D),
        "encoder": [
            {"self_attn": mha_p(D), "lin1": lin(D, F), "lin2": lin(F, D),
             "norm1": ln_p(D), "norm2": ln_p(D)}
            for _ in range(cfg["enc_layers"])],
        "decoder": [
            {"self_attn": mha_p(D), "cross_attn": mha_p(D),
             "lin1": lin(D, F), "lin2": lin(F, D),
             "norm1": ln_p(D), "norm2": ln_p(D), "norm3": ln_p(D)}
            for _ in range(cfg["dec_layers"])],
        "dec_norm": ln_p(D),
        "query_embed": jax.random.normal(next(keys), (cfg["num_queries"], D), F32),
        "class_embed": lin(D, cfg["num_classes"]),
        "bbox1": lin(D, D),
        "bbox2": lin(D, D),
        "bbox3": lin(D, 4),
    }


def prepare_kernel_params(params, cfg):
    """Re-layout raw params for the fused kernels (done once, outside jit):
       * d_model (64) zero-padded to 128 lanes everywhere (LN gamma/beta padded with
         zeros so padded lanes stay exactly zero through the stack)
       * per-layer weights packed into lane-concatenated slabs, stacked over layers
       * all (1,D) biases / LN params packed into a few [rows, 256] f32 slabs
       * 1/sqrt(head_dim) folded into Wq / bq (encoder, decoder self- and cross-attn)
       * class_embed + bbox3 packed into two [128,128] blocks applied to x and h2."""
    D = cfg["d_model"]
    C = cfg["num_classes"]
    dh = D // cfg["nheads"]
    scale = 1.0 / math.sqrt(dh)

    def pad2(w, rows=LANE, cols=LANE):
        out = jnp.zeros((rows, cols), F32)
        return out.at[:w.shape[0], :w.shape[1]].set(w)

    def rowv(v, width=2 * LANE):
        out = jnp.zeros((width,), F32)
        return out.at[:v.shape[0]].set(v)

    def qk_fused(wq, bq, wk, bk):
        w = jnp.zeros((LANE, 2 * LANE), F32)
        w = w.at[:D, :D].set(wq * scale)
        w = w.at[:D, LANE:LANE + D].set(wk)
        b = jnp.zeros((2 * LANE,), F32)
        b = b.at[:D].set(bq * scale).at[LANE:LANE + D].set(bk)
        return w, b

    def enc_layer(lp):
        sa = lp["self_attn"]
        wqk, bqk = qk_fused(sa["wq"]["w"], sa["wq"]["b"], sa["wk"]["w"], sa["wk"]["b"])
        w = jnp.concatenate([
            wqk,
            pad2(sa["wv"]["w"]), pad2(sa["wo"]["w"]),
            pad2(lp["lin1"]["w"]), pad2(lp["lin2"]["w"])], axis=1)        # [128, 768]
        b = jnp.stack([
            bqk, rowv(sa["wv"]["b"]), rowv(sa["wo"]["b"]),
            rowv(lp["norm1"]["g"]), rowv(lp["norm1"]["b"]),
            rowv(lp["lin1"]["b"]), rowv(lp["lin2"]["b"]),
            rowv(lp["norm2"]["g"]), rowv(lp["norm2"]["b"])])              # [9, 256]
        return w, b

    def dec_layer(lp):
        sa, ca = lp["self_attn"], lp["cross_attn"]
        sa_wqk, sa_bqk = qk_fused(sa["wq"]["w"], sa["wq"]["b"],
                                  sa["wk"]["w"], sa["wk"]["b"])
        w = jnp.concatenate([
            sa_wqk,
            pad2(sa["wv"]["w"]), pad2(sa["wo"]["w"]),
            pad2(ca["wq"]["w"] * scale), pad2(ca["wk"]["w"]),
            pad2(ca["wv"]["w"]), pad2(ca["wo"]["w"]),
            pad2(lp["lin1"]["w"]), pad2(lp["lin2"]["w"])], axis=1)        # [128, 1280]
        b = jnp.stack([
            sa_bqk, rowv(sa["wv"]["b"]), rowv(sa["wo"]["b"]),
            rowv(lp["norm1"]["g"]), rowv(lp["norm1"]["b"]),
            rowv(ca["wq"]["b"] * scale), rowv(ca["wk"]["b"]),
            rowv(ca["wv"]["b"]), rowv(ca["wo"]["b"]),
            rowv(lp["norm2"]["g"]), rowv(lp["norm2"]["b"]),
            rowv(lp["lin1"]["b"]), rowv(lp["lin2"]["b"]),
            rowv(lp["norm3"]["g"]), rowv(lp["norm3"]["b"])])              # [15, 256]
        return w, b

    enc = [enc_layer(lp) for lp in params["encoder"]]
    dec = [dec_layer(lp) for lp in params["decoder"]]

    # static weights slab: proj | bbox_mlp1 | bbox_mlp2 | (class from x) | (bbox from h2)
    wf_x = jnp.zeros((LANE, LANE), F32).at[:D, :C].set(params["class_embed"]["w"])
    wf_h = jnp.zeros((LANE, LANE), F32).at[:D, C:C + 4].set(params["bbox3"]["w"])
    static_w = jnp.concatenate([
        pad2(params["input_proj"]["w"]),
        pad2(params["bbox1"]["w"]),
        pad2(params["bbox2"]["w"]),
        wf_x, wf_h], axis=0)                                              # [640, 128]

    bf = jnp.zeros((2 * LANE,), F32)
    bf = bf.at[:C].set(params["class_embed"]["b"]).at[C:C + 4].set(params["bbox3"]["b"])
    misc_b = jnp.stack([
        rowv(params["conv2"]["b"]), rowv(params["input_proj"]["b"]),
        rowv(params["dec_norm"]["g"]), rowv(params["dec_norm"]["b"]),
        rowv(params["bbox1"]["b"]), rowv(params["bbox2"]["b"]),
        bf, jnp.zeros((2 * LANE,), F32)])                                 # [8, 256]

    return {
        "conv1_w": pad2(params["conv1"]["w"],
                        params["conv1"]["w"].shape[0], LANE).astype(BF16),  # [147,128]
        "conv1_b": rowv(params["conv1"]["b"], LANE).reshape(1, LANE),
        "conv2_w": pad2(params["conv2"]["w"],
                        params["conv2"]["w"].shape[0], LANE).astype(BF16),  # [144,128]
        "static_w": static_w.astype(BF16),
        "enc_w": jnp.stack([w for w, _ in enc]).astype(BF16),             # [n_enc,128,768]
        "enc_b": jnp.stack([b for _, b in enc]),                          # [n_enc,9,256]
        "dec_w": jnp.stack([w for w, _ in dec]).astype(BF16),             # [n_dec,128,1280]
        "dec_b": jnp.stack([b for _, b in dec]),                          # [n_dec,15,256]
        "misc_b": misc_b,
        "query_embed": pad2(params["query_embed"],
                            cfg["num_queries"], LANE),                    # [Q,128]
    }


if __name__ == "__main__":
    cfg = dict(
        d_model=64, nheads=4, dim_ff=128,
        enc_layers=2, dec_layers=2,
        num_queries=16, num_classes=3,
        stem_ch=16, backbone_ch=32,
    )
    key = jax.random.PRNGKey(0)
    pkey, xkey = jax.random.split(key)
    raw_params = init_params(pkey, cfg)
    kparams = prepare_kernel_params(raw_params, cfg)   # fuse/pad/cast once, outside jit
    images = jax.random.normal(xkey, (2, 3, 32, 32), F32)  # NCHW, like PyTorch

    fwd = jax.jit(partial(detr_forward, cfg=cfg))
    out = fwd(kparams, images)
    jax.block_until_ready(out)

    assert out["pred_logits"].shape == (2, cfg["num_queries"], cfg["num_classes"])
    assert out["pred_boxes"].shape == (2, cfg["num_queries"], 4)
    assert bool(jnp.all(jnp.isfinite(out["pred_logits"])))
    assert bool(jnp.all((out["pred_boxes"] >= 0) & (out["pred_boxes"] <= 1)))
    print("KERNEL_OK")
</pallas_src>

<mosaic_0001>
module attributes {stable_mosaic.version = 11 : i64} {
  func.func @_conv1_kernel(%arg0: i32, %arg1: memref<1x64x147xf32, #tpu.memory_space<vmem>>, %arg2: memref<147x128xbf16, #tpu.memory_space<vmem>>, %arg3: memref<1x128xf32, #tpu.memory_space<vmem>>, %arg4: memref<1x64x128xf32, #tpu.memory_space<vmem>>) attributes {dimension_semantics = [#tpu.dimension_semantics<parallel>], iteration_bounds = array<i64: 2>, scalar_prefetch = 0 : i64, scratch_operands = 0 : i64, tpu.core_type = #tpu.core_type<tc>, window_params = [{transform_indices = @transform_0, window_bounds = array<i64: 1, 64, 147>}, {pipeline_mode = #tpu.pipeline_mode<synchronous>, transform_indices = @transform_1, window_bounds = array<i64: 147, 128>}, {pipeline_mode = #tpu.pipeline_mode<synchronous>, transform_indices = @transform_2, window_bounds = array<i64: 1, 128>}, {transform_indices = @transform_3, window_bounds = array<i64: 1, 64, 128>}]} {
    %c0 = arith.constant 0 : index
    %c0_0 = arith.constant 0 : index
    %c0_1 = arith.constant 0 : index
    %0 = vector.load %arg1[%c0, %c0_0, %c0_1] : memref<1x64x147xf32, #tpu.memory_space<vmem>>, vector<1x64x147xf32>
    %1 = vector.shape_cast %0 : vector<1x64x147xf32> to vector<64x147xf32>
    %2 = arith.truncf %1 : vector<64x147xf32> to vector<64x147xbf16>
    %c0_2 = arith.constant 0 : index
    %c0_3 = arith.constant 0 : index
    %3 = vector.load %arg2[%c0_2, %c0_3] : memref<147x128xbf16, #tpu.memory_space<vmem>>, vector<147x128xbf16>
    %cst = arith.constant dense<0.000000e+00> : vector<64x128xf32>
    %4 = tpu.matmul %2, %3, %cst {dimension_numbers = #tpu.dot_dimension_numbers<[1], [0], [0], [1], [0, 0, 1, 1], [], []>} : vector<64x147xbf16>, vector<147x128xbf16>, vector<64x128xf32> -> vector<64x128xf32>
    %c0_4 = arith.constant 0 : index
    %c0_5 = arith.constant 0 : index
    %5 = vector.load %arg3[%c0_4, %c0_5] : memref<1x128xf32, #tpu.memory_space<vmem>>, vector<1x128xf32>
    %6 = vector.broadcast %5 : vector<1x128xf32> to vector<64x128xf32>
    %7 = arith.addf %4, %6 : vector<64x128xf32>
    %cst_6 = arith.constant 0.000000e+00 : f32
    %8 = vector.broadcast %cst_6 : f32 to vector<64x128xf32>
    %9 = arith.maximumf %7, %8 : vector<64x128xf32>
    %c0_7 = arith.constant 0 : index
    %c0_8 = arith.constant 0 : index
    %c0_9 = arith.constant 0 : index
    %10 = vector.load %arg4[%c0_7, %c0_8, %c0_9] : memref<1x64x128xf32, #tpu.memory_space<vmem>>, vector<1x64x128xf32>
    %11 = vector.shape_cast %10 : vector<1x64x128xf32> to vector<64x128xf32>
    %12 = vector.shape_cast %9 : vector<64x128xf32> to vector<1x64x128xf32>
    tpu.vector_store %arg4[%c0_7, %c0_8, %c0_9], %12 {strides = array<i32>} : memref<1x64x128xf32, #tpu.memory_space<vmem>>, vector<1x64x128xf32>,
    return
  }
  func.func @transform_0(%arg0: i32) -> (i32, i32, i32) {
    %c0_i32 = arith.constant 0 : i32
    %c0_i32_0 = arith.constant 0 : i32
    %c0_i32_1 = arith.constant 0 : i32
    return %arg0, %c0_i32, %c0_i32_0 : i32, i32, i32
  }
  func.func @transform_1(%arg0: i32) -> (i32, i32) {
    %c0_i32 = arith.constant 0 : i32
    %c0_i32_0 = arith.constant 0 : i32
    %c0_i32_1 = arith.constant 0 : i32
    return %c0_i32, %c0_i32_0 : i32, i32
  }
  func.func @transform_2(%arg0: i32) -> (i32, i32) {
    %c0_i32 = arith.constant 0 : i32
    %c0_i32_0 = arith.constant 0 : i32
    %c0_i32_1 = arith.constant 0 : i32
    return %c0_i32, %c0_i32_0 : i32, i32
  }
  func.func @transform_3(%arg0: i32) -> (i32, i32, i32) {
    %c0_i32 = arith.constant 0 : i32
    %c0_i32_0 = arith.constant 0 : i32
    %c0_i32_1 = arith.constant 0 : i32
    return %arg0, %c0_i32, %c0_i32_0 : i32, i32, i32
  }
}

module attributes {stable_mosaic.version = 11 : i64} {
  func.func @_detr_kernel(%arg0: i32, %arg1: memref<1x16x144xf32, #tpu.memory_space<vmem>>, %arg2: memref<16x128xf32, #tpu.memory_space<vmem>>, %arg3: memref<16x128xf32, #tpu.memory_space<vmem>>, %arg4: memref<144x128xbf16, #tpu.memory_space<vmem>>, %arg5: memref<640x128xbf16, #tpu.memory_space<vmem>>, %arg6: memref<2x128x768xbf16, #tpu.memory_space<vmem>>, %arg7: memref<2x9x256xf32, #tpu.memory_space<vmem>>, %arg8: memref<2x128x1280xbf16, #tpu.memory_space<vmem>>, %arg9: memref<2x15x256xf32, #tpu.memory_space<vmem>>, %arg10: memref<8x256xf32, #tpu.memory_space<vmem>>, %arg11: memref<1x16x128xf32, #tpu.memory_space<vmem>>) attributes {dimension_semantics = [#tpu.dimension_semantics<parallel>], iteration_bounds = array<i64: 2>, scalar_prefetch = 0 : i64, scratch_operands = 0 : i64, tpu.core_type = #tpu.core_type<tc>, window_params = [{transform_indices = @transform_0, window_bounds = array<i64: 1, 16, 144>}, {pipeline_mode = #tpu.pipeline_mode<synchronous>, transform_indices = @transform_1, window_bounds = array<i64: 16, 128>}, {pipeline_mode = #tpu.pipeline_mode<synchronous>, transform_indices = @transform_2, window_bounds = array<i64: 16, 128>}, {pipeline_mode = #tpu.pipeline_mode<synchronous>, transform_indices = @transform_3, window_bounds = array<i64: 144, 128>}, {pipeline_mode = #tpu.pipeline_mode<synchronous>, transform_indices = @transform_4, window_bounds = array<i64: 640, 128>}, {pipeline_mode = #tpu.pipeline_mode<synchronous>, transform_indices = @transform_5, window_bounds = array<i64: 2, 128, 768>}, {pipeline_mode = #tpu.pipeline_mode<synchronous>, transform_indices = @transform_6, window_bounds = array<i64: 2, 9, 256>}, {pipeline_mode = #tpu.pipeline_mode<synchronous>, transform_indices = @transform_7, window_bounds = array<i64: 2, 128, 1280>}, {pipeline_mode = #tpu.pipeline_mode<synchronous>, transform_indices = @transform_8, window_bounds = array<i64: 2, 15, 256>}, {pipeline_mode = #tpu.pipeline_mode<synchronous>, transform_indices = @transform_9, window_bounds = array<i64: 8, 256>}, {transform_indices = @transform_10, window_bounds = array<i64: 1, 16, 128>}]} {
    %0 = tpu.iota {dimensions = array<i32: 1>} : vector<1x128xi32>
    %c0_i32 = arith.constant 0 : i32
    %1 = vector.broadcast %c0_i32 : i32 to vector<1x128xi32>
    %2 = arith.cmpi sge, %0, %1 : vector<1x128xi32>
    %c16_i32 = arith.constant 16 : i32
    %3 = vector.broadcast %c16_i32 : i32 to vector<1x128xi32>
    %4 = arith.cmpi slt, %0, %3 : vector<1x128xi32>
    %5 = arith.andi %2, %4 : vector<1x128xi1>
    %6 = arith.extui %5 : vector<1x128xi1> to vector<1x128xi32>
    %7 = arith.sitofp %6 : vector<1x128xi32> to vector<1x128xf32>
    %c16_i32_0 = arith.constant 16 : i32
    %8 = vector.broadcast %c16_i32_0 : i32 to vector<1x128xi32>
    %9 = arith.cmpi sge, %0, %8 : vector<1x128xi32>
    %c32_i32 = arith.constant 32 : i32
    %10 = vector.broadcast %c32_i32 : i32 to vector<1x128xi32>
    %11 = arith.cmpi slt, %0, %10 : vector<1x128xi32>
    %12 = arith.andi %9, %11 : vector<1x128xi1>
    %13 = arith.extui %12 : vector<1x128xi1> to vector<1x128xi32>
    %14 = arith.sitofp %13 : vector<1x128xi32> to vector<1x128xf32>
    %c32_i32_1 = arith.constant 32 : i32
    %15 = vector.broadcast %c32_i32_1 : i32 to vector<1x128xi32>
    %16 = arith.cmpi sge, %0, %15 : vector<1x128xi32>
    %c48_i32 = arith.constant 48 : i32
    %17 = vector.broadcast %c48_i32 : i32 to vector<1x128xi32>
    %18 = arith.cmpi slt, %0, %17 : vector<1x128xi32>
    %19 = arith.andi %16, %18 : vector<1x128xi1>
    %20 = arith.extui %19 : vector<1x128xi1> to vector<1x128xi32>
    %21 = arith.sitofp %20 : vector<1x128xi32> to vector<1x128xf32>
    %c48_i32_2 = arith.constant 48 : i32
    %22 = vector.broadcast %c48_i32_2 : i32 to vector<1x128xi32>
    %23 = arith.cmpi sge, %0, %22 : vector<1x128xi32>
    %c64_i32 = arith.constant 64 : i32
    %24 = vector.broadcast %c64_i32 : i32 to vector<1x128xi32>
    %25 = arith.cmpi slt, %0, %24 : vector<1x128xi32>
    %26 = arith.andi %23, %25 : vector<1x128xi1>
    %27 = arith.extui %26 : vector<1x128xi1> to vector<1x128xi32>
    %28 = arith.sitofp %27 : vector<1x128xi32> to vector<1x128xf32>
    %c64_i32_3 = arith.constant 64 : i32
    %29 = vector.broadcast %c64_i32_3 : i32 to vector<1x128xi32>
    %30 = arith.cmpi slt, %0, %29 : vector<1x128xi32>
    %31 = arith.extui %30 : vector<1x128xi1> to vector<1x128xi32>
    %32 = arith.sitofp %31 : vector<1x128xi32> to vector<1x128xf32>
    %c0 = arith.constant 0 : index
    %c0_4 = arith.constant 0 : index
    %33 = vector.load %arg10[%c0, %c0_4] : memref<8x256xf32, #tpu.memory_space<vmem>>, vector<1x128xf32>
    %c1 = arith.constant 1 : index
    %c0_5 = arith.constant 0 : index
    %34 = vector.load %arg10[%c1, %c0_5] : memref<8x256xf32, #tpu.memory_space<vmem>>, vector<1x128xf32>
    %c0_6 = arith.constant 0 : index
    %c0_7 = arith.constant 0 : index
    %c0_8 = arith.constant 0 : index
    %35 = vector.load %arg1[%c0_6, %c0_7, %c0_8] : memref<1x16x144xf32, #tpu.memory_space<vmem>>, vector<1x16x144xf32>
    %36 = vector.shape_cast %35 : vector<1x16x144xf32> to vector<16x144xf32>
    %37 = arith.truncf %36 : vector<16x144xf32> to vector<16x144xbf16>
    %c0_9 = arith.constant 0 : index
    %c0_10 = arith.constant 0 : index
    %38 = vector.load %arg4[%c0_9, %c0_10] : memref<144x128xbf16, #tpu.memory_space<vmem>>, vector<144x128xbf16>
    %cst = arith.constant dense<0.000000e+00> : vector<16x128xf32>
    %39 = tpu.matmul %37, %38, %cst {dimension_numbers = #tpu.dot_dimension_numbers<[1], [0], [0], [1], [0, 0, 1, 1], [], []>} : vector<16x144xbf16>, vector<144x128xbf16>, vector<16x128xf32> -> vector<16x128xf32>
    %40 = vector.broadcast %33 : vector<1x128xf32> to vector<16x128xf32>
    %41 = arith.addf %39, %40 : vector<16x128xf32>
    %cst_11 = arith.constant 0.000000e+00 : f32
    %42 = vector.broadcast %cst_11 : f32 to vector<16x128xf32>
    %43 = arith.maximumf %41, %42 : vector<16x128xf32>
    %44 = arith.truncf %43 : vector<16x128xf32> to vector<16x128xbf16>
    %c0_12 = arith.constant 0 : index
    %c0_13 = arith.constant 0 : index
    %45 = vector.load %arg5[%c0_12, %c0_13] : memref<640x128xbf16, #tpu.memory_space<vmem>>, vector<128x128xbf16>
    %cst_14 = arith.constant dense<0.000000e+00> : vector<16x128xf32>
    %46 = tpu.matmul %44, %45, %cst_14 {dimension_numbers = #tpu.dot_dimension_numbers<[1], [0], [0], [1], [0, 0, 1, 1], [], []>} : vector<16x128xbf16>, vector<128x128xbf16>, vector<16x128xf32> -> vector<16x128xf32>
    %47 = vector.broadcast %34 : vector<1x128xf32> to vector<16x128xf32>
    %48 = arith.addf %46, %47 : vector<16x128xf32>
    %c0_15 = arith.constant 0 : index
    %c0_16 = arith.constant 0 : index
    %49 = vector.load %arg2[%c0_15, %c0_16] : memref<16x128xf32, #tpu.memory_space<vmem>>, vector<16x128xf32>
    %c0_17 = arith.constant 0 : index
    %c0_18 = arith.constant 0 : index
    %c0_19 = arith.constant 0 : index
    %50 = vector.load %arg7[%c0_17, %c0_18, %c0_19] : memref<2x9x256xf32, #tpu.memory_space<vmem>>, vector<1x1x256xf32>
    %51 = vector.shape_cast %50 : vector<1x1x256xf32> to vector<1x256xf32>
    %c0_20 = arith.constant 0 : index
    %c1_21 = arith.constant 1 : index
    %c0_22 = arith.constant 0 : index
    %52 = vector.load %arg7[%c0_20, %c1_21, %c0_22] : memref<2x9x256xf32, #tpu.memory_space<vmem>>, vector<1x1x128xf32>
    %53 = vector.shape_cast %52 : vector<1x1x128xf32> to vector<1x128xf32>
    %c0_23 = arith.constant 0 : index
    %c2 = arith.constant 2 : index
    %c0_24 = arith.constant 0 : index
    %54 = vector.load %arg7[%c0_23, %c2, %c0_24] : memref<2x9x256xf32, #tpu.memory_space<vmem>>, vector<1x1x128xf32>
    %55 = vector.shape_cast %54 : vector<1x1x128xf32> to vector<1x128xf32>
    %c0_25 = arith.constant 0 : index
    %c3 = arith.constant 3 : index
    %c0_26 = arith.constant 0 : index
    %56 = vector.load %arg7[%c0_25, %c3, %c0_26] : memref<2x9x256xf32, #tpu.memory_space<vmem>>, vector<1x1x128xf32>
    %57 = vector.shape_cast %56 : vector<1x1x128xf32> to vector<1x128xf32>
    %c0_27 = arith.constant 0 : index
    %c4 = arith.constant 4 : index
    %c0_28 = arith.constant 0 : index
    %58 = vector.load %arg7[%c0_27, %c4, %c0_28] : memref<2x9x256xf32, #tpu.memory_space<vmem>>, vector<1x1x128xf32>
    %59 = vector.shape_cast %58 : vector<1x1x128xf32> to vector<1x128xf32>
    %c0_29 = arith.constant 0 : index
    %c5 = arith.constant 5 : index
    %c0_30 = arith.constant 0 : index
    %60 = vector.load %arg7[%c0_29, %c5, %c0_30] : memref<2x9x256xf32, #tpu.memory_space<vmem>>, vector<1x1x128xf32>
    %61 = vector.shape_cast %60 : vector<1x1x128xf32> to vector<1x128xf32>
    %c0_31 = arith.constant 0 : index
    %c6 = arith.constant 6 : index
    %c0_32 = arith.constant 0 : index
    %62 = vector.load %arg7[%c0_31, %c6, %c0_32] : memref<2x9x256xf32, #tpu.memory_space<vmem>>, vector<1x1x128xf32>
    %63 = vector.shape_cast %62 : vector<1x1x128xf32> to vector<1x128xf32>
    %c0_33 = arith.constant 0 : index
    %c7 = arith.constant 7 : index
    %c0_34 = arith.constant 0 : index
    %64 = vector.load %arg7[%c0_33, %c7, %c0_34] : memref<2x9x256xf32, #tpu.memory_space<vmem>>, vector<1x1x128xf32>
    %65 = vector.shape_cast %64 : vector<1x1x128xf32> to vector<1x128xf32>
    %c0_35 = arith.constant 0 : index
    %c8 = arith.constant 8 : index
    %c0_36 = arith.constant 0 : index
    %66 = vector.load %arg7[%c0_35, %c8, %c0_36] : memref<2x9x256xf32, #tpu.memory_space<vmem>>, vector<1x1x128xf32>
    %67 = vector.shape_cast %66 : vector<1x1x128xf32> to vector<1x128xf32>
    %68 = arith.addf %48, %49 : vector<16x128xf32>
    %69 = arith.truncf %68 : vector<16x128xf32> to vector<16x128xbf16>
    %70 = arith.truncf %48 : vector<16x128xf32> to vector<16x128xbf16>
    %c0_37 = arith.constant 0 : index
    %c0_38 = arith.constant 0 : index
    %c0_39 = arith.constant 0 : index
    %71 = vector.load %arg6[%c0_37, %c0_38, %c0_39] : memref<2x128x768xbf16, #tpu.memory_space<vmem>>, vector<1x128x256xbf16>
    %72 = vector.shape_cast %71 : vector<1x128x256xbf16> to vector<128x256xbf16>
    %cst_40 = arith.constant dense<0.000000e+00> : vector<16x256xf32>
    %73 = tpu.matmul %69, %72, %cst_40 {dimension_numbers = #tpu.dot_dimension_numbers<[1], [0], [0], [1], [0, 0, 1, 1], [], []>} : vector<16x128xbf16>, vector<128x256xbf16>, vector<16x256xf32> -> vector<16x256xf32>
    %74 = vector.broadcast %51 : vector<1x256xf32> to vector<16x256xf32>
    %75 = arith.addf %73, %74 : vector<16x256xf32>
    %c0_41 = arith.constant 0 : index
    %c0_42 = arith.constant 0 : index
    %c256 = arith.constant 256 : index
    %76 = vector.load %arg6[%c0_41, %c0_42, %c256] : memref<2x128x768xbf16, #tpu.memory_space<vmem>>, vector<1x128x128xbf16>
    %77 = vector.shape_cast %76 : vector<1x128x128xbf16> to vector<128x128xbf16>
    %cst_43 = arith.constant dense<0.000000e+00> : vector<16x128xf32>
    %78 = tpu.matmul %70, %77, %cst_43 {dimension_numbers = #tpu.dot_dimension_numbers<[1], [0], [0], [1], [0, 0, 1, 1], [], []>} : vector<16x128xbf16>, vector<128x128xbf16>, vector<16x128xf32> -> vector<16x128xf32>
    %79 = vector.broadcast %53 : vector<1x128xf32> to vector<16x128xf32>
    %80 = arith.addf %78, %79 : vector<16x128xf32>
    %81 = vector.extract_strided_slice %75 {offsets = [0, 0], sizes = [16, 128], strides = [1, 1]} : vector<16x256xf32> to vector<16x128xf32>
    %82 = vector.extract_strided_slice %75 {offsets = [0, 128], sizes = [16, 128], strides = [1, 1]} : vector<16x256xf32> to vector<16x128xf32>
    %83 = arith.truncf %82 : vector<16x128xf32> to vector<16x128xbf16>
    %cst_44 = arith.constant 0.000000e+00 : f32
    %84 = vector.broadcast %cst_44 : f32 to vector<16x128xf32>
    %85 = vector.broadcast %7 : vector<1x128xf32> to vector<16x128xf32>
    %86 = arith.mulf %81, %85 : vector<16x128xf32>
    %87 = arith.truncf %86 : vector<16x128xf32> to vector<16x128xbf16>
    %cst_45 = arith.constant dense<0.000000e+00> : vector<16x16xf32>
    %88 = tpu.matmul %87, %83, %cst_45 {dimension_numbers = #tpu.dot_dimension_numbers<[1], [1], [0], [0], [0, 0, 1, 0], [], []>} : vector<16x128xbf16>, vector<16x128xbf16>, vector<16x16xf32> -> vector<16x16xf32>
    %cst_46 = arith.constant dense<0xFF800000> : vector<16xf32>
    %89 = vector.multi_reduction <maximumf>, %88, %cst_46 [1] : vector<16x16xf32> to vector<16xf32>
    %90 = vector.shape_cast %89 : vector<16xf32> to vector<16x1xf32>
    %91 = vector.broadcast %90 : vector<16x1xf32> to vector<16x16xf32>
    %92 = arith.subf %88, %91 : vector<16x16xf32>
    %93 = math.exp %92 : vector<16x16xf32>
    %cst_47 = arith.constant dense<0.000000e+00> : vector<16xf32>
    %94 = vector.multi_reduction <add>, %93, %cst_47 [1] : vector<16x16xf32> to vector<16xf32>
    %95 = vector.shape_cast %94 : vector<16xf32> to vector<16x1xf32>
    %96 = tpu.reciprocal %95 {approx = true} : vector<16x1xf32> -> vector<16x1xf32>
    %97 = vector.broadcast %96 : vector<16x1xf32> to vector<16x16xf32>
    %98 = arith.mulf %93, %97 : vector<16x16xf32>
    %99 = arith.truncf %98 : vector<16x16xf32> to vector<16x16xbf16>
    %100 = vector.broadcast %7 : vector<1x128xf32> to vector<16x128xf32>
    %101 = arith.mulf %80, %100 : vector<16x128xf32>
    %102 = arith.truncf %101 : vector<16x128xf32> to vector<16x128xbf16>
    %cst_48 = arith.constant dense<0.000000e+00> : vector<16x128xf32>
    %103 = tpu.matmul %99, %102, %cst_48 {dimension_numbers = #tpu.dot_dimension_numbers<[1], [0], [0], [1], [0, 0, 1, 1], [], []>} : vector<16x16xbf16>, vector<16x128xbf16>, vector<16x128xf32> -> vector<16x128xf32>
    %104 = arith.addf %84, %103 : vector<16x128xf32>
    %105 = vector.broadcast %14 : vector<1x128xf32> to vector<16x128xf32>
    %106 = arith.mulf %81, %105 : vector<16x128xf32>
    %107 = arith.truncf %106 : vector<16x128xf32> to vector<16x128xbf16>
    %cst_49 = arith.constant dense<0.000000e+00> : vector<16x16xf32>
    %108 = tpu.matmul %107, %83, %cst_49 {dimension_numbers = #tpu.dot_dimension_numbers<[1], [1], [0], [0], [0, 0, 1, 0], [], []>} : vector<16x128xbf16>, vector<16x128xbf16>, vector<16x16xf32> -> vector<16x16xf32>
    %cst_50 = arith.constant dense<0xFF800000> : vector<16xf32>
    %109 = vector.multi_reduction <maximumf>, %108, %cst_50 [1] : vector<16x16xf32> to vector<16xf32>
    %110 = vector.shape_cast %109 : vector<16xf32> to vector<16x1xf32>
    %111 = vector.broadcast %110 : vector<16x1xf32> to vector<16x16xf32>
    %112 = arith.subf %108, %111 : vector<16x16xf32>
    %113 = math.exp %112 : vector<16x16xf32>
    %cst_51 = arith.constant dense<0.000000e+00> : vector<16xf32>
    %114 = vector.multi_reduction <add>, %113, %cst_51 [1] : vector<16x16xf32> to vector<16xf32>
    %115 = vector.shape_cast %114 : vector<16xf32> to vector<16x1xf32>
    %116 = tpu.reciprocal %115 {approx = true} : vector<16x1xf32> -> vector<16x1xf32>
    %117 = vector.broadcast %116 : vector<16x1xf32> to vector<16x16xf32>
    %118 = arith.mulf %113, %117 : vector<16x16xf32>
    %119 = arith.truncf %118 : vector<16x16xf32> to vector<16x16xbf16>
    %120 = vector.broadcast %14 : vector<1x128xf32> to vector<16x128xf32>
    %121 = arith.mulf %80, %120 : vector<16x128xf32>
    %122 = arith.truncf %121 : vector<16x128xf32> to vector<16x128xbf16>
    %cst_52 = arith.constant dense<0.000000e+00> : vector<16x128xf32>
    %123 = tpu.matmul %119, %122, %cst_52 {dimension_numbers = #tpu.dot_dimension_numbers<[1], [0], [0], [1], [0, 0, 1, 1], [], []>} : vector<16x16xbf16>, vector<16x128xbf16>, vector<16x128xf32> -> vector<16x128xf32>
    %124 = arith.addf %104, %123 : vector<16x128xf32>
    %125 = vector.broadcast %21 : vector<1x128xf32> to vector<16x128xf32>
    %126 = arith.mulf %81, %125 : vector<16x128xf32>
    %127 = arith.truncf %126 : vector<16x128xf32> to vector<16x128xbf16>
    %cst_53 = arith.constant dense<0.000000e+00> : vector<16x16xf32>
    %128 = tpu.matmul %127, %83, %cst_53 {dimension_numbers = #tpu.dot_dimension_numbers<[1], [1], [0], [0], [0, 0, 1, 0], [], []>} : vector<16x128xbf16>, vector<16x128xbf16>, vector<16x16xf32> -> vector<16x16xf32>
    %cst_54 = arith.constant dense<0xFF800000> : vector<16xf32>
    %129 = vector.multi_reduction <maximumf>, %128, %cst_54 [1] : vector<16x16xf32> to vector<16xf32>
    %130 = vector.shape_cast %129 : vector<16xf32> to vector<16x1xf32>
    %131 = vector.broadcast %130 : vector<16x1xf32> to vector<16x16xf32>
    %132 = arith.subf %128, %131 : vector<16x16xf32>
    %133 = math.exp %132 : vector<16x16xf32>
    %cst_55 = arith.constant dense<0.000000e+00> : vector<16xf32>
    %134 = vector.multi_reduction <add>, %133, %cst_55 [1] : vector<16x16xf32> to vector<16xf32>
    %135 = vector.shape_cast %134 : vector<16xf32> to vector<16x1xf32>
    %136 = tpu.reciprocal %135 {approx = true} : vector<16x1xf32> -> vector<16x1xf32>
    %137 = vector.broadcast %136 : vector<16x1xf32> to vector<16x16xf32>
    %138 = arith.mulf %133, %137 : vector<16x16xf32>
    %139 = arith.truncf %138 : vector<16x16xf32> to vector<16x16xbf16>
    %140 = vector.broadcast %21 : vector<1x128xf32> to vector<16x128xf32>
    %141 = arith.mulf %80, %140 : vector<16x128xf32>
    %142 = arith.truncf %141 : vector<16x128xf32> to vector<16x128xbf16>
    %cst_56 = arith.constant dense<0.000000e+00> : vector<16x128xf32>
    %143 = tpu.matmul %139, %142, %cst_56 {dimension_numbers = #tpu.dot_dimension_numbers<[1], [0], [0], [1], [0, 0, 1, 1], [], []>} : vector<16x16xbf16>, vector<16x128xbf16>, vector<16x128xf32> -> vector<16x128xf32>
    %144 = arith.addf %124, %143 : vector<16x128xf32>
    %145 = vector.broadcast %28 : vector<1x128xf32> to vector<16x128xf32>
    %146 = arith.mulf %81, %145 : vector<16x128xf32>
    %147 = arith.truncf %146 : vector<16x128xf32> to vector<16x128xbf16>
    %cst_57 = arith.constant dense<0.000000e+00> : vector<16x16xf32>
    %148 = tpu.matmul %147, %83, %cst_57 {dimension_numbers = #tpu.dot_dimension_numbers<[1], [1], [0], [0], [0, 0, 1, 0], [], []>} : vector<16x128xbf16>, vector<16x128xbf16>, vector<16x16xf32> -> vector<16x16xf32>
    %cst_58 = arith.constant dense<0xFF800000> : vector<16xf32>
    %149 = vector.multi_reduction <maximumf>, %148, %cst_58 [1] : vector<16x16xf32> to vector<16xf32>
    %150 = vector.shape_cast %149 : vector<16xf32> to vector<16x1xf32>
    %151 = vector.broadcast %150 : vector<16x1xf32> to vector<16x16xf32>
    %152 = arith.subf %148, %151 : vector<16x16xf32>
    %153 = math.exp %152 : vector<16x16xf32>
    %cst_59 = arith.constant dense<0.000000e+00> : vector<16xf32>
    %154 = vector.multi_reduction <add>, %153, %cst_59 [1] : vector<16x16xf32> to vector<16xf32>
    %155 = vector.shape_cast %154 : vector<16xf32> to vector<16x1xf32>
    %156 = tpu.reciprocal %155 {approx = true} : vector<16x1xf32> -> vector<16x1xf32>
    %157 = vector.broadcast %156 : vector<16x1xf32> to vector<16x16xf32>
    %158 = arith.mulf %153, %157 : vector<16x16xf32>
    %159 = arith.truncf %158 : vector<16x16xf32> to vector<16x16xbf16>
    %160 = vector.broadcast %28 : vector<1x128xf32> to vector<16x128xf32>
    %161 = arith.mulf %80, %160 : vector<16x128xf32>
    %162 = arith.truncf %161 : vector<16x128xf32> to vector<16x128xbf16>
    %cst_60 = arith.constant dense<0.000000e+00> : vector<16x128xf32>
    %163 = tpu.matmul %159, %162, %cst_60 {dimension_numbers = #tpu.dot_dimension_numbers<[1], [0], [0], [1], [0, 0, 1, 1], [], []>} : vector<16x16xbf16>, vector<16x128xbf16>, vector<16x128xf32> -> vector<16x128xf32>
    %164 = arith.addf %144, %163 : vector<16x128xf32>
    %165 = arith.truncf %164 : vector<16x128xf32> to vector<16x128xbf16>
    %c0_61 = arith.constant 0 : index
    %c0_62 = arith.constant 0 : index
    %c384 = arith.constant 384 : index
    %166 = vector.load %arg6[%c0_61, %c0_62, %c384] : memref<2x128x768xbf16, #tpu.memory_space<vmem>>, vector<1x128x128xbf16>
    %167 = vector.shape_cast %166 : vector<1x128x128xbf16> to vector<128x128xbf16>
    %cst_63 = arith.constant dense<0.000000e+00> : vector<16x128xf32>
    %168 = tpu.matmul %165, %167, %cst_63 {dimension_numbers = #tpu.dot_dimension_numbers<[1], [0], [0], [1], [0, 0, 1, 1], [], []>} : vector<16x128xbf16>, vector<128x128xbf16>, vector<16x128xf32> -> vector<16x128xf32>
    %169 = vector.broadcast %55 : vector<1x128xf32> to vector<16x128xf32>
    %170 = arith.addf %168, %169 : vector<16x128xf32>
    %171 = arith.addf %48, %170 : vector<16x128xf32>
    %cst_64 = arith.constant dense<0.000000e+00> : vector<16xf32>
    %172 = vector.multi_reduction <add>, %171, %cst_64 [1] : vector<16x128xf32> to vector<16xf32>
    %173 = vector.shape_cast %172 : vector<16xf32> to vector<16x1xf32>
    %cst_65 = arith.constant 1.562500e-02 : f32
    %174 = vector.broadcast %cst_65 : f32 to vector<16x1xf32>
    %175 = arith.mulf %173, %174 : vector<16x1xf32>
    %176 = vector.broadcast %175 : vector<16x1xf32> to vector<16x128xf32>
    %177 = arith.subf %171, %176 : vector<16x128xf32>
    %178 = arith.mulf %177, %177 : vector<16x128xf32>
    %179 = vector.broadcast %32 : vector<1x128xf32> to vector<16x128xf32>
    %180 = arith.mulf %178, %179 : vector<16x128xf32>
    %cst_66 = arith.constant dense<0.000000e+00> : vector<16xf32>
    %181 = vector.multi_reduction <add>, %180, %cst_66 [1] : vector<16x128xf32> to vector<16xf32>
    %182 = vector.shape_cast %181 : vector<16xf32> to vector<16x1xf32>
    %cst_67 = arith.constant 1.562500e-02 : f32
    %183 = vector.broadcast %cst_67 : f32 to vector<16x1xf32>
    %184 = arith.mulf %182, %183 : vector<16x1xf32>
    %cst_68 = arith.constant 9.99999974E-6 : f32
    %185 = vector.broadcast %cst_68 : f32 to vector<16x1xf32>
    %186 = arith.addf %184, %185 : vector<16x1xf32>
    %187 = math.rsqrt %186 : vector<16x1xf32>
    %188 = vector.broadcast %187 : vector<16x1xf32> to vector<16x128xf32>
    %189 = arith.mulf %177, %188 : vector<16x128xf32>
    %190 = vector.broadcast %57 : vector<1x128xf32> to vector<16x128xf32>
    %191 = arith.mulf %189, %190 : vector<16x128xf32>
    %192 = vector.broadcast %59 : vector<1x128xf32> to vector<16x128xf32>
    %193 = arith.addf %191, %192 : vector<16x128xf32>
    %194 = arith.truncf %193 : vector<16x128xf32> to vector<16x128xbf16>
    %c0_69 = arith.constant 0 : index
    %c0_70 = arith.constant 0 : index
    %c512 = arith.constant 512 : index
    %195 = vector.load %arg6[%c0_69, %c0_70, %c512] : memref<2x128x768xbf16, #tpu.memory_space<vmem>>, vector<1x128x128xbf16>
    %196 = vector.shape_cast %195 : vector<1x128x128xbf16> to vector<128x128xbf16>
    %cst_71 = arith.constant dense<0.000000e+00> : vector<16x128xf32>
    %197 = tpu.matmul %194, %196, %cst_71 {dimension_numbers = #tpu.dot_dimension_numbers<[1], [0], [0], [1], [0, 0, 1, 1], [], []>} : vector<16x128xbf16>, vector<128x128xbf16>, vector<16x128xf32> -> vector<16x128xf32>
    %198 = vector.broadcast %61 : vector<1x128xf32> to vector<16x128xf32>
    %199 = arith.addf %197, %198 : vector<16x128xf32>
    %cst_72 = arith.constant 0.000000e+00 : f32
    %200 = vector.broadcast %cst_72 : f32 to vector<16x128xf32>
    %201 = arith.maximumf %199, %200 : vector<16x128xf32>
    %202 = arith.truncf %201 : vector<16x128xf32> to vector<16x128xbf16>
    %c0_73 = arith.constant 0 : index
    %c0_74 = arith.constant 0 : index
    %c640 = arith.constant 640 : index
    %203 = vector.load %arg6[%c0_73, %c0_74, %c640] : memref<2x128x768xbf16, #tpu.memory_space<vmem>>, vector<1x128x128xbf16>
    %204 = vector.shape_cast %203 : vector<1x128x128xbf16> to vector<128x128xbf16>
    %cst_75 = arith.constant dense<0.000000e+00> : vector<16x128xf32>
    %205 = tpu.matmul %202, %204, %cst_75 {dimension_numbers = #tpu.dot_dimension_numbers<[1], [0], [0], [1], [0, 0, 1, 1], [], []>} : vector<16x128xbf16>, vector<128x128xbf16>, vector<16x128xf32> -> vector<16x128xf32>
    %206 = vector.broadcast %63 : vector<1x128xf32> to vector<16x128xf32>
    %207 = arith.addf %205, %206 : vector<16x128xf32>
    %208 = arith.addf %193, %207 : vector<16x128xf32>
    %cst_76 = arith.constant dense<0.000000e+00> : vector<16xf32>
    %209 = vector.multi_reduction <add>, %208, %cst_76 [1] : vector<16x128xf32> to vector<16xf32>
    %210 = vector.shape_cast %209 : vector<16xf32> to vector<16x1xf32>
    %cst_77 = arith.constant 1.562500e-02 : f32
    %211 = vector.broadcast %cst_77 : f32 to vector<16x1xf32>
    %212 = arith.mulf %210, %211 : vector<16x1xf32>
    %213 = vector.broadcast %212 : vector<16x1xf32> to vector<16x128xf32>
    %214 = arith.subf %208, %213 : vector<16x128xf32>
    %215 = arith.mulf %214, %214 : vector<16x128xf32>
    %216 = vector.broadcast %32 : vector<1x128xf32> to vector<16x128xf32>
    %217 = arith.mulf %215, %216 : vector<16x128xf32>
    %cst_78 = arith.constant dense<0.000000e+00> : vector<16xf32>
    %218 = vector.multi_reduction <add>, %217, %cst_78 [1] : vector<16x128xf32> to vector<16xf32>
    %219 = vector.shape_cast %218 : vector<16xf32> to vector<16x1xf32>
    %cst_79 = arith.constant 1.562500e-02 : f32
    %220 = vector.broadcast %cst_79 : f32 to vector<16x1xf32>
    %221 = arith.mulf %219, %220 : vector<16x1xf32>
    %cst_80 = arith.constant 9.99999974E-6 : f32
    %222 = vector.broadcast %cst_80 : f32 to vector<16x1xf32>
    %223 = arith.addf %221, %222 : vector<16x1xf32>
    %224 = math.rsqrt %223 : vector<16x1xf32>
    %225 = vector.broadcast %224 : vector<16x1xf32> to vector<16x128xf32>
    %226 = arith.mulf %214, %225 : vector<16x128xf32>
    %227 = vector.broadcast %65 : vector<1x128xf32> to vector<16x128xf32>
    %228 = arith.mulf %226, %227 : vector<16x128xf32>
    %229 = vector.broadcast %67 : vector<1x128xf32> to vector<16x128xf32>
    %230 = arith.addf %228, %229 : vector<16x128xf32>
    %c1_81 = arith.constant 1 : index
    %c0_82 = arith.constant 0 : index
    %c0_83 = arith.constant 0 : index
    %231 = vector.load %arg7[%c1_81, %c0_82, %c0_83] : memref<2x9x256xf32, #tpu.memory_space<vmem>>, vector<1x1x256xf32>
    %232 = vector.shape_cast %231 : vector<1x1x256xf32> to vector<1x256xf32>
    %c1_84 = arith.constant 1 : index
    %c1_85 = arith.constant 1 : index
    %c0_86 = arith.constant 0 : index
    %233 = vector.load %arg7[%c1_84, %c1_85, %c0_86] : memref<2x9x256xf32, #tpu.memory_space<vmem>>, vector<1x1x128xf32>
    %234 = vector.shape_cast %233 : vector<1x1x128xf32> to vector<1x128xf32>
    %c1_87 = arith.constant 1 : index
    %c2_88 = arith.constant 2 : index
    %c0_89 = arith.constant 0 : index
    %235 = vector.load %arg7[%c1_87, %c2_88, %c0_89] : memref<2x9x256xf32, #tpu.memory_space<vmem>>, vector<1x1x128xf32>
    %236 = vector.shape_cast %235 : vector<1x1x128xf32> to vector<1x128xf32>
    %c1_90 = arith.constant 1 : index
    %c3_91 = arith.constant 3 : index
    %c0_92 = arith.constant 0 : index
    %237 = vector.load %arg7[%c1_90, %c3_91, %c0_92] : memref<2x9x256xf32, #tpu.memory_space<vmem>>, vector<1x1x128xf32>
    %238 = vector.shape_cast %237 : vector<1x1x128xf32> to vector<1x128xf32>
    %c1_93 = arith.constant 1 : index
    %c4_94 = arith.constant 4 : index
    %c0_95 = arith.constant 0 : index
    %239 = vector.load %arg7[%c1_93, %c4_94, %c0_95] : memref<2x9x256xf32, #tpu.memory_space<vmem>>, vector<1x1x128xf32>
    %240 = vector.shape_cast %239 : vector<1x1x128xf32> to vector<1x128xf32>
    %c1_96 = arith.constant 1 : index
    %c5_97 = arith.constant 5 : index
    %c0_98 = arith.constant 0 : index
    %241 = vector.load %arg7[%c1_96, %c5_97, %c0_98] : memref<2x9x256xf32, #tpu.memory_space<vmem>>, vector<1x1x128xf32>
    %242 = vector.shape_cast %241 : vector<1x1x128xf32> to vector<1x128xf32>
    %c1_99 = arith.constant 1 : index
    %c6_100 = arith.constant 6 : index
    %c0_101 = arith.constant 0 : index
    %243 = vector.load %arg7[%c1_99, %c6_100, %c0_101] : memref<2x9x256xf32, #tpu.memory_space<vmem>>, vector<1x1x128xf32>
    %244 = vector.shape_cast %243 : vector<1x1x128xf32> to vector<1x128xf32>
    %c1_102 = arith.constant 1 : index
    %c7_103 = arith.constant 7 : index
    %c0_104 = arith.constant 0 : index
    %245 = vector.load %arg7[%c1_102, %c7_103, %c0_104] : memref<2x9x256xf32, #tpu.memory_space<vmem>>, vector<1x1x128xf32>
    %246 = vector.shape_cast %245 : vector<1x1x128xf32> to vector<1x128xf32>
    %c1_105 = arith.constant 1 : index
    %c8_106 = arith.constant 8 : index
    %c0_107 = arith.constant 0 : index
    %247 = vector.load %arg7[%c1_105, %c8_106, %c0_107] : memref<2x9x256xf32, #tpu.memory_space<vmem>>, vector<1x1x128xf32>
    %248 = vector.shape_cast %247 : vector<1x1x128xf32> to vector<1x128xf32>
    %249 = arith.addf %230, %49 : vector<16x128xf32>
    %250 = arith.truncf %249 : vector<16x128xf32> to vector<16x128xbf16>
    %251 = arith.truncf %230 : vector<16x128xf32> to vector<16x128xbf16>
    %c1_108 = arith.constant 1 : index
    %c0_109 = arith.constant 0 : index
    %c0_110 = arith.constant 0 : index
    %252 = vector.load %arg6[%c1_108, %c0_109, %c0_110] : memref<2x128x768xbf16, #tpu.memory_space<vmem>>, vector<1x128x256xbf16>
    %253 = vector.shape_cast %252 : vector<1x128x256xbf16> to vector<128x256xbf16>
    %cst_111 = arith.constant dense<0.000000e+00> : vector<16x256xf32>
    %254 = tpu.matmul %250, %253, %cst_111 {dimension_numbers = #tpu.dot_dimension_numbers<[1], [0], [0], [1], [0, 0, 1, 1], [], []>} : vector<16x128xbf16>, vector<128x256xbf16>, vector<16x256xf32> -> vector<16x256xf32>
    %255 = vector.broadcast %232 : vector<1x256xf32> to vector<16x256xf32>
    %256 = arith.addf %254, %255 : vector<16x256xf32>
    %c1_112 = arith.constant 1 : index
    %c0_113 = arith.constant 0 : index
    %c256_114 = arith.constant 256 : index
    %257 = vector.load %arg6[%c1_112, %c0_113, %c256_114] : memref<2x128x768xbf16, #tpu.memory_space<vmem>>, vector<1x128x128xbf16>
    %258 = vector.shape_cast %257 : vector<1x128x128xbf16> to vector<128x128xbf16>
    %cst_115 = arith.constant dense<0.000000e+00> : vector<16x128xf32>
    %259 = tpu.matmul %251, %258, %cst_115 {dimension_numbers = #tpu.dot_dimension_numbers<[1], [0], [0], [1], [0, 0, 1, 1], [], []>} : vector<16x128xbf16>, vector<128x128xbf16>, vector<16x128xf32> -> vector<16x128xf32>
    %260 = vector.broadcast %234 : vector<1x128xf32> to vector<16x128xf32>
    %261 = arith.addf %259, %260 : vector<16x128xf32>
    %262 = vector.extract_strided_slice %256 {offsets = [0, 0], sizes = [16, 128], strides = [1, 1]} : vector<16x256xf32> to vector<16x128xf32>
    %263 = vector.extract_strided_slice %256 {offsets = [0, 128], sizes = [16, 128], strides = [1, 1]} : vector<16x256xf32> to vector<16x128xf32>
    %264 = arith.truncf %263 : vector<16x128xf32> to vector<16x128xbf16>
    %cst_116 = arith.constant 0.000000e+00 : f32
    %265 = vector.broadcast %cst_116 : f32 to vector<16x128xf32>
    %266 = vector.broadcast %7 : vector<1x128xf32> to vector<16x128xf32>
    %267 = arith.mulf %262, %266 : vector<16x128xf32>
    %268 = arith.truncf %267 : vector<16x128xf32> to vector<16x128xbf16>
    %cst_117 = arith.constant dense<0.000000e+00> : vector<16x16xf32>
    %269 = tpu.matmul %268, %264, %cst_117 {dimension_numbers = #tpu.dot_dimension_numbers<[1], [1], [0], [0], [0, 0, 1, 0], [], []>} : vector<16x128xbf16>, vector<16x128xbf16>, vector<16x16xf32> -> vector<16x16xf32>
    %cst_118 = arith.constant dense<0xFF800000> : vector<16xf32>
    %270 = vector.multi_reduction <maximumf>, %269, %cst_118 [1] : vector<16x16xf32> to vector<16xf32>
    %271 = vector.shape_cast %270 : vector<16xf32> to vector<16x1xf32>
    %272 = vector.broadcast %271 : vector<16x1xf32> to vector<16x16xf32>
    %273 = arith.subf %269, %272 : vector<16x16xf32>
    %274 = math.exp %273 : vector<16x16xf32>
    %cst_119 = arith.constant dense<0.000000e+00> : vector<16xf32>
    %275 = vector.multi_reduction <add>, %274, %cst_119 [1] : vector<16x16xf32> to vector<16xf32>
    %276 = vector.shape_cast %275 : vector<16xf32> to vector<16x1xf32>
    %277 = tpu.reciprocal %276 {approx = true} : vector<16x1xf32> -> vector<16x1xf32>
    %278 = vector.broadcast %277 : vector<16x1xf32> to vector<16x16xf32>
    %279 = arith.mulf %274, %278 : vector<16x16xf32>
    %280 = arith.truncf %279 : vector<16x16xf32> to vector<16x16xbf16>
    %281 = vector.broadcast %7 : vector<1x128xf32> to vector<16x128xf32>
    %282 = arith.mulf %261, %281 : vector<16x128xf32>
    %283 = arith.truncf %282 : vector<16x128xf32> to vector<16x128xbf16>
    %cst_120 = arith.constant dense<0.000000e+00> : vector<16x128xf32>
    %284 = tpu.matmul %280, %283, %cst_120 {dimension_numbers = #tpu.dot_dimension_numbers<[1], [0], [0], [1], [0, 0, 1, 1], [], []>} : vector<16x16xbf16>, vector<16x128xbf16>, vector<16x128xf32> -> vector<16x128xf32>
    %285 = arith.addf %265, %284 : vector<16x128xf32>
    %286 = vector.broadcast %14 : vector<1x128xf32> to vector<16x128xf32>
    %287 = arith.mulf %262, %286 : vector<16x128xf32>
    %288 = arith.truncf %287 : vector<16x128xf32> to vector<16x128xbf16>
    %cst_121 = arith.constant dense<0.000000e+00> : vector<16x16xf32>
    %289 = tpu.matmul %288, %264, %cst_121 {dimension_numbers = #tpu.dot_dimension_numbers<[1], [1], [0], [0], [0, 0, 1, 0], [], []>} : vector<16x128xbf16>, vector<16x128xbf16>, vector<16x16xf32> -> vector<16x16xf32>
    %cst_122 = arith.constant dense<0xFF800000> : vector<16xf32>
    %290 = vector.multi_reduction <maximumf>, %289, %cst_122 [1] : vector<16x16xf32> to vector<16xf32>
    %291 = vector.shape_cast %290 : vector<16xf32> to vector<16x1xf32>
    %292 = vector.broadcast %291 : vector<16x1xf32> to vector<16x16xf32>
    %293 = arith.subf %289, %292 : vector<16x16xf32>
    %294 = math.exp %293 : vector<16x16xf32>
    %cst_123 = arith.constant dense<0.000000e+00> : vector<16xf32>
    %295 = vector.multi_reduction <add>, %294, %cst_123 [1] : vector<16x16xf32> to vector<16xf32>
    %296 = vector.shape_cast %295 : vector<16xf32> to vector<16x1xf32>
    %297 = tpu.reciprocal %296 {approx = true} : vector<16x1xf32> -> vector<16x1xf32>
    %298 = vector.broadcast %297 : vector<16x1xf32> to vector<16x16xf32>
    %299 = arith.mulf %294, %298 : vector<16x16xf32>
    %300 = arith.truncf %299 : vector<16x16xf32> to vector<16x16xbf16>
    %301 = vector.broadcast %14 : vector<1x128xf32> to vector<16x128xf32>
    %302 = arith.mulf %261, %301 : vector<16x128xf32>
    %303 = arith.truncf %302 : vector<16x128xf32> to vector<16x128xbf16>
    %cst_124 = arith.constant dense<0.000000e+00> : vector<16x128xf32>
    %304 = tpu.matmul %300, %303, %cst_124 {dimension_numbers = #tpu.dot_dimension_numbers<[1], [0], [0], [1], [0, 0, 1, 1], [], []>} : vector<16x16xbf16>, vector<16x128xbf16>, vector<16x128xf32> -> vector<16x128xf32>
    %305 = arith.addf %285, %304 : vector<16x128xf32>
    %306 = vector.broadcast %21 : vector<1x128xf32> to vector<16x128xf32>
    %307 = arith.mulf %262, %306 : vector<16x128xf32>
    %308 = arith.truncf %307 : vector<16x128xf32> to vector<16x128xbf16>
    %cst_125 = arith.constant dense<0.000000e+00> : vector<16x16xf32>
    %309 = tpu.matmul %308, %264, %cst_125 {dimension_numbers = #tpu.dot_dimension_numbers<[1], [1], [0], [0], [0, 0, 1, 0], [], []>} : vector<16x128xbf16>, vector<16x128xbf16>, vector<16x16xf32> -> vector<16x16xf32>
    %cst_126 = arith.constant dense<0xFF800000> : vector<16xf32>
    %310 = vector.multi_reduction <maximumf>, %309, %cst_126 [1] : vector<16x16xf32> to vector<16xf32>
    %311 = vector.shape_cast %310 : vector<16xf32> to vector<16x1xf32>
    %312 = vector.broadcast %311 : vector<16x1xf32> to vector<16x16xf32>
    %313 = arith.subf %309, %312 : vector<16x16xf32>
    %314 = math.exp %313 : vector<16x16xf32>
    %cst_127 = arith.constant dense<0.000000e+00> : vector<16xf32>
    %315 = vector.multi_reduction <add>, %314, %cst_127 [1] : vector<16x16xf32> to vector<16xf32>
    %316 = vector.shape_cast %315 : vector<16xf32> to vector<16x1xf32>
    %317 = tpu.reciprocal %316 {approx = true} : vector<16x1xf32> -> vector<16x1xf32>
    %318 = vector.broadcast %317 : vector<16x1xf32> to vector<16x16xf32>
    %319 = arith.mulf %314, %318 : vector<16x16xf32>
    %320 = arith.truncf %319 : vector<16x16xf32> to vector<16x16xbf16>
    %321 = vector.broadcast %21 : vector<1x128xf32> to vector<16x128xf32>
    %322 = arith.mulf %261, %321 : vector<16x128xf32>
    %323 = arith.truncf %322 : vector<16x128xf32> to vector<16x128xbf16>
    %cst_128 = arith.constant dense<0.000000e+00> : vector<16x128xf32>
    %324 = tpu.matmul %320, %323, %cst_128 {dimension_numbers = #tpu.dot_dimension_numbers<[1], [0], [0], [1], [0, 0, 1, 1], [], []>} : vector<16x16xbf16>, vector<16x128xbf16>, vector<16x128xf32> -> vector<16x128xf32>
    %325 = arith.addf %305, %324 : vector<16x128xf32>
    %326 = vector.broadcast %28 : vector<1x128xf32> to vector<16x128xf32>
    %327 = arith.mulf %262, %326 : vector<16x128xf32>
    %328 = arith.truncf %327 : vector<16x128xf32> to vector<16x128xbf16>
    %cst_129 = arith.constant dense<0.000000e+00> : vector<16x16xf32>
    %329 = tpu.matmul %328, %264, %cst_129 {dimension_numbers = #tpu.dot_dimension_numbers<[1], [1], [0], [0], [0, 0, 1, 0], [], []>} : vector<16x128xbf16>, vector<16x128xbf16>, vector<16x16xf32> -> vector<16x16xf32>
    %cst_130 = arith.constant dense<0xFF800000> : vector<16xf32>
    %330 = vector.multi_reduction <maximumf>, %329, %cst_130 [1] : vector<16x16xf32> to vector<16xf32>
    %331 = vector.shape_cast %330 : vector<16xf32> to vector<16x1xf32>
    %332 = vector.broadcast %331 : vector<16x1xf32> to vector<16x16xf32>
    %333 = arith.subf %329, %332 : vector<16x16xf32>
    %334 = math.exp %333 : vector<16x16xf32>
    %cst_131 = arith.constant dense<0.000000e+00> : vector<16xf32>
    %335 = vector.multi_reduction <add>, %334, %cst_131 [1] : vector<16x16xf32> to vector<16xf32>
    %336 = vector.shape_cast %335 : vector<16xf32> to vector<16x1xf32>
    %337 = tpu.reciprocal %336 {approx = true} : vector<16x1xf32> -> vector<16x1xf32>
    %338 = vector.broadcast %337 : vector<16x1xf32> to vector<16x16xf32>
    %339 = arith.mulf %334, %338 : vector<16x16xf32>
    %340 = arith.truncf %339 : vector<16x16xf32> to vector<16x16xbf16>
    %341 = vector.broadcast %28 : vector<1x128xf32> to vector<16x128xf32>
    %342 = arith.mulf %261, %341 : vector<16x128xf32>
    %343 = arith.truncf %342 : vector<16x128xf32> to vector<16x128xbf16>
    %cst_132 = arith.constant dense<0.000000e+00> : vector<16x128xf32>
    %344 = tpu.matmul %340, %343, %cst_132 {dimension_numbers = #tpu.dot_dimension_numbers<[1], [0], [0], [1], [0, 0, 1, 1], [], []>} : vector<16x16xbf16>, vector<16x128xbf16>, vector<16x128xf32> -> vector<16x128xf32>
    %345 = arith.addf %325, %344 : vector<16x128xf32>
    %346 = arith.truncf %345 : vector<16x128xf32> to vector<16x128xbf16>
    %c1_133 = arith.constant 1 : index
    %c0_134 = arith.constant 0 : index
    %c384_135 = arith.constant 384 : index
    %347 = vector.load %arg6[%c1_133, %c0_134, %c384_135] : memref<2x128x768xbf16, #tpu.memory_space<vmem>>, vector<1x128x128xbf16>
    %348 = vector.shape_cast %347 : vector<1x128x128xbf16> to vector<128x128xbf16>
    %cst_136 = arith.constant dense<0.000000e+00> : vector<16x128xf32>
    %349 = tpu.matmul %346, %348, %cst_136 {dimension_numbers = #tpu.dot_dimension_numbers<[1], [0], [0], [1], [0, 0, 1, 1], [], []>} : vector<16x128xbf16>, vector<128x128xbf16>, vector<16x128xf32> -> vector<16x128xf32>
    %350 = vector.broadcast %236 : vector<1x128xf32> to vector<16x128xf32>
    %351 = arith.addf %349, %350 : vector<16x128xf32>
    %352 = arith.addf %230, %351 : vector<16x128xf32>
    %cst_137 = arith.constant dense<0.000000e+00> : vector<16xf32>
    %353 = vector.multi_reduction <add>, %352, %cst_137 [1] : vector<16x128xf32> to vector<16xf32>
    %354 = vector.shape_cast %353 : vector<16xf32> to vector<16x1xf32>
    %cst_138 = arith.constant 1.562500e-02 : f32
    %355 = vector.broadcast %cst_138 : f32 to vector<16x1xf32>
    %356 = arith.mulf %354, %355 : vector<16x1xf32>
    %357 = vector.broadcast %356 : vector<16x1xf32> to vector<16x128xf32>
    %358 = arith.subf %352, %357 : vector<16x128xf32>
    %359 = arith.mulf %358, %358 : vector<16x128xf32>
    %360 = vector.broadcast %32 : vector<1x128xf32> to vector<16x128xf32>
    %361 = arith.mulf %359, %360 : vector<16x128xf32>
    %cst_139 = arith.constant dense<0.000000e+00> : vector<16xf32>
    %362 = vector.multi_reduction <add>, %361, %cst_139 [1] : vector<16x128xf32> to vector<16xf32>
    %363 = vector.shape_cast %362 : vector<16xf32> to vector<16x1xf32>
    %cst_140 = arith.constant 1.562500e-02 : f32
    %364 = vector.broadcast %cst_140 : f32 to vector<16x1xf32>
    %365 = arith.mulf %363, %364 : vector<16x1xf32>
    %cst_141 = arith.constant 9.99999974E-6 : f32
    %366 = vector.broadcast %cst_141 : f32 to vector<16x1xf32>
    %367 = arith.addf %365, %366 : vector<16x1xf32>
    %368 = math.rsqrt %367 : vector<16x1xf32>
    %369 = vector.broadcast %368 : vector<16x1xf32> to vector<16x128xf32>
    %370 = arith.mulf %358, %369 : vector<16x128xf32>
    %371 = vector.broadcast %238 : vector<1x128xf32> to vector<16x128xf32>
    %372 = arith.mulf %370, %371 : vector<16x128xf32>
    %373 = vector.broadcast %240 : vector<1x128xf32> to vector<16x128xf32>
    %374 = arith.addf %372, %373 : vector<16x128xf32>
    %375 = arith.truncf %374 : vector<16x128xf32> to vector<16x128xbf16>
    %c1_142 = arith.constant 1 : index
    %c0_143 = arith.constant 0 : index
    %c512_144 = arith.constant 512 : index
    %376 = vector.load %arg6[%c1_142, %c0_143, %c512_144] : memref<2x128x768xbf16, #tpu.memory_space<vmem>>, vector<1x128x128xbf16>
    %377 = vector.shape_cast %376 : vector<1x128x128xbf16> to vector<128x128xbf16>
    %cst_145 = arith.constant dense<0.000000e+00> : vector<16x128xf32>
    %378 = tpu.matmul %375, %377, %cst_145 {dimension_numbers = #tpu.dot_dimension_numbers<[1], [0], [0], [1], [0, 0, 1, 1], [], []>} : vector<16x128xbf16>, vector<128x128xbf16>, vector<16x128xf32> -> vector<16x128xf32>
    %379 = vector.broadcast %242 : vector<1x128xf32> to vector<16x128xf32>
    %380 = arith.addf %378, %379 : vector<16x128xf32>
    %cst_146 = arith.constant 0.000000e+00 : f32
    %381 = vector.broadcast %cst_146 : f32 to vector<16x128xf32>
    %382 = arith.maximumf %380, %381 : vector<16x128xf32>
    %383 = arith.truncf %382 : vector<16x128xf32> to vector<16x128xbf16>
    %c1_147 = arith.constant 1 : index
    %c0_148 = arith.constant 0 : index
    %c640_149 = arith.constant 640 : index
    %384 = vector.load %arg6[%c1_147, %c0_148, %c640_149] : memref<2x128x768xbf16, #tpu.memory_space<vmem>>, vector<1x128x128xbf16>
    %385 = vector.shape_cast %384 : vector<1x128x128xbf16> to vector<128x128xbf16>
    %cst_150 = arith.constant dense<0.000000e+00> : vector<16x128xf32>
    %386 = tpu.matmul %383, %385, %cst_150 {dimension_numbers = #tpu.dot_dimension_numbers<[1], [0], [0], [1], [0, 0, 1, 1], [], []>} : vector<16x128xbf16>, vector<128x128xbf16>, vector<16x128xf32> -> vector<16x128xf32>
    %387 = vector.broadcast %244 : vector<1x128xf32> to vector<16x128xf32>
    %388 = arith.addf %386, %387 : vector<16x128xf32>
    %389 = arith.addf %374, %388 : vector<16x128xf32>
    %cst_151 = arith.constant dense<0.000000e+00> : vector<16xf32>
    %390 = vector.multi_reduction <add>, %389, %cst_151 [1] : vector<16x128xf32> to vector<16xf32>
    %391 = vector.shape_cast %390 : vector<16xf32> to vector<16x1xf32>
    %cst_152 = arith.constant 1.562500e-02 : f32
    %392 = vector.broadcast %cst_152 : f32 to vector<16x1xf32>
    %393 = arith.mulf %391, %392 : vector<16x1xf32>
    %394 = vector.broadcast %393 : vector<16x1xf32> to vector<16x128xf32>
    %395 = arith.subf %389, %394 : vector<16x128xf32>
    %396 = arith.mulf %395, %395 : vector<16x128xf32>
    %397 = vector.broadcast %32 : vector<1x128xf32> to vector<16x128xf32>
    %398 = arith.mulf %396, %397 : vector<16x128xf32>
    %cst_153 = arith.constant dense<0.000000e+00> : vector<16xf32>
    %399 = vector.multi_reduction <add>, %398, %cst_153 [1] : vector<16x128xf32> to vector<16xf32>
    %400 = vector.shape_cast %399 : vector<16xf32> to vector<16x1xf32>
    %cst_154 = arith.constant 1.562500e-02 : f32
    %401 = vector.broadcast %cst_154 : f32 to vector<16x1xf32>
    %402 = arith.mulf %400, %401 : vector<16x1xf32>
    %cst_155 = arith.constant 9.99999974E-6 : f32
    %403 = vector.broadcast %cst_155 : f32 to vector<16x1xf32>
    %404 = arith.addf %402, %403 : vector<16x1xf32>
    %405 = math.rsqrt %404 : vector<16x1xf32>
    %406 = vector.broadcast %405 : vector<16x1xf32> to vector<16x128xf32>
    %407 = arith.mulf %395, %406 : vector<16x128xf32>
    %408 = vector.broadcast %246 : vector<1x128xf32> to vector<16x128xf32>
    %409 = arith.mulf %407, %408 : vector<16x128xf32>
    %410 = vector.broadcast %248 : vector<1x128xf32> to vector<16x128xf32>
    %411 = arith.addf %409, %410 : vector<16x128xf32>
    %412 = arith.truncf %411 : vector<16x128xf32> to vector<16x128xbf16>
    %413 = arith.addf %411, %49 : vector<16x128xf32>
    %414 = arith.truncf %413 : vector<16x128xf32> to vector<16x128xbf16>
    %c0_156 = arith.constant 0 : index
    %c0_157 = arith.constant 0 : index
    %415 = vector.load %arg3[%c0_156, %c0_157] : memref<16x128xf32, #tpu.memory_space<vmem>>, vector<16x128xf32>
    %cst_158 = arith.constant 0.000000e+00 : f32
    %416 = vector.broadcast %cst_158 : f32 to vector<16x128xf32>
    %c0_159 = arith.constant 0 : index
    %c0_160 = arith.constant 0 : index
    %c0_161 = arith.constant 0 : index
    %417 = vector.load %arg9[%c0_159, %c0_160, %c0_161] : memref<2x15x256xf32, #tpu.memory_space<vmem>>, vector<1x1x256xf32>
    %418 = vector.shape_cast %417 : vector<1x1x256xf32> to vector<1x256xf32>
    %c0_162 = arith.constant 0 : index
    %c1_163 = arith.constant 1 : index
    %c0_164 = arith.constant 0 : index
    %419 = vector.load %arg9[%c0_162, %c1_163, %c0_164] : memref<2x15x256xf32, #tpu.memory_space<vmem>>, vector<1x1x128xf32>
    %420 = vector.shape_cast %419 : vector<1x1x128xf32> to vector<1x128xf32>
    %c0_165 = arith.constant 0 : index
    %c2_166 = arith.constant 2 : index
    %c0_167 = arith.constant 0 : index
    %421 = vector.load %arg9[%c0_165, %c2_166, %c0_167] : memref<2x15x256xf32, #tpu.memory_space<vmem>>, vector<1x1x128xf32>
    %422 = vector.shape_cast %421 : vector<1x1x128xf32> to vector<1x128xf32>
    %c0_168 = arith.constant 0 : index
    %c3_169 = arith.constant 3 : index
    %c0_170 = arith.constant 0 : index
    %423 = vector.load %arg9[%c0_168, %c3_169, %c0_170] : memref<2x15x256xf32, #tpu.memory_space<vmem>>, vector<1x1x128xf32>
    %424 = vector.shape_cast %423 : vector<1x1x128xf32> to vector<1x128xf32>
    %c0_171 = arith.constant 0 : index
    %c4_172 = arith.constant 4 : index
    %c0_173 = arith.constant 0 : index
    %425 = vector.load %arg9[%c0_171, %c4_172, %c0_173] : memref<2x15x256xf32, #tpu.memory_space<vmem>>, vector<1x1x128xf32>
    %426 = vector.shape_cast %425 : vector<1x1x128xf32> to vector<1x128xf32>
    %c0_174 = arith.constant 0 : index
    %c5_175 = arith.constant 5 : index
    %c0_176 = arith.constant 0 : index
    %427 = vector.load %arg9[%c0_174, %c5_175, %c0_176] : memref<2x15x256xf32, #tpu.memory_space<vmem>>, vector<1x1x128xf32>
    %428 = vector.shape_cast %427 : vector<1x1x128xf32> to vector<1x128xf32>
    %c0_177 = arith.constant 0 : index
    %c6_178 = arith.constant 6 : index
    %c0_179 = arith.constant 0 : index
    %429 = vector.load %arg9[%c0_177, %c6_178, %c0_179] : memref<2x15x256xf32, #tpu.memory_space<vmem>>, vector<1x1x128xf32>
    %430 = vector.shape_cast %429 : vector<1x1x128xf32> to vector<1x128xf32>
    %c0_180 = arith.constant 0 : index
    %c7_181 = arith.constant 7 : index
    %c0_182 = arith.constant 0 : index
    %431 = vector.load %arg9[%c0_180, %c7_181, %c0_182] : memref<2x15x256xf32, #tpu.memory_space<vmem>>, vector<1x1x128xf32>
    %432 = vector.shape_cast %431 : vector<1x1x128xf32> to vector<1x128xf32>
    %c0_183 = arith.constant 0 : index
    %c8_184 = arith.constant 8 : index
    %c0_185 = arith.constant 0 : index
    %433 = vector.load %arg9[%c0_183, %c8_184, %c0_185] : memref<2x15x256xf32, #tpu.memory_space<vmem>>, vector<1x1x128xf32>
    %434 = vector.shape_cast %433 : vector<1x1x128xf32> to vector<1x128xf32>
    %c0_186 = arith.constant 0 : index
    %c9 = arith.constant 9 : index
    %c0_187 = arith.constant 0 : index
    %435 = vector.load %arg9[%c0_186, %c9, %c0_187] : memref<2x15x256xf32, #tpu.memory_space<vmem>>, vector<1x1x128xf32>
    %436 = vector.shape_cast %435 : vector<1x1x128xf32> to vector<1x128xf32>
    %c0_188 = arith.constant 0 : index
    %c10 = arith.constant 10 : index
    %c0_189 = arith.constant 0 : index
    %437 = vector.load %arg9[%c0_188, %c10, %c0_189] : memref<2x15x256xf32, #tpu.memory_space<vmem>>, vector<1x1x128xf32>
    %438 = vector.shape_cast %437 : vector<1x1x128xf32> to vector<1x128xf32>
    %c0_190 = arith.constant 0 : index
    %c11 = arith.constant 11 : index
    %c0_191 = arith.constant 0 : index
    %439 = vector.load %arg9[%c0_190, %c11, %c0_191] : memref<2x15x256xf32, #tpu.memory_space<vmem>>, vector<1x1x128xf32>
    %440 = vector.shape_cast %439 : vector<1x1x128xf32> to vector<1x128xf32>
    %c0_192 = arith.constant 0 : index
    %c12 = arith.constant 12 : index
    %c0_193 = arith.constant 0 : index
    %441 = vector.load %arg9[%c0_192, %c12, %c0_193] : memref<2x15x256xf32, #tpu.memory_space<vmem>>, vector<1x1x128xf32>
    %442 = vector.shape_cast %441 : vector<1x1x128xf32> to vector<1x128xf32>
    %c0_194 = arith.constant 0 : index
    %c13 = arith.constant 13 : index
    %c0_195 = arith.constant 0 : index
    %443 = vector.load %arg9[%c0_194, %c13, %c0_195] : memref<2x15x256xf32, #tpu.memory_space<vmem>>, vector<1x1x128xf32>
    %444 = vector.shape_cast %443 : vector<1x1x128xf32> to vector<1x128xf32>
    %c0_196 = arith.constant 0 : index
    %c14 = arith.constant 14 : index
    %c0_197 = arith.constant 0 : index
    %445 = vector.load %arg9[%c0_196, %c14, %c0_197] : memref<2x15x256xf32, #tpu.memory_space<vmem>>, vector<1x1x128xf32>
    %446 = vector.shape_cast %445 : vector<1x1x128xf32> to vector<1x128xf32>
    %447 = arith.addf %416, %415 : vector<16x128xf32>
    %448 = arith.truncf %447 : vector<16x128xf32> to vector<16x128xbf16>
    %449 = arith.truncf %416 : vector<16x128xf32> to vector<16x128xbf16>
    %c0_198 = arith.constant 0 : index
    %c0_199 = arith.constant 0 : index
    %c0_200 = arith.constant 0 : index
    %450 = vector.load %arg8[%c0_198, %c0_199, %c0_200] : memref<2x128x1280xbf16, #tpu.memory_space<vmem>>, vector<1x128x256xbf16>
    %451 = vector.shape_cast %450 : vector<1x128x256xbf16> to vector<128x256xbf16>
    %cst_201 = arith.constant dense<0.000000e+00> : vector<16x256xf32>
    %452 = tpu.matmul %448, %451, %cst_201 {dimension_numbers = #tpu.dot_dimension_numbers<[1], [0], [0], [1], [0, 0, 1, 1], [], []>} : vector<16x128xbf16>, vector<128x256xbf16>, vector<16x256xf32> -> vector<16x256xf32>
    %453 = vector.broadcast %418 : vector<1x256xf32> to vector<16x256xf32>
    %454 = arith.addf %452, %453 : vector<16x256xf32>
    %c0_202 = arith.constant 0 : index
    %c0_203 = arith.constant 0 : index
    %c256_204 = arith.constant 256 : index
    %455 = vector.load %arg8[%c0_202, %c0_203, %c256_204] : memref<2x128x1280xbf16, #tpu.memory_space<vmem>>, vector<1x128x128xbf16>
    %456 = vector.shape_cast %455 : vector<1x128x128xbf16> to vector<128x128xbf16>
    %cst_205 = arith.constant dense<0.000000e+00> : vector<16x128xf32>
    %457 = tpu.matmul %449, %456, %cst_205 {dimension_numbers = #tpu.dot_dimension_numbers<[1], [0], [0], [1], [0, 0, 1, 1], [], []>} : vector<16x128xbf16>, vector<128x128xbf16>, vector<16x128xf32> -> vector<16x128xf32>
    %458 = vector.broadcast %420 : vector<1x128xf32> to vector<16x128xf32>
    %459 = arith.addf %457, %458 : vector<16x128xf32>
    %460 = vector.extract_strided_slice %454 {offsets = [0, 0], sizes = [16, 128], strides = [1, 1]} : vector<16x256xf32> to vector<16x128xf32>
    %461 = vector.extract_strided_slice %454 {offsets = [0, 128], sizes = [16, 128], strides = [1, 1]} : vector<16x256xf32> to vector<16x128xf32>
    %462 = arith.truncf %461 : vector<16x128xf32> to vector<16x128xbf16>
    %cst_206 = arith.constant 0.000000e+00 : f32
    %463 = vector.broadcast %cst_206 : f32 to vector<16x128xf32>
    %464 = vector.broadcast %7 : vector<1x128xf32> to vector<16x128xf32>
    %465 = arith.mulf %460, %464 : vector<16x128xf32>
    %466 = arith.truncf %465 : vector<16x128xf32> to vector<16x128xbf16>
    %cst_207 = arith.constant dense<0.000000e+00> : vector<16x16xf32>
    %467 = tpu.matmul %466, %462, %cst_207 {dimension_numbers = #tpu.dot_dimension_numbers<[1], [1], [0], [0], [0, 0, 1, 0], [], []>} : vector<16x128xbf16>, vector<16x128xbf16>, vector<16x16xf32> -> vector<16x16xf32>
    %cst_208 = arith.constant dense<0xFF800000> : vector<16xf32>
    %468 = vector.multi_reduction <maximumf>, %467, %cst_208 [1] : vector<16x16xf32> to vector<16xf32>
    %469 = vector.shape_cast %468 : vector<16xf32> to vector<16x1xf32>
    %470 = vector.broadcast %469 : vector<16x1xf32> to vector<16x16xf32>
    %471 = arith.subf %467, %470 : vector<16x16xf32>
    %472 = math.exp %471 : vector<16x16xf32>
    %cst_209 = arith.constant dense<0.000000e+00> : vector<16xf32>
    %473 = vector.multi_reduction <add>, %472, %cst_209 [1] : vector<16x16xf32> to vector<16xf32>
    %474 = vector.shape_cast %473 : vector<16xf32> to vector<16x1xf32>
    %475 = tpu.reciprocal %474 {approx = true} : vector<16x1xf32> -> vector<16x1xf32>
    %476 = vector.broadcast %475 : vector<16x1xf32> to vector<16x16xf32>
    %477 = arith.mulf %472, %476 : vector<16x16xf32>
    %478 = arith.truncf %477 : vector<16x16xf32> to vector<16x16xbf16>
    %479 = vector.broadcast %7 : vector<1x128xf32> to vector<16x128xf32>
    %480 = arith.mulf %459, %479 : vector<16x128xf32>
    %481 = arith.truncf %480 : vector<16x128xf32> to vector<16x128xbf16>
    %cst_210 = arith.constant dense<0.000000e+00> : vector<16x128xf32>
    %482 = tpu.matmul %478, %481, %cst_210 {dimension_numbers = #tpu.dot_dimension_numbers<[1], [0], [0], [1], [0, 0, 1, 1], [], []>} : vector<16x16xbf16>, vector<16x128xbf16>, vector<16x128xf32> -> vector<16x128xf32>
    %483 = arith.addf %463, %482 : vector<16x128xf32>
    %484 = vector.broadcast %14 : vector<1x128xf32> to vector<16x128xf32>
    %485 = arith.mulf %460, %484 : vector<16x128xf32>
    %486 = arith.truncf %485 : vector<16x128xf32> to vector<16x128xbf16>
    %cst_211 = arith.constant dense<0.000000e+00> : vector<16x16xf32>
    %487 = tpu.matmul %486, %462, %cst_211 {dimension_numbers = #tpu.dot_dimension_numbers<[1], [1], [0], [0], [0, 0, 1, 0], [], []>} : vector<16x128xbf16>, vector<16x128xbf16>, vector<16x16xf32> -> vector<16x16xf32>
    %cst_212 = arith.constant dense<0xFF800000> : vector<16xf32>
    %488 = vector.multi_reduction <maximumf>, %487, %cst_212 [1] : vector<16x16xf32> to vector<16xf32>
    %489 = vector.shape_cast %488 : vector<16xf32> to vector<16x1xf32>
    %490 = vector.broadcast %489 : vector<16x1xf32> to vector<16x16xf32>
    %491 = arith.subf %487, %490 : vector<16x16xf32>
    %492 = math.exp %491 : vector<16x16xf32>
    %cst_213 = arith.constant dense<0.000000e+00> : vector<16xf32>
    %493 = vector.multi_reduction <add>, %492, %cst_213 [1] : vector<16x16xf32> to vector<16xf32>
    %494 = vector.shape_cast %493 : vector<16xf32> to vector<16x1xf32>
    %495 = tpu.reciprocal %494 {approx = true} : vector<16x1xf32> -> vector<16x1xf32>
    %496 = vector.broadcast %495 : vector<16x1xf32> to vector<16x16xf32>
    %497 = arith.mulf %492, %496 : vector<16x16xf32>
    %498 = arith.truncf %497 : vector<16x16xf32> to vector<16x16xbf16>
    %499 = vector.broadcast %14 : vector<1x128xf32> to vector<16x128xf32>
    %500 = arith.mulf %459, %499 : vector<16x128xf32>
    %501 = arith.truncf %500 : vector<16x128xf32> to vector<16x128xbf16>
    %cst_214 = arith.constant dense<0.000000e+00> : vector<16x128xf32>
    %502 = tpu.matmul %498, %501, %cst_214 {dimension_numbers = #tpu.dot_dimension_numbers<[1], [0], [0], [1], [0, 0, 1, 1], [], []>} : vector<16x16xbf16>, vector<16x128xbf16>, vector<16x128xf32> -> vector<16x128xf32>
    %503 = arith.addf %483, %502 : vector<16x128xf32>
    %504 = vector.broadcast %21 : vector<1x128xf32> to vector<16x128xf32>
    %505 = arith.mulf %460, %504 : vector<16x128xf32>
    %506 = arith.truncf %505 : vector<16x128xf32> to vector<16x128xbf16>
    %cst_215 = arith.constant dense<0.000000e+00> : vector<16x16xf32>
    %507 = tpu.matmul %506, %462, %cst_215 {dimension_numbers = #tpu.dot_dimension_numbers<[1], [1], [0], [0], [0, 0, 1, 0], [], []>} : vector<16x128xbf16>, vector<16x128xbf16>, vector<16x16xf32> -> vector<16x16xf32>
    %cst_216 = arith.constant dense<0xFF800000> : vector<16xf32>
    %508 = vector.multi_reduction <maximumf>, %507, %cst_216 [1] : vector<16x16xf32> to vector<16xf32>
    %509 = vector.shape_cast %508 : vector<16xf32> to vector<16x1xf32>
    %510 = vector.broadcast %509 : vector<16x1xf32> to vector<16x16xf32>
    %511 = arith.subf %507, %510 : vector<16x16xf32>
    %512 = math.exp %511 : vector<16x16xf32>
    %cst_217 = arith.constant dense<0.000000e+00> : vector<16xf32>
    %513 = vector.multi_reduction <add>, %512, %cst_217 [1] : vector<16x16xf32> to vector<16xf32>
    %514 = vector.shape_cast %513 : vector<16xf32> to vector<16x1xf32>
    %515 = tpu.reciprocal %514 {approx = true} : vector<16x1xf32> -> vector<16x1xf32>
    %516 = vector.broadcast %515 : vector<16x1xf32> to vector<16x16xf32>
    %517 = arith.mulf %512, %516 : vector<16x16xf32>
    %518 = arith.truncf %517 : vector<16x16xf32> to vector<16x16xbf16>
    %519 = vector.broadcast %21 : vector<1x128xf32> to vector<16x128xf32>
    %520 = arith.mulf %459, %519 : vector<16x128xf32>
    %521 = arith.truncf %520 : vector<16x128xf32> to vector<16x128xbf16>
    %cst_218 = arith.constant dense<0.000000e+00> : vector<16x128xf32>
    %522 = tpu.matmul %518, %521, %cst_218 {dimension_numbers = #tpu.dot_dimension_numbers<[1], [0], [0], [1], [0, 0, 1, 1], [], []>} : vector<16x16xbf16>, vector<16x128xbf16>, vector<16x128xf32> -> vector<16x128xf32>
    %523 = arith.addf %503, %522 : vector<16x128xf32>
    %524 = vector.broadcast %28 : vector<1x128xf32> to vector<16x128xf32>
    %525 = arith.mulf %460, %524 : vector<16x128xf32>
    %526 = arith.truncf %525 : vector<16x128xf32> to vector<16x128xbf16>
    %cst_219 = arith.constant dense<0.000000e+00> : vector<16x16xf32>
    %527 = tpu.matmul %526, %462, %cst_219 {dimension_numbers = #tpu.dot_dimension_numbers<[1], [1], [0], [0], [0, 0, 1, 0], [], []>} : vector<16x128xbf16>, vector<16x128xbf16>, vector<16x16xf32> -> vector<16x16xf32>
    %cst_220 = arith.constant dense<0xFF800000> : vector<16xf32>
    %528 = vector.multi_reduction <maximumf>, %527, %cst_220 [1] : vector<16x16xf32> to vector<16xf32>
    %529 = vector.shape_cast %528 : vector<16xf32> to vector<16x1xf32>
    %530 = vector.broadcast %529 : vector<16x1xf32> to vector<16x16xf32>
    %531 = arith.subf %527, %530 : vector<16x16xf32>
    %532 = math.exp %531 : vector<16x16xf32>
    %cst_221 = arith.constant dense<0.000000e+00> : vector<16xf32>
    %533 = vector.multi_reduction <add>, %532, %cst_221 [1] : vector<16x16xf32> to vector<16xf32>
    %534 = vector.shape_cast %533 : vector<16xf32> to vector<16x1xf32>
    %535 = tpu.reciprocal %534 {approx = true} : vector<16x1xf32> -> vector<16x1xf32>
    %536 = vector.broadcast %535 : vector<16x1xf32> to vector<16x16xf32>
    %537 = arith.mulf %532, %536 : vector<16x16xf32>
    %538 = arith.truncf %537 : vector<16x16xf32> to vector<16x16xbf16>
    %539 = vector.broadcast %28 : vector<1x128xf32> to vector<16x128xf32>
    %540 = arith.mulf %459, %539 : vector<16x128xf32>
    %541 = arith.truncf %540 : vector<16x128xf32> to vector<16x128xbf16>
    %cst_222 = arith.constant dense<0.000000e+00> : vector<16x128xf32>
    %542 = tpu.matmul %538, %541, %cst_222 {dimension_numbers = #tpu.dot_dimension_numbers<[1], [0], [0], [1], [0, 0, 1, 1], [], []>} : vector<16x16xbf16>, vector<16x128xbf16>, vector<16x128xf32> -> vector<16x128xf32>
    %543 = arith.addf %523, %542 : vector<16x128xf32>
    %544 = arith.truncf %543 : vector<16x128xf32> to vector<16x128xbf16>
    %c0_223 = arith.constant 0 : index
    %c0_224 = arith.constant 0 : index
    %c384_225 = arith.constant 384 : index
    %545 = vector.load %arg8[%c0_223, %c0_224, %c384_225] : memref<2x128x1280xbf16, #tpu.memory_space<vmem>>, vector<1x128x128xbf16>
    %546 = vector.shape_cast %545 : vector<1x128x128xbf16> to vector<128x128xbf16>
    %cst_226 = arith.constant dense<0.000000e+00> : vector<16x128xf32>
    %547 = tpu.matmul %544, %546, %cst_226 {dimension_numbers = #tpu.dot_dimension_numbers<[1], [0], [0], [1], [0, 0, 1, 1], [], []>} : vector<16x128xbf16>, vector<128x128xbf16>, vector<16x128xf32> -> vector<16x128xf32>
    %548 = vector.broadcast %422 : vector<1x128xf32> to vector<16x128xf32>
    %549 = arith.addf %547, %548 : vector<16x128xf32>
    %550 = arith.addf %416, %549 : vector<16x128xf32>
    %cst_227 = arith.constant dense<0.000000e+00> : vector<16xf32>
    %551 = vector.multi_reduction <add>, %550, %cst_227 [1] : vector<16x128xf32> to vector<16xf32>
    %552 = vector.shape_cast %551 : vector<16xf32> to vector<16x1xf32>
    %cst_228 = arith.constant 1.562500e-02 : f32
    %553 = vector.broadcast %cst_228 : f32 to vector<16x1xf32>
    %554 = arith.mulf %552, %553 : vector<16x1xf32>
    %555 = vector.broadcast %554 : vector<16x1xf32> to vector<16x128xf32>
    %556 = arith.subf %550, %555 : vector<16x128xf32>
    %557 = arith.mulf %556, %556 : vector<16x128xf32>
    %558 = vector.broadcast %32 : vector<1x128xf32> to vector<16x128xf32>
    %559 = arith.mulf %557, %558 : vector<16x128xf32>
    %cst_229 = arith.constant dense<0.000000e+00> : vector<16xf32>
    %560 = vector.multi_reduction <add>, %559, %cst_229 [1] : vector<16x128xf32> to vector<16xf32>
    %561 = vector.shape_cast %560 : vector<16xf32> to vector<16x1xf32>
    %cst_230 = arith.constant 1.562500e-02 : f32
    %562 = vector.broadcast %cst_230 : f32 to vector<16x1xf32>
    %563 = arith.mulf %561, %562 : vector<16x1xf32>
    %cst_231 = arith.constant 9.99999974E-6 : f32
    %564 = vector.broadcast %cst_231 : f32 to vector<16x1xf32>
    %565 = arith.addf %563, %564 : vector<16x1xf32>
    %566 = math.rsqrt %565 : vector<16x1xf32>
    %567 = vector.broadcast %566 : vector<16x1xf32> to vector<16x128xf32>
    %568 = arith.mulf %556, %567 : vector<16x128xf32>
    %569 = vector.broadcast %424 : vector<1x128xf32> to vector<16x128xf32>
    %570 = arith.mulf %568, %569 : vector<16x128xf32>
    %571 = vector.broadcast %426 : vector<1x128xf32> to vector<16x128xf32>
    %572 = arith.addf %570, %571 : vector<16x128xf32>
    %573 = arith.addf %572, %415 : vector<16x128xf32>
    %574 = arith.truncf %573 : vector<16x128xf32> to vector<16x128xbf16>
    %c0_232 = arith.constant 0 : index
    %c0_233 = arith.constant 0 : index
    %c512_234 = arith.constant 512 : index
    %575 = vector.load %arg8[%c0_232, %c0_233, %c512_234] : memref<2x128x1280xbf16, #tpu.memory_space<vmem>>, vector<1x128x128xbf16>
    %576 = vector.shape_cast %575 : vector<1x128x128xbf16> to vector<128x128xbf16>
    %cst_235 = arith.constant dense<0.000000e+00> : vector<16x128xf32>
    %577 = tpu.matmul %574, %576, %cst_235 {dimension_numbers = #tpu.dot_dimension_numbers<[1], [0], [0], [1], [0, 0, 1, 1], [], []>} : vector<16x128xbf16>, vector<128x128xbf16>, vector<16x128xf32> -> vector<16x128xf32>
    %578 = vector.broadcast %428 : vector<1x128xf32> to vector<16x128xf32>
    %579 = arith.addf %577, %578 : vector<16x128xf32>
    %c0_236 = arith.constant 0 : index
    %c0_237 = arith.constant 0 : index
    %c640_238 = arith.constant 640 : index
    %580 = vector.load %arg8[%c0_236, %c0_237, %c640_238] : memref<2x128x1280xbf16, #tpu.memory_space<vmem>>, vector<1x128x128xbf16>
    %581 = vector.shape_cast %580 : vector<1x128x128xbf16> to vector<128x128xbf16>
    %cst_239 = arith.constant dense<0.000000e+00> : vector<16x128xf32>
    %582 = tpu.matmul %414, %581, %cst_239 {dimension_numbers = #tpu.dot_dimension_numbers<[1], [0], [0], [1], [0, 0, 1, 1], [], []>} : vector<16x128xbf16>, vector<128x128xbf16>, vector<16x128xf32> -> vector<16x128xf32>
    %583 = vector.broadcast %430 : vector<1x128xf32> to vector<16x128xf32>
    %584 = arith.addf %582, %583 : vector<16x128xf32>
    %c0_240 = arith.constant 0 : index
    %c0_241 = arith.constant 0 : index
    %c768 = arith.constant 768 : index
    %585 = vector.load %arg8[%c0_240, %c0_241, %c768] : memref<2x128x1280xbf16, #tpu.memory_space<vmem>>, vector<1x128x128xbf16>
    %586 = vector.shape_cast %585 : vector<1x128x128xbf16> to vector<128x128xbf16>
    %cst_242 = arith.constant dense<0.000000e+00> : vector<16x128xf32>
    %587 = tpu.matmul %412, %586, %cst_242 {dimension_numbers = #tpu.dot_dimension_numbers<[1], [0], [0], [1], [0, 0, 1, 1], [], []>} : vector<16x128xbf16>, vector<128x128xbf16>, vector<16x128xf32> -> vector<16x128xf32>
    %588 = vector.broadcast %432 : vector<1x128xf32> to vector<16x128xf32>
    %589 = arith.addf %587, %588 : vector<16x128xf32>
    %590 = arith.truncf %584 : vector<16x128xf32> to vector<16x128xbf16>
    %cst_243 = arith.constant 0.000000e+00 : f32
    %591 = vector.broadcast %cst_243 : f32 to vector<16x128xf32>
    %592 = vector.broadcast %7 : vector<1x128xf32> to vector<16x128xf32>
    %593 = arith.mulf %579, %592 : vector<16x128xf32>
    %594 = arith.truncf %593 : vector<16x128xf32> to vector<16x128xbf16>
    %cst_244 = arith.constant dense<0.000000e+00> : vector<16x16xf32>
    %595 = tpu.matmul %594, %590, %cst_244 {dimension_numbers = #tpu.dot_dimension_numbers<[1], [1], [0], [0], [0, 0, 1, 0], [], []>} : vector<16x128xbf16>, vector<16x128xbf16>, vector<16x16xf32> -> vector<16x16xf32>
    %cst_245 = arith.constant dense<0xFF800000> : vector<16xf32>
    %596 = vector.multi_reduction <maximumf>, %595, %cst_245 [1] : vector<16x16xf32> to vector<16xf32>
    %597 = vector.shape_cast %596 : vector<16xf32> to vector<16x1xf32>
    %598 = vector.broadcast %597 : vector<16x1xf32> to vector<16x16xf32>
    %599 = arith.subf %595, %598 : vector<16x16xf32>
    %600 = math.exp %599 : vector<16x16xf32>
    %cst_246 = arith.constant dense<0.000000e+00> : vector<16xf32>
    %601 = vector.multi_reduction <add>, %600, %cst_246 [1] : vector<16x16xf32> to vector<16xf32>
    %602 = vector.shape_cast %601 : vector<16xf32> to vector<16x1xf32>
    %603 = tpu.reciprocal %602 {approx = true} : vector<16x1xf32> -> vector<16x1xf32>
    %604 = vector.broadcast %603 : vector<16x1xf32> to vector<16x16xf32>
    %605 = arith.mulf %600, %604 : vector<16x16xf32>
    %606 = arith.truncf %605 : vector<16x16xf32> to vector<16x16xbf16>
    %607 = vector.broadcast %7 : vector<1x128xf32> to vector<16x128xf32>
    %608 = arith.mulf %589, %607 : vector<16x128xf32>
    %609 = arith.truncf %608 : vector<16x128xf32> to vector<16x128xbf16>
    %cst_247 = arith.constant dense<0.000000e+00> : vector<16x128xf32>
    %610 = tpu.matmul %606, %609, %cst_247 {dimension_numbers = #tpu.dot_dimension_numbers<[1], [0], [0], [1], [0, 0, 1, 1], [], []>} : vector<16x16xbf16>, vector<16x128xbf16>, vector<16x128xf32> -> vector<16x128xf32>
    %611 = arith.addf %591, %610 : vector<16x128xf32>
    %612 = vector.broadcast %14 : vector<1x128xf32> to vector<16x128xf32>
    %613 = arith.mulf %579, %612 : vector<16x128xf32>
    %614 = arith.truncf %613 : vector<16x128xf32> to vector<16x128xbf16>
    %cst_248 = arith.constant dense<0.000000e+00> : vector<16x16xf32>
    %615 = tpu.matmul %614, %590, %cst_248 {dimension_numbers = #tpu.dot_dimension_numbers<[1], [1], [0], [0], [0, 0, 1, 0], [], []>} : vector<16x128xbf16>, vector<16x128xbf16>, vector<16x16xf32> -> vector<16x16xf32>
    %cst_249 = arith.constant dense<0xFF800000> : vector<16xf32>
    %616 = vector.multi_reduction <maximumf>, %615, %cst_249 [1] : vector<16x16xf32> to vector<16xf32>
    %617 = vector.shape_cast %616 : vector<16xf32> to vector<16x1xf32>
    %618 = vector.broadcast %617 : vector<16x1xf32> to vector<16x16xf32>
    %619 = arith.subf %615, %618 : vector<16x16xf32>
    %620 = math.exp %619 : vector<16x16xf32>
    %cst_250 = arith.constant dense<0.000000e+00> : vector<16xf32>
    %621 = vector.multi_reduction <add>, %620, %cst_250 [1] : vector<16x16xf32> to vector<16xf32>
    %622 = vector.shape_cast %621 : vector<16xf32> to vector<16x1xf32>
    %623 = tpu.reciprocal %622 {approx = true} : vector<16x1xf32> -> vector<16x1xf32>
    %624 = vector.broadcast %623 : vector<16x1xf32> to vector<16x16xf32>
    %625 = arith.mulf %620, %624 : vector<16x16xf32>
    %626 = arith.truncf %625 : vector<16x16xf32> to vector<16x16xbf16>
    %627 = vector.broadcast %14 : vector<1x128xf32> to vector<16x128xf32>
    %628 = arith.mulf %589, %627 : vector<16x128xf32>
    %629 = arith.truncf %628 : vector<16x128xf32> to vector<16x128xbf16>
    %cst_251 = arith.constant dense<0.000000e+00> : vector<16x128xf32>
    %630 = tpu.matmul %626, %629, %cst_251 {dimension_numbers = #tpu.dot_dimension_numbers<[1], [0], [0], [1], [0, 0, 1, 1], [], []>} : vector<16x16xbf16>, vector<16x128xbf16>, vector<16x128xf32> -> vector<16x128xf32>
    %631 = arith.addf %611, %630 : vector<16x128xf32>
    %632 = vector.broadcast %21 : vector<1x128xf32> to vector<16x128xf32>
    %633 = arith.mulf %579, %632 : vector<16x128xf32>
    %634 = arith.truncf %633 : vector<16x128xf32> to vector<16x128xbf16>
    %cst_252 = arith.constant dense<0.000000e+00> : vector<16x16xf32>
    %635 = tpu.matmul %634, %590, %cst_252 {dimension_numbers = #tpu.dot_dimension_numbers<[1], [1], [0], [0], [0, 0, 1, 0], [], []>} : vector<16x128xbf16>, vector<16x128xbf16>, vector<16x16xf32> -> vector<16x16xf32>
    %cst_253 = arith.constant dense<0xFF800000> : vector<16xf32>
    %636 = vector.multi_reduction <maximumf>, %635, %cst_253 [1] : vector<16x16xf32> to vector<16xf32>
    %637 = vector.shape_cast %636 : vector<16xf32> to vector<16x1xf32>
    %638 = vector.broadcast %637 : vector<16x1xf32> to vector<16x16xf32>
    %639 = arith.subf %635, %638 : vector<16x16xf32>
    %640 = math.exp %639 : vector<16x16xf32>
    %cst_254 = arith.constant dense<0.000000e+00> : vector<16xf32>
    %641 = vector.multi_reduction <add>, %640, %cst_254 [1] : vector<16x16xf32> to vector<16xf32>
    %642 = vector.shape_cast %641 : vector<16xf32> to vector<16x1xf32>
    %643 = tpu.reciprocal %642 {approx = true} : vector<16x1xf32> -> vector<16x1xf32>
    %644 = vector.broadcast %643 : vector<16x1xf32> to vector<16x16xf32>
    %645 = arith.mulf %640, %644 : vector<16x16xf32>
    %646 = arith.truncf %645 : vector<16x16xf32> to vector<16x16xbf16>
    %647 = vector.broadcast %21 : vector<1x128xf32> to vector<16x128xf32>
    %648 = arith.mulf %589, %647 : vector<16x128xf32>
    %649 = arith.truncf %648 : vector<16x128xf32> to vector<16x128xbf16>
    %cst_255 = arith.constant dense<0.000000e+00> : vector<16x128xf32>
    %650 = tpu.matmul %646, %649, %cst_255 {dimension_numbers = #tpu.dot_dimension_numbers<[1], [0], [0], [1], [0, 0, 1, 1], [], []>} : vector<16x16xbf16>, vector<16x128xbf16>, vector<16x128xf32> -> vector<16x128xf32>
    %651 = arith.addf %631, %650 : vector<16x128xf32>
    %652 = vector.broadcast %28 : vector<1x128xf32> to vector<16x128xf32>
    %653 = arith.mulf %579, %652 : vector<16x128xf32>
    %654 = arith.truncf %653 : vector<16x128xf32> to vector<16x128xbf16>
    %cst_256 = arith.constant dense<0.000000e+00> : vector<16x16xf32>
    %655 = tpu.matmul %654, %590, %cst_256 {dimension_numbers = #tpu.dot_dimension_numbers<[1], [1], [0], [0], [0, 0, 1, 0], [], []>} : vector<16x128xbf16>, vector<16x128xbf16>, vector<16x16xf32> -> vector<16x16xf32>
    %cst_257 = arith.constant dense<0xFF800000> : vector<16xf32>
    %656 = vector.multi_reduction <maximumf>, %655, %cst_257 [1] : vector<16x16xf32> to vector<16xf32>
    %657 = vector.shape_cast %656 : vector<16xf32> to vector<16x1xf32>
    %658 = vector.broadcast %657 : vector<16x1xf32> to vector<16x16xf32>
    %659 = arith.subf %655, %658 : vector<16x16xf32>
    %660 = math.exp %659 : vector<16x16xf32>
    %cst_258 = arith.constant dense<0.000000e+00> : vector<16xf32>
    %661 = vector.multi_reduction <add>, %660, %cst_258 [1] : vector<16x16xf32> to vector<16xf32>
    %662 = vector.shape_cast %661 : vector<16xf32> to vector<16x1xf32>
    %663 = tpu.reciprocal %662 {approx = true} : vector<16x1xf32> -> vector<16x1xf32>
    %664 = vector.broadcast %663 : vector<16x1xf32> to vector<16x16xf32>
    %665 = arith.mulf %660, %664 : vector<16x16xf32>
    %666 = arith.truncf %665 : vector<16x16xf32> to vector<16x16xbf16>
    %667 = vector.broadcast %28 : vector<1x128xf32> to vector<16x128xf32>
    %668 = arith.mulf %589, %667 : vector<16x128xf32>
    %669 = arith.truncf %668 : vector<16x128xf32> to vector<16x128xbf16>
    %cst_259 = arith.constant dense<0.000000e+00> : vector<16x128xf32>
    %670 = tpu.matmul %666, %669, %cst_259 {dimension_numbers = #tpu.dot_dimension_numbers<[1], [0], [0], [1], [0, 0, 1, 1], [], []>} : vector<16x16xbf16>, vector<16x128xbf16>, vector<16x128xf32> -> vector<16x128xf32>
    %671 = arith.addf %651, %670 : vector<16x128xf32>
    %672 = arith.truncf %671 : vector<16x128xf32> to vector<16x128xbf16>
    %c0_260 = arith.constant 0 : index
    %c0_261 = arith.constant 0 : index
    %c896 = arith.constant 896 : index
    %673 = vector.load %arg8[%c0_260, %c0_261, %c896] : memref<2x128x1280xbf16, #tpu.memory_space<vmem>>, vector<1x128x128xbf16>
    %674 = vector.shape_cast %673 : vector<1x128x128xbf16> to vector<128x128xbf16>
    %cst_262 = arith.constant dense<0.000000e+00> : vector<16x128xf32>
    %675 = tpu.matmul %672, %674, %cst_262 {dimension_numbers = #tpu.dot_dimension_numbers<[1], [0], [0], [1], [0, 0, 1, 1], [], []>} : vector<16x128xbf16>, vector<128x128xbf16>, vector<16x128xf32> -> vector<16x128xf32>
    %676 = vector.broadcast %434 : vector<1x128xf32> to vector<16x128xf32>
    %677 = arith.addf %675, %676 : vector<16x128xf32>
    %678 = arith.addf %572, %677 : vector<16x128xf32>
    %cst_263 = arith.constant dense<0.000000e+00> : vector<16xf32>
    %679 = vector.multi_reduction <add>, %678, %cst_263 [1] : vector<16x128xf32> to vector<16xf32>
    %680 = vector.shape_cast %679 : vector<16xf32> to vector<16x1xf32>
    %cst_264 = arith.constant 1.562500e-02 : f32
    %681 = vector.broadcast %cst_264 : f32 to vector<16x1xf32>
    %682 = arith.mulf %680, %681 : vector<16x1xf32>
    %683 = vector.broadcast %682 : vector<16x1xf32> to vector<16x128xf32>
    %684 = arith.subf %678, %683 : vector<16x128xf32>
    %685 = arith.mulf %684, %684 : vector<16x128xf32>
    %686 = vector.broadcast %32 : vector<1x128xf32> to vector<16x128xf32>
    %687 = arith.mulf %685, %686 : vector<16x128xf32>
    %cst_265 = arith.constant dense<0.000000e+00> : vector<16xf32>
    %688 = vector.multi_reduction <add>, %687, %cst_265 [1] : vector<16x128xf32> to vector<16xf32>
    %689 = vector.shape_cast %688 : vector<16xf32> to vector<16x1xf32>
    %cst_266 = arith.constant 1.562500e-02 : f32
    %690 = vector.broadcast %cst_266 : f32 to vector<16x1xf32>
    %691 = arith.mulf %689, %690 : vector<16x1xf32>
    %cst_267 = arith.constant 9.99999974E-6 : f32
    %692 = vector.broadcast %cst_267 : f32 to vector<16x1xf32>
    %693 = arith.addf %691, %692 : vector<16x1xf32>
    %694 = math.rsqrt %693 : vector<16x1xf32>
    %695 = vector.broadcast %694 : vector<16x1xf32> to vector<16x128xf32>
    %696 = arith.mulf %684, %695 : vector<16x128xf32>
    %697 = vector.broadcast %436 : vector<1x128xf32> to vector<16x128xf32>
    %698 = arith.mulf %696, %697 : vector<16x128xf32>
    %699 = vector.broadcast %438 : vector<1x128xf32> to vector<16x128xf32>
    %700 = arith.addf %698, %699 : vector<16x128xf32>
    %701 = arith.truncf %700 : vector<16x128xf32> to vector<16x128xbf16>
    %c0_268 = arith.constant 0 : index
    %c0_269 = arith.constant 0 : index
    %c1024 = arith.constant 1024 : index
    %702 = vector.load %arg8[%c0_268, %c0_269, %c1024] : memref<2x128x1280xbf16, #tpu.memory_space<vmem>>, vector<1x128x128xbf16>
    %703 = vector.shape_cast %702 : vector<1x128x128xbf16> to vector<128x128xbf16>
    %cst_270 = arith.constant dense<0.000000e+00> : vector<16x128xf32>
    %704 = tpu.matmul %701, %703, %cst_270 {dimension_numbers = #tpu.dot_dimension_numbers<[1], [0], [0], [1], [0, 0, 1, 1], [], []>} : vector<16x128xbf16>, vector<128x128xbf16>, vector<16x128xf32> -> vector<16x128xf32>
    %705 = vector.broadcast %440 : vector<1x128xf32> to vector<16x128xf32>
    %706 = arith.addf %704, %705 : vector<16x128xf32>
    %cst_271 = arith.constant 0.000000e+00 : f32
    %707 = vector.broadcast %cst_271 : f32 to vector<16x128xf32>
    %708 = arith.maximumf %706, %707 : vector<16x128xf32>
    %709 = arith.truncf %708 : vector<16x128xf32> to vector<16x128xbf16>
    %c0_272 = arith.constant 0 : index
    %c0_273 = arith.constant 0 : index
    %c1152 = arith.constant 1152 : index
    %710 = vector.load %arg8[%c0_272, %c0_273, %c1152] : memref<2x128x1280xbf16, #tpu.memory_space<vmem>>, vector<1x128x128xbf16>
    %711 = vector.shape_cast %710 : vector<1x128x128xbf16> to vector<128x128xbf16>
    %cst_274 = arith.constant dense<0.000000e+00> : vector<16x128xf32>
    %712 = tpu.matmul %709, %711, %cst_274 {dimension_numbers = #tpu.dot_dimension_numbers<[1], [0], [0], [1], [0, 0, 1, 1], [], []>} : vector<16x128xbf16>, vector<128x128xbf16>, vector<16x128xf32> -> vector<16x128xf32>
    %713 = vector.broadcast %442 : vector<1x128xf32> to vector<16x128xf32>
    %714 = arith.addf %712, %713 : vector<16x128xf32>
    %715 = arith.addf %700, %714 : vector<16x128xf32>
    %cst_275 = arith.constant dense<0.000000e+00> : vector<16xf32>
    %716 = vector.multi_reduction <add>, %715, %cst_275 [1] : vector<16x128xf32> to vector<16xf32>
    %717 = vector.shape_cast %716 : vector<16xf32> to vector<16x1xf32>
    %cst_276 = arith.constant 1.562500e-02 : f32
    %718 = vector.broadcast %cst_276 : f32 to vector<16x1xf32>
    %719 = arith.mulf %717, %718 : vector<16x1xf32>
    %720 = vector.broadcast %719 : vector<16x1xf32> to vector<16x128xf32>
    %721 = arith.subf %715, %720 : vector<16x128xf32>
    %722 = arith.mulf %721, %721 : vector<16x128xf32>
    %723 = vector.broadcast %32 : vector<1x128xf32> to vector<16x128xf32>
    %724 = arith.mulf %722, %723 : vector<16x128xf32>
    %cst_277 = arith.constant dense<0.000000e+00> : vector<16xf32>
    %725 = vector.multi_reduction <add>, %724, %cst_277 [1] : vector<16x128xf32> to vector<16xf32>
    %726 = vector.shape_cast %725 : vector<16xf32> to vector<16x1xf32>
    %cst_278 = arith.constant 1.562500e-02 : f32
    %727 = vector.broadcast %cst_278 : f32 to vector<16x1xf32>
    %728 = arith.mulf %726, %727 : vector<16x1xf32>
    %cst_279 = arith.constant 9.99999974E-6 : f32
    %729 = vector.broadcast %cst_279 : f32 to vector<16x1xf32>
    %730 = arith.addf %728, %729 : vector<16x1xf32>
    %731 = math.rsqrt %730 : vector<16x1xf32>
    %732 = vector.broadcast %731 : vector<16x1xf32> to vector<16x128xf32>
    %733 = arith.mulf %721, %732 : vector<16x128xf32>
    %734 = vector.broadcast %444 : vector<1x128xf32> to vector<16x128xf32>
    %735 = arith.mulf %733, %734 : vector<16x128xf32>
    %736 = vector.broadcast %446 : vector<1x128xf32> to vector<16x128xf32>
    %737 = arith.addf %735, %736 : vector<16x128xf32>
    %c1_280 = arith.constant 1 : index
    %c0_281 = arith.constant 0 : index
    %c0_282 = arith.constant 0 : index
    %738 = vector.load %arg9[%c1_280, %c0_281, %c0_282] : memref<2x15x256xf32, #tpu.memory_space<vmem>>, vector<1x1x256xf32>
    %739 = vector.shape_cast %738 : vector<1x1x256xf32> to vector<1x256xf32>
    %c1_283 = arith.constant 1 : index
    %c1_284 = arith.constant 1 : index
    %c0_285 = arith.constant 0 : index
    %740 = vector.load %arg9[%c1_283, %c1_284, %c0_285] : memref<2x15x256xf32, #tpu.memory_space<vmem>>, vector<1x1x128xf32>
    %741 = vector.shape_cast %740 : vector<1x1x128xf32> to vector<1x128xf32>
    %c1_286 = arith.constant 1 : index
    %c2_287 = arith.constant 2 : index
    %c0_288 = arith.constant 0 : index
    %742 = vector.load %arg9[%c1_286, %c2_287, %c0_288] : memref<2x15x256xf32, #tpu.memory_space<vmem>>, vector<1x1x128xf32>
    %743 = vector.shape_cast %742 : vector<1x1x128xf32> to vector<1x128xf32>
    %c1_289 = arith.constant 1 : index
    %c3_290 = arith.constant 3 : index
    %c0_291 = arith.constant 0 : index
    %744 = vector.load %arg9[%c1_289, %c3_290, %c0_291] : memref<2x15x256xf32, #tpu.memory_space<vmem>>, vector<1x1x128xf32>
    %745 = vector.shape_cast %744 : vector<1x1x128xf32> to vector<1x128xf32>
    %c1_292 = arith.constant 1 : index
    %c4_293 = arith.constant 4 : index
    %c0_294 = arith.constant 0 : index
    %746 = vector.load %arg9[%c1_292, %c4_293, %c0_294] : memref<2x15x256xf32, #tpu.memory_space<vmem>>, vector<1x1x128xf32>
    %747 = vector.shape_cast %746 : vector<1x1x128xf32> to vector<1x128xf32>
    %c1_295 = arith.constant 1 : index
    %c5_296 = arith.constant 5 : index
    %c0_297 = arith.constant 0 : index
    %748 = vector.load %arg9[%c1_295, %c5_296, %c0_297] : memref<2x15x256xf32, #tpu.memory_space<vmem>>, vector<1x1x128xf32>
    %749 = vector.shape_cast %748 : vector<1x1x128xf32> to vector<1x128xf32>
    %c1_298 = arith.constant 1 : index
    %c6_299 = arith.constant 6 : index
    %c0_300 = arith.constant 0 : index
    %750 = vector.load %arg9[%c1_298, %c6_299, %c0_300] : memref<2x15x256xf32, #tpu.memory_space<vmem>>, vector<1x1x128xf32>
    %751 = vector.shape_cast %750 : vector<1x1x128xf32> to vector<1x128xf32>
    %c1_301 = arith.constant 1 : index
    %c7_302 = arith.constant 7 : index
    %c0_303 = arith.constant 0 : index
    %752 = vector.load %arg9[%c1_301, %c7_302, %c0_303] : memref<2x15x256xf32, #tpu.memory_space<vmem>>, vector<1x1x128xf32>
    %753 = vector.shape_cast %752 : vector<1x1x128xf32> to vector<1x128xf32>
    %c1_304 = arith.constant 1 : index
    %c8_305 = arith.constant 8 : index
    %c0_306 = arith.constant 0 : index
    %754 = vector.load %arg9[%c1_304, %c8_305, %c0_306] : memref<2x15x256xf32, #tpu.memory_space<vmem>>, vector<1x1x128xf32>
    %755 = vector.shape_cast %754 : vector<1x1x128xf32> to vector<1x128xf32>
    %c1_307 = arith.constant 1 : index
    %c9_308 = arith.constant 9 : index
    %c0_309 = arith.constant 0 : index
    %756 = vector.load %arg9[%c1_307, %c9_308, %c0_309] : memref<2x15x256xf32, #tpu.memory_space<vmem>>, vector<1x1x128xf32>
    %757 = vector.shape_cast %756 : vector<1x1x128xf32> to vector<1x128xf32>
    %c1_310 = arith.constant 1 : index
    %c10_311 = arith.constant 10 : index
    %c0_312 = arith.constant 0 : index
    %758 = vector.load %arg9[%c1_310, %c10_311, %c0_312] : memref<2x15x256xf32, #tpu.memory_space<vmem>>, vector<1x1x128xf32>
    %759 = vector.shape_cast %758 : vector<1x1x128xf32> to vector<1x128xf32>
    %c1_313 = arith.constant 1 : index
    %c11_314 = arith.constant 11 : index
    %c0_315 = arith.constant 0 : index
    %760 = vector.load %arg9[%c1_313, %c11_314, %c0_315] : memref<2x15x256xf32, #tpu.memory_space<vmem>>, vector<1x1x128xf32>
    %761 = vector.shape_cast %760 : vector<1x1x128xf32> to vector<1x128xf32>
    %c1_316 = arith.constant 1 : index
    %c12_317 = arith.constant 12 : index
    %c0_318 = arith.constant 0 : index
    %762 = vector.load %arg9[%c1_316, %c12_317, %c0_318] : memref<2x15x256xf32, #tpu.memory_space<vmem>>, vector<1x1x128xf32>
    %763 = vector.shape_cast %762 : vector<1x1x128xf32> to vector<1x128xf32>
    %c1_319 = arith.constant 1 : index
    %c13_320 = arith.constant 13 : index
    %c0_321 = arith.constant 0 : index
    %764 = vector.load %arg9[%c1_319, %c13_320, %c0_321] : memref<2x15x256xf32, #tpu.memory_space<vmem>>, vector<1x1x128xf32>
    %765 = vector.shape_cast %764 : vector<1x1x128xf32> to vector<1x128xf32>
    %c1_322 = arith.constant 1 : index
    %c14_323 = arith.constant 14 : index
    %c0_324 = arith.constant 0 : index
    %766 = vector.load %arg9[%c1_322, %c14_323, %c0_324] : memref<2x15x256xf32, #tpu.memory_space<vmem>>, vector<1x1x128xf32>
    %767 = vector.shape_cast %766 : vector<1x1x128xf32> to vector<1x128xf32>
    %768 = arith.addf %737, %415 : vector<16x128xf32>
    %769 = arith.truncf %768 : vector<16x128xf32> to vector<16x128xbf16>
    %770 = arith.truncf %737 : vector<16x128xf32> to vector<16x128xbf16>
    %c1_325 = arith.constant 1 : index
    %c0_326 = arith.constant 0 : index
    %c0_327 = arith.constant 0 : index
    %771 = vector.load %arg8[%c1_325, %c0_326, %c0_327] : memref<2x128x1280xbf16, #tpu.memory_space<vmem>>, vector<1x128x256xbf16>
    %772 = vector.shape_cast %771 : vector<1x128x256xbf16> to vector<128x256xbf16>
    %cst_328 = arith.constant dense<0.000000e+00> : vector<16x256xf32>
    %773 = tpu.matmul %769, %772, %cst_328 {dimension_numbers = #tpu.dot_dimension_numbers<[1], [0], [0], [1], [0, 0, 1, 1], [], []>} : vector<16x128xbf16>, vector<128x256xbf16>, vector<16x256xf32> -> vector<16x256xf32>
    %774 = vector.broadcast %739 : vector<1x256xf32> to vector<16x256xf32>
    %775 = arith.addf %773, %774 : vector<16x256xf32>
    %c1_329 = arith.constant 1 : index
    %c0_330 = arith.constant 0 : index
    %c256_331 = arith.constant 256 : index
    %776 = vector.load %arg8[%c1_329, %c0_330, %c256_331] : memref<2x128x1280xbf16, #tpu.memory_space<vmem>>, vector<1x128x128xbf16>
    %777 = vector.shape_cast %776 : vector<1x128x128xbf16> to vector<128x128xbf16>
    %cst_332 = arith.constant dense<0.000000e+00> : vector<16x128xf32>
    %778 = tpu.matmul %770, %777, %cst_332 {dimension_numbers = #tpu.dot_dimension_numbers<[1], [0], [0], [1], [0, 0, 1, 1], [], []>} : vector<16x128xbf16>, vector<128x128xbf16>, vector<16x128xf32> -> vector<16x128xf32>
    %779 = vector.broadcast %741 : vector<1x128xf32> to vector<16x128xf32>
    %780 = arith.addf %778, %779 : vector<16x128xf32>
    %781 = vector.extract_strided_slice %775 {offsets = [0, 0], sizes = [16, 128], strides = [1, 1]} : vector<16x256xf32> to vector<16x128xf32>
    %782 = vector.extract_strided_slice %775 {offsets = [0, 128], sizes = [16, 128], strides = [1, 1]} : vector<16x256xf32> to vector<16x128xf32>
    %783 = arith.truncf %782 : vector<16x128xf32> to vector<16x128xbf16>
    %cst_333 = arith.constant 0.000000e+00 : f32
    %784 = vector.broadcast %cst_333 : f32 to vector<16x128xf32>
    %785 = vector.broadcast %7 : vector<1x128xf32> to vector<16x128xf32>
    %786 = arith.mulf %781, %785 : vector<16x128xf32>
    %787 = arith.truncf %786 : vector<16x128xf32> to vector<16x128xbf16>
    %cst_334 = arith.constant dense<0.000000e+00> : vector<16x16xf32>
    %788 = tpu.matmul %787, %783, %cst_334 {dimension_numbers = #tpu.dot_dimension_numbers<[1], [1], [0], [0], [0, 0, 1, 0], [], []>} : vector<16x128xbf16>, vector<16x128xbf16>, vector<16x16xf32> -> vector<16x16xf32>
    %cst_335 = arith.constant dense<0xFF800000> : vector<16xf32>
    %789 = vector.multi_reduction <maximumf>, %788, %cst_335 [1] : vector<16x16xf32> to vector<16xf32>
    %790 = vector.shape_cast %789 : vector<16xf32> to vector<16x1xf32>
    %791 = vector.broadcast %790 : vector<16x1xf32> to vector<16x16xf32>
    %792 = arith.subf %788, %791 : vector<16x16xf32>
    %793 = math.exp %792 : vector<16x16xf32>
    %cst_336 = arith.constant dense<0.000000e+00> : vector<16xf32>
    %794 = vector.multi_reduction <add>, %793, %cst_336 [1] : vector<16x16xf32> to vector<16xf32>
    %795 = vector.shape_cast %794 : vector<16xf32> to vector<16x1xf32>
    %796 = tpu.reciprocal %795 {approx = true} : vector<16x1xf32> -> vector<16x1xf32>
    %797 = vector.broadcast %796 : vector<16x1xf32> to vector<16x16xf32>
    %798 = arith.mulf %793, %797 : vector<16x16xf32>
    %799 = arith.truncf %798 : vector<16x16xf32> to vector<16x16xbf16>
    %800 = vector.broadcast %7 : vector<1x128xf32> to vector<16x128xf32>
    %801 = arith.mulf %780, %800 : vector<16x128xf32>
    %802 = arith.truncf %801 : vector<16x128xf32> to vector<16x128xbf16>
    %cst_337 = arith.constant dense<0.000000e+00> : vector<16x128xf32>
    %803 = tpu.matmul %799, %802, %cst_337 {dimension_numbers = #tpu.dot_dimension_numbers<[1], [0], [0], [1], [0, 0, 1, 1], [], []>} : vector<16x16xbf16>, vector<16x128xbf16>, vector<16x128xf32> -> vector<16x128xf32>
    %804 = arith.addf %784, %803 : vector<16x128xf32>
    %805 = vector.broadcast %14 : vector<1x128xf32> to vector<16x128xf32>
    %806 = arith.mulf %781, %805 : vector<16x128xf32>
    %807 = arith.truncf %806 : vector<16x128xf32> to vector<16x128xbf16>
    %cst_338 = arith.constant dense<0.000000e+00> : vector<16x16xf32>
    %808 = tpu.matmul %807, %783, %cst_338 {dimension_numbers = #tpu.dot_dimension_numbers<[1], [1], [0], [0], [0, 0, 1, 0], [], []>} : vector<16x128xbf16>, vector<16x128xbf16>, vector<16x16xf32> -> vector<16x16xf32>
    %cst_339 = arith.constant dense<0xFF800000> : vector<16xf32>
    %809 = vector.multi_reduction <maximumf>, %808, %cst_339 [1] : vector<16x16xf32> to vector<16xf32>
    %810 = vector.shape_cast %809 : vector<16xf32> to vector<16x1xf32>
    %811 = vector.broadcast %810 : vector<16x1xf32> to vector<16x16xf32>
    %812 = arith.subf %808, %811 : vector<16x16xf32>
    %813 = math.exp %812 : vector<16x16xf32>
    %cst_340 = arith.constant dense<0.000000e+00> : vector<16xf32>
    %814 = vector.multi_reduction <add>, %813, %cst_340 [1] : vector<16x16xf32> to vector<16xf32>
    %815 = vector.shape_cast %814 : vector<16xf32> to vector<16x1xf32>
    %816 = tpu.reciprocal %815 {approx = true} : vector<16x1xf32> -> vector<16x1xf32>
    %817 = vector.broadcast %816 : vector<16x1xf32> to vector<16x16xf32>
    %818 = arith.mulf %813, %817 : vector<16x16xf32>
    %819 = arith.truncf %818 : vector<16x16xf32> to vector<16x16xbf16>
    %820 = vector.broadcast %14 : vector<1x128xf32> to vector<16x128xf32>
    %821 = arith.mulf %780, %820 : vector<16x128xf32>
    %822 = arith.truncf %821 : vector<16x128xf32> to vector<16x128xbf16>
    %cst_341 = arith.constant dense<0.000000e+00> : vector<16x128xf32>
    %823 = tpu.matmul %819, %822, %cst_341 {dimension_numbers = #tpu.dot_dimension_numbers<[1], [0], [0], [1], [0, 0, 1, 1], [], []>} : vector<16x16xbf16>, vector<16x128xbf16>, vector<16x128xf32> -> vector<16x128xf32>
    %824 = arith.addf %804, %823 : vector<16x128xf32>
    %825 = vector.broadcast %21 : vector<1x128xf32> to vector<16x128xf32>
    %826 = arith.mulf %781, %825 : vector<16x128xf32>
    %827 = arith.truncf %826 : vector<16x128xf32> to vector<16x128xbf16>
    %cst_342 = arith.constant dense<0.000000e+00> : vector<16x16xf32>
    %828 = tpu.matmul %827, %783, %cst_342 {dimension_numbers = #tpu.dot_dimension_numbers<[1], [1], [0], [0], [0, 0, 1, 0], [], []>} : vector<16x128xbf16>, vector<16x128xbf16>, vector<16x16xf32> -> vector<16x16xf32>
    %cst_343 = arith.constant dense<0xFF800000> : vector<16xf32>
    %829 = vector.multi_reduction <maximumf>, %828, %cst_343 [1] : vector<16x16xf32> to vector<16xf32>
    %830 = vector.shape_cast %829 : vector<16xf32> to vector<16x1xf32>
    %831 = vector.broadcast %830 : vector<16x1xf32> to vector<16x16xf32>
    %832 = arith.subf %828, %831 : vector<16x16xf32>
    %833 = math.exp %832 : vector<16x16xf32>
    %cst_344 = arith.constant dense<0.000000e+00> : vector<16xf32>
    %834 = vector.multi_reduction <add>, %833, %cst_344 [1] : vector<16x16xf32> to vector<16xf32>
    %835 = vector.shape_cast %834 : vector<16xf32> to vector<16x1xf32>
    %836 = tpu.reciprocal %835 {approx = true} : vector<16x1xf32> -> vector<16x1xf32>
    %837 = vector.broadcast %836 : vector<16x1xf32> to vector<16x16xf32>
    %838 = arith.mulf %833, %837 : vector<16x16xf32>
    %839 = arith.truncf %838 : vector<16x16xf32> to vector<16x16xbf16>
    %840 = vector.broadcast %21 : vector<1x128xf32> to vector<16x128xf32>
    %841 = arith.mulf %780, %840 : vector<16x128xf32>
    %842 = arith.truncf %841 : vector<16x128xf32> to vector<16x128xbf16>
    %cst_345 = arith.constant dense<0.000000e+00> : vector<16x128xf32>
    %843 = tpu.matmul %839, %842, %cst_345 {dimension_numbers = #tpu.dot_dimension_numbers<[1], [0], [0], [1], [0, 0, 1, 1], [], []>} : vector<16x16xbf16>, vector<16x128xbf16>, vector<16x128xf32> -> vector<16x128xf32>
    %844 = arith.addf %824, %843 : vector<16x128xf32>
    %845 = vector.broadcast %28 : vector<1x128xf32> to vector<16x128xf32>
    %846 = arith.mulf %781, %845 : vector<16x128xf32>
    %847 = arith.truncf %846 : vector<16x128xf32> to vector<16x128xbf16>
    %cst_346 = arith.constant dense<0.000000e+00> : vector<16x16xf32>
    %848 = tpu.matmul %847, %783, %cst_346 {dimension_numbers = #tpu.dot_dimension_numbers<[1], [1], [0], [0], [0, 0, 1, 0], [], []>} : vector<16x128xbf16>, vector<16x128xbf16>, vector<16x16xf32> -> vector<16x16xf32>
    %cst_347 = arith.constant dense<0xFF800000> : vector<16xf32>
    %849 = vector.multi_reduction <maximumf>, %848, %cst_347 [1] : vector<16x16xf32> to vector<16xf32>
    %850 = vector.shape_cast %849 : vector<16xf32> to vector<16x1xf32>
    %851 = vector.broadcast %850 : vector<16x1xf32> to vector<16x16xf32>
    %852 = arith.subf %848, %851 : vector<16x16xf32>
    %853 = math.exp %852 : vector<16x16xf32>
    %cst_348 = arith.constant dense<0.000000e+00> : vector<16xf32>
    %854 = vector.multi_reduction <add>, %853, %cst_348 [1] : vector<16x16xf32> to vector<16xf32>
    %855 = vector.shape_cast %854 : vector<16xf32> to vector<16x1xf32>
    %856 = tpu.reciprocal %855 {approx = true} : vector<16x1xf32> -> vector<16x1xf32>
    %857 = vector.broadcast %856 : vector<16x1xf32> to vector<16x16xf32>
    %858 = arith.mulf %853, %857 : vector<16x16xf32>
    %859 = arith.truncf %858 : vector<16x16xf32> to vector<16x16xbf16>
    %860 = vector.broadcast %28 : vector<1x128xf32> to vector<16x128xf32>
    %861 = arith.mulf %780, %860 : vector<16x128xf32>
    %862 = arith.truncf %861 : vector<16x128xf32> to vector<16x128xbf16>
    %cst_349 = arith.constant dense<0.000000e+00> : vector<16x128xf32>
    %863 = tpu.matmul %859, %862, %cst_349 {dimension_numbers = #tpu.dot_dimension_numbers<[1], [0], [0], [1], [0, 0, 1, 1], [], []>} : vector<16x16xbf16>, vector<16x128xbf16>, vector<16x128xf32> -> vector<16x128xf32>
    %864 = arith.addf %844, %863 : vector<16x128xf32>
    %865 = arith.truncf %864 : vector<16x128xf32> to vector<16x128xbf16>
    %c1_350 = arith.constant 1 : index
    %c0_351 = arith.constant 0 : index
    %c384_352 = arith.constant 384 : index
    %866 = vector.load %arg8[%c1_350, %c0_351, %c384_352] : memref<2x128x1280xbf16, #tpu.memory_space<vmem>>, vector<1x128x128xbf16>
    %867 = vector.shape_cast %866 : vector<1x128x128xbf16> to vector<128x128xbf16>
    %cst_353 = arith.constant dense<0.000000e+00> : vector<16x128xf32>
    %868 = tpu.matmul %865, %867, %cst_353 {dimension_numbers = #tpu.dot_dimension_numbers<[1], [0], [0], [1], [0, 0, 1, 1], [], []>} : vector<16x128xbf16>, vector<128x128xbf16>, vector<16x128xf32> -> vector<16x128xf32>
    %869 = vector.broadcast %743 : vector<1x128xf32> to vector<16x128xf32>
    %870 = arith.addf %868, %869 : vector<16x128xf32>
    %871 = arith.addf %737, %870 : vector<16x128xf32>
    %cst_354 = arith.constant dense<0.000000e+00> : vector<16xf32>
    %872 = vector.multi_reduction <add>, %871, %cst_354 [1] : vector<16x128xf32> to vector<16xf32>
    %873 = vector.shape_cast %872 : vector<16xf32> to vector<16x1xf32>
    %cst_355 = arith.constant 1.562500e-02 : f32
    %874 = vector.broadcast %cst_355 : f32 to vector<16x1xf32>
    %875 = arith.mulf %873, %874 : vector<16x1xf32>
    %876 = vector.broadcast %875 : vector<16x1xf32> to vector<16x128xf32>
    %877 = arith.subf %871, %876 : vector<16x128xf32>
    %878 = arith.mulf %877, %877 : vector<16x128xf32>
    %879 = vector.broadcast %32 : vector<1x128xf32> to vector<16x128xf32>
    %880 = arith.mulf %878, %879 : vector<16x128xf32>
    %cst_356 = arith.constant dense<0.000000e+00> : vector<16xf32>
    %881 = vector.multi_reduction <add>, %880, %cst_356 [1] : vector<16x128xf32> to vector<16xf32>
    %882 = vector.shape_cast %881 : vector<16xf32> to vector<16x1xf32>
    %cst_357 = arith.constant 1.562500e-02 : f32
    %883 = vector.broadcast %cst_357 : f32 to vector<16x1xf32>
    %884 = arith.mulf %882, %883 : vector<16x1xf32>
    %cst_358 = arith.constant 9.99999974E-6 : f32
    %885 = vector.broadcast %cst_358 : f32 to vector<16x1xf32>
    %886 = arith.addf %884, %885 : vector<16x1xf32>
    %887 = math.rsqrt %886 : vector<16x1xf32>
    %888 = vector.broadcast %887 : vector<16x1xf32> to vector<16x128xf32>
    %889 = arith.mulf %877, %888 : vector<16x128xf32>
    %890 = vector.broadcast %745 : vector<1x128xf32> to vector<16x128xf32>
    %891 = arith.mulf %889, %890 : vector<16x128xf32>
    %892 = vector.broadcast %747 : vector<1x128xf32> to vector<16x128xf32>
    %893 = arith.addf %891, %892 : vector<16x128xf32>
    %894 = arith.addf %893, %415 : vector<16x128xf32>
    %895 = arith.truncf %894 : vector<16x128xf32> to vector<16x128xbf16>
    %c1_359 = arith.constant 1 : index
    %c0_360 = arith.constant 0 : index
    %c512_361 = arith.constant 512 : index
    %896 = vector.load %arg8[%c1_359, %c0_360, %c512_361] : memref<2x128x1280xbf16, #tpu.memory_space<vmem>>, vector<1x128x128xbf16>
    %897 = vector.shape_cast %896 : vector<1x128x128xbf16> to vector<128x128xbf16>
    %cst_362 = arith.constant dense<0.000000e+00> : vector<16x128xf32>
    %898 = tpu.matmul %895, %897, %cst_362 {dimension_numbers = #tpu.dot_dimension_numbers<[1], [0], [0], [1], [0, 0, 1, 1], [], []>} : vector<16x128xbf16>, vector<128x128xbf16>, vector<16x128xf32> -> vector<16x128xf32>
    %899 = vector.broadcast %749 : vector<1x128xf32> to vector<16x128xf32>
    %900 = arith.addf %898, %899 : vector<16x128xf32>
    %c1_363 = arith.constant 1 : index
    %c0_364 = arith.constant 0 : index
    %c640_365 = arith.constant 640 : index
    %901 = vector.load %arg8[%c1_363, %c0_364, %c640_365] : memref<2x128x1280xbf16, #tpu.memory_space<vmem>>, vector<1x128x128xbf16>
    %902 = vector.shape_cast %901 : vector<1x128x128xbf16> to vector<128x128xbf16>
    %cst_366 = arith.constant dense<0.000000e+00> : vector<16x128xf32>
    %903 = tpu.matmul %414, %902, %cst_366 {dimension_numbers = #tpu.dot_dimension_numbers<[1], [0], [0], [1], [0, 0, 1, 1], [], []>} : vector<16x128xbf16>, vector<128x128xbf16>, vector<16x128xf32> -> vector<16x128xf32>
    %904 = vector.broadcast %751 : vector<1x128xf32> to vector<16x128xf32>
    %905 = arith.addf %903, %904 : vector<16x128xf32>
    %c1_367 = arith.constant 1 : index
    %c0_368 = arith.constant 0 : index
    %c768_369 = arith.constant 768 : index
    %906 = vector.load %arg8[%c1_367, %c0_368, %c768_369] : memref<2x128x1280xbf16, #tpu.memory_space<vmem>>, vector<1x128x128xbf16>
    %907 = vector.shape_cast %906 : vector<1x128x128xbf16> to vector<128x128xbf16>
    %cst_370 = arith.constant dense<0.000000e+00> : vector<16x128xf32>
    %908 = tpu.matmul %412, %907, %cst_370 {dimension_numbers = #tpu.dot_dimension_numbers<[1], [0], [0], [1], [0, 0, 1, 1], [], []>} : vector<16x128xbf16>, vector<128x128xbf16>, vector<16x128xf32> -> vector<16x128xf32>
    %909 = vector.broadcast %753 : vector<1x128xf32> to vector<16x128xf32>
    %910 = arith.addf %908, %909 : vector<16x128xf32>
    %911 = arith.truncf %905 : vector<16x128xf32> to vector<16x128xbf16>
    %cst_371 = arith.constant 0.000000e+00 : f32
    %912 = vector.broadcast %cst_371 : f32 to vector<16x128xf32>
    %913 = vector.broadcast %7 : vector<1x128xf32> to vector<16x128xf32>
    %914 = arith.mulf %900, %913 : vector<16x128xf32>
    %915 = arith.truncf %914 : vector<16x128xf32> to vector<16x128xbf16>
    %cst_372 = arith.constant dense<0.000000e+00> : vector<16x16xf32>
    %916 = tpu.matmul %915, %911, %cst_372 {dimension_numbers = #tpu.dot_dimension_numbers<[1], [1], [0], [0], [0, 0, 1, 0], [], []>} : vector<16x128xbf16>, vector<16x128xbf16>, vector<16x16xf32> -> vector<16x16xf32>
    %cst_373 = arith.constant dense<0xFF800000> : vector<16xf32>
    %917 = vector.multi_reduction <maximumf>, %916, %cst_373 [1] : vector<16x16xf32> to vector<16xf32>
    %918 = vector.shape_cast %917 : vector<16xf32> to vector<16x1xf32>
    %919 = vector.broadcast %918 : vector<16x1xf32> to vector<16x16xf32>
    %920 = arith.subf %916, %919 : vector<16x16xf32>
    %921 = math.exp %920 : vector<16x16xf32>
    %cst_374 = arith.constant dense<0.000000e+00> : vector<16xf32>
    %922 = vector.multi_reduction <add>, %921, %cst_374 [1] : vector<16x16xf32> to vector<16xf32>
    %923 = vector.shape_cast %922 : vector<16xf32> to vector<16x1xf32>
    %924 = tpu.reciprocal %923 {approx = true} : vector<16x1xf32> -> vector<16x1xf32>
    %925 = vector.broadcast %924 : vector<16x1xf32> to vector<16x16xf32>
    %926 = arith.mulf %921, %925 : vector<16x16xf32>
    %927 = arith.truncf %926 : vector<16x16xf32> to vector<16x16xbf16>
    %928 = vector.broadcast %7 : vector<1x128xf32> to vector<16x128xf32>
    %929 = arith.mulf %910, %928 : vector<16x128xf32>
    %930 = arith.truncf %929 : vector<16x128xf32> to vector<16x128xbf16>
    %cst_375 = arith.constant dense<0.000000e+00> : vector<16x128xf32>
    %931 = tpu.matmul %927, %930, %cst_375 {dimension_numbers = #tpu.dot_dimension_numbers<[1], [0], [0], [1], [0, 0, 1, 1], [], []>} : vector<16x16xbf16>, vector<16x128xbf16>, vector<16x128xf32> -> vector<16x128xf32>
    %932 = arith.addf %912, %931 : vector<16x128xf32>
    %933 = vector.broadcast %14 : vector<1x128xf32> to vector<16x128xf32>
    %934 = arith.mulf %900, %933 : vector<16x128xf32>
    %935 = arith.truncf %934 : vector<16x128xf32> to vector<16x128xbf16>
    %cst_376 = arith.constant dense<0.000000e+00> : vector<16x16xf32>
    %936 = tpu.matmul %935, %911, %cst_376 {dimension_numbers = #tpu.dot_dimension_numbers<[1], [1], [0], [0], [0, 0, 1, 0], [], []>} : vector<16x128xbf16>, vector<16x128xbf16>, vector<16x16xf32> -> vector<16x16xf32>
    %cst_377 = arith.constant dense<0xFF800000> : vector<16xf32>
    %937 = vector.multi_reduction <maximumf>, %936, %cst_377 [1] : vector<16x16xf32> to vector<16xf32>
    %938 = vector.shape_cast %937 : vector<16xf32> to vector<16x1xf32>
    %939 = vector.broadcast %938 : vector<16x1xf32> to vector<16x16xf32>
    %940 = arith.subf %936, %939 : vector<16x16xf32>
    %941 = math.exp %940 : vector<16x16xf32>
    %cst_378 = arith.constant dense<0.000000e+00> : vector<16xf32>
    %942 = vector.multi_reduction <add>, %941, %cst_378 [1] : vector<16x16xf32> to vector<16xf32>
    %943 = vector.shape_cast %942 : vector<16xf32> to vector<16x1xf32>
    %944 = tpu.reciprocal %943 {approx = true} : vector<16x1xf32> -> vector<16x1xf32>
    %945 = vector.broadcast %944 : vector<16x1xf32> to vector<16x16xf32>
    %946 = arith.mulf %941, %945 : vector<16x16xf32>
    %947 = arith.truncf %946 : vector<16x16xf32> to vector<16x16xbf16>
    %948 = vector.broadcast %14 : vector<1x128xf32> to vector<16x128xf32>
    %949 = arith.mulf %910, %948 : vector<16x128xf32>
    %950 = arith.truncf %949 : vector<16x128xf32> to vector<16x128xbf16>
    %cst_379 = arith.constant dense<0.000000e+00> : vector<16x128xf32>
    %951 = tpu.matmul %947, %950, %cst_379 {dimension_numbers = #tpu.dot_dimension_numbers<[1], [0], [0], [1], [0, 0, 1, 1], [], []>} : vector<16x16xbf16>, vector<16x128xbf16>, vector<16x128xf32> -> vector<16x128xf32>
    %952 = arith.addf %932, %951 : vector<16x128xf32>
    %953 = vector.broadcast %21 : vector<1x128xf32> to vector<16x128xf32>
    %954 = arith.mulf %900, %953 : vector<16x128xf32>
    %955 = arith.truncf %954 : vector<16x128xf32> to vector<16x128xbf16>
    %cst_380 = arith.constant dense<0.000000e+00> : vector<16x16xf32>
    %956 = tpu.matmul %955, %911, %cst_380 {dimension_numbers = #tpu.dot_dimension_numbers<[1], [1], [0], [0], [0, 0, 1, 0], [], []>} : vector<16x128xbf16>, vector<16x128xbf16>, vector<16x16xf32> -> vector<16x16xf32>
    %cst_381 = arith.constant dense<0xFF800000> : vector<16xf32>
    %957 = vector.multi_reduction <maximumf>, %956, %cst_381 [1] : vector<16x16xf32> to vector<16xf32>
    %958 = vector.shape_cast %957 : vector<16xf32> to vector<16x1xf32>
    %959 = vector.broadcast %958 : vector<16x1xf32> to vector<16x16xf32>
    %960 = arith.subf %956, %959 : vector<16x16xf32>
    %961 = math.exp %960 : vector<16x16xf32>
    %cst_382 = arith.constant dense<0.000000e+00> : vector<16xf32>
    %962 = vector.multi_reduction <add>, %961, %cst_382 [1] : vector<16x16xf32> to vector<16xf32>
    %963 = vector.shape_cast %962 : vector<16xf32> to vector<16x1xf32>
    %964 = tpu.reciprocal %963 {approx = true} : vector<16x1xf32> -> vector<16x1xf32>
    %965 = vector.broadcast %964 : vector<16x1xf32> to vector<16x16xf32>
    %966 = arith.mulf %961, %965 : vector<16x16xf32>
    %967 = arith.truncf %966 : vector<16x16xf32> to vector<16x16xbf16>
    %968 = vector.broadcast %21 : vector<1x128xf32> to vector<16x128xf32>
    %969 = arith.mulf %910, %968 : vector<16x128xf32>
    %970 = arith.truncf %969 : vector<16x128xf32> to vector<16x128xbf16>
    %cst_383 = arith.constant dense<0.000000e+00> : vector<16x128xf32>
    %971 = tpu.matmul %967, %970, %cst_383 {dimension_numbers = #tpu.dot_dimension_numbers<[1], [0], [0], [1], [0, 0, 1, 1], [], []>} : vector<16x16xbf16>, vector<16x128xbf16>, vector<16x128xf32> -> vector<16x128xf32>
    %972 = arith.addf %952, %971 : vector<16x128xf32>
    %973 = vector.broadcast %28 : vector<1x128xf32> to vector<16x128xf32>
    %974 = arith.mulf %900, %973 : vector<16x128xf32>
    %975 = arith.truncf %974 : vector<16x128xf32> to vector<16x128xbf16>
    %cst_384 = arith.constant dense<0.000000e+00> : vector<16x16xf32>
    %976 = tpu.matmul %975, %911, %cst_384 {dimension_numbers = #tpu.dot_dimension_numbers<[1], [1], [0], [0], [0, 0, 1, 0], [], []>} : vector<16x128xbf16>, vector<16x128xbf16>, vector<16x16xf32> -> vector<16x16xf32>
    %cst_385 = arith.constant dense<0xFF800000> : vector<16xf32>
    %977 = vector.multi_reduction <maximumf>, %976, %cst_385 [1] : vector<16x16xf32> to vector<16xf32>
    %978 = vector.shape_cast %977 : vector<16xf32> to vector<16x1xf32>
    %979 = vector.broadcast %978 : vector<16x1xf32> to vector<16x16xf32>
    %980 = arith.subf %976, %979 : vector<16x16xf32>
    %981 = math.exp %980 : vector<16x16xf32>
    %cst_386 = arith.constant dense<0.000000e+00> : vector<16xf32>
    %982 = vector.multi_reduction <add>, %981, %cst_386 [1] : vector<16x16xf32> to vector<16xf32>
    %983 = vector.shape_cast %982 : vector<16xf32> to vector<16x1xf32>
    %984 = tpu.reciprocal %983 {approx = true} : vector<16x1xf32> -> vector<16x1xf32>
    %985 = vector.broadcast %984 : vector<16x1xf32> to vector<16x16xf32>
    %986 = arith.mulf %981, %985 : vector<16x16xf32>
    %987 = arith.truncf %986 : vector<16x16xf32> to vector<16x16xbf16>
    %988 = vector.broadcast %28 : vector<1x128xf32> to vector<16x128xf32>
    %989 = arith.mulf %910, %988 : vector<16x128xf32>
    %990 = arith.truncf %989 : vector<16x128xf32> to vector<16x128xbf16>
    %cst_387 = arith.constant dense<0.000000e+00> : vector<16x128xf32>
    %991 = tpu.matmul %987, %990, %cst_387 {dimension_numbers = #tpu.dot_dimension_numbers<[1], [0], [0], [1], [0, 0, 1, 1], [], []>} : vector<16x16xbf16>, vector<16x128xbf16>, vector<16x128xf32> -> vector<16x128xf32>
    %992 = arith.addf %972, %991 : vector<16x128xf32>
    %993 = arith.truncf %992 : vector<16x128xf32> to vector<16x128xbf16>
    %c1_388 = arith.constant 1 : index
    %c0_389 = arith.constant 0 : index
    %c896_390 = arith.constant 896 : index
    %994 = vector.load %arg8[%c1_388, %c0_389, %c896_390] : memref<2x128x1280xbf16, #tpu.memory_space<vmem>>, vector<1x128x128xbf16>
    %995 = vector.shape_cast %994 : vector<1x128x128xbf16> to vector<128x128xbf16>
    %cst_391 = arith.constant dense<0.000000e+00> : vector<16x128xf32>
    %996 = tpu.matmul %993, %995, %cst_391 {dimension_numbers = #tpu.dot_dimension_numbers<[1], [0], [0], [1], [0, 0, 1, 1], [], []>} : vector<16x128xbf16>, vector<128x128xbf16>, vector<16x128xf32> -> vector<16x128xf32>
    %997 = vector.broadcast %755 : vector<1x128xf32> to vector<16x128xf32>
    %998 = arith.addf %996, %997 : vector<16x128xf32>
    %999 = arith.addf %893, %998 : vector<16x128xf32>
    %cst_392 = arith.constant dense<0.000000e+00> : vector<16xf32>
    %1000 = vector.multi_reduction <add>, %999, %cst_392 [1] : vector<16x128xf32> to vector<16xf32>
    %1001 = vector.shape_cast %1000 : vector<16xf32> to vector<16x1xf32>
    %cst_393 = arith.constant 1.562500e-02 : f32
    %1002 = vector.broadcast %cst_393 : f32 to vector<16x1xf32>
    %1003 = arith.mulf %1001, %1002 : vector<16x1xf32>
    %1004 = vector.broadcast %1003 : vector<16x1xf32> to vector<16x128xf32>
    %1005 = arith.subf %999, %1004 : vector<16x128xf32>
    %1006 = arith.mulf %1005, %1005 : vector<16x128xf32>
    %1007 = vector.broadcast %32 : vector<1x128xf32> to vector<16x128xf32>
    %1008 = arith.mulf %1006, %1007 : vector<16x128xf32>
    %cst_394 = arith.constant dense<0.000000e+00> : vector<16xf32>
    %1009 = vector.multi_reduction <add>, %1008, %cst_394 [1] : vector<16x128xf32> to vector<16xf32>
    %1010 = vector.shape_cast %1009 : vector<16xf32> to vector<16x1xf32>
    %cst_395 = arith.constant 1.562500e-02 : f32
    %1011 = vector.broadcast %cst_395 : f32 to vector<16x1xf32>
    %1012 = arith.mulf %1010, %1011 : vector<16x1xf32>
    %cst_396 = arith.constant 9.99999974E-6 : f32
    %1013 = vector.broadcast %cst_396 : f32 to vector<16x1xf32>
    %1014 = arith.addf %1012, %1013 : vector<16x1xf32>
    %1015 = math.rsqrt %1014 : vector<16x1xf32>
    %1016 = vector.broadcast %1015 : vector<16x1xf32> to vector<16x128xf32>
    %1017 = arith.mulf %1005, %1016 : vector<16x128xf32>
    %1018 = vector.broadcast %757 : vector<1x128xf32> to vector<16x128xf32>
    %1019 = arith.mulf %1017, %1018 : vector<16x128xf32>
    %1020 = vector.broadcast %759 : vector<1x128xf32> to vector<16x128xf32>
    %1021 = arith.addf %1019, %1020 : vector<16x128xf32>
    %1022 = arith.truncf %1021 : vector<16x128xf32> to vector<16x128xbf16>
    %c1_397 = arith.constant 1 : index
    %c0_398 = arith.constant 0 : index
    %c1024_399 = arith.constant 1024 : index
    %1023 = vector.load %arg8[%c1_397, %c0_398, %c1024_399] : memref<2x128x1280xbf16, #tpu.memory_space<vmem>>, vector<1x128x128xbf16>
    %1024 = vector.shape_cast %1023 : vector<1x128x128xbf16> to vector<128x128xbf16>
    %cst_400 = arith.constant dense<0.000000e+00> : vector<16x128xf32>
    %1025 = tpu.matmul %1022, %1024, %cst_400 {dimension_numbers = #tpu.dot_dimension_numbers<[1], [0], [0], [1], [0, 0, 1, 1], [], []>} : vector<16x128xbf16>, vector<128x128xbf16>, vector<16x128xf32> -> vector<16x128xf32>
    %1026 = vector.broadcast %761 : vector<1x128xf32> to vector<16x128xf32>
    %1027 = arith.addf %1025, %1026 : vector<16x128xf32>
    %cst_401 = arith.constant 0.000000e+00 : f32
    %1028 = vector.broadcast %cst_401 : f32 to vector<16x128xf32>
    %1029 = arith.maximumf %1027, %1028 : vector<16x128xf32>
    %1030 = arith.truncf %1029 : vector<16x128xf32> to vector<16x128xbf16>
    %c1_402 = arith.constant 1 : index
    %c0_403 = arith.constant 0 : index
    %c1152_404 = arith.constant 1152 : index
    %1031 = vector.load %arg8[%c1_402, %c0_403, %c1152_404] : memref<2x128x1280xbf16, #tpu.memory_space<vmem>>, vector<1x128x128xbf16>
    %1032 = vector.shape_cast %1031 : vector<1x128x128xbf16> to vector<128x128xbf16>
    %cst_405 = arith.constant dense<0.000000e+00> : vector<16x128xf32>
    %1033 = tpu.matmul %1030, %1032, %cst_405 {dimension_numbers = #tpu.dot_dimension_numbers<[1], [0], [0], [1], [0, 0, 1, 1], [], []>} : vector<16x128xbf16>, vector<128x128xbf16>, vector<16x128xf32> -> vector<16x128xf32>
    %1034 = vector.broadcast %763 : vector<1x128xf32> to vector<16x128xf32>
    %1035 = arith.addf %1033, %1034 : vector<16x128xf32>
    %1036 = arith.addf %1021, %1035 : vector<16x128xf32>
    %cst_406 = arith.constant dense<0.000000e+00> : vector<16xf32>
    %1037 = vector.multi_reduction <add>, %1036, %cst_406 [1] : vector<16x128xf32> to vector<16xf32>
    %1038 = vector.shape_cast %1037 : vector<16xf32> to vector<16x1xf32>
    %cst_407 = arith.constant 1.562500e-02 : f32
    %1039 = vector.broadcast %cst_407 : f32 to vector<16x1xf32>
    %1040 = arith.mulf %1038, %1039 : vector<16x1xf32>
    %1041 = vector.broadcast %1040 : vector<16x1xf32> to vector<16x128xf32>
    %1042 = arith.subf %1036, %1041 : vector<16x128xf32>
    %1043 = arith.mulf %1042, %1042 : vector<16x128xf32>
    %1044 = vector.broadcast %32 : vector<1x128xf32> to vector<16x128xf32>
    %1045 = arith.mulf %1043, %1044 : vector<16x128xf32>
    %cst_408 = arith.constant dense<0.000000e+00> : vector<16xf32>
    %1046 = vector.multi_reduction <add>, %1045, %cst_408 [1] : vector<16x128xf32> to vector<16xf32>
    %1047 = vector.shape_cast %1046 : vector<16xf32> to vector<16x1xf32>
    %cst_409 = arith.constant 1.562500e-02 : f32
    %1048 = vector.broadcast %cst_409 : f32 to vector<16x1xf32>
    %1049 = arith.mulf %1047, %1048 : vector<16x1xf32>
    %cst_410 = arith.constant 9.99999974E-6 : f32
    %1050 = vector.broadcast %cst_410 : f32 to vector<16x1xf32>
    %1051 = arith.addf %1049, %1050 : vector<16x1xf32>
    %1052 = math.rsqrt %1051 : vector<16x1xf32>
    %1053 = vector.broadcast %1052 : vector<16x1xf32> to vector<16x128xf32>
    %1054 = arith.mulf %1042, %1053 : vector<16x128xf32>
    %1055 = vector.broadcast %765 : vector<1x128xf32> to vector<16x128xf32>
    %1056 = arith.mulf %1054, %1055 : vector<16x128xf32>
    %1057 = vector.broadcast %767 : vector<1x128xf32> to vector<16x128xf32>
    %1058 = arith.addf %1056, %1057 : vector<16x128xf32>
    %c2_411 = arith.constant 2 : index
    %c0_412 = arith.constant 0 : index
    %1059 = vector.load %arg10[%c2_411, %c0_412] : memref<8x256xf32, #tpu.memory_space<vmem>>, vector<1x128xf32>
    %c3_413 = arith.constant 3 : index
    %c0_414 = arith.constant 0 : index
    %1060 = vector.load %arg10[%c3_413, %c0_414] : memref<8x256xf32, #tpu.memory_space<vmem>>, vector<1x128xf32>
    %c4_415 = arith.constant 4 : index
    %c0_416 = arith.constant 0 : index
    %1061 = vector.load %arg10[%c4_415, %c0_416] : memref<8x256xf32, #tpu.memory_space<vmem>>, vector<1x128xf32>
    %c5_417 = arith.constant 5 : index
    %c0_418 = arith.constant 0 : index
    %1062 = vector.load %arg10[%c5_417, %c0_418] : memref<8x256xf32, #tpu.memory_space<vmem>>, vector<1x128xf32>
    %c6_419 = arith.constant 6 : index
    %c0_420 = arith.constant 0 : index
    %1063 = vector.load %arg10[%c6_419, %c0_420] : memref<8x256xf32, #tpu.memory_space<vmem>>, vector<1x128xf32>
    %cst_421 = arith.constant dense<0.000000e+00> : vector<16xf32>
    %1064 = vector.multi_reduction <add>, %1058, %cst_421 [1] : vector<16x128xf32> to vector<16xf32>
    %1065 = vector.shape_cast %1064 : vector<16xf32> to vector<16x1xf32>
    %cst_422 = arith.constant 1.562500e-02 : f32
    %1066 = vector.broadcast %cst_422 : f32 to vector<16x1xf32>
    %1067 = arith.mulf %1065, %1066 : vector<16x1xf32>
    %1068 = vector.broadcast %1067 : vector<16x1xf32> to vector<16x128xf32>
    %1069 = arith.subf %1058, %1068 : vector<16x128xf32>
    %1070 = arith.mulf %1069, %1069 : vector<16x128xf32>
    %1071 = vector.broadcast %32 : vector<1x128xf32> to vector<16x128xf32>
    %1072 = arith.mulf %1070, %1071 : vector<16x128xf32>
    %cst_423 = arith.constant dense<0.000000e+00> : vector<16xf32>
    %1073 = vector.multi_reduction <add>, %1072, %cst_423 [1] : vector<16x128xf32> to vector<16xf32>
    %1074 = vector.shape_cast %1073 : vector<16xf32> to vector<16x1xf32>
    %cst_424 = arith.constant 1.562500e-02 : f32
    %1075 = vector.broadcast %cst_424 : f32 to vector<16x1xf32>
    %1076 = arith.mulf %1074, %1075 : vector<16x1xf32>
    %cst_425 = arith.constant 9.99999974E-6 : f32
    %1077 = vector.broadcast %cst_425 : f32 to vector<16x1xf32>
    %1078 = arith.addf %1076, %1077 : vector<16x1xf32>
    %1079 = math.rsqrt %1078 : vector<16x1xf32>
    %1080 = vector.broadcast %1079 : vector<16x1xf32> to vector<16x128xf32>
    %1081 = arith.mulf %1069, %1080 : vector<16x128xf32>
    %1082 = vector.broadcast %1059 : vector<1x128xf32> to vector<16x128xf32>
    %1083 = arith.mulf %1081, %1082 : vector<16x128xf32>
    %1084 = vector.broadcast %1060 : vector<1x128xf32> to vector<16x128xf32>
    %1085 = arith.addf %1083, %1084 : vector<16x128xf32>
    %1086 = arith.truncf %1085 : vector<16x128xf32> to vector<16x128xbf16>
    %c128 = arith.constant 128 : index
    %c0_426 = arith.constant 0 : index
    %1087 = vector.load %arg5[%c128, %c0_426] : memref<640x128xbf16, #tpu.memory_space<vmem>>, vector<128x128xbf16>
    %cst_427 = arith.constant dense<0.000000e+00> : vector<16x128xf32>
    %1088 = tpu.matmul %1086, %1087, %cst_427 {dimension_numbers = #tpu.dot_dimension_numbers<[1], [0], [0], [1], [0, 0, 1, 1], [], []>} : vector<16x128xbf16>, vector<128x128xbf16>, vector<16x128xf32> -> vector<16x128xf32>
    %1089 = vector.broadcast %1061 : vector<1x128xf32> to vector<16x128xf32>
    %1090 = arith.addf %1088, %1089 : vector<16x128xf32>
    %cst_428 = arith.constant 0.000000e+00 : f32
    %1091 = vector.broadcast %cst_428 : f32 to vector<16x128xf32>
    %1092 = arith.maximumf %1090, %1091 : vector<16x128xf32>
    %1093 = arith.truncf %1092 : vector<16x128xf32> to vector<16x128xbf16>
    %c256_429 = arith.constant 256 : index
    %c0_430 = arith.constant 0 : index
    %1094 = vector.load %arg5[%c256_429, %c0_430] : memref<640x128xbf16, #tpu.memory_space<vmem>>, vector<128x128xbf16>
    %cst_431 = arith.constant dense<0.000000e+00> : vector<16x128xf32>
    %1095 = tpu.matmul %1093, %1094, %cst_431 {dimension_numbers = #tpu.dot_dimension_numbers<[1], [0], [0], [1], [0, 0, 1, 1], [], []>} : vector<16x128xbf16>, vector<128x128xbf16>, vector<16x128xf32> -> vector<16x128xf32>
    %1096 = vector.broadcast %1062 : vector<1x128xf32> to vector<16x128xf32>
    %1097 = arith.addf %1095, %1096 : vector<16x128xf32>
    %cst_432 = arith.constant 0.000000e+00 : f32
    %1098 = vector.broadcast %cst_432 : f32 to vector<16x128xf32>
    %1099 = arith.maximumf %1097, %1098 : vector<16x128xf32>
    %c384_433 = arith.constant 384 : index
    %c0_434 = arith.constant 0 : index
    %1100 = vector.load %arg5[%c384_433, %c0_434] : memref<640x128xbf16, #tpu.memory_space<vmem>>, vector<128x128xbf16>
    %cst_435 = arith.constant dense<0.000000e+00> : vector<16x128xf32>
    %1101 = tpu.matmul %1086, %1100, %cst_435 {dimension_numbers = #tpu.dot_dimension_numbers<[1], [0], [0], [1], [0, 0, 1, 1], [], []>} : vector<16x128xbf16>, vector<128x128xbf16>, vector<16x128xf32> -> vector<16x128xf32>
    %1102 = arith.truncf %1099 : vector<16x128xf32> to vector<16x128xbf16>
    %c512_436 = arith.constant 512 : index
    %c0_437 = arith.constant 0 : index
    %1103 = vector.load %arg5[%c512_436, %c0_437] : memref<640x128xbf16, #tpu.memory_space<vmem>>, vector<128x128xbf16>
    %cst_438 = arith.constant dense<0.000000e+00> : vector<16x128xf32>
    %1104 = tpu.matmul %1102, %1103, %cst_438 {dimension_numbers = #tpu.dot_dimension_numbers<[1], [0], [0], [1], [0, 0, 1, 1], [], []>} : vector<16x128xbf16>, vector<128x128xbf16>, vector<16x128xf32> -> vector<16x128xf32>
    %1105 = arith.addf %1101, %1104 : vector<16x128xf32>
    %1106 = vector.broadcast %1063 : vector<1x128xf32> to vector<16x128xf32>
    %1107 = arith.addf %1105, %1106 : vector<16x128xf32>
    %1108 = tpu.iota {dimensions = array<i32: 1>} : vector<16x128xi32>
    %c3_i32 = arith.constant 3 : i32
    %1109 = vector.broadcast %c3_i32 : i32 to vector<16x128xi32>
    %1110 = arith.cmpi sge, %1108, %1109 : vector<16x128xi32>
    %c7_i32 = arith.constant 7 : i32
    %1111 = vector.broadcast %c7_i32 : i32 to vector<16x128xi32>
    %1112 = arith.cmpi slt, %1108, %1111 : vector<16x128xi32>
    %1113 = arith.andi %1110, %1112 : vector<16x128xi1>
    %1114 = arith.negf %1107 : vector<16x128xf32>
    %1115 = math.exp %1114 : vector<16x128xf32>
    %cst_439 = arith.constant 1.000000e+00 : f32
    %1116 = vector.broadcast %cst_439 : f32 to vector<16x128xf32>
    %1117 = arith.addf %1116, %1115 : vector<16x128xf32>
    %1118 = arith.divf %1116, %1117 : vector<16x128xf32>
    %1119 = arith.select %1113, %1118, %1107 : vector<16x128xi1>, vector<16x128xf32>
    %c0_440 = arith.constant 0 : index
    %c0_441 = arith.constant 0 : index
    %c0_442 = arith.constant 0 : index
    %1120 = vector.load %arg11[%c0_440, %c0_441, %c0_442] : memref<1x16x128xf32, #tpu.memory_space<vmem>>, vector<1x16x128xf32>
    %1121 = vector.shape_cast %1120 : vector<1x16x128xf32> to vector<16x128xf32>
    %1122 = vector.shape_cast %1119 : vector<16x128xf32> to vector<1x16x128xf32>
    tpu.vector_store %arg11[%c0_440, %c0_441, %c0_442], %1122 {strides = array<i32>} : memref<1x16x128xf32, #tpu.memory_space<vmem>>, vector<1x16x128xf32>,
    return
  }
  func.func @transform_0(%arg0: i32) -> (i32, i32, i32) {
    %c0_i32 = arith.constant 0 : i32
    %c0_i32_0 = arith.constant 0 : i32
    %c0_i32_1 = arith.constant 0 : i32
    return %arg0, %c0_i32, %c0_i32_0 : i32, i32, i32
  }
  func.func @transform_1(%arg0: i32) -> (i32, i32) {
    %c0_i32 = arith.constant 0 : i32
    %c0_i32_0 = arith.constant 0 : i32
    %c0_i32_1 = arith.constant 0 : i32
    return %c0_i32, %c0_i32_0 : i32, i32
  }
  func.func @transform_2(%arg0: i32) -> (i32, i32) {
    %c0_i32 = arith.constant 0 : i32
    %c0_i32_0 = arith.constant 0 : i32
    %c0_i32_1 = arith.constant 0 : i32
    return %c0_i32, %c0_i32_0 : i32, i32
  }
  func.func @transform_3(%arg0: i32) -> (i32, i32) {
    %c0_i32 = arith.constant 0 : i32
    %c0_i32_0 = arith.constant 0 : i32
    %c0_i32_1 = arith.constant 0 : i32
    return %c0_i32, %c0_i32_0 : i32, i32
  }
  func.func @transform_4(%arg0: i32) -> (i32, i32) {
    %c0_i32 = arith.constant 0 : i32
    %c0_i32_0 = arith.constant 0 : i32
    %c0_i32_1 = arith.constant 0 : i32
    return %c0_i32, %c0_i32_0 : i32, i32
  }
  func.func @transform_5(%arg0: i32) -> (i32, i32, i32) {
    %c0_i32 = arith.constant 0 : i32
    %c0_i32_0 = arith.constant 0 : i32
    %c0_i32_1 = arith.constant 0 : i32
    %c0_i32_2 = arith.constant 0 : i32
    return %c0_i32, %c0_i32_0, %c0_i32_1 : i32, i32, i32
  }
  func.func @transform_6(%arg0: i32) -> (i32, i32, i32) {
    %c0_i32 = arith.constant 0 : i32
    %c0_i32_0 = arith.constant 0 : i32
    %c0_i32_1 = arith.constant 0 : i32
    %c0_i32_2 = arith.constant 0 : i32
    return %c0_i32, %c0_i32_0, %c0_i32_1 : i32, i32, i32
  }
  func.func @transform_7(%arg0: i32) -> (i32, i32, i32) {
    %c0_i32 = arith.constant 0 : i32
    %c0_i32_0 = arith.constant 0 : i32
    %c0_i32_1 = arith.constant 0 : i32
    %c0_i32_2 = arith.constant 0 : i32
    return %c0_i32, %c0_i32_0, %c0_i32_1 : i32, i32, i32
  }
  func.func @transform_8(%arg0: i32) -> (i32, i32, i32) {
    %c0_i32 = arith.constant 0 : i32
    %c0_i32_0 = arith.constant 0 : i32
    %c0_i32_1 = arith.constant 0 : i32
    %c0_i32_2 = arith.constant 0 : i32
    return %c0_i32, %c0_i32_0, %c0_i32_1 : i32, i32, i32
  }
  func.func @transform_9(%arg0: i32) -> (i32, i32) {
    %c0_i32 = arith.constant 0 : i32
    %c0_i32_0 = arith.constant 0 : i32
    %c0_i32_1 = arith.constant 0 : i32
    return %c0_i32, %c0_i32_0 : i32, i32
  }
  func.func @transform_10(%arg0: i32) -> (i32, i32, i32) {
    %c0_i32 = arith.constant 0 : i32
    %c0_i32_0 = arith.constant 0 : i32
    %c0_i32_1 = arith.constant 0 : i32
    return %arg0, %c0_i32, %c0_i32_0 : i32, i32, i32
  }
}

</mosaic_0001>

<llo_original>
// kernel: detr_forward.2
$region0: #{detr_forward.2}
  #allocation0 [shape = 'u32[]', space=smem, size = 0x4, offset = 0x4, fixed_abs, tag = 'smem constant byte address 0x4 - core index']
  #allocation1 [shape = 'u32[144,128]{1,0:T(1,128)}', space=vmem, size = 0x12000, scoped, tag = 'internal scratch']
  %s0 = inlined_call_operand.vmem [shape: f32[2,64,147], index: 0, kind: input, shape index: {}]
  %s1 = inlined_call_operand.vmem [shape: bf16[147,128], index: 1, kind: input, shape index: {}]
  %s2 = inlined_call_operand.vmem [shape: f32[1,128], index: 2, kind: input, shape index: {}]
  %s3 = inlined_call_operand.vmem [shape: f32[2,64,128], index: 3, kind: output, shape index: {}]
  %s4 = sld [smem:[#allocation0]]
  $region45: #{detr_forward.2} parent=0
    _
  %s6 = ssub.s32 1, %s4
  %s7 = scalar_select 0, %s6, %s4
  loop: start=0, step=1, limit=4
  $region2: #{detr_forward.2} parent=0 // loop_pre_header
    _
  $region3: #{detr_forward.2} parent=0 // loop_header
    %s9 = sphi 0, %s13
    %p10 = scmp.ge.s32.totalorder %s9, 4
    %s19 = sphi 0, %s21
    %s22 = sphi 0, %s19
    %s23 = sphi 0, %s22
    %s39 = sphi 0, %s23
    %s43 = sphi 0, %s43
    %s45 = sphi 0, %s43
    %s46 = sphi 0, %s45
    %s60 = sphi 0, %s46
    %s64 = sphi 0, %s64
    %s66 = sphi 0, %s64
    %s67 = sphi 0, %s66
    %s81 = sphi 0, %s67
    %s87 = sphi 0, %s89
    %s90 = sphi 0, %s87
    %s91 = sphi 0, %s90
    %s107 = sphi 0, %s91
  $region4: #{detr_forward.2} parent=0 // loop_header_branch
    %12 = sbr.rel (%p10) target = $region8
  $region5: #{detr_forward.2} parent=0 // loop_body
    %s14 = ssub.s32 %s9, 1
    %s15 = ssub.s32 %s9, 2
    %s16 = sadd.s32 %s9, 1
    %s17 = ssub.s32 %s9, %s16
    %p18 = scmp.eq.s32.totalorder %s17, 0
    %s20 = sadd.s32 %s19, 1
    %s21 = scalar_select %p18, %s19, %s20
    %p24 = pneg %p18
    %p25 = scmp.eq.s32.totalorder %s9, 1
    %p26 = por %p24, %p25
    %p27 = scmp.ne.s32.totalorder %s19, %s22
    %p28 = scmp.eq.s32.totalorder %s9, 0
    %p29 = por %p27, %p28
    %p30 = scmp.ne.s32.totalorder %s19, %s22
    %p31 = scmp.eq.s32.totalorder %s14, 1
    %p32 = por %p30, %p31
    %p33 = scmp.ne.s32.totalorder %s22, %s23
    %p34 = scmp.eq.s32.totalorder %s14, 0
    %p35 = por %p33, %p34
    %p36 = scmp.ne.s32.totalorder %s22, %s23
    %p37 = scmp.eq.s32.totalorder %s15, 1
    %p38 = por %p36, %p37
    %p40 = scmp.ne.s32.totalorder %s23, %s39
    %p41 = scmp.eq.s32.totalorder %s15, 0
    %p42 = por %p40, %p41
    %s44 = sadd.s32 %s43, 1
    %p47 = scmp.eq.s32.totalorder %s9, 1
    %p48 = scmp.ne.s32.totalorder %s43, %s45
    %p49 = scmp.eq.s32.totalorder %s9, 0
    %p50 = por %p48, %p49
    %p51 = scmp.ne.s32.totalorder %s43, %s45
    %p52 = scmp.eq.s32.totalorder %s14, 1
    %p53 = por %p51, %p52
    %p54 = scmp.ne.s32.totalorder %s45, %s46
    %p55 = scmp.eq.s32.totalorder %s14, 0
    %p56 = por %p54, %p55
    %p57 = scmp.ne.s32.totalorder %s45, %s46
    %p58 = scmp.eq.s32.totalorder %s15, 1
    %p59 = por %p57, %p58
    %p61 = scmp.ne.s32.totalorder %s46, %s60
    %p62 = scmp.eq.s32.totalorder %s15, 0
    %p63 = por %p61, %p62
    %s65 = sadd.s32 %s64, 1
    %p68 = scmp.eq.s32.totalorder %s9, 1
    %p69 = scmp.ne.s32.totalorder %s64, %s66
    %p70 = scmp.eq.s32.totalorder %s9, 0
    %p71 = por %p69, %p70
    %p72 = scmp.ne.s32.totalorder %s64, %s66
    %p73 = scmp.eq.s32.totalorder %s14, 1
    %p74 = por %p72, %p73
    %p75 = scmp.ne.s32.totalorder %s66, %s67
    %p76 = scmp.eq.s32.totalorder %s14, 0
    %p77 = por %p75, %p76
    %p78 = scmp.ne.s32.totalorder %s66, %s67
    %p79 = scmp.eq.s32.totalorder %s15, 1
    %p80 = por %p78, %p79
    %p82 = scmp.ne.s32.totalorder %s67, %s81
    %p83 = scmp.eq.s32.totalorder %s15, 0
    %p84 = por %p82, %p83
    %s85 = ssub.s32 %s9, %s16
    %p86 = scmp.eq.s32.totalorder %s85, 0
    %s88 = sadd.s32 %s87, 1
    %s89 = scalar_select %p86, %s87, %s88
    %p92 = pneg %p86
    %p93 = scmp.eq.s32.totalorder %s9, 1
    %p94 = por %p92, %p93
    %p95 = scmp.ne.s32.totalorder %s87, %s90
    %p96 = scmp.eq.s32.totalorder %s9, 0
    %p97 = por %p95, %p96
    %p98 = scmp.ne.s32.totalorder %s87, %s90
    %p99 = scmp.eq.s32.totalorder %s14, 1
    %p100 = por %p98, %p99
    %p101 = scmp.ne.s32.totalorder %s90, %s91
    %p102 = scmp.eq.s32.totalorder %s14, 0
    %p103 = por %p101, %p102
    %p104 = scmp.ne.s32.totalorder %s90, %s91
    %p105 = scmp.eq.s32.totalorder %s15, 1
    %p106 = por %p104, %p105
    %p108 = scmp.ne.s32.totalorder %s91, %s107
    %p109 = scmp.eq.s32.totalorder %s15, 0
    %p110 = por %p108, %p109
    %p111 = scmp.le.s32.totalorder 1, %s9
    %p112 = scmp.lt.s32.totalorder %s9, 3
    %p113 = pnand %p111, %p112
    %p114 = pneg %p113
    // Predicated region
    $region9: #{detr_forward.2} parent=5 // pred_check
      _
    $region10: #{detr_forward.2} parent=5 // pred_check_branch
      %116 = sbr.rel (%p113) target = $region12
    $region11: #{detr_forward.2} parent=5 // pred_region
      %s117 = ssub.s32 %s9, 1
      // Predicated region
      $region13: #{detr_forward.2} parent=11 // pred_check
        %p118 = pneg %p56
      $region14: #{detr_forward.2} parent=11 // pred_check_branch
        %120 = sbr.rel (%p118) target = $region16
      $region15: #{detr_forward.2} parent=11 // pred_region
        _
      $region16: #{detr_forward.2} parent=11 // pred_fallthru
        _
      // Predicated region
      $region17: #{detr_forward.2} parent=11 // pred_check
        %p121 = pneg %p77
      $region18: #{detr_forward.2} parent=11 // pred_check_branch
        %123 = sbr.rel (%p121) target = $region20
      $region19: #{detr_forward.2} parent=11 // pred_region
        _
      $region20: #{detr_forward.2} parent=11 // pred_fallthru
        _
    $region12: #{detr_forward.2} parent=5 // pred_fallthru
      _
    %p124 = scmp.lt.s32.totalorder %s9, 2
    // Predicated region
    $region21: #{detr_forward.2} parent=5 // pred_check
      %p125 = pneg %p124
    $region22: #{detr_forward.2} parent=5 // pred_check_branch
      %127 = sbr.rel (%p125) target = $region24
    $region23: #{detr_forward.2} parent=5 // pred_region
      // Predicated region
      $region25: #{detr_forward.2} parent=23 // pred_check
        %p128 = pneg %p29
      $region26: #{detr_forward.2} parent=23 // pred_check_branch
        %130 = sbr.rel (%p128) target = $region28
      $region27: #{detr_forward.2} parent=23 // pred_region
        %p131 = scmp.lt.s32.totalorder %s9, 1
        %s132 = scalar_select %p131, %s9, 1
        %s133 = smul.addr %s132, 16
        %s134 = smul.addr %s133, 8
        %s135 = scalar_lea.vmem %s0, %s134
      $region28: #{detr_forward.2} parent=23 // pred_fallthru
        _
    $region24: #{detr_forward.2} parent=5 // pred_fallthru
      _
    %p136 = scmp.le.s32.totalorder 1, %s9
    %p137 = scmp.lt.s32.totalorder %s9, 3
    %p138 = pnand %p136, %p137
    %p139 = pneg %p138
    // Predicated region
    $region29: #{detr_forward.2} parent=5 // pred_check
      _
    $region30: #{detr_forward.2} parent=5 // pred_check_branch
      %141 = sbr.rel (%p138) target = $region32
    $region31: #{detr_forward.2} parent=5 // pred_region
      %s142 = ssub.s32 %s9, 1
      %p143 = scmp.lt.s32.totalorder %s14, 1
      %s144 = scalar_select %p143, %s14, 1
      %s145 = smul.addr %s144, 16
      %s146 = smul.addr %s145, 8
      %s147 = scalar_lea.vmem %s0, %s146
      %p148 = pneg %p35
      %p149 = pneg %p32
      %p150 = pneg %p56
      %p151 = pneg %p53
      %p152 = pneg %p77
      %p153 = pneg %p74
      %p154 = pneg %p103
      %p155 = pneg %p100
      %p156 = scmp.lt.s32.totalorder %s14, 1
      %s157 = scalar_select %p156, %s14, 1
      %s158 = smul.addr %s157, 8
      %s159 = smul.addr %s158, 8
      %s160 = scalar_lea.vmem %s3, %s159
      %p161 = scmp.lt.s32.totalorder %s14, 1
      %s162 = scalar_select %p161, %s14, 1
      %s163 = smul.addr %s162, 16
      %s164 = smul.addr %s163, 8
      %s165 = scalar_lea.vmem %s0, %s164
      %p166 = scmp.lt.s32.totalorder %s14, 1
      %s167 = scalar_select %p166, %s14, 1
      %s168 = smul.addr %s167, 8
      %s169 = smul.addr %s168, 8
      %s170 = scalar_lea.vmem %s3, %s169
      %v172 = vld [vmem:[%s165] sm:$0xff]
      %v173 = vld [vmem:[%s165 + $0x8] sm:$0xff]
      %v174 = vld [vmem:[%s165 + $0x10] sm:$0xff]
      %v175 = vld [vmem:[%s165 + $0x18] sm:$0xff]
      %v176 = vld [vmem:[%s165 + $0x20] sm:$0xff]
      %v177 = vld [vmem:[%s165 + $0x28] sm:$0xff]
      %v178 = vld [vmem:[%s165 + $0x30] sm:$0xff]
      %v179 = vld [vmem:[%s165 + $0x38] sm:$0xff]
      %v180 = vld [vmem:[%s165 + $0x40] sm:$0xff]
      %v181 = vld [vmem:[%s165 + $0x48] sm:$0xff]
      %v182 = vld [vmem:[%s165 + $0x50] sm:$0xff]
      %v183 = vld [vmem:[%s165 + $0x58] sm:$0xff]
      %v184 = vld [vmem:[%s165 + $0x60] sm:$0xff]
      %v185 = vld [vmem:[%s165 + $0x68] sm:$0xff]
      %v186 = vld [vmem:[%s165 + $0x70] sm:$0xff]
      %v187 = vld [vmem:[%s165 + $0x78] sm:$0xff]
      %v188 = vpack.c.bf16 %v174, %v172
      %v189 = vpack.c.bf16 %v175, %v173
      %v190 = vpack.c.bf16 %v178, %v176
      %v191 = vpack.c.bf16 %v179, %v177
      %v192 = vpack.c.bf16 %v182, %v180
      %v193 = vpack.c.bf16 %v183, %v181
      %v194 = vpack.c.bf16 %v186, %v184
      %v195 = vpack.c.bf16 %v187, %v185
      %v196 = vld [vmem:[%s1] sm:$0xf]
      %v197 = vld [vmem:[%s1 + $0x4] sm:$0xf]
      %v198 = vld [vmem:[%s1 + $0x8] sm:$0xf]
      %v199 = vld [vmem:[%s1 + $0xc] sm:$0xf]
      %v200 = vld [vmem:[%s1 + $0x10] sm:$0xf]
      %v201 = vld [vmem:[%s1 + $0x14] sm:$0xf]
      %v202 = vld [vmem:[%s1 + $0x18] sm:$0xf]
      %v203 = vld [vmem:[%s1 + $0x1c] sm:$0xf]
      %v204 = vld [vmem:[%s1 + $0x20] sm:$0xf]
      %v205 = vld [vmem:[%s1 + $0x24] sm:$0xf]
      %v206 = vld [vmem:[%s1 + $0x28] sm:$0xf]
      %v207 = vld [vmem:[%s1 + $0x2c] sm:$0xf]
      %v208 = vld [vmem:[%s1 + $0x30] sm:$0xf]
      %v209 = vld [vmem:[%s1 + $0x34] sm:$0xf]
      %v210 = vld [vmem:[%s1 + $0x38] sm:$0xf]
      %v211 = vld [vmem:[%s1 + $0x3c] sm:$0xf]
      %v212 = vld [vmem:[%s1 + $0x40] sm:$0xf]
      %v213 = vld [vmem:[%s1 + $0x44] sm:$0xf]
      %v214 = vld [vmem:[%s1 + $0x48] sm:$0x3]
      %v215 = vld [vmem:[%s2] sm:$0x1]
      %v217 = vlaneseq
      %v218 = vshrl.u32 %v217, 7
      %v219 = vsub.s32 0, %v218
      %v220 = vrot.slane %v215, %v219
      %v241 = vunpack.c.l.b16 %v196
      %v242 = vunpack.c.l.b16 %v197
      %v243 = vunpack.c.l.b16 %v198
      %v244 = vunpack.c.l.b16 %v199
      %v245 = vunpack.c.l.b16 %v200
      %v246 = vunpack.c.l.b16 %v201
      %v247 = vunpack.c.l.b16 %v202
      %v248 = vunpack.c.l.b16 %v203
      %v249 = vunpack.c.l.b16 %v204
      %v250 = vunpack.c.l.b16 %v205
      %v251 = vunpack.c.l.b16 %v206
      %v252 = vunpack.c.l.b16 %v207
      %v253 = vunpack.c.l.b16 %v208
      %v254 = vunpack.c.l.b16 %v209
      %v255 = vunpack.c.l.b16 %v210
      %v256 = vunpack.c.l.b16 %v211
      %v257 = vunpack.c.l.b16 %v212
      %v258 = vunpack.c.l.b16 %v213
      %v259 = vunpack.c.l.b16 %v214
      %v260 = vpack.c.b16 %v242, %v241
      %v261 = vpack.c.b16 %v244, %v243
      %v262 = vpack.c.b16 %v246, %v245
      %v263 = vpack.c.b16 %v248, %v247
      %v264 = vpack.c.b16 %v250, %v249
      %v265 = vpack.c.b16 %v252, %v251
      %v266 = vpack.c.b16 %v254, %v253
      %v267 = vpack.c.b16 %v256, %v255
      %v268 = vpack.c.b16 %v258, %v257
      %v269 = vpack.c.b16 %v259, %v259
      %vm279 = vcmask 154624
      %v281 = vsel %vm279, %v189, 0
      %v284 = vsel %vm279, %v191, 0
      %v287 = vsel %vm279, %v193, 0
      %v290 = vsel %vm279, %v195, 0
      %vm292 = vcmask 1040384
      %vm293 = vcmask 1041408
      %v294 = vsel %vm292, 4294967295, 65535
      %v295 = vsel %vm293, %v294, 0
      %v297 = vand.u32 %v269, %v295
      %299 = vmatprep.subr.bf16.mxu0 0
      %300 = vmatpush1.bf16.msra.mxu0 %v267
      %301 = vmatprep.subr.bf16.mxu0 0
      %302 = vmatpush1.bf16.msra.mxu0 %v266
      %303 = vmatprep.subr.bf16.mxu0 0
      %304 = vmatpush1.bf16.msra.mxu0 %v265
      %305 = vmatprep.subr.bf16.mxu0 0
      %306 = vmatpush1.bf16.msra.mxu0 %v264
      %307 = vmatprep.subr.bf16.mxu0 0
      %308 = vmatpush1.bf16.msra.mxu0 %v263
      %309 = vmatprep.subr.bf16.mxu0 0
      %310 = vmatpush1.bf16.msra.mxu0 %v262
      %311 = vmatprep.subr.bf16.mxu0 0
      %312 = vmatpush1.bf16.msra.mxu0 %v261
      %313 = vmatprep.subr.bf16.mxu0 0
      %314 = vmatpush1.bf16.msra.mxu0 %v260
      %315 = vmatprep.subr.bf16.mxu0 0
      %316 = vmatpush2.bf16.msra.mxu0 0
      %317 = vmatprep.subr.bf16.mxu0 0
      %318 = vmatpush2.bf16.msra.mxu0 0
      %319 = vmatprep.subr.bf16.mxu0 0
      %320 = vmatpush2.bf16.msra.mxu0 0
      %321 = vmatprep.subr.bf16.mxu0 0
      %322 = vmatpush2.bf16.msra.mxu0 0
      %323 = vmatprep.subr.bf16.mxu0 0
      %324 = vmatpush2.bf16.msra.mxu0 0
      %325 = vmatprep.subr.bf16.mxu0 0
      %326 = vmatpush2.bf16.msra.mxu0 0
      %327 = vmatprep.subr.bf16.mxu0 0
      %328 = vmatpush2.bf16.msra.mxu0 %v297
      %329 = vmatprep.subr.bf16.mxu0 0
      %330 = vmatpush2.bf16.msra.mxu0 %v268
      %331 = vmatprep.mubr.bf16.mxu0 %v281
      %332 = vmatmul.mubr.bf16.gmra.mxu0 %v188
      %v333 = vpop.f32.mrf.mxu0
      %v334 = vadd.f32 %v220, %v333
      %v335 = vpop.f32.mrf.mxu0
      %v336 = vpop.f32.mrf.mxu0
      %v337 = vadd.f32 %v220, %v336
      %v338 = vpop.f32.mrf.mxu0
      %339 = vmatprep.mubr.bf16.mxu0 %v284
      %340 = vmatmul.mubr.bf16.gmra.mxu0 %v190
      %v341 = vpop.f32.mrf.mxu0
      %v342 = vadd.f32 %v220, %v341
      %v343 = vpop.f32.mrf.mxu0
      %v344 = vpop.f32.mrf.mxu0
      %v345 = vadd.f32 %v220, %v344
      %v346 = vpop.f32.mrf.mxu0
      %347 = vmatprep.mubr.bf16.mxu0 %v287
      %348 = vmatmul.mubr.bf16.gmra.mxu0 %v192
      %v349 = vpop.f32.mrf.mxu0
      %v350 = vadd.f32 %v220, %v349
      %v351 = vpop.f32.mrf.mxu0
      %v352 = vpop.f32.mrf.mxu0
      %v353 = vadd.f32 %v220, %v352
      %v354 = vpop.f32.mrf.mxu0
      %355 = vmatprep.mubr.bf16.mxu0 %v290
      %356 = vmatmul.mubr.bf16.gmra.mxu0 %v194
      %v357 = vpop.f32.mrf.mxu0
      %v358 = vadd.f32 %v220, %v357
      %v359 = vpop.f32.mrf.mxu0
      %v360 = vpop.f32.mrf.mxu0
      %v361 = vadd.f32 %v220, %v360
      %v362 = vpop.f32.mrf.mxu0
      %363 = vdwg.mxu0
      %v364 = vmax.f32 %v334, 0.0
      %v365 = vmax.f32 %v337, 0.0
      %v366 = vmax.f32 %v342, 0.0
      %v367 = vmax.f32 %v345, 0.0
      %v368 = vmax.f32 %v350, 0.0
      %v369 = vmax.f32 %v353, 0.0
      %v370 = vmax.f32 %v358, 0.0
      %v371 = vmax.f32 %v361, 0.0
      %372 = vst [vmem:[%s170] sm:$0xff] %v364
      %373 = vst [vmem:[%s170 + $0x8] sm:$0xff] %v365
      %374 = vst [vmem:[%s170 + $0x10] sm:$0xff] %v366
      %375 = vst [vmem:[%s170 + $0x18] sm:$0xff] %v367
      %376 = vst [vmem:[%s170 + $0x20] sm:$0xff] %v368
      %377 = vst [vmem:[%s170 + $0x28] sm:$0xff] %v369
      %378 = vst [vmem:[%s170 + $0x30] sm:$0xff] %v370
      %379 = vst [vmem:[%s170 + $0x38] sm:$0xff] %v371
      %p380 = scmp.lt.s32.totalorder %s14, 1
      %s381 = scalar_select %p380, %s14, 1
      %s382 = smul.addr %s381, 8
      %s383 = smul.addr %s382, 8
      %s384 = scalar_lea.vmem %s3, %s383
      // Predicated region
      $region33: #{detr_forward.2} parent=31 // pred_check
        %p385 = pneg %p100
      $region34: #{detr_forward.2} parent=31 // pred_check_branch
        %387 = sbr.rel (%p385) target = $region36
      $region35: #{detr_forward.2} parent=31 // pred_region
        _
      $region36: #{detr_forward.2} parent=31 // pred_fallthru
        _
    $region32: #{detr_forward.2} parent=5 // pred_fallthru
      _
    %p388 = scmp.le.s32.totalorder 2, %s9
    // Predicated region
    $region37: #{detr_forward.2} parent=5 // pred_check
      %p389 = pneg %p388
    $region38: #{detr_forward.2} parent=5 // pred_check_branch
      %391 = sbr.rel (%p389) target = $region40
    $region39: #{detr_forward.2} parent=5 // pred_region
      %s392 = ssub.s32 %s9, 2
      // Predicated region
      $region41: #{detr_forward.2} parent=39 // pred_check
        %p393 = pneg %p106
      $region42: #{detr_forward.2} parent=39 // pred_check_branch
        %395 = sbr.rel (%p393) target = $region44
      $region43: #{detr_forward.2} parent=39 // pred_region
        %p396 = scmp.lt.s32.totalorder %s15, 1
        %s397 = scalar_select %p396, %s15, 1
        %s398 = smul.addr %s397, 8
        %s399 = smul.addr %s398, 8
        %s400 = scalar_lea.vmem %s3, %s399
      $region44: #{detr_forward.2} parent=39 // pred_fallthru
        _
    $region40: #{detr_forward.2} parent=5 // pred_fallthru
      _
  $region6: #{detr_forward.2} parent=0 // loop_footer
    %s13 = sadd.s32 1, %s9
  $region7: #{detr_forward.2} parent=0 // loop_footer_branch
    %8 = sbr.rel target = $region3
  $region8: #{detr_forward.2} parent=0 // loop_exit
    _

// kernel: detr_forward.3
$region0: #{detr_forward.3}
  #allocation0 [shape = 'u32[]', space=smem, size = 0x4, offset = 0x4, fixed_abs, tag = 'smem constant byte address 0x4 - core index']
  #allocation1 [shape = 'u32[144,128]{1,0:T(1,128)}', space=vmem, size = 0x12000, scoped, tag = 'internal scratch']
  %s0 = inlined_call_operand.vmem [shape: f32[2,16,144], index: 0, kind: input, shape index: {}]
  %s1 = inlined_call_operand.vmem [shape: f32[16,128], index: 1, kind: input, shape index: {}]
  %s2 = inlined_call_operand.vmem [shape: f32[16,128], index: 2, kind: input, shape index: {}]
  %s3 = inlined_call_operand.vmem [shape: bf16[144,128], index: 3, kind: input, shape index: {}]
  %s4 = inlined_call_operand.vmem [shape: bf16[640,128], index: 4, kind: input, shape index: {}]
  %s5 = inlined_call_operand.vmem [shape: bf16[2,128,768], index: 5, kind: input, shape index: {}]
  %s6 = inlined_call_operand.vmem [shape: f32[2,9,256], index: 6, kind: input, shape index: {}]
  %s7 = inlined_call_operand.vmem [shape: bf16[2,128,1280], index: 7, kind: input, shape index: {}]
  %s8 = inlined_call_operand.vmem [shape: f32[2,15,256], index: 8, kind: input, shape index: {}]
  %s9 = inlined_call_operand.vmem [shape: f32[8,256], index: 9, kind: input, shape index: {}]
  %s10 = inlined_call_operand.vmem [shape: f32[2,16,128], index: 10, kind: output, shape index: {}]
  %s11 = sld [smem:[#allocation0]]
  $region73: #{detr_forward.3} parent=0
    _
  %s13 = ssub.s32 1, %s11
  %s14 = scalar_select 0, %s13, %s11
  loop: start=0, step=1, limit=4
  $region2: #{detr_forward.3} parent=0 // loop_pre_header
    _
  $region3: #{detr_forward.3} parent=0 // loop_header
    %s16 = sphi 0, %s20
    %p17 = scmp.ge.s32.totalorder %s16, 4
    %s26 = sphi 0, %s28
    %s29 = sphi 0, %s26
    %s30 = sphi 0, %s29
    %s46 = sphi 0, %s30
    %s50 = sphi 0, %s50
    %s52 = sphi 0, %s50
    %s53 = sphi 0, %s52
    %s67 = sphi 0, %s53
    %s71 = sphi 0, %s71
    %s73 = sphi 0, %s71
    %s74 = sphi 0, %s73
    %s88 = sphi 0, %s74
    %s92 = sphi 0, %s92
    %s94 = sphi 0, %s92
    %s95 = sphi 0, %s94
    %s109 = sphi 0, %s95
    %s113 = sphi 0, %s113
    %s115 = sphi 0, %s113
    %s116 = sphi 0, %s115
    %s130 = sphi 0, %s116
    %s134 = sphi 0, %s134
    %s136 = sphi 0, %s134
    %s137 = sphi 0, %s136
    %s151 = sphi 0, %s137
    %s155 = sphi 0, %s155
    %s157 = sphi 0, %s155
    %s158 = sphi 0, %s157
    %s172 = sphi 0, %s158
    %s176 = sphi 0, %s176
    %s178 = sphi 0, %s176
    %s179 = sphi 0, %s178
    %s193 = sphi 0, %s179
    %s197 = sphi 0, %s197
    %s199 = sphi 0, %s197
    %s200 = sphi 0, %s199
    %s214 = sphi 0, %s200
    %s218 = sphi 0, %s218
    %s220 = sphi 0, %s218
    %s221 = sphi 0, %s220
    %s235 = sphi 0, %s221
    %s241 = sphi 0, %s243
    %s244 = sphi 0, %s241
    %s245 = sphi 0, %s244
    %s261 = sphi 0, %s245
  $region4: #{detr_forward.3} parent=0 // loop_header_branch
    %19 = sbr.rel (%p17) target = $region8
  $region5: #{detr_forward.3} parent=0 // loop_body
    %s21 = ssub.s32 %s16, 1
    %s22 = ssub.s32 %s16, 2
    %s23 = sadd.s32 %s16, 1
    %s24 = ssub.s32 %s16, %s23
    %p25 = scmp.eq.s32.totalorder %s24, 0
    %s27 = sadd.s32 %s26, 1
    %s28 = scalar_select %p25, %s26, %s27
    %p31 = pneg %p25
    %p32 = scmp.eq.s32.totalorder %s16, 1
    %p33 = por %p31, %p32
    %p34 = scmp.ne.s32.totalorder %s26, %s29
    %p35 = scmp.eq.s32.totalorder %s16, 0
    %p36 = por %p34, %p35
    %p37 = scmp.ne.s32.totalorder %s26, %s29
    %p38 = scmp.eq.s32.totalorder %s21, 1
    %p39 = por %p37, %p38
    %p40 = scmp.ne.s32.totalorder %s29, %s30
    %p41 = scmp.eq.s32.totalorder %s21, 0
    %p42 = por %p40, %p41
    %p43 = scmp.ne.s32.totalorder %s29, %s30
    %p44 = scmp.eq.s32.totalorder %s22, 1
    %p45 = por %p43, %p44
    %p47 = scmp.ne.s32.totalorder %s30, %s46
    %p48 = scmp.eq.s32.totalorder %s22, 0
    %p49 = por %p47, %p48
    %s51 = sadd.s32 %s50, 1
    %p54 = scmp.eq.s32.totalorder %s16, 1
    %p55 = scmp.ne.s32.totalorder %s50, %s52
    %p56 = scmp.eq.s32.totalorder %s16, 0
    %p57 = por %p55, %p56
    %p58 = scmp.ne.s32.totalorder %s50, %s52
    %p59 = scmp.eq.s32.totalorder %s21, 1
    %p60 = por %p58, %p59
    %p61 = scmp.ne.s32.totalorder %s52, %s53
    %p62 = scmp.eq.s32.totalorder %s21, 0
    %p63 = por %p61, %p62
    %p64 = scmp.ne.s32.totalorder %s52, %s53
    %p65 = scmp.eq.s32.totalorder %s22, 1
    %p66 = por %p64, %p65
    %p68 = scmp.ne.s32.totalorder %s53, %s67
    %p69 = scmp.eq.s32.totalorder %s22, 0
    %p70 = por %p68, %p69
    %s72 = sadd.s32 %s71, 1
    %p75 = scmp.eq.s32.totalorder %s16, 1
    %p76 = scmp.ne.s32.totalorder %s71, %s73
    %p77 = scmp.eq.s32.totalorder %s16, 0
    %p78 = por %p76, %p77
    %p79 = scmp.ne.s32.totalorder %s71, %s73
    %p80 = scmp.eq.s32.totalorder %s21, 1
    %p81 = por %p79, %p80
    %p82 = scmp.ne.s32.totalorder %s73, %s74
    %p83 = scmp.eq.s32.totalorder %s21, 0
    %p84 = por %p82, %p83
    %p85 = scmp.ne.s32.totalorder %s73, %s74
    %p86 = scmp.eq.s32.totalorder %s22, 1
    %p87 = por %p85, %p86
    %p89 = scmp.ne.s32.totalorder %s74, %s88
    %p90 = scmp.eq.s32.totalorder %s22, 0
    %p91 = por %p89, %p90
    %s93 = sadd.s32 %s92, 1
    %p96 = scmp.eq.s32.totalorder %s16, 1
    %p97 = scmp.ne.s32.totalorder %s92, %s94
    %p98 = scmp.eq.s32.totalorder %s16, 0
    %p99 = por %p97, %p98
    %p100 = scmp.ne.s32.totalorder %s92, %s94
    %p101 = scmp.eq.s32.totalorder %s21, 1
    %p102 = por %p100, %p101
    %p103 = scmp.ne.s32.totalorder %s94, %s95
    %p104 = scmp.eq.s32.totalorder %s21, 0
    %p105 = por %p103, %p104
    %p106 = scmp.ne.s32.totalorder %s94, %s95
    %p107 = scmp.eq.s32.totalorder %s22, 1
    %p108 = por %p106, %p107
    %p110 = scmp.ne.s32.totalorder %s95, %s109
    %p111 = scmp.eq.s32.totalorder %s22, 0
    %p112 = por %p110, %p111
    %s114 = sadd.s32 %s113, 1
    %p117 = scmp.eq.s32.totalorder %s16, 1
    %p118 = scmp.ne.s32.totalorder %s113, %s115
    %p119 = scmp.eq.s32.totalorder %s16, 0
    %p120 = por %p118, %p119
    %p121 = scmp.ne.s32.totalorder %s113, %s115
    %p122 = scmp.eq.s32.totalorder %s21, 1
    %p123 = por %p121, %p122
    %p124 = scmp.ne.s32.totalorder %s115, %s116
    %p125 = scmp.eq.s32.totalorder %s21, 0
    %p126 = por %p124, %p125
    %p127 = scmp.ne.s32.totalorder %s115, %s116
    %p128 = scmp.eq.s32.totalorder %s22, 1
    %p129 = por %p127, %p128
    %p131 = scmp.ne.s32.totalorder %s116, %s130
    %p132 = scmp.eq.s32.totalorder %s22, 0
    %p133 = por %p131, %p132
    %s135 = sadd.s32 %s134, 1
    %p138 = scmp.eq.s32.totalorder %s16, 1
    %p139 = scmp.ne.s32.totalorder %s134, %s136
    %p140 = scmp.eq.s32.totalorder %s16, 0
    %p141 = por %p139, %p140
    %p142 = scmp.ne.s32.totalorder %s134, %s136
    %p143 = scmp.eq.s32.totalorder %s21, 1
    %p144 = por %p142, %p143
    %p145 = scmp.ne.s32.totalorder %s136, %s137
    %p146 = scmp.eq.s32.totalorder %s21, 0
    %p147 = por %p145, %p146
    %p148 = scmp.ne.s32.totalorder %s136, %s137
    %p149 = scmp.eq.s32.totalorder %s22, 1
    %p150 = por %p148, %p149
    %p152 = scmp.ne.s32.totalorder %s137, %s151
    %p153 = scmp.eq.s32.totalorder %s22, 0
    %p154 = por %p152, %p153
    %s156 = sadd.s32 %s155, 1
    %p159 = scmp.eq.s32.totalorder %s16, 1
    %p160 = scmp.ne.s32.totalorder %s155, %s157
    %p161 = scmp.eq.s32.totalorder %s16, 0
    %p162 = por %p160, %p161
    %p163 = scmp.ne.s32.totalorder %s155, %s157
    %p164 = scmp.eq.s32.totalorder %s21, 1
    %p165 = por %p163, %p164
    %p166 = scmp.ne.s32.totalorder %s157, %s158
    %p167 = scmp.eq.s32.totalorder %s21, 0
    %p168 = por %p166, %p167
    %p169 = scmp.ne.s32.totalorder %s157, %s158
    %p170 = scmp.eq.s32.totalorder %s22, 1
    %p171 = por %p169, %p170
    %p173 = scmp.ne.s32.totalorder %s158, %s172
    %p174 = scmp.eq.s32.totalorder %s22, 0
    %p175 = por %p173, %p174
    %s177 = sadd.s32 %s176, 1
    %p180 = scmp.eq.s32.totalorder %s16, 1
    %p181 = scmp.ne.s32.totalorder %s176, %s178
    %p182 = scmp.eq.s32.totalorder %s16, 0
    %p183 = por %p181, %p182
    %p184 = scmp.ne.s32.totalorder %s176, %s178
    %p185 = scmp.eq.s32.totalorder %s21, 1
    %p186 = por %p184, %p185
    %p187 = scmp.ne.s32.totalorder %s178, %s179
    %p188 = scmp.eq.s32.totalorder %s21, 0
    %p189 = por %p187, %p188
    %p190 = scmp.ne.s32.totalorder %s178, %s179
    %p191 = scmp.eq.s32.totalorder %s22, 1
    %p192 = por %p190, %p191
    %p194 = scmp.ne.s32.totalorder %s179, %s193
    %p195 = scmp.eq.s32.totalorder %s22, 0
    %p196 = por %p194, %p195
    %s198 = sadd.s32 %s197, 1
    %p201 = scmp.eq.s32.totalorder %s16, 1
    %p202 = scmp.ne.s32.totalorder %s197, %s199
    %p203 = scmp.eq.s32.totalorder %s16, 0
    %p204 = por %p202, %p203
    %p205 = scmp.ne.s32.totalorder %s197, %s199
    %p206 = scmp.eq.s32.totalorder %s21, 1
    %p207 = por %p205, %p206
    %p208 = scmp.ne.s32.totalorder %s199, %s200
    %p209 = scmp.eq.s32.totalorder %s21, 0
    %p210 = por %p208, %p209
    %p211 = scmp.ne.s32.totalorder %s199, %s200
    %p212 = scmp.eq.s32.totalorder %s22, 1
    %p213 = por %p211, %p212
    %p215 = scmp.ne.s32.totalorder %s200, %s214
    %p216 = scmp.eq.s32.totalorder %s22, 0
    %p217 = por %p215, %p216
    %s219 = sadd.s32 %s218, 1
    %p222 = scmp.eq.s32.totalorder %s16, 1
    %p223 = scmp.ne.s32.totalorder %s218, %s220
    %p224 = scmp.eq.s32.totalorder %s16, 0
    %p225 = por %p223, %p224
    %p226 = scmp.ne.s32.totalorder %s218, %s220
    %p227 = scmp.eq.s32.totalorder %s21, 1
    %p228 = por %p226, %p227
    %p229 = scmp.ne.s32.totalorder %s220, %s221
    %p230 = scmp.eq.s32.totalorder %s21, 0
    %p231 = por %p229, %p230
    %p232 = scmp.ne.s32.totalorder %s220, %s221
    %p233 = scmp.eq.s32.totalorder %s22, 1
    %p234 = por %p232, %p233
    %p236 = scmp.ne.s32.totalorder %s221, %s235
    %p237 = scmp.eq.s32.totalorder %s22, 0
    %p238 = por %p236, %p237
    %s239 = ssub.s32 %s16, %s23
    %p240 = scmp.eq.s32.totalorder %s239, 0
    %s242 = sadd.s32 %s241, 1
    %s243 = scalar_select %p240, %s241, %s242
    %p246 = pneg %p240
    %p247 = scmp.eq.s32.totalorder %s16, 1
    %p248 = por %p246, %p247
    %p249 = scmp.ne.s32.totalorder %s241, %s244
    %p250 = scmp.eq.s32.totalorder %s16, 0
    %p251 = por %p249, %p250
    %p252 = scmp.ne.s32.totalorder %s241, %s244
    %p253 = scmp.eq.s32.totalorder %s21, 1
    %p254 = por %p252, %p253
    %p255 = scmp.ne.s32.totalorder %s244, %s245
    %p256 = scmp.eq.s32.totalorder %s21, 0
    %p257 = por %p255, %p256
    %p258 = scmp.ne.s32.totalorder %s244, %s245
    %p259 = scmp.eq.s32.totalorder %s22, 1
    %p260 = por %p258, %p259
    %p262 = scmp.ne.s32.totalorder %s245, %s261
    %p263 = scmp.eq.s32.totalorder %s22, 0
    %p264 = por %p262, %p263
    %p265 = scmp.le.s32.totalorder 1, %s16
    %p266 = scmp.lt.s32.totalorder %s16, 3
    %p267 = pnand %p265, %p266
    %p268 = pneg %p267
    // Predicated region
    $region9: #{detr_forward.3} parent=5 // pred_check
      _
    $region10: #{detr_forward.3} parent=5 // pred_check_branch
      %270 = sbr.rel (%p267) target = $region12
    $region11: #{detr_forward.3} parent=5 // pred_region
      %s271 = ssub.s32 %s16, 1
      // Predicated region
      $region13: #{detr_forward.3} parent=11 // pred_check
        %p272 = pneg %p63
      $region14: #{detr_forward.3} parent=11 // pred_check_branch
        %274 = sbr.rel (%p272) target = $region16
      $region15: #{detr_forward.3} parent=11 // pred_region
        _
      $region16: #{detr_forward.3} parent=11 // pred_fallthru
        _
      // Predicated region
      $region17: #{detr_forward.3} parent=11 // pred_check
        %p275 = pneg %p84
      $region18: #{detr_forward.3} parent=11 // pred_check_branch
        %277 = sbr.rel (%p275) target = $region20
      $region19: #{detr_forward.3} parent=11 // pred_region
        _
      $region20: #{detr_forward.3} parent=11 // pred_fallthru
        _
      // Predicated region
      $region21: #{detr_forward.3} parent=11 // pred_check
        %p278 = pneg %p105
      $region22: #{detr_forward.3} parent=11 // pred_check_branch
        %280 = sbr.rel (%p278) target = $region24
      $region23: #{detr_forward.3} parent=11 // pred_region
        _
      $region24: #{detr_forward.3} parent=11 // pred_fallthru
        _
      // Predicated region
      $region25: #{detr_forward.3} parent=11 // pred_check
        %p281 = pneg %p126
      $region26: #{detr_forward.3} parent=11 // pred_check_branch
        %283 = sbr.rel (%p281) target = $region28
      $region27: #{detr_forward.3} parent=11 // pred_region
        _
      $region28: #{detr_forward.3} parent=11 // pred_fallthru
        _
      // Predicated region
      $region29: #{detr_forward.3} parent=11 // pred_check
        %p284 = pneg %p147
      $region30: #{detr_forward.3} parent=11 // pred_check_branch
        %286 = sbr.rel (%p284) target = $region32
      $region31: #{detr_forward.3} parent=11 // pred_region
        _
      $region32: #{detr_forward.3} parent=11 // pred_fallthru
        _
      // Predicated region
      $region33: #{detr_forward.3} parent=11 // pred_check
        %p287 = pneg %p168
      $region34: #{detr_forward.3} parent=11 // pred_check_branch
        %289 = sbr.rel (%p287) target = $region36
      $region35: #{detr_forward.3} parent=11 // pred_region
        _
      $region36: #{detr_forward.3} parent=11 // pred_fallthru
        _
      // Predicated region
      $region37: #{detr_forward.3} parent=11 // pred_check
        %p290 = pneg %p189
      $region38: #{detr_forward.3} parent=11 // pred_check_branch
        %292 = sbr.rel (%p290) target = $region40
      $region39: #{detr_forward.3} parent=11 // pred_region
        _
      $region40: #{detr_forward.3} parent=11 // pred_fallthru
        _
      // Predicated region
      $region41: #{detr_forward.3} parent=11 // pred_check
        %p293 = pneg %p210
      $region42: #{detr_forward.3} parent=11 // pred_check_branch
        %295 = sbr.rel (%p293) target = $region44
      $region43: #{detr_forward.3} parent=11 // pred_region
        _
      $region44: #{detr_forward.3} parent=11 // pred_fallthru
        _
      // Predicated region
      $region45: #{detr_forward.3} parent=11 // pred_check
        %p296 = pneg %p231
      $region46: #{detr_forward.3} parent=11 // pred_check_branch
        %298 = sbr.rel (%p296) target = $region48
      $region47: #{detr_forward.3} parent=11 // pred_region
        _
      $region48: #{detr_forward.3} parent=11 // pred_fallthru
        _
    $region12: #{detr_forward.3} parent=5 // pred_fallthru
      _
    %p299 = scmp.lt.s32.totalorder %s16, 2
    // Predicated region
    $region49: #{detr_forward.3} parent=5 // pred_check
      %p300 = pneg %p299
    $region50: #{detr_forward.3} parent=5 // pred_check_branch
      %302 = sbr.rel (%p300) target = $region52
    $region51: #{detr_forward.3} parent=5 // pred_region
      // Predicated region
      $region53: #{detr_forward.3} parent=51 // pred_check
        %p303 = pneg %p36
      $region54: #{detr_forward.3} parent=51 // pred_check_branch
        %305 = sbr.rel (%p303) target = $region56
      $region55: #{detr_forward.3} parent=51 // pred_region
        %p306 = scmp.lt.s32.totalorder %s16, 1
        %s307 = scalar_select %p306, %s16, 1
        %s308 = smul.addr %s307, 4
        %s309 = smul.addr %s308, 8
        %s310 = scalar_lea.vmem %s0, %s309
      $region56: #{detr_forward.3} parent=51 // pred_fallthru
        _
    $region52: #{detr_forward.3} parent=5 // pred_fallthru
      _
    %p311 = scmp.le.s32.totalorder 1, %s16
    %p312 = scmp.lt.s32.totalorder %s16, 3
    %p313 = pnand %p311, %p312
    %p314 = pneg %p313
    // Predicated region
    $region57: #{detr_forward.3} parent=5 // pred_check
      _
    $region58: #{detr_forward.3} parent=5 // pred_check_branch
      %316 = sbr.rel (%p313) target = $region60
    $region59: #{detr_forward.3} parent=5 // pred_region
      %s317 = ssub.s32 %s16, 1
      %p318 = scmp.lt.s32.totalorder %s21, 1
      %s319 = scalar_select %p318, %s21, 1
      %s320 = smul.addr %s319, 4
      %s321 = smul.addr %s320, 8
      %s322 = scalar_lea.vmem %s0, %s321
      %p323 = pneg %p42
      %p324 = pneg %p39
      %p325 = pneg %p63
      %p326 = pneg %p60
      %p327 = pneg %p84
      %p328 = pneg %p81
      %p329 = pneg %p105
      %p330 = pneg %p102
      %p331 = pneg %p126
      %p332 = pneg %p123
      %p333 = pneg %p147
      %p334 = pneg %p144
      %p335 = pneg %p168
      %p336 = pneg %p165
      %p337 = pneg %p189
      %p338 = pneg %p186
      %p339 = pneg %p210
      %p340 = pneg %p207
      %p341 = pneg %p231
      %p342 = pneg %p228
      %p343 = pneg %p257
      %p344 = pneg %p254
      %p345 = scmp.lt.s32.totalorder %s21, 1
      %s346 = scalar_select %p345, %s21, 1
      %s347 = smul.addr %s346, 2
      %s348 = smul.addr %s347, 8
      %s349 = scalar_lea.vmem %s10, %s348
      %p350 = scmp.lt.s32.totalorder %s21, 1
      %s351 = scalar_select %p350, %s21, 1
      %s352 = smul.addr %s351, 4
      %s353 = smul.addr %s352, 8
      %s354 = scalar_lea.vmem %s0, %s353
      %p355 = scmp.lt.s32.totalorder %s21, 1
      %s356 = scalar_select %p355, %s21, 1
      %s357 = smul.addr %s356, 2
      %s358 = smul.addr %s357, 8
      %s359 = scalar_lea.vmem %s10, %s358
      %v361 = vlaneseq
      %v362 = vand.u32 %v361, 127
      %vm363 = vcmp.ge.s32.totalorder %v362, 0
      %vm364 = vcmp.lt.s32.totalorder %v362, 16
      %vm365 = vmand %vm363, %vm364
      %v366 = vsel %vm365, 1, 0
      %v367 = vcvt.s32.f32 %v366
      %vm368 = vcmp.ge.s32.totalorder %v362, 16
      %vm369 = vcmp.lt.s32.totalorder %v362, 32
      %vm370 = vmand %vm368, %vm369
      %v371 = vsel %vm370, 1, 0
      %v372 = vcvt.s32.f32 %v371
      %vm373 = vcmp.ge.s32.totalorder %v362, 32
      %vm374 = vcmp.lt.s32.totalorder %v362, 48
      %vm375 = vmand %vm373, %vm374
      %v376 = vsel %vm375, 1, 0
      %v377 = vcvt.s32.f32 %v376
      %vm378 = vcmp.ge.s32.totalorder %v362, 48
      %vm379 = vcmp.lt.s32.totalorder %v362, 64
      %vm380 = vmand %vm378, %vm379
      %v381 = vsel %vm380, 1, 0
      %v382 = vcvt.s32.f32 %v381
      %v383 = vsel %vm379, 1, 0
      %v384 = vcvt.s32.f32 %v383
      %v385 = vld [vmem:[%s9] ss:$0 sm:$0xff]
      %v386 = vld [vmem:[%s9 + $0x1] ss:$0 sm:$0xff]
      %v387 = vld [vmem:[%s354] sm:$0xff]
      %v388 = vld [vmem:[%s354 + $0x8] sm:$0xff]
      %v389 = vld [vmem:[%s354 + $0x10] sm:$0xff]
      %v390 = vld [vmem:[%s354 + $0x18] sm:$0xff]
      %v391 = vpack.c.bf16 %v389, %v387
      %v392 = vpack.c.bf16 %v390, %v388
      %v393 = vld [vmem:[%s3] sm:$0xf]
      %v394 = vld [vmem:[%s3 + $0x4] sm:$0xf]
      %v395 = vld [vmem:[%s3 + $0x8] sm:$0xf]
      %v396 = vld [vmem:[%s3 + $0xc] sm:$0xf]
      %v397 = vld [vmem:[%s3 + $0x10] sm:$0xf]
      %v398 = vld [vmem:[%s3 + $0x14] sm:$0xf]
      %v399 = vld [vmem:[%s3 + $0x18] sm:$0xf]
      %v400 = vld [vmem:[%s3 + $0x1c] sm:$0xf]
      %v401 = vld [vmem:[%s3 + $0x20] sm:$0xf]
      %v402 = vld [vmem:[%s3 + $0x24] sm:$0xf]
      %v403 = vld [vmem:[%s3 + $0x28] sm:$0xf]
      %v404 = vld [vmem:[%s3 + $0x2c] sm:$0xf]
      %v405 = vld [vmem:[%s3 + $0x30] sm:$0xf]
      %v406 = vld [vmem:[%s3 + $0x34] sm:$0xf]
      %v407 = vld [vmem:[%s3 + $0x38] sm:$0xf]
      %v408 = vld [vmem:[%s3 + $0x3c] sm:$0xf]
      %v409 = vld [vmem:[%s3 + $0x40] sm:$0xf]
      %v410 = vld [vmem:[%s3 + $0x44] sm:$0xf]
      %v429 = vunpack.c.l.b16 %v393
      %v430 = vunpack.c.l.b16 %v394
      %v431 = vunpack.c.l.b16 %v395
      %v432 = vunpack.c.l.b16 %v396
      %v433 = vunpack.c.l.b16 %v397
      %v434 = vunpack.c.l.b16 %v398
      %v435 = vunpack.c.l.b16 %v399
      %v436 = vunpack.c.l.b16 %v400
      %v437 = vunpack.c.l.b16 %v401
      %v438 = vunpack.c.l.b16 %v402
      %v439 = vunpack.c.l.b16 %v403
      %v440 = vunpack.c.l.b16 %v404
      %v441 = vunpack.c.l.b16 %v405
      %v442 = vunpack.c.l.b16 %v406
      %v443 = vunpack.c.l.b16 %v407
      %v444 = vunpack.c.l.b16 %v408
      %v445 = vunpack.c.l.b16 %v409
      %v446 = vunpack.c.l.b16 %v410
      %v447 = vpack.c.b16 %v430, %v429
      %v448 = vpack.c.b16 %v432, %v431
      %v449 = vpack.c.b16 %v434, %v433
      %v450 = vpack.c.b16 %v436, %v435
      %v451 = vpack.c.b16 %v438, %v437
      %v452 = vpack.c.b16 %v440, %v439
      %v453 = vpack.c.b16 %v442, %v441
      %v454 = vpack.c.b16 %v444, %v443
      %v455 = vpack.c.b16 %v446, %v445
      %vm465 = vcmask 130048
      %v467 = vsel %vm465, %v392, 0
      %469 = vmatprep.subr.bf16.mxu0 0
      %470 = vmatpush1.bf16.msra.mxu0 %v454
      %471 = vmatprep.subr.bf16.mxu0 0
      %472 = vmatpush1.bf16.msra.mxu0 %v453
      %473 = vmatprep.subr.bf16.mxu0 0
      %474 = vmatpush1.bf16.msra.mxu0 %v452
      %475 = vmatprep.subr.bf16.mxu0 0
      %476 = vmatpush1.bf16.msra.mxu0 %v451
      %477 = vmatprep.subr.bf16.mxu0 0
      %478 = vmatpush1.bf16.msra.mxu0 %v450
      %479 = vmatprep.subr.bf16.mxu0 0
      %480 = vmatpush1.bf16.msra.mxu0 %v449
      %481 = vmatprep.subr.bf16.mxu0 0
      %482 = vmatpush1.bf16.msra.mxu0 %v448
      %483 = vmatprep.subr.bf16.mxu0 0
      %484 = vmatpush1.bf16.msra.mxu0 %v447
      %485 = vmatprep.subr.bf16.mxu0 0
      %486 = vmatpush2.bf16.msra.mxu0 0
      %487 = vmatprep.subr.bf16.mxu0 0
      %488 = vmatpush2.bf16.msra.mxu0 0
      %489 = vmatprep.subr.bf16.mxu0 0
      %490 = vmatpush2.bf16.msra.mxu0 0
      %491 = vmatprep.subr.bf16.mxu0 0
      %492 = vmatpush2.bf16.msra.mxu0 0
      %493 = vmatprep.subr.bf16.mxu0 0
      %494 = vmatpush2.bf16.msra.mxu0 0
      %495 = vmatprep.subr.bf16.mxu0 0
      %496 = vmatpush2.bf16.msra.mxu0 0
      %497 = vmatprep.subr.bf16.mxu0 0
      %498 = vmatpush2.bf16.msra.mxu0 0
      %499 = vmatprep.subr.bf16.mxu0 0
      %500 = vmatpush2.bf16.msra.mxu0 %v455
      %501 = vmatprep.mubr.bf16.mxu0 %v467
      %502 = vmatmul.mubr.bf16.gmra.mxu0 %v391
      %v503 = vpop.f32.mrf.mxu0
      %v504 = vadd.f32 %v385, %v503
      %v505 = vpop.f32.mrf.mxu0
      %v506 = vpop.f32.mrf.mxu0
      %v507 = vadd.f32 %v385, %v506
      %v508 = vpop.f32.mrf.mxu0
      %509 = vdwg.mxu0
      %v510 = vmax.f32 %v504, 0.0
      %v511 = vmax.f32 %v507, 0.0
      %v512 = vpack.c.bf16 %v511, %v510
      %v513 = vld [vmem:[%s4] sm:$0xf]
      %v514 = vld [vmem:[%s4 + $0x4] sm:$0xf]
      %v515 = vld [vmem:[%s4 + $0x8] sm:$0xf]
      %v516 = vld [vmem:[%s4 + $0xc] sm:$0xf]
      %v517 = vld [vmem:[%s4 + $0x10] sm:$0xf]
      %v518 = vld [vmem:[%s4 + $0x14] sm:$0xf]
      %v519 = vld [vmem:[%s4 + $0x18] sm:$0xf]
      %v520 = vld [vmem:[%s4 + $0x1c] sm:$0xf]
      %v521 = vld [vmem:[%s4 + $0x20] sm:$0xf]
      %v522 = vld [vmem:[%s4 + $0x24] sm:$0xf]
      %v523 = vld [vmem:[%s4 + $0x28] sm:$0xf]
      %v524 = vld [vmem:[%s4 + $0x2c] sm:$0xf]
      %v525 = vld [vmem:[%s4 + $0x30] sm:$0xf]
      %v526 = vld [vmem:[%s4 + $0x34] sm:$0xf]
      %v527 = vld [vmem:[%s4 + $0x38] sm:$0xf]
      %v528 = vld [vmem:[%s4 + $0x3c] sm:$0xf]
      %v545 = vunpack.c.l.b16 %v513
      %v546 = vunpack.c.l.b16 %v514
      %v547 = vunpack.c.l.b16 %v515
      %v548 = vunpack.c.l.b16 %v516
      %v549 = vunpack.c.l.b16 %v517
      %v550 = vunpack.c.l.b16 %v518
      %v551 = vunpack.c.l.b16 %v519
      %v552 = vunpack.c.l.b16 %v520
      %v553 = vunpack.c.l.b16 %v521
      %v554 = vunpack.c.l.b16 %v522
      %v555 = vunpack.c.l.b16 %v523
      %v556 = vunpack.c.l.b16 %v524
      %v557 = vunpack.c.l.b16 %v525
      %v558 = vunpack.c.l.b16 %v526
      %v559 = vunpack.c.l.b16 %v527
      %v560 = vunpack.c.l.b16 %v528
      %v561 = vpack.c.b16 %v546, %v545
      %v562 = vpack.c.b16 %v548, %v547
      %v563 = vpack.c.b16 %v550, %v549
      %v564 = vpack.c.b16 %v552, %v551
      %v565 = vpack.c.b16 %v554, %v553
      %v566 = vpack.c.b16 %v556, %v555
      %v567 = vpack.c.b16 %v558, %v557
      %v568 = vpack.c.b16 %v560, %v559
      %577 = vmatprep.subr.bf16.mxu0 0
      %578 = vmatpush1.bf16.msra.mxu0 %v568
      %579 = vmatprep.subr.bf16.mxu0 0
      %580 = vmatpush1.bf16.msra.mxu0 %v567
      %581 = vmatprep.subr.bf16.mxu0 0
      %582 = vmatpush1.bf16.msra.mxu0 %v566
      %583 = vmatprep.subr.bf16.mxu0 0
      %584 = vmatpush1.bf16.msra.mxu0 %v565
      %585 = vmatprep.subr.bf16.mxu0 0
      %586 = vmatpush1.bf16.msra.mxu0 %v564
      %587 = vmatprep.subr.bf16.mxu0 0
      %588 = vmatpush1.bf16.msra.mxu0 %v563
      %589 = vmatprep.subr.bf16.mxu0 0
      %590 = vmatpush1.bf16.msra.mxu0 %v562
      %591 = vmatprep.subr.bf16.mxu0 0
      %592 = vmatpush1.bf16.msra.mxu0 %v561
      %593 = vmatprep.subr.bf16.mxu0 0
      %594 = vmatpush2.bf16.msra.mxu0 0
      %595 = vmatprep.subr.bf16.mxu0 0
      %596 = vmatpush2.bf16.msra.mxu0 0
      %597 = vmatprep.subr.bf16.mxu0 0
      %598 = vmatpush2.bf16.msra.mxu0 0
      %599 = vmatprep.subr.bf16.mxu0 0
      %600 = vmatpush2.bf16.msra.mxu0 0
      %601 = vmatprep.subr.bf16.mxu0 0
      %602 = vmatpush2.bf16.msra.mxu0 0
      %603 = vmatprep.subr.bf16.mxu0 0
      %604 = vmatpush2.bf16.msra.mxu0 0
      %605 = vmatprep.subr.bf16.mxu0 0
      %606 = vmatpush2.bf16.msra.mxu0 0
      %607 = vmatprep.subr.bf16.mxu0 0
      %608 = vmatpush2.bf16.msra.mxu0 0
      %609 = vmatprep.mubr.bf16.mxu0 0
      %610 = vmatmul.mubr.bf16.gmra.mxu0 %v512
      %v611 = vpop.f32.mrf.mxu0
      %v612 = vadd.f32 %v386, %v611
      %v613 = vpop.f32.mrf.mxu0
      %v614 = vpop.f32.mrf.mxu0
      %v615 = vadd.f32 %v386, %v614
      %v616 = vpop.f32.mrf.mxu0
      %617 = vdwg.mxu0
      %v618 = vld [vmem:[%s1] sm:$0xff]
      %v619 = vld [vmem:[%s1 + $0x8] sm:$0xff]
      %v620 = vld [vmem:[%s6] ss:$8 sm:$0x3]
      %v621 = vld [vmem:[%s6 + $0x1] ss:$0 sm:$0xff]
      %v622 = vld [vmem:[%s6 + $0x2] ss:$0 sm:$0xff]
      %v623 = vld [vmem:[%s6 + $0x3] ss:$0 sm:$0xff]
      %v624 = vld [vmem:[%s6 + $0x4] ss:$0 sm:$0xff]
      %v625 = vld [vmem:[%s6 + $0x5] ss:$0 sm:$0xff]
      %v626 = vld [vmem:[%s6 + $0x6] ss:$0 sm:$0xff]
      %v627 = vld [vmem:[%s6 + $0x7] ss:$0 sm:$0xff]
      %v628 = vld [vmem:[%s6 + $0x10] ss:$0 sm:$0xff]
      %v629 = vadd.f32 %v612, %v618
      %v630 = vadd.f32 %v615, %v619
      %v631 = vpack.c.bf16 %v630, %v629
      %v632 = vpack.c.bf16 %v615, %v612
      %v633 = vld [vmem:[%s5] sm:$0xff]
      %v634 = vld [vmem:[%s5 + $0x18] sm:$0xff]
      %v635 = vld [vmem:[%s5 + $0x30] sm:$0xff]
      %v636 = vld [vmem:[%s5 + $0x48] sm:$0xff]
      %v637 = vld [vmem:[%s5 + $0x60] sm:$0xff]
      %v638 = vld [vmem:[%s5 + $0x78] sm:$0xff]
      %v639 = vld [vmem:[%s5 + $0x90] sm:$0xff]
      %v640 = vld [vmem:[%s5 + $0xa8] sm:$0xff]
      %v641 = vld [vmem:[%s5 + $0xc0] sm:$0xff]
      %v642 = vld [vmem:[%s5 + $0xd8] sm:$0xff]
      %v643 = vld [vmem:[%s5 + $0xf0] sm:$0xff]
      %v644 = vld [vmem:[%s5 + $0x108] sm:$0xff]
      %v645 = vld [vmem:[%s5 + $0x120] sm:$0xff]
      %v646 = vld [vmem:[%s5 + $0x138] sm:$0xff]
      %v647 = vld [vmem:[%s5 + $0x150] sm:$0xff]
      %v648 = vld [vmem:[%s5 + $0x168] sm:$0xff]
      %v650 = vlaneseq
      %v651 = vshrl.u32 %v650, 7
      %v652 = vsub.s32 0, %v651
      %v653 = vrot.slane %v620, %v652
      %v654 = vlaneseq
      %v655 = vshrl.u32 %v654, 7
      %v656 = vsub.s32 1, %v655
      %v657 = vrot.slane %v620, %v656
      %v676 = vunpack.c.l.b16 %v633
      %v677 = vunpack.c.h.b16 %v633
      %v678 = vunpack.c.l.b16 %v634
      %v679 = vunpack.c.h.b16 %v634
      %v680 = vunpack.c.l.b16 %v635
      %v681 = vunpack.c.h.b16 %v635
      %v682 = vunpack.c.l.b16 %v636
      %v683 = vunpack.c.h.b16 %v636
      %v684 = vunpack.c.l.b16 %v637
      %v685 = vunpack.c.h.b16 %v637
      %v686 = vunpack.c.l.b16 %v638
      %v687 = vunpack.c.h.b16 %v638
      %v688 = vunpack.c.l.b16 %v639
      %v689 = vunpack.c.h.b16 %v639
      %v690 = vunpack.c.l.b16 %v640
      %v691 = vunpack.c.h.b16 %v640
      %v692 = vunpack.c.l.b16 %v641
      %v693 = vunpack.c.h.b16 %v641
      %v694 = vunpack.c.l.b16 %v642
      %v695 = vunpack.c.h.b16 %v642
      %v696 = vunpack.c.l.b16 %v643
      %v697 = vunpack.c.h.b16 %v643
      %v698 = vunpack.c.l.b16 %v644
      %v699 = vunpack.c.h.b16 %v644
      %v700 = vunpack.c.l.b16 %v645
      %v701 = vunpack.c.h.b16 %v645
      %v702 = vunpack.c.l.b16 %v646
      %v703 = vunpack.c.h.b16 %v646
      %v704 = vunpack.c.l.b16 %v647
      %v705 = vunpack.c.h.b16 %v647
      %v706 = vunpack.c.l.b16 %v648
      %v707 = vunpack.c.h.b16 %v648
      %v708 = vpack.c.b16 %v678, %v676
      %v709 = vpack.c.b16 %v679, %v677
      %v710 = vpack.c.b16 %v682, %v680
      %v711 = vpack.c.b16 %v683, %v681
      %v712 = vpack.c.b16 %v686, %v684
      %v713 = vpack.c.b16 %v687, %v685
      %v714 = vpack.c.b16 %v690, %v688
      %v715 = vpack.c.b16 %v691, %v689
      %v716 = vpack.c.b16 %v694, %v692
      %v717 = vpack.c.b16 %v695, %v693
      %v718 = vpack.c.b16 %v698, %v696
      %v719 = vpack.c.b16 %v699, %v697
      %v720 = vpack.c.b16 %v702, %v700
      %v721 = vpack.c.b16 %v703, %v701
      %v722 = vpack.c.b16 %v706, %v704
      %v723 = vpack.c.b16 %v707, %v705
      %740 = vmatprep.subr.bf16.mxu0 %v723
      %741 = vmatpush1.bf16.msra.mxu0 %v722
      %742 = vmatprep.subr.bf16.mxu0 %v721
      %743 = vmatpush1.bf16.msra.mxu0 %v720
      %744 = vmatprep.subr.bf16.mxu0 %v719
      %745 = vmatpush1.bf16.msra.mxu0 %v718
      %746 = vmatprep.subr.bf16.mxu0 %v717
      %747 = vmatpush1.bf16.msra.mxu0 %v716
      %748 = vmatprep.subr.bf16.mxu0 %v715
      %749 = vmatpush1.bf16.msra.mxu0 %v714
      %750 = vmatprep.subr.bf16.mxu0 %v713
      %751 = vmatpush1.bf16.msra.mxu0 %v712
      %752 = vmatprep.subr.bf16.mxu0 %v711
      %753 = vmatpush1.bf16.msra.mxu0 %v710
      %754 = vmatprep.subr.bf16.mxu0 %v709
      %755 = vmatpush1.bf16.msra.mxu0 %v708
      %756 = vmatprep.subr.bf16.mxu0 0
      %757 = vmatpush2.bf16.msra.mxu0 0
      %758 = vmatprep.subr.bf16.mxu0 0
      %759 = vmatpush2.bf16.msra.mxu0 0
      %760 = vmatprep.subr.bf16.mxu0 0
      %761 = vmatpush2.bf16.msra.mxu0 0
      %762 = vmatprep.subr.bf16.mxu0 0
      %763 = vmatpush2.bf16.msra.mxu0 0
      %764 = vmatprep.subr.bf16.mxu0 0
      %765 = vmatpush2.bf16.msra.mxu0 0
      %766 = vmatprep.subr.bf16.mxu0 0
      %767 = vmatpush2.bf16.msra.mxu0 0
      %768 = vmatprep.subr.bf16.mxu0 0
      %769 = vmatpush2.bf16.msra.mxu0 0
      %770 = vmatprep.subr.bf16.mxu0 0
      %771 = vmatpush2.bf16.msra.mxu0 0
      %772 = vmatprep.mubr.bf16.mxu0 0
      %773 = vmatmul.mubr.bf16.gmra.mxu0 %v631
      %v774 = vpop.f32.mrf.mxu0
      %v775 = vadd.f32 %v653, %v774
      %v776 = vpop.f32.mrf.mxu0
      %v777 = vadd.f32 %v657, %v776
      %v778 = vpop.f32.mrf.mxu0
      %v779 = vadd.f32 %v653, %v778
      %v780 = vpop.f32.mrf.mxu0
      %v781 = vadd.f32 %v657, %v780
      %782 = vdwg.mxu0
      %v783 = vld [vmem:[%s5 + $0x8] sm:$0xf]
      %v784 = vld [vmem:[%s5 + $0x20] sm:$0xf]
      %v785 = vld [vmem:[%s5 + $0x38] sm:$0xf]
      %v786 = vld [vmem:[%s5 + $0x50] sm:$0xf]
      %v787 = vld [vmem:[%s5 + $0x68] sm:$0xf]
      %v788 = vld [vmem:[%s5 + $0x80] sm:$0xf]
      %v789 = vld [vmem:[%s5 + $0x98] sm:$0xf]
      %v790 = vld [vmem:[%s5 + $0xb0] sm:$0xf]
      %v791 = vld [vmem:[%s5 + $0xc8] sm:$0xf]
      %v792 = vld [vmem:[%s5 + $0xe0] sm:$0xf]
      %v793 = vld [vmem:[%s5 + $0xf8] sm:$0xf]
      %v794 = vld [vmem:[%s5 + $0x110] sm:$0xf]
      %v795 = vld [vmem:[%s5 + $0x128] sm:$0xf]
      %v796 = vld [vmem:[%s5 + $0x140] sm:$0xf]
      %v797 = vld [vmem:[%s5 + $0x158] sm:$0xf]
      %v798 = vld [vmem:[%s5 + $0x170] sm:$0xf]
      %v815 = vunpack.c.l.b16 %v783
      %v816 = vunpack.c.l.b16 %v784
      %v817 = vunpack.c.l.b16 %v785
      %v818 = vunpack.c.l.b16 %v786
      %v819 = vunpack.c.l.b16 %v787
      %v820 = vunpack.c.l.b16 %v788
      %v821 = vunpack.c.l.b16 %v789
      %v822 = vunpack.c.l.b16 %v790
      %v823 = vunpack.c.l.b16 %v791
      %v824 = vunpack.c.l.b16 %v792
      %v825 = vunpack.c.l.b16 %v793
      %v826 = vunpack.c.l.b16 %v794
      %v827 = vunpack.c.l.b16 %v795
      %v828 = vunpack.c.l.b16 %v796
      %v829 = vunpack.c.l.b16 %v797
      %v830 = vunpack.c.l.b16 %v798
      %v831 = vpack.c.b16 %v816, %v815
      %v832 = vpack.c.b16 %v818, %v817
      %v833 = vpack.c.b16 %v820, %v819
      %v834 = vpack.c.b16 %v822, %v821
      %v835 = vpack.c.b16 %v824, %v823
      %v836 = vpack.c.b16 %v826, %v825
      %v837 = vpack.c.b16 %v828, %v827
      %v838 = vpack.c.b16 %v830, %v829
      %847 = vmatprep.subr.bf16.mxu0 0
      %848 = vmatpush1.bf16.msra.mxu0 %v838
      %849 = vmatprep.subr.bf16.mxu0 0
      %850 = vmatpush1.bf16.msra.mxu0 %v837
      %851 = vmatprep.subr.bf16.mxu0 0
      %852 = vmatpush1.bf16.msra.mxu0 %v836
      %853 = vmatprep.subr.bf16.mxu0 0
      %854 = vmatpush1.bf16.msra.mxu0 %v835
      %855 = vmatprep.subr.bf16.mxu0 0
      %856 = vmatpush1.bf16.msra.mxu0 %v834
      %857 = vmatprep.subr.bf16.mxu0 0
      %858 = vmatpush1.bf16.msra.mxu0 %v833
      %859 = vmatprep.subr.bf16.mxu0 0
      %860 = vmatpush1.bf16.msra.mxu0 %v832
      %861 = vmatprep.subr.bf16.mxu0 0
      %862 = vmatpush1.bf16.msra.mxu0 %v831
      %863 = vmatprep.subr.bf16.mxu0 0
      %864 = vmatpush2.bf16.msra.mxu0 0
      %865 = vmatprep.subr.bf16.mxu0 0
      %866 = vmatpush2.bf16.msra.mxu0 0
      %867 = vmatprep.subr.bf16.mxu0 0
      %868 = vmatpush2.bf16.msra.mxu0 0
      %869 = vmatprep.subr.bf16.mxu0 0
      %870 = vmatpush2.bf16.msra.mxu0 0
      %871 = vmatprep.subr.bf16.mxu0 0
      %872 = vmatpush2.bf16.msra.mxu0 0
      %873 = vmatprep.subr.bf16.mxu0 0
      %874 = vmatpush2.bf16.msra.mxu0 0
      %875 = vmatprep.subr.bf16.mxu0 0
      %876 = vmatpush2.bf16.msra.mxu0 0
      %877 = vmatprep.subr.bf16.mxu0 0
      %878 = vmatpush2.bf16.msra.mxu0 0
      %879 = vmatprep.mubr.bf16.mxu0 0
      %880 = vmatmul.mubr.bf16.gmra.mxu0 %v632
      %v881 = vpop.f32.mrf.mxu0
      %v882 = vadd.f32 %v621, %v881
      %v883 = vpop.f32.mrf.mxu0
      %v884 = vpop.f32.mrf.mxu0
      %v885 = vadd.f32 %v621, %v884
      %v886 = vpop.f32.mrf.mxu0
      %887 = vdwg.mxu0
      %v888 = vpack.c.bf16 %v781, %v777
      %v889 = vmul.f32 %v775, %v367
      %v890 = vmul.f32 %v779, %v367
      %v891 = vpack.c.bf16 %v890, %v889
      %892 = vmatprep.subr.bf16.mxu0 0
      %893 = vmatpush1.bf16.xpose.msra.mxu0 0
      %894 = vmatprep.subr.bf16.mxu0 0
      %895 = vmatpush1.bf16.xpose.msra.mxu0 0
      %896 = vmatprep.subr.bf16.mxu0 0
      %897 = vmatpush1.bf16.xpose.msra.mxu0 0
      %898 = vmatprep.subr.bf16.mxu0 0
      %899 = vmatpush1.bf16.xpose.msra.mxu0 0
      %900 = vmatprep.subr.bf16.mxu0 0
      %901 = vmatpush1.bf16.xpose.msra.mxu0 0
      %902 = vmatprep.subr.bf16.mxu0 0
      %903 = vmatpush1.bf16.xpose.msra.mxu0 0
      %904 = vmatprep.subr.bf16.mxu0 0
      %905 = vmatpush1.bf16.xpose.msra.mxu0 0
      %906 = vmatprep.subr.bf16.mxu0 0
      %907 = vmatpush1.bf16.xpose.msra.mxu0 %v888
      %908 = vmatprep.subr.bf16.mxu0 0
      %909 = vmatpush2.bf16.xpose.msra.mxu0 0
      %910 = vmatprep.subr.bf16.mxu0 0
      %911 = vmatpush2.bf16.xpose.msra.mxu0 0
      %912 = vmatprep.subr.bf16.mxu0 0
      %913 = vmatpush2.bf16.xpose.msra.mxu0 0
      %914 = vmatprep.subr.bf16.mxu0 0
      %915 = vmatpush2.bf16.xpose.msra.mxu0 0
      %916 = vmatprep.subr.bf16.mxu0 0
      %917 = vmatpush2.bf16.xpose.msra.mxu0 0
      %918 = vmatprep.subr.bf16.mxu0 0
      %919 = vmatpush2.bf16.xpose.msra.mxu0 0
      %920 = vmatprep.subr.bf16.mxu0 0
      %921 = vmatpush2.bf16.xpose.msra.mxu0 0
      %922 = vmatprep.subr.bf16.mxu0 0
      %923 = vmatpush2.bf16.xpose.msra.mxu0 0
      %924 = vmatprep.mubr.bf16.mxu0 0
      %925 = vmatmul.mubr.bf16.gmra.mxu0 %v891
      %v926 = vpop.f32.mrf.mxu0
      %v927 = vadd.f32 0.0, %v926
      %v928 = vpop.f32.mrf.mxu0
      %v929 = vpop.f32.mrf.mxu0
      %v930 = vadd.f32 0.0, %v929
      %v931 = vpop.f32.mrf.mxu0
      %932 = vdwg.mxu0
      %v933 = vsel %vm465, %v927, -inf
      %934 = vmax.xlane.f32.xlu0 %v933
      %v935 = vpop.xlane.xlu0 %934
      %v936 = vsel %vm465, %v930, -inf
      %937 = vmax.xlane.f32.xlu0 %v936
      %v938 = vpop.xlane.xlu0 %937
      %v939 = vsub.f32 %v927, %v935
      %v940 = vsub.f32 %v930, %v938
      %v941 = vmul.f32 %v939, 1.442695
      %v942 = vpow.pop %v941
      %v943 = vmul.f32 %v940, 1.442695
      %v944 = vpow.pop %v943
      %v945 = vsel %vm465, %v942, 0.0
      %946 = vadd.xlane.f32.xlu0 %v945
      %v947 = vpop.xlane.xlu0 %946
      %v948 = vsel %vm465, %v944, 0.0
      %949 = vadd.xlane.f32.xlu0 %v948
      %v950 = vpop.xlane.xlu0 %949
      %v951 = vrcp.pop %v947
      %v952 = vrcp.pop %v950
      %v953 = vmul.f32 %v942, %v951
      %v954 = vmul.f32 %v944, %v952
      %v955 = vpack.c.bf16 %v954, %v953
      %v956 = vmul.f32 %v882, %v367
      %v957 = vmul.f32 %v885, %v367
      %v958 = vpack.c.bf16 %v957, %v956
      %v959 = vmul.f32 %v775, %v372
      %v960 = vmul.f32 %v779, %v372
      %v961 = vpack.c.bf16 %v960, %v959
      %962 = vmatprep.subr.bf16.mxu0 0
      %963 = vmatpush1.bf16.xpose.msra.mxu0 0
      %964 = vmatprep.subr.bf16.mxu0 0
      %965 = vmatpush1.bf16.xpose.msra.mxu0 0
      %966 = vmatprep.subr.bf16.mxu0 0
      %967 = vmatpush1.bf16.xpose.msra.mxu0 0
      %968 = vmatprep.subr.bf16.mxu0 0
      %969 = vmatpush1.bf16.xpose.msra.mxu0 0
      %970 = vmatprep.subr.bf16.mxu0 0
      %971 = vmatpush1.bf16.xpose.msra.mxu0 0
      %972 = vmatprep.subr.bf16.mxu0 0
      %973 = vmatpush1.bf16.xpose.msra.mxu0 0
      %974 = vmatprep.subr.bf16.mxu0 0
      %975 = vmatpush1.bf16.xpose.msra.mxu0 0
      %976 = vmatprep.subr.bf16.mxu0 0
      %977 = vmatpush1.bf16.xpose.msra.mxu0 %v888
      %978 = vmatprep.subr.bf16.mxu0 0
      %979 = vmatpush2.bf16.xpose.msra.mxu0 0
      %980 = vmatprep.subr.bf16.mxu0 0
      %981 = vmatpush2.bf16.xpose.msra.mxu0 0
      %982 = vmatprep.subr.bf16.mxu0 0
      %983 = vmatpush2.bf16.xpose.msra.mxu0 0
      %984 = vmatprep.subr.bf16.mxu0 0
      %985 = vmatpush2.bf16.xpose.msra.mxu0 0
      %986 = vmatprep.subr.bf16.mxu0 0
      %987 = vmatpush2.bf16.xpose.msra.mxu0 0
      %988 = vmatprep.subr.bf16.mxu0 0
      %989 = vmatpush2.bf16.xpose.msra.mxu0 0
      %990 = vmatprep.subr.bf16.mxu0 0
      %991 = vmatpush2.bf16.xpose.msra.mxu0 0
      %992 = vmatprep.subr.bf16.mxu0 0
      %993 = vmatpush2.bf16.xpose.msra.mxu0 0
      %994 = vmatprep.mubr.bf16.mxu0 0
      %995 = vmatmul.mubr.bf16.gmra.mxu0 %v961
      %v996 = vpop.f32.mrf.mxu0
      %v997 = vadd.f32 0.0, %v996
      %v998 = vpop.f32.mrf.mxu0
      %v999 = vpop.f32.mrf.mxu0
      %v1000 = vadd.f32 0.0, %v999
      %v1001 = vpop.f32.mrf.mxu0
      %1002 = vdwg.mxu0
      %v1003 = vsel %vm465, %v997, -inf
      %1004 = vmax.xlane.f32.xlu0 %v1003
      %v1005 = vpop.xlane.xlu0 %1004
      %v1006 = vsel %vm465, %v1000, -inf
      %1007 = vmax.xlane.f32.xlu0 %v1006
      %v1008 = vpop.xlane.xlu0 %1007
      %v1009 = vsub.f32 %v997, %v1005
      %v1010 = vsub.f32 %v1000, %v1008
      %v1011 = vmul.f32 %v1009, 1.442695
      %v1012 = vpow.pop %v1011
      %v1013 = vmul.f32 %v1010, 1.442695
      %v1014 = vpow.pop %v1013
      %v1015 = vsel %vm465, %v1012, 0.0
      %1016 = vadd.xlane.f32.xlu0 %v1015
      %v1017 = vpop.xlane.xlu0 %1016
      %v1018 = vsel %vm465, %v1014, 0.0
      %1019 = vadd.xlane.f32.xlu0 %v1018
      %v1020 = vpop.xlane.xlu0 %1019
      %v1021 = vrcp.pop %v1017
      %v1022 = vrcp.pop %v1020
      %v1023 = vmul.f32 %v1012, %v1021
      %v1024 = vmul.f32 %v1014, %v1022
      %v1025 = vpack.c.bf16 %v1024, %v1023
      %v1026 = vmul.f32 %v882, %v372
      %v1027 = vmul.f32 %v885, %v372
      %v1028 = vpack.c.bf16 %v1027, %v1026
      %v1030 = vsel %vm465, %v1025, 0
      %1032 = vmatprep.subr.bf16.mxu0 0
      %1033 = vmatpush1.bf16.msra.mxu0 0
      %1034 = vmatprep.subr.bf16.mxu0 0
      %1035 = vmatpush1.bf16.msra.mxu0 0
      %1036 = vmatprep.subr.bf16.mxu0 0
      %1037 = vmatpush1.bf16.msra.mxu0 0
      %1038 = vmatprep.subr.bf16.mxu0 0
      %1039 = vmatpush1.bf16.msra.mxu0 0
      %1040 = vmatprep.subr.bf16.mxu0 0
      %1041 = vmatpush1.bf16.msra.mxu0 0
      %1042 = vmatprep.subr.bf16.mxu0 0
      %1043 = vmatpush1.bf16.msra.mxu0 0
      %1044 = vmatprep.subr.bf16.mxu0 0
      %1045 = vmatpush1.bf16.msra.mxu0 0
      %1046 = vmatprep.subr.bf16.mxu0 0
      %1047 = vmatpush1.bf16.msra.mxu0 %v1028
      %1048 = vmatprep.subr.bf16.mxu0 0
      %1049 = vmatpush2.bf16.msra.mxu0 0
      %1050 = vmatprep.subr.bf16.mxu0 0
      %1051 = vmatpush2.bf16.msra.mxu0 0
      %1052 = vmatprep.subr.bf16.mxu0 0
      %1053 = vmatpush2.bf16.msra.mxu0 0
      %1054 = vmatprep.subr.bf16.mxu0 0
      %1055 = vmatpush2.bf16.msra.mxu0 0
      %1056 = vmatprep.subr.bf16.mxu0 0
      %1057 = vmatpush2.bf16.msra.mxu0 0
      %1058 = vmatprep.subr.bf16.mxu0 0
      %1059 = vmatpush2.bf16.msra.mxu0 0
      %1060 = vmatprep.subr.bf16.mxu0 0
      %1061 = vmatpush2.bf16.msra.mxu0 0
      %1062 = vmatprep.subr.bf16.mxu0 0
      %1063 = vmatpush2.bf16.msra.mxu0 0
      %1064 = vmatprep.mubr.bf16.mxu0 0
      %1065 = vmatmul.mubr.bf16.gmra.mxu0 %v1030
      %v1066 = vpop.f32.mrf.mxu0
      %v1067 = vadd.f32 0.0, %v1066
      %v1068 = vpop.f32.mrf.mxu0
      %v1069 = vpop.f32.mrf.mxu0
      %v1070 = vadd.f32 0.0, %v1069
      %v1071 = vpop.f32.mrf.mxu0
      %1072 = vdwg.mxu0
      %v1074 = vsel %vm465, %v955, 0
      %1076 = vmatprep.subr.bf16.mxu0 0
      %1077 = vmatpush1.bf16.msra.mxu0 0
      %1078 = vmatprep.subr.bf16.mxu0 0
      %1079 = vmatpush1.bf16.msra.mxu0 0
      %1080 = vmatprep.subr.bf16.mxu0 0
      %1081 = vmatpush1.bf16.msra.mxu0 0
      %1082 = vmatprep.subr.bf16.mxu0 0
      %1083 = vmatpush1.bf16.msra.mxu0 0
      %1084 = vmatprep.subr.bf16.mxu0 0
      %1085 = vmatpush1.bf16.msra.mxu0 0
      %1086 = vmatprep.subr.bf16.mxu0 0
      %1087 = vmatpush1.bf16.msra.mxu0 0
      %1088 = vmatprep.subr.bf16.mxu0 0
      %1089 = vmatpush1.bf16.msra.mxu0 0
      %1090 = vmatprep.subr.bf16.mxu0 0
      %1091 = vmatpush1.bf16.msra.mxu0 %v958
      %1092 = vmatprep.subr.bf16.mxu0 0
      %1093 = vmatpush2.bf16.msra.mxu0 0
      %1094 = vmatprep.subr.bf16.mxu0 0
      %1095 = vmatpush2.bf16.msra.mxu0 0
      %1096 = vmatprep.subr.bf16.mxu0 0
      %1097 = vmatpush2.bf16.msra.mxu0 0
      %1098 = vmatprep.subr.bf16.mxu0 0
      %1099 = vmatpush2.bf16.msra.mxu0 0
      %1100 = vmatprep.subr.bf16.mxu0 0
      %1101 = vmatpush2.bf16.msra.mxu0 0
      %1102 = vmatprep.subr.bf16.mxu0 0
      %1103 = vmatpush2.bf16.msra.mxu0 0
      %1104 = vmatprep.subr.bf16.mxu0 0
      %1105 = vmatpush2.bf16.msra.mxu0 0
      %1106 = vmatprep.subr.bf16.mxu0 0
      %1107 = vmatpush2.bf16.msra.mxu0 0
      %1108 = vmatprep.mubr.bf16.mxu0 0
      %1109 = vmatmul.mubr.bf16.gmra.mxu0 %v1074
      %v1110 = vpop.f32.mrf.mxu0
      %v1111 = vadd.f32 %v1067, %v1110
      %v1112 = vpop.f32.mrf.mxu0
      %v1113 = vpop.f32.mrf.mxu0
      %v1114 = vadd.f32 %v1070, %v1113
      %v1115 = vpop.f32.mrf.mxu0
      %1116 = vdwg.mxu0
      %v1117 = vmul.f32 %v775, %v377
      %v1118 = vmul.f32 %v779, %v377
      %v1119 = vpack.c.bf16 %v1118, %v1117
      %1120 = vmatprep.subr.bf16.mxu0 0
      %1121 = vmatpush1.bf16.xpose.msra.mxu0 0
      %1122 = vmatprep.subr.bf16.mxu0 0
      %1123 = vmatpush1.bf16.xpose.msra.mxu0 0
      %1124 = vmatprep.subr.bf16.mxu0 0
      %1125 = vmatpush1.bf16.xpose.msra.mxu0 0
      %1126 = vmatprep.subr.bf16.mxu0 0
      %1127 = vmatpush1.bf16.xpose.msra.mxu0 0
      %1128 = vmatprep.subr.bf16.mxu0 0
      %1129 = vmatpush1.bf16.xpose.msra.mxu0 0
      %1130 = vmatprep.subr.bf16.mxu0 0
      %1131 = vmatpush1.bf16.xpose.msra.mxu0 0
      %1132 = vmatprep.subr.bf16.mxu0 0
      %1133 = vmatpush1.bf16.xpose.msra.mxu0 0
      %1134 = vmatprep.subr.bf16.mxu0 0
      %1135 = vmatpush1.bf16.xpose.msra.mxu0 %v888
      %1136 = vmatprep.subr.bf16.mxu0 0
      %1137 = vmatpush2.bf16.xpose.msra.mxu0 0
      %1138 = vmatprep.subr.bf16.mxu0 0
      %1139 = vmatpush2.bf16.xpose.msra.mxu0 0
      %1140 = vmatprep.subr.bf16.mxu0 0
      %1141 = vmatpush2.bf16.xpose.msra.mxu0 0
      %1142 = vmatprep.subr.bf16.mxu0 0
      %1143 = vmatpush2.bf16.xpose.msra.mxu0 0
      %1144 = vmatprep.subr.bf16.mxu0 0
      %1145 = vmatpush2.bf16.xpose.msra.mxu0 0
      %1146 = vmatprep.subr.bf16.mxu0 0
      %1147 = vmatpush2.bf16.xpose.msra.mxu0 0
      %1148 = vmatprep.subr.bf16.mxu0 0
      %1149 = vmatpush2.bf16.xpose.msra.mxu0 0
      %1150 = vmatprep.subr.bf16.mxu0 0
      %1151 = vmatpush2.bf16.xpose.msra.mxu0 0
      %1152 = vmatprep.mubr.bf16.mxu0 0
      %1153 = vmatmul.mubr.bf16.gmra.mxu0 %v1119
      %v1154 = vpop.f32.mrf.mxu0
      %v1155 = vadd.f32 0.0, %v1154
      %v1156 = vpop.f32.mrf.mxu0
      %v1157 = vpop.f32.mrf.mxu0
      %v1158 = vadd.f32 0.0, %v1157
      %v1159 = vpop.f32.mrf.mxu0
      %1160 = vdwg.mxu0
      %v1161 = vsel %vm465, %v1155, -inf
      %1162 = vmax.xlane.f32.xlu0 %v1161
      %v1163 = vpop.xlane.xlu0 %1162
      %v1164 = vsel %vm465, %v1158, -inf
      %1165 = vmax.xlane.f32.xlu0 %v1164
      %v1166 = vpop.xlane.xlu0 %1165
      %v1167 = vsub.f32 %v1155, %v1163
      %v1168 = vsub.f32 %v1158, %v1166
      %v1169 = vmul.f32 %v1167, 1.442695
      %v1170 = vpow.pop %v1169
      %v1171 = vmul.f32 %v1168, 1.442695
      %v1172 = vpow.pop %v1171
      %v1173 = vsel %vm465, %v1170, 0.0
      %1174 = vadd.xlane.f32.xlu0 %v1173
      %v1175 = vpop.xlane.xlu0 %1174
      %v1176 = vsel %vm465, %v1172, 0.0
      %1177 = vadd.xlane.f32.xlu0 %v1176
      %v1178 = vpop.xlane.xlu0 %1177
      %v1179 = vrcp.pop %v1175
      %v1180 = vrcp.pop %v1178
      %v1181 = vmul.f32 %v1170, %v1179
      %v1182 = vmul.f32 %v1172, %v1180
      %v1183 = vpack.c.bf16 %v1182, %v1181
      %v1184 = vmul.f32 %v882, %v377
      %v1185 = vmul.f32 %v885, %v377
      %v1186 = vpack.c.bf16 %v1185, %v1184
      %v1188 = vsel %vm465, %v1183, 0
      %1190 = vmatprep.subr.bf16.mxu0 0
      %1191 = vmatpush1.bf16.msra.mxu0 0
      %1192 = vmatprep.subr.bf16.mxu0 0
      %1193 = vmatpush1.bf16.msra.mxu0 0
      %1194 = vmatprep.subr.bf16.mxu0 0
      %1195 = vmatpush1.bf16.msra.mxu0 0
      %1196 = vmatprep.subr.bf16.mxu0 0
      %1197 = vmatpush1.bf16.msra.mxu0 0
      %1198 = vmatprep.subr.bf16.mxu0 0
      %1199 = vmatpush1.bf16.msra.mxu0 0
      %1200 = vmatprep.subr.bf16.mxu0 0
      %1201 = vmatpush1.bf16.msra.mxu0 0
      %1202 = vmatprep.subr.bf16.mxu0 0
      %1203 = vmatpush1.bf16.msra.mxu0 0
      %1204 = vmatprep.subr.bf16.mxu0 0
      %1205 = vmatpush1.bf16.msra.mxu0 %v1186
      %1206 = vmatprep.subr.bf16.mxu0 0
      %1207 = vmatpush2.bf16.msra.mxu0 0
      %1208 = vmatprep.subr.bf16.mxu0 0
      %1209 = vmatpush2.bf16.msra.mxu0 0
      %1210 = vmatprep.subr.bf16.mxu0 0
      %1211 = vmatpush2.bf16.msra.mxu0 0
      %1212 = vmatprep.subr.bf16.mxu0 0
      %1213 = vmatpush2.bf16.msra.mxu0 0
      %1214 = vmatprep.subr.bf16.mxu0 0
      %1215 = vmatpush2.bf16.msra.mxu0 0
      %1216 = vmatprep.subr.bf16.mxu0 0
      %1217 = vmatpush2.bf16.msra.mxu0 0
      %1218 = vmatprep.subr.bf16.mxu0 0
      %1219 = vmatpush2.bf16.msra.mxu0 0
      %1220 = vmatprep.subr.bf16.mxu0 0
      %1221 = vmatpush2.bf16.msra.mxu0 0
      %1222 = vmatprep.mubr.bf16.mxu0 0
      %1223 = vmatmul.mubr.bf16.gmra.mxu0 %v1188
      %v1224 = vpop.f32.mrf.mxu0
      %v1225 = vadd.f32 0.0, %v1224
      %v1226 = vpop.f32.mrf.mxu0
      %v1227 = vpop.f32.mrf.mxu0
      %v1228 = vadd.f32 0.0, %v1227
      %v1229 = vpop.f32.mrf.mxu0
      %1230 = vdwg.mxu0
      %v1231 = vadd.f32 %v1111, %v1225
      %v1232 = vadd.f32 %v1114, %v1228
      %v1233 = vmul.f32 %v775, %v382
      %v1234 = vmul.f32 %v779, %v382
      %v1235 = vpack.c.bf16 %v1234, %v1233
      %1236 = vmatprep.subr.bf16.mxu0 0
      %1237 = vmatpush1.bf16.xpose.msra.mxu0 0
      %1238 = vmatprep.subr.bf16.mxu0 0
      %1239 = vmatpush1.bf16.xpose.msra.mxu0 0
      %1240 = vmatprep.subr.bf16.mxu0 0
      %1241 = vmatpush1.bf16.xpose.msra.mxu0 0
      %1242 = vmatprep.subr.bf16.mxu0 0
      %1243 = vmatpush1.bf16.xpose.msra.mxu0 0
      %1244 = vmatprep.subr.bf16.mxu0 0
      %1245 = vmatpush1.bf16.xpose.msra.mxu0 0
      %1246 = vmatprep.subr.bf16.mxu0 0
      %1247 = vmatpush1.bf16.xpose.msra.mxu0 0
      %1248 = vmatprep.subr.bf16.mxu0 0
      %1249 = vmatpush1.bf16.xpose.msra.mxu0 0
      %1250 = vmatprep.subr.bf16.mxu0 0
      %1251 = vmatpush1.bf16.xpose.msra.mxu0 %v888
      %1252 = vmatprep.subr.bf16.mxu0 0
      %1253 = vmatpush2.bf16.xpose.msra.mxu0 0
      %1254 = vmatprep.subr.bf16.mxu0 0
      %1255 = vmatpush2.bf16.xpose.msra.mxu0 0
      %1256 = vmatprep.subr.bf16.mxu0 0
      %1257 = vmatpush2.bf16.xpose.msra.mxu0 0
      %1258 = vmatprep.subr.bf16.mxu0 0
      %1259 = vmatpush2.bf16.xpose.msra.mxu0 0
      %1260 = vmatprep.subr.bf16.mxu0 0
      %1261 = vmatpush2.bf16.xpose.msra.mxu0 0
      %1262 = vmatprep.subr.bf16.mxu0 0
      %1263 = vmatpush2.bf16.xpose.msra.mxu0 0
      %1264 = vmatprep.subr.bf16.mxu0 0
      %1265 = vmatpush2.bf16.xpose.msra.mxu0 0
      %1266 = vmatprep.subr.bf16.mxu0 0
      %1267 = vmatpush2.bf16.xpose.msra.mxu0 0
      %1268 = vmatprep.mubr.bf16.mxu0 0
      %1269 = vmatmul.mubr.bf16.gmra.mxu0 %v1235
      %v1270 = vpop.f32.mrf.mxu0
      %v1271 = vadd.f32 0.0, %v1270
      %v1272 = vpop.f32.mrf.mxu0
      %v1273 = vpop.f32.mrf.mxu0
      %v1274 = vadd.f32 0.0, %v1273
      %v1275 = vpop.f32.mrf.mxu0
      %1276 = vdwg.mxu0
      %v1277 = vsel %vm465, %v1271, -inf
      %1278 = vmax.xlane.f32.xlu0 %v1277
      %v1279 = vpop.xlane.xlu0 %1278
      %v1280 = vsel %vm465, %v1274, -inf
      %1281 = vmax.xlane.f32.xlu0 %v1280
      %v1282 = vpop.xlane.xlu0 %1281
      %v1283 = vsub.f32 %v1271, %v1279
      %v1284 = vsub.f32 %v1274, %v1282
      %v1285 = vmul.f32 %v1283, 1.442695
      %v1286 = vpow.pop %v1285
      %v1287 = vmul.f32 %v1284, 1.442695
      %v1288 = vpow.pop %v1287
      %v1289 = vsel %vm465, %v1286, 0.0
      %1290 = vadd.xlane.f32.xlu0 %v1289
      %v1291 = vpop.xlane.xlu0 %1290
      %v1292 = vsel %vm465, %v1288, 0.0
      %1293 = vadd.xlane.f32.xlu0 %v1292
      %v1294 = vpop.xlane.xlu0 %1293
      %v1295 = vrcp.pop %v1291
      %v1296 = vrcp.pop %v1294
      %v1297 = vmul.f32 %v1286, %v1295
      %v1298 = vmul.f32 %v1288, %v1296
      %v1299 = vpack.c.bf16 %v1298, %v1297
      %v1300 = vmul.f32 %v882, %v382
      %v1301 = vmul.f32 %v885, %v382
      %v1302 = vpack.c.bf16 %v1301, %v1300
      %v1304 = vsel %vm465, %v1299, 0
      %1306 = vmatprep.subr.bf16.mxu0 0
      %1307 = vmatpush1.bf16.msra.mxu0 0
      %1308 = vmatprep.subr.bf16.mxu0 0
      %1309 = vmatpush1.bf16.msra.mxu0 0
      %1310 = vmatprep.subr.bf16.mxu0 0
      %1311 = vmatpush1.bf16.msra.mxu0 0
      %1312 = vmatprep.subr.bf16.mxu0 0
      %1313 = vmatpush1.bf16.msra.mxu0 0
      %1314 = vmatprep.subr.bf16.mxu0 0
      %1315 = vmatpush1.bf16.msra.mxu0 0
      %1316 = vmatprep.subr.bf16.mxu0 0
      %1317 = vmatpush1.bf16.msra.mxu0 0
      %1318 = vmatprep.subr.bf16.mxu0 0
      %1319 = vmatpush1.bf16.msra.mxu0 0
      %1320 = vmatprep.subr.bf16.mxu0 0
      %1321 = vmatpush1.bf16.msra.mxu0 %v1302
      %1322 = vmatprep.subr.bf16.mxu0 0
      %1323 = vmatpush2.bf16.msra.mxu0 0
      %1324 = vmatprep.subr.bf16.mxu0 0
      %1325 = vmatpush2.bf16.msra.mxu0 0
      %1326 = vmatprep.subr.bf16.mxu0 0
      %1327 = vmatpush2.bf16.msra.mxu0 0
      %1328 = vmatprep.subr.bf16.mxu0 0
      %1329 = vmatpush2.bf16.msra.mxu0 0
      %1330 = vmatprep.subr.bf16.mxu0 0
      %1331 = vmatpush2.bf16.msra.mxu0 0
      %1332 = vmatprep.subr.bf16.mxu0 0
      %1333 = vmatpush2.bf16.msra.mxu0 0
      %1334 = vmatprep.subr.bf16.mxu0 0
      %1335 = vmatpush2.bf16.msra.mxu0 0
      %1336 = vmatprep.subr.bf16.mxu0 0
      %1337 = vmatpush2.bf16.msra.mxu0 0
      %1338 = vmatprep.mubr.bf16.mxu0 0
      %1339 = vmatmul.mubr.bf16.gmra.mxu0 %v1304
      %v1340 = vpop.f32.mrf.mxu0
      %v1341 = vadd.f32 0.0, %v1340
      %v1342 = vpop.f32.mrf.mxu0
      %v1343 = vpop.f32.mrf.mxu0
      %v1344 = vadd.f32 0.0, %v1343
      %v1345 = vpop.f32.mrf.mxu0
      %1346 = vdwg.mxu0
      %v1347 = vadd.f32 %v1231, %v1341
      %v1348 = vadd.f32 %v1232, %v1344
      %v1349 = vpack.c.bf16 %v1348, %v1347
      %v1350 = vld [vmem:[%s5 + $0xc] sm:$0xf]
      %v1351 = vld [vmem:[%s5 + $0x24] sm:$0xf]
      %v1352 = vld [vmem:[%s5 + $0x3c] sm:$0xf]
      %v1353 = vld [vmem:[%s5 + $0x54] sm:$0xf]
      %v1354 = vld [vmem:[%s5 + $0x6c] sm:$0xf]
      %v1355 = vld [vmem:[%s5 + $0x84] sm:$0xf]
      %v1356 = vld [vmem:[%s5 + $0x9c] sm:$0xf]
      %v1357 = vld [vmem:[%s5 + $0xb4] sm:$0xf]
      %v1358 = vld [vmem:[%s5 + $0xcc] sm:$0xf]
      %v1359 = vld [vmem:[%s5 + $0xe4] sm:$0xf]
      %v1360 = vld [vmem:[%s5 + $0xfc] sm:$0xf]
      %v1361 = vld [vmem:[%s5 + $0x114] sm:$0xf]
      %v1362 = vld [vmem:[%s5 + $0x12c] sm:$0xf]
      %v1363 = vld [vmem:[%s5 + $0x144] sm:$0xf]
      %v1364 = vld [vmem:[%s5 + $0x15c] sm:$0xf]
      %v1365 = vld [vmem:[%s5 + $0x174] sm:$0xf]
      %v1382 = vunpack.c.l.b16 %v1350
      %v1383 = vunpack.c.l.b16 %v1351
      %v1384 = vunpack.c.l.b16 %v1352
      %v1385 = vunpack.c.l.b16 %v1353
      %v1386 = vunpack.c.l.b16 %v1354
      %v1387 = vunpack.c.l.b16 %v1355
      %v1388 = vunpack.c.l.b16 %v1356
      %v1389 = vunpack.c.l.b16 %v1357
      %v1390 = vunpack.c.l.b16 %v1358
      %v1391 = vunpack.c.l.b16 %v1359
      %v1392 = vunpack.c.l.b16 %v1360
      %v1393 = vunpack.c.l.b16 %v1361
      %v1394 = vunpack.c.l.b16 %v1362
      %v1395 = vunpack.c.l.b16 %v1363
      %v1396 = vunpack.c.l.b16 %v1364
      %v1397 = vunpack.c.l.b16 %v1365
      %v1398 = vpack.c.b16 %v1383, %v1382
      %v1399 = vpack.c.b16 %v1385, %v1384
      %v1400 = vpack.c.b16 %v1387, %v1386
      %v1401 = vpack.c.b16 %v1389, %v1388
      %v1402 = vpack.c.b16 %v1391, %v1390
      %v1403 = vpack.c.b16 %v1393, %v1392
      %v1404 = vpack.c.b16 %v1395, %v1394
      %v1405 = vpack.c.b16 %v1397, %v1396
      %1414 = vmatprep.subr.bf16.mxu0 0
      %1415 = vmatpush1.bf16.msra.mxu0 %v1405
      %1416 = vmatprep.subr.bf16.mxu0 0
      %1417 = vmatpush1.bf16.msra.mxu0 %v1404
      %1418 = vmatprep.subr.bf16.mxu0 0
      %1419 = vmatpush1.bf16.msra.mxu0 %v1403
      %1420 = vmatprep.subr.bf16.mxu0 0
      %1421 = vmatpush1.bf16.msra.mxu0 %v1402
      %1422 = vmatprep.subr.bf16.mxu0 0
      %1423 = vmatpush1.bf16.msra.mxu0 %v1401
      %1424 = vmatprep.subr.bf16.mxu0 0
      %1425 = vmatpush1.bf16.msra.mxu0 %v1400
      %1426 = vmatprep.subr.bf16.mxu0 0
      %1427 = vmatpush1.bf16.msra.mxu0 %v1399
      %1428 = vmatprep.subr.bf16.mxu0 0
      %1429 = vmatpush1.bf16.msra.mxu0 %v1398
      %1430 = vmatprep.subr.bf16.mxu0 0
      %1431 = vmatpush2.bf16.msra.mxu0 0
      %1432 = vmatprep.subr.bf16.mxu0 0
      %1433 = vmatpush2.bf16.msra.mxu0 0
      %1434 = vmatprep.subr.bf16.mxu0 0
      %1435 = vmatpush2.bf16.msra.mxu0 0
      %1436 = vmatprep.subr.bf16.mxu0 0
      %1437 = vmatpush2.bf16.msra.mxu0 0
      %1438 = vmatprep.subr.bf16.mxu0 0
      %1439 = vmatpush2.bf16.msra.mxu0 0
      %1440 = vmatprep.subr.bf16.mxu0 0
      %1441 = vmatpush2.bf16.msra.mxu0 0
      %1442 = vmatprep.subr.bf16.mxu0 0
      %1443 = vmatpush2.bf16.msra.mxu0 0
      %1444 = vmatprep.subr.bf16.mxu0 0
      %1445 = vmatpush2.bf16.msra.mxu0 0
      %1446 = vmatprep.mubr.bf16.mxu0 0
      %1447 = vmatmul.mubr.bf16.gmra.mxu0 %v1349
      %v1448 = vpop.f32.mrf.mxu0
      %v1449 = vadd.f32 %v622, %v1448
      %v1450 = vpop.f32.mrf.mxu0
      %v1451 = vpop.f32.mrf.mxu0
      %v1452 = vadd.f32 %v622, %v1451
      %v1453 = vpop.f32.mrf.mxu0
      %1454 = vdwg.mxu0
      %v1455 = vadd.f32 %v612, %v1449
      %v1456 = vadd.f32 %v615, %v1452
      %1457 = vadd.xlane.f32.xlu0 %v1455
      %v1458 = vpop.xlane.xlu0 %1457
      %1459 = vadd.xlane.f32.xlu0 %v1456
      %v1460 = vpop.xlane.xlu0 %1459
      %v1461 = vmul.f32 %v1458, 0.015625
      %v1462 = vmul.f32 %v1460, 0.015625
      %v1463 = vsub.f32 %v1455, %v1461
      %v1464 = vsub.f32 %v1456, %v1462
      %v1465 = vmul.f32 %v1463, %v1463
      %v1466 = vmul.f32 %v1464, %v1464
      %v1467 = vmul.f32 %v1465, %v384
      %v1468 = vmul.f32 %v1466, %v384
      %1469 = vadd.xlane.f32.xlu0 %v1467
      %v1470 = vpop.xlane.xlu0 %1469
      %1471 = vadd.xlane.f32.xlu0 %v1468
      %v1472 = vpop.xlane.xlu0 %1471
      %v1473 = vmul.f32 %v1470, 0.015625
      %v1474 = vmul.f32 %v1472, 0.015625
      %v1475 = vadd.f32 %v1473, 1e-05
      %v1476 = vadd.f32 %v1474, 1e-05
      %v1477 = vrsqrt.pop %v1475
      %v1478 = vrsqrt.pop %v1476
      %v1479 = vmul.f32 %v1463, %v1477
      %v1480 = vmul.f32 %v1464, %v1478
      %v1481 = vmul.f32 %v1479, %v623
      %v1482 = vmul.f32 %v1480, %v623
      %v1483 = vadd.f32 %v1481, %v624
      %v1484 = vadd.f32 %v1482, %v624
      %v1485 = vpack.c.bf16 %v1484, %v1483
      %v1486 = vld [vmem:[%s5 + $0x10] sm:$0xf]
      %v1487 = vld [vmem:[%s5 + $0x28] sm:$0xf]
      %v1488 = vld [vmem:[%s5 + $0x40] sm:$0xf]
      %v1489 = vld [vmem:[%s5 + $0x58] sm:$0xf]
      %v1490 = vld [vmem:[%s5 + $0x70] sm:$0xf]
      %v1491 = vld [vmem:[%s5 + $0x88] sm:$0xf]
      %v1492 = vld [vmem:[%s5 + $0xa0] sm:$0xf]
      %v1493 = vld [vmem:[%s5 + $0xb8] sm:$0xf]
      %v1494 = vld [vmem:[%s5 + $0xd0] sm:$0xf]
      %v1495 = vld [vmem:[%s5 + $0xe8] sm:$0xf]
      %v1496 = vld [vmem:[%s5 + $0x100] sm:$0xf]
      %v1497 = vld [vmem:[%s5 + $0x118] sm:$0xf]
      %v1498 = vld [vmem:[%s5 + $0x130] sm:$0xf]
      %v1499 = vld [vmem:[%s5 + $0x148] sm:$0xf]
      %v1500 = vld [vmem:[%s5 + $0x160] sm:$0xf]
      %v1501 = vld [vmem:[%s5 + $0x178] sm:$0xf]
      %v1518 = vunpack.c.l.b16 %v1486
      %v1519 = vunpack.c.l.b16 %v1487
      %v1520 = vunpack.c.l.b16 %v1488
      %v1521 = vunpack.c.l.b16 %v1489
      %v1522 = vunpack.c.l.b16 %v1490
      %v1523 = vunpack.c.l.b16 %v1491
      %v1524 = vunpack.c.l.b16 %v1492
      %v1525 = vunpack.c.l.b16 %v1493
      %v1526 = vunpack.c.l.b16 %v1494
      %v1527 = vunpack.c.l.b16 %v1495
      %v1528 = vunpack.c.l.b16 %v1496
      %v1529 = vunpack.c.l.b16 %v1497
      %v1530 = vunpack.c.l.b16 %v1498
      %v1531 = vunpack.c.l.b16 %v1499
      %v1532 = vunpack.c.l.b16 %v1500
      %v1533 = vunpack.c.l.b16 %v1501
      %v1534 = vpack.c.b16 %v1519, %v1518
      %v1535 = vpack.c.b16 %v1521, %v1520
      %v1536 = vpack.c.b16 %v1523, %v1522
      %v1537 = vpack.c.b16 %v1525, %v1524
      %v1538 = vpack.c.b16 %v1527, %v1526
      %v1539 = vpack.c.b16 %v1529, %v1528
      %v1540 = vpack.c.b16 %v1531, %v1530
      %v1541 = vpack.c.b16 %v1533, %v1532
      %1550 = vmatprep.subr.bf16.mxu0 0
      %1551 = vmatpush1.bf16.msra.mxu0 %v1541
      %1552 = vmatprep.subr.bf16.mxu0 0
      %1553 = vmatpush1.bf16.msra.mxu0 %v1540
      %1554 = vmatprep.subr.bf16.mxu0 0
      %1555 = vmatpush1.bf16.msra.mxu0 %v1539
      %1556 = vmatprep.subr.bf16.mxu0 0
      %1557 = vmatpush1.bf16.msra.mxu0 %v1538
      %1558 = vmatprep.subr.bf16.mxu0 0
      %1559 = vmatpush1.bf16.msra.mxu0 %v1537
      %1560 = vmatprep.subr.bf16.mxu0 0
      %1561 = vmatpush1.bf16.msra.mxu0 %v1536
      %1562 = vmatprep.subr.bf16.mxu0 0
      %1563 = vmatpush1.bf16.msra.mxu0 %v1535
      %1564 = vmatprep.subr.bf16.mxu0 0
      %1565 = vmatpush1.bf16.msra.mxu0 %v1534
      %1566 = vmatprep.subr.bf16.mxu0 0
      %1567 = vmatpush2.bf16.msra.mxu0 0
      %1568 = vmatprep.subr.bf16.mxu0 0
      %1569 = vmatpush2.bf16.msra.mxu0 0
      %1570 = vmatprep.subr.bf16.mxu0 0
      %1571 = vmatpush2.bf16.msra.mxu0 0
      %1572 = vmatprep.subr.bf16.mxu0 0
      %1573 = vmatpush2.bf16.msra.mxu0 0
      %1574 = vmatprep.subr.bf16.mxu0 0
      %1575 = vmatpush2.bf16.msra.mxu0 0
      %1576 = vmatprep.subr.bf16.mxu0 0
      %1577 = vmatpush2.bf16.msra.mxu0 0
      %1578 = vmatprep.subr.bf16.mxu0 0
      %1579 = vmatpush2.bf16.msra.mxu0 0
      %1580 = vmatprep.subr.bf16.mxu0 0
      %1581 = vmatpush2.bf16.msra.mxu0 0
      %1582 = vmatprep.mubr.bf16.mxu0 0
      %1583 = vmatmul.mubr.bf16.gmra.mxu0 %v1485
      %v1584 = vpop.f32.mrf.mxu0
      %v1585 = vadd.f32 %v625, %v1584
      %v1586 = vpop.f32.mrf.mxu0
      %v1587 = vpop.f32.mrf.mxu0
      %v1588 = vadd.f32 %v625, %v1587
      %v1589 = vpop.f32.mrf.mxu0
      %1590 = vdwg.mxu0
      %v1591 = vmax.f32 %v1585, 0.0
      %v1592 = vmax.f32 %v1588, 0.0
      %v1593 = vpack.c.bf16 %v1592, %v1591
      %v1594 = vld [vmem:[%s5 + $0x14] sm:$0xf]
      %v1595 = vld [vmem:[%s5 + $0x2c] sm:$0xf]
      %v1596 = vld [vmem:[%s5 + $0x44] sm:$0xf]
      %v1597 = vld [vmem:[%s5 + $0x5c] sm:$0xf]
      %v1598 = vld [vmem:[%s5 + $0x74] sm:$0xf]
      %v1599 = vld [vmem:[%s5 + $0x8c] sm:$0xf]
      %v1600 = vld [vmem:[%s5 + $0xa4] sm:$0xf]
      %v1601 = vld [vmem:[%s5 + $0xbc] sm:$0xf]
      %v1602 = vld [vmem:[%s5 + $0xd4] sm:$0xf]
      %v1603 = vld [vmem:[%s5 + $0xec] sm:$0xf]
      %v1604 = vld [vmem:[%s5 + $0x104] sm:$0xf]
      %v1605 = vld [vmem:[%s5 + $0x11c] sm:$0xf]
      %v1606 = vld [vmem:[%s5 + $0x134] sm:$0xf]
      %v1607 = vld [vmem:[%s5 + $0x14c] sm:$0xf]
      %v1608 = vld [vmem:[%s5 + $0x164] sm:$0xf]
      %v1609 = vld [vmem:[%s5 + $0x17c] sm:$0xf]
      %v1626 = vunpack.c.l.b16 %v1594
      %v1627 = vunpack.c.l.b16 %v1595
      %v1628 = vunpack.c.l.b16 %v1596
      %v1629 = vunpack.c.l.b16 %v1597
      %v1630 = vunpack.c.l.b16 %v1598
      %v1631 = vunpack.c.l.b16 %v1599
      %v1632 = vunpack.c.l.b16 %v1600
      %v1633 = vunpack.c.l.b16 %v1601
      %v1634 = vunpack.c.l.b16 %v1602
      %v1635 = vunpack.c.l.b16 %v1603
      %v1636 = vunpack.c.l.b16 %v1604
      %v1637 = vunpack.c.l.b16 %v1605
      %v1638 = vunpack.c.l.b16 %v1606
      %v1639 = vunpack.c.l.b16 %v1607
      %v1640 = vunpack.c.l.b16 %v1608
      %v1641 = vunpack.c.l.b16 %v1609
      %v1642 = vpack.c.b16 %v1627, %v1626
      %v1643 = vpack.c.b16 %v1629, %v1628
      %v1644 = vpack.c.b16 %v1631, %v1630
      %v1645 = vpack.c.b16 %v1633, %v1632
      %v1646 = vpack.c.b16 %v1635, %v1634
      %v1647 = vpack.c.b16 %v1637, %v1636
      %v1648 = vpack.c.b16 %v1639, %v1638
      %v1649 = vpack.c.b16 %v1641, %v1640
      %1658 = vmatprep.subr.bf16.mxu0 0
      %1659 = vmatpush1.bf16.msra.mxu0 %v1649
      %1660 = vmatprep.subr.bf16.mxu0 0
      %1661 = vmatpush1.bf16.msra.mxu0 %v1648
      %1662 = vmatprep.subr.bf16.mxu0 0
      %1663 = vmatpush1.bf16.msra.mxu0 %v1647
      %1664 = vmatprep.subr.bf16.mxu0 0
      %1665 = vmatpush1.bf16.msra.mxu0 %v1646
      %1666 = vmatprep.subr.bf16.mxu0 0
      %1667 = vmatpush1.bf16.msra.mxu0 %v1645
      %1668 = vmatprep.subr.bf16.mxu0 0
      %1669 = vmatpush1.bf16.msra.mxu0 %v1644
      %1670 = vmatprep.subr.bf16.mxu0 0
      %1671 = vmatpush1.bf16.msra.mxu0 %v1643
      %1672 = vmatprep.subr.bf16.mxu0 0
      %1673 = vmatpush1.bf16.msra.mxu0 %v1642
      %1674 = vmatprep.subr.bf16.mxu0 0
      %1675 = vmatpush2.bf16.msra.mxu0 0
      %1676 = vmatprep.subr.bf16.mxu0 0
      %1677 = vmatpush2.bf16.msra.mxu0 0
      %1678 = vmatprep.subr.bf16.mxu0 0
      %1679 = vmatpush2.bf16.msra.mxu0 0
      %1680 = vmatprep.subr.bf16.mxu0 0
      %1681 = vmatpush2.bf16.msra.mxu0 0
      %1682 = vmatprep.subr.bf16.mxu0 0
      %1683 = vmatpush2.bf16.msra.mxu0 0
      %1684 = vmatprep.subr.bf16.mxu0 0
      %1685 = vmatpush2.bf16.msra.mxu0 0
      %1686 = vmatprep.subr.bf16.mxu0 0
      %1687 = vmatpush2.bf16.msra.mxu0 0
      %1688 = vmatprep.subr.bf16.mxu0 0
      %1689 = vmatpush2.bf16.msra.mxu0 0
      %1690 = vmatprep.mubr.bf16.mxu0 0
      %1691 = vmatmul.mubr.bf16.gmra.mxu0 %v1593
      %v1692 = vpop.f32.mrf.mxu0
      %v1693 = vadd.f32 %v626, %v1692
      %v1694 = vpop.f32.mrf.mxu0
      %v1695 = vpop.f32.mrf.mxu0
      %v1696 = vadd.f32 %v626, %v1695
      %v1697 = vpop.f32.mrf.mxu0
      %1698 = vdwg.mxu0
      %v1699 = vadd.f32 %v1483, %v1693
      %v1700 = vadd.f32 %v1484, %v1696
      %1701 = vadd.xlane.f32.xlu0 %v1699
      %v1702 = vpop.xlane.xlu0 %1701
      %1703 = vadd.xlane.f32.xlu0 %v1700
      %v1704 = vpop.xlane.xlu0 %1703
      %v1705 = vmul.f32 %v1702, 0.015625
      %v1706 = vmul.f32 %v1704, 0.015625
      %v1707 = vsub.f32 %v1699, %v1705
      %v1708 = vsub.f32 %v1700, %v1706
      %v1709 = vmul.f32 %v1707, %v1707
      %v1710 = vmul.f32 %v1708, %v1708
      %v1711 = vmul.f32 %v1709, %v384
      %v1712 = vmul.f32 %v1710, %v384
      %1713 = vadd.xlane.f32.xlu0 %v1711
      %v1714 = vpop.xlane.xlu0 %1713
      %1715 = vadd.xlane.f32.xlu0 %v1712
      %v1716 = vpop.xlane.xlu0 %1715
      %v1717 = vmul.f32 %v1714, 0.015625
      %v1718 = vmul.f32 %v1716, 0.015625
      %v1719 = vadd.f32 %v1717, 1e-05
      %v1720 = vadd.f32 %v1718, 1e-05
      %v1721 = vrsqrt.pop %v1719
      %v1722 = vrsqrt.pop %v1720
      %v1723 = vmul.f32 %v1707, %v1721
      %v1724 = vmul.f32 %v1708, %v1722
      %v1725 = vmul.f32 %v1723, %v627
      %v1726 = vmul.f32 %v1724, %v627
      %v1727 = vadd.f32 %v1725, %v628
      %v1728 = vadd.f32 %v1726, %v628
      %s1729 = scalar_lea.vmem %s6, 32
      %v1730 = vld [vmem:[%s1729] ss:$8 sm:$0x3]
      %v1731 = vld [vmem:[%s1729 + $0x1] ss:$0 sm:$0xff]
      %v1732 = vld [vmem:[%s1729 + $0x2] ss:$0 sm:$0xff]
      %v1733 = vld [vmem:[%s1729 + $0x3] ss:$0 sm:$0xff]
      %v1734 = vld [vmem:[%s1729 + $0x4] ss:$0 sm:$0xff]
      %v1735 = vld [vmem:[%s1729 + $0x5] ss:$0 sm:$0xff]
      %v1736 = vld [vmem:[%s1729 + $0x6] ss:$0 sm:$0xff]
      %v1737 = vld [vmem:[%s1729 + $0x7] ss:$0 sm:$0xff]
      %v1738 = vld [vmem:[%s1729 + $0x10] ss:$0 sm:$0xff]
      %v1739 = vadd.f32 %v1727, %v618
      %v1740 = vadd.f32 %v1728, %v619
      %v1741 = vpack.c.bf16 %v1740, %v1739
      %v1742 = vpack.c.bf16 %v1728, %v1727
      %s1743 = scalar_lea.vmem %s5, 384
      %v1744 = vld [vmem:[%s1743] sm:$0xff]
      %v1745 = vld [vmem:[%s1743 + $0x18] sm:$0xff]
      %v1746 = vld [vmem:[%s1743 + $0x30] sm:$0xff]
      %v1747 = vld [vmem:[%s1743 + $0x48] sm:$0xff]
      %v1748 = vld [vmem:[%s1743 + $0x60] sm:$0xff]
      %v1749 = vld [vmem:[%s1743 + $0x78] sm:$0xff]
      %v1750 = vld [vmem:[%s1743 + $0x90] sm:$0xff]
      %v1751 = vld [vmem:[%s1743 + $0xa8] sm:$0xff]
      %v1752 = vld [vmem:[%s1743 + $0xc0] sm:$0xff]
      %v1753 = vld [vmem:[%s1743 + $0xd8] sm:$0xff]
      %v1754 = vld [vmem:[%s1743 + $0xf0] sm:$0xff]
      %v1755 = vld [vmem:[%s1743 + $0x108] sm:$0xff]
      %v1756 = vld [vmem:[%s1743 + $0x120] sm:$0xff]
      %v1757 = vld [vmem:[%s1743 + $0x138] sm:$0xff]
      %v1758 = vld [vmem:[%s1743 + $0x150] sm:$0xff]
      %v1759 = vld [vmem:[%s1743 + $0x168] sm:$0xff]
      %v1761 = vlaneseq
      %v1762 = vshrl.u32 %v1761, 7
      %v1763 = vsub.s32 0, %v1762
      %v1764 = vrot.slane %v1730, %v1763
      %v1765 = vlaneseq
      %v1766 = vshrl.u32 %v1765, 7
      %v1767 = vsub.s32 1, %v1766
      %v1768 = vrot.slane %v1730, %v1767
      %v1787 = vunpack.c.l.b16 %v1744
      %v1788 = vunpack.c.h.b16 %v1744
      %v1789 = vunpack.c.l.b16 %v1745
      %v1790 = vunpack.c.h.b16 %v1745
      %v1791 = vunpack.c.l.b16 %v1746
      %v1792 = vunpack.c.h.b16 %v1746
      %v1793 = vunpack.c.l.b16 %v1747
      %v1794 = vunpack.c.h.b16 %v1747
      %v1795 = vunpack.c.l.b16 %v1748
      %v1796 = vunpack.c.h.b16 %v1748
      %v1797 = vunpack.c.l.b16 %v1749
      %v1798 = vunpack.c.h.b16 %v1749
      %v1799 = vunpack.c.l.b16 %v1750
      %v1800 = vunpack.c.h.b16 %v1750
      %v1801 = vunpack.c.l.b16 %v1751
      %v1802 = vunpack.c.h.b16 %v1751
      %v1803 = vunpack.c.l.b16 %v1752
      %v1804 = vunpack.c.h.b16 %v1752
      %v1805 = vunpack.c.l.b16 %v1753
      %v1806 = vunpack.c.h.b16 %v1753
      %v1807 = vunpack.c.l.b16 %v1754
      %v1808 = vunpack.c.h.b16 %v1754
      %v1809 = vunpack.c.l.b16 %v1755
      %v1810 = vunpack.c.h.b16 %v1755
      %v1811 = vunpack.c.l.b16 %v1756
      %v1812 = vunpack.c.h.b16 %v1756
      %v1813 = vunpack.c.l.b16 %v1757
      %v1814 = vunpack.c.h.b16 %v1757
      %v1815 = vunpack.c.l.b16 %v1758
      %v1816 = vunpack.c.h.b16 %v1758
      %v1817 = vunpack.c.l.b16 %v1759
      %v1818 = vunpack.c.h.b16 %v1759
      %v1819 = vpack.c.b16 %v1789, %v1787
      %v1820 = vpack.c.b16 %v1790, %v1788
      %v1821 = vpack.c.b16 %v1793, %v1791
      %v1822 = vpack.c.b16 %v1794, %v1792
      %v1823 = vpack.c.b16 %v1797, %v1795
      %v1824 = vpack.c.b16 %v1798, %v1796
      %v1825 = vpack.c.b16 %v1801, %v1799
      %v1826 = vpack.c.b16 %v1802, %v1800
      %v1827 = vpack.c.b16 %v1805, %v1803
      %v1828 = vpack.c.b16 %v1806, %v1804
      %v1829 = vpack.c.b16 %v1809, %v1807
      %v1830 = vpack.c.b16 %v1810, %v1808
      %v1831 = vpack.c.b16 %v1813, %v1811
      %v1832 = vpack.c.b16 %v1814, %v1812
      %v1833 = vpack.c.b16 %v1817, %v1815
      %v1834 = vpack.c.b16 %v1818, %v1816
      %1851 = vmatprep.subr.bf16.mxu0 %v1834
      %1852 = vmatpush1.bf16.msra.mxu0 %v1833
      %1853 = vmatprep.subr.bf16.mxu0 %v1832
      %1854 = vmatpush1.bf16.msra.mxu0 %v1831
      %1855 = vmatprep.subr.bf16.mxu0 %v1830
      %1856 = vmatpush1.bf16.msra.mxu0 %v1829
      %1857 = vmatprep.subr.bf16.mxu0 %v1828
      %1858 = vmatpush1.bf16.msra.mxu0 %v1827
      %1859 = vmatprep.subr.bf16.mxu0 %v1826
      %1860 = vmatpush1.bf16.msra.mxu0 %v1825
      %1861 = vmatprep.subr.bf16.mxu0 %v1824
      %1862 = vmatpush1.bf16.msra.mxu0 %v1823
      %1863 = vmatprep.subr.bf16.mxu0 %v1822
      %1864 = vmatpush1.bf16.msra.mxu0 %v1821
      %1865 = vmatprep.subr.bf16.mxu0 %v1820
      %1866 = vmatpush1.bf16.msra.mxu0 %v1819
      %1867 = vmatprep.subr.bf16.mxu0 0
      %1868 = vmatpush2.bf16.msra.mxu0 0
      %1869 = vmatprep.subr.bf16.mxu0 0
      %1870 = vmatpush2.bf16.msra.mxu0 0
      %1871 = vmatprep.subr.bf16.mxu0 0
      %1872 = vmatpush2.bf16.msra.mxu0 0
      %1873 = vmatprep.subr.bf16.mxu0 0
      %1874 = vmatpush2.bf16.msra.mxu0 0
      %1875 = vmatprep.subr.bf16.mxu0 0
      %1876 = vmatpush2.bf16.msra.mxu0 0
      %1877 = vmatprep.subr.bf16.mxu0 0
      %1878 = vmatpush2.bf16.msra.mxu0 0
      %1879 = vmatprep.subr.bf16.mxu0 0
      %1880 = vmatpush2.bf16.msra.mxu0 0
      %1881 = vmatprep.subr.bf16.mxu0 0
      %1882 = vmatpush2.bf16.msra.mxu0 0
      %1883 = vmatprep.mubr.bf16.mxu0 0
      %1884 = vmatmul.mubr.bf16.gmra.mxu0 %v1741
      %v1885 = vpop.f32.mrf.mxu0
      %v1886 = vadd.f32 %v1764, %v1885
      %v1887 = vpop.f32.mrf.mxu0
      %v1888 = vadd.f32 %v1768, %v1887
      %v1889 = vpop.f32.mrf.mxu0
      %v1890 = vadd.f32 %v1764, %v1889
      %v1891 = vpop.f32.mrf.mxu0
      %v1892 = vadd.f32 %v1768, %v1891
      %1893 = vdwg.mxu0
      %v1894 = vld [vmem:[%s1743 + $0x8] sm:$0xf]
      %v1895 = vld [vmem:[%s1743 + $0x20] sm:$0xf]
      %v1896 = vld [vmem:[%s1743 + $0x38] sm:$0xf]
      %v1897 = vld [vmem:[%s1743 + $0x50] sm:$0xf]
      %v1898 = vld [vmem:[%s1743 + $0x68] sm:$0xf]
      %v1899 = vld [vmem:[%s1743 + $0x80] sm:$0xf]
      %v1900 = vld [vmem:[%s1743 + $0x98] sm:$0xf]
      %v1901 = vld [vmem:[%s1743 + $0xb0] sm:$0xf]
      %v1902 = vld [vmem:[%s1743 + $0xc8] sm:$0xf]
      %v1903 = vld [vmem:[%s1743 + $0xe0] sm:$0xf]
      %v1904 = vld [vmem:[%s1743 + $0xf8] sm:$0xf]
      %v1905 = vld [vmem:[%s1743 + $0x110] sm:$0xf]
      %v1906 = vld [vmem:[%s1743 + $0x128] sm:$0xf]
      %v1907 = vld [vmem:[%s1743 + $0x140] sm:$0xf]
      %v1908 = vld [vmem:[%s1743 + $0x158] sm:$0xf]
      %v1909 = vld [vmem:[%s1743 + $0x170] sm:$0xf]
      %v1926 = vunpack.c.l.b16 %v1894
      %v1927 = vunpack.c.l.b16 %v1895
      %v1928 = vunpack.c.l.b16 %v1896
      %v1929 = vunpack.c.l.b16 %v1897
      %v1930 = vunpack.c.l.b16 %v1898
      %v1931 = vunpack.c.l.b16 %v1899
      %v1932 = vunpack.c.l.b16 %v1900
      %v1933 = vunpack.c.l.b16 %v1901
      %v1934 = vunpack.c.l.b16 %v1902
      %v1935 = vunpack.c.l.b16 %v1903
      %v1936 = vunpack.c.l.b16 %v1904
      %v1937 = vunpack.c.l.b16 %v1905
      %v1938 = vunpack.c.l.b16 %v1906
      %v1939 = vunpack.c.l.b16 %v1907
      %v1940 = vunpack.c.l.b16 %v1908
      %v1941 = vunpack.c.l.b16 %v1909
      %v1942 = vpack.c.b16 %v1927, %v1926
      %v1943 = vpack.c.b16 %v1929, %v1928
      %v1944 = vpack.c.b16 %v1931, %v1930
      %v1945 = vpack.c.b16 %v1933, %v1932
      %v1946 = vpack.c.b16 %v1935, %v1934
      %v1947 = vpack.c.b16 %v1937, %v1936
      %v1948 = vpack.c.b16 %v1939, %v1938
      %v1949 = vpack.c.b16 %v1941, %v1940
      %1958 = vmatprep.subr.bf16.mxu0 0
      %1959 = vmatpush1.bf16.msra.mxu0 %v1949
      %1960 = vmatprep.subr.bf16.mxu0 0
      %1961 = vmatpush1.bf16.msra.mxu0 %v1948
      %1962 = vmatprep.subr.bf16.mxu0 0
      %1963 = vmatpush1.bf16.msra.mxu0 %v1947
      %1964 = vmatprep.subr.bf16.mxu0 0
      %1965 = vmatpush1.bf16.msra.mxu0 %v1946
      %1966 = vmatprep.subr.bf16.mxu0 0
      %1967 = vmatpush1.bf16.msra.mxu0 %v1945
      %1968 = vmatprep.subr.bf16.mxu0 0
      %1969 = vmatpush1.bf16.msra.mxu0 %v1944
      %1970 = vmatprep.subr.bf16.mxu0 0
      %1971 = vmatpush1.bf16.msra.mxu0 %v1943
      %1972 = vmatprep.subr.bf16.mxu0 0
      %1973 = vmatpush1.bf16.msra.mxu0 %v1942
      %1974 = vmatprep.subr.bf16.mxu0 0
      %1975 = vmatpush2.bf16.msra.mxu0 0
      %1976 = vmatprep.subr.bf16.mxu0 0
      %1977 = vmatpush2.bf16.msra.mxu0 0
      %1978 = vmatprep.subr.bf16.mxu0 0
      %1979 = vmatpush2.bf16.msra.mxu0 0
      %1980 = vmatprep.subr.bf16.mxu0 0
      %1981 = vmatpush2.bf16.msra.mxu0 0
      %1982 = vmatprep.subr.bf16.mxu0 0
      %1983 = vmatpush2.bf16.msra.mxu0 0
      %1984 = vmatprep.subr.bf16.mxu0 0
      %1985 = vmatpush2.bf16.msra.mxu0 0
      %1986 = vmatprep.subr.bf16.mxu0 0
      %1987 = vmatpush2.bf16.msra.mxu0 0
      %1988 = vmatprep.subr.bf16.mxu0 0
      %1989 = vmatpush2.bf16.msra.mxu0 0
      %1990 = vmatprep.mubr.bf16.mxu0 0
      %1991 = vmatmul.mubr.bf16.gmra.mxu0 %v1742
      %v1992 = vpop.f32.mrf.mxu0
      %v1993 = vadd.f32 %v1731, %v1992
      %v1994 = vpop.f32.mrf.mxu0
      %v1995 = vpop.f32.mrf.mxu0
      %v1996 = vadd.f32 %v1731, %v1995
      %v1997 = vpop.f32.mrf.mxu0
      %1998 = vdwg.mxu0
      %v1999 = vpack.c.bf16 %v1892, %v1888
      %v2000 = vmul.f32 %v1886, %v367
      %v2001 = vmul.f32 %v1890, %v367
      %v2002 = vpack.c.bf16 %v2001, %v2000
      %2003 = vmatprep.subr.bf16.mxu0 0
      %2004 = vmatpush1.bf16.xpose.msra.mxu0 0
      %2005 = vmatprep.subr.bf16.mxu0 0
      %2006 = vmatpush1.bf16.xpose.msra.mxu0 0
      %2007 = vmatprep.subr.bf16.mxu0 0
      %2008 = vmatpush1.bf16.xpose.msra.mxu0 0
      %2009 = vmatprep.subr.bf16.mxu0 0
      %2010 = vmatpush1.bf16.xpose.msra.mxu0 0
      %2011 = vmatprep.subr.bf16.mxu0 0
      %2012 = vmatpush1.bf16.xpose.msra.mxu0 0
      %2013 = vmatprep.subr.bf16.mxu0 0
      %2014 = vmatpush1.bf16.xpose.msra.mxu0 0
      %2015 = vmatprep.subr.bf16.mxu0 0
      %2016 = vmatpush1.bf16.xpose.msra.mxu0 0
      %2017 = vmatprep.subr.bf16.mxu0 0
      %2018 = vmatpush1.bf16.xpose.msra.mxu0 %v1999
      %2019 = vmatprep.subr.bf16.mxu0 0
      %2020 = vmatpush2.bf16.xpose.msra.mxu0 0
      %2021 = vmatprep.subr.bf16.mxu0 0
      %2022 = vmatpush2.bf16.xpose.msra.mxu0 0
      %2023 = vmatprep.subr.bf16.mxu0 0
      %2024 = vmatpush2.bf16.xpose.msra.mxu0 0
      %2025 = vmatprep.subr.bf16.mxu0 0
      %2026 = vmatpush2.bf16.xpose.msra.mxu0 0
      %2027 = vmatprep.subr.bf16.mxu0 0
      %2028 = vmatpush2.bf16.xpose.msra.mxu0 0
      %2029 = vmatprep.subr.bf16.mxu0 0
      %2030 = vmatpush2.bf16.xpose.msra.mxu0 0
      %2031 = vmatprep.subr.bf16.mxu0 0
      %2032 = vmatpush2.bf16.xpose.msra.mxu0 0
      %2033 = vmatprep.subr.bf16.mxu0 0
      %2034 = vmatpush2.bf16.xpose.msra.mxu0 0
      %2035 = vmatprep.mubr.bf16.mxu0 0
      %2036 = vmatmul.mubr.bf16.gmra.mxu0 %v2002
      %v2037 = vpop.f32.mrf.mxu0
      %v2038 = vadd.f32 0.0, %v2037
      %v2039 = vpop.f32.mrf.mxu0
      %v2040 = vpop.f32.mrf.mxu0
      %v2041 = vadd.f32 0.0, %v2040
      %v2042 = vpop.f32.mrf.mxu0
      %2043 = vdwg.mxu0
      %v2044 = vsel %vm465, %v2038, -inf
      %2045 = vmax.xlane.f32.xlu0 %v2044
      %v2046 = vpop.xlane.xlu0 %2045
      %v2047 = vsel %vm465, %v2041, -inf
      %2048 = vmax.xlane.f32.xlu0 %v2047
      %v2049 = vpop.xlane.xlu0 %2048
      %v2050 = vsub.f32 %v2038, %v2046
      %v2051 = vsub.f32 %v2041, %v2049
      %v2052 = vmul.f32 %v2050, 1.442695
      %v2053 = vpow.pop %v2052
      %v2054 = vmul.f32 %v2051, 1.442695
      %v2055 = vpow.pop %v2054
      %v2056 = vsel %vm465, %v2053, 0.0
      %2057 = vadd.xlane.f32.xlu0 %v2056
      %v2058 = vpop.xlane.xlu0 %2057
      %v2059 = vsel %vm465, %v2055, 0.0
      %2060 = vadd.xlane.f32.xlu0 %v2059
      %v2061 = vpop.xlane.xlu0 %2060
      %v2062 = vrcp.pop %v2058
      %v2063 = vrcp.pop %v2061
      %v2064 = vmul.f32 %v2053, %v2062
      %v2065 = vmul.f32 %v2055, %v2063
      %v2066 = vpack.c.bf16 %v2065, %v2064
      %v2067 = vmul.f32 %v1993, %v367
      %v2068 = vmul.f32 %v1996, %v367
      %v2069 = vpack.c.bf16 %v2068, %v2067
      %v2070 = vmul.f32 %v1886, %v372
      %v2071 = vmul.f32 %v1890, %v372
      %v2072 = vpack.c.bf16 %v2071, %v2070
      %2073 = vmatprep.subr.bf16.mxu0 0
      %2074 = vmatpush1.bf16.xpose.msra.mxu0 0
      %2075 = vmatprep.subr.bf16.mxu0 0
      %2076 = vmatpush1.bf16.xpose.msra.mxu0 0
      %2077 = vmatprep.subr.bf16.mxu0 0
      %2078 = vmatpush1.bf16.xpose.msra.mxu0 0
      %2079 = vmatprep.subr.bf16.mxu0 0
      %2080 = vmatpush1.bf16.xpose.msra.mxu0 0
      %2081 = vmatprep.subr.bf16.mxu0 0
      %2082 = vmatpush1.bf16.xpose.msra.mxu0 0
      %2083 = vmatprep.subr.bf16.mxu0 0
      %2084 = vmatpush1.bf16.xpose.msra.mxu0 0
      %2085 = vmatprep.subr.bf16.mxu0 0
      %2086 = vmatpush1.bf16.xpose.msra.mxu0 0
      %2087 = vmatprep.subr.bf16.mxu0 0
      %2088 = vmatpush1.bf16.xpose.msra.mxu0 %v1999
      %2089 = vmatprep.subr.bf16.mxu0 0
      %2090 = vmatpush2.bf16.xpose.msra.mxu0 0
      %2091 = vmatprep.subr.bf16.mxu0 0
      %2092 = vmatpush2.bf16.xpose.msra.mxu0 0
      %2093 = vmatprep.subr.bf16.mxu0 0
      %2094 = vmatpush2.bf16.xpose.msra.mxu0 0
      %2095 = vmatprep.subr.bf16.mxu0 0
      %2096 = vmatpush2.bf16.xpose.msra.mxu0 0
      %2097 = vmatprep.subr.bf16.mxu0 0
      %2098 = vmatpush2.bf16.xpose.msra.mxu0 0
      %2099 = vmatprep.subr.bf16.mxu0 0
      %2100 = vmatpush2.bf16.xpose.msra.mxu0 0
      %2101 = vmatprep.subr.bf16.mxu0 0
      %2102 = vmatpush2.bf16.xpose.msra.mxu0 0
      %2103 = vmatprep.subr.bf16.mxu0 0
      %2104 = vmatpush2.bf16.xpose.msra.mxu0 0
      %2105 = vmatprep.mubr.bf16.mxu0 0
      %2106 = vmatmul.mubr.bf16.gmra.mxu0 %v2072
      %v2107 = vpop.f32.mrf.mxu0
      %v2108 = vadd.f32 0.0, %v2107
      %v2109 = vpop.f32.mrf.mxu0
      %v2110 = vpop.f32.mrf.mxu0
      %v2111 = vadd.f32 0.0, %v2110
      %v2112 = vpop.f32.mrf.mxu0
      %2113 = vdwg.mxu0
      %v2114 = vsel %vm465, %v2108, -inf
      %2115 = vmax.xlane.f32.xlu0 %v2114
      %v2116 = vpop.xlane.xlu0 %2115
      %v2117 = vsel %vm465, %v2111, -inf
      %2118 = vmax.xlane.f32.xlu0 %v2117
      %v2119 = vpop.xlane.xlu0 %2118
      %v2120 = vsub.f32 %v2108, %v2116
      %v2121 = vsub.f32 %v2111, %v2119
      %v2122 = vmul.f32 %v2120, 1.442695
      %v2123 = vpow.pop %v2122
      %v2124 = vmul.f32 %v2121, 1.442695
      %v2125 = vpow.pop %v2124
      %v2126 = vsel %vm465, %v2123, 0.0
      %2127 = vadd.xlane.f32.xlu0 %v2126
      %v2128 = vpop.xlane.xlu0 %2127
      %v2129 = vsel %vm465, %v2125, 0.0
      %2130 = vadd.xlane.f32.xlu0 %v2129
      %v2131 = vpop.xlane.xlu0 %2130
      %v2132 = vrcp.pop %v2128
      %v2133 = vrcp.pop %v2131
      %v2134 = vmul.f32 %v2123, %v2132
      %v2135 = vmul.f32 %v2125, %v2133
      %v2136 = vpack.c.bf16 %v2135, %v2134
      %v2137 = vmul.f32 %v1993, %v372
      %v2138 = vmul.f32 %v1996, %v372
      %v2139 = vpack.c.bf16 %v2138, %v2137
      %v2141 = vsel %vm465, %v2136, 0
      %2143 = vmatprep.subr.bf16.mxu0 0
      %2144 = vmatpush1.bf16.msra.mxu0 0
      %2145 = vmatprep.subr.bf16.mxu0 0
      %2146 = vmatpush1.bf16.msra.mxu0 0
      %2147 = vmatprep.subr.bf16.mxu0 0
      %2148 = vmatpush1.bf16.msra.mxu0 0
      %2149 = vmatprep.subr.bf16.mxu0 0
      %2150 = vmatpush1.bf16.msra.mxu0 0
      %2151 = vmatprep.subr.bf16.mxu0 0
      %2152 = vmatpush1.bf16.msra.mxu0 0
      %2153 = vmatprep.subr.bf16.mxu0 0
      %2154 = vmatpush1.bf16.msra.mxu0 0
      %2155 = vmatprep.subr.bf16.mxu0 0
      %2156 = vmatpush1.bf16.msra.mxu0 0
      %2157 = vmatprep.subr.bf16.mxu0 0
      %2158 = vmatpush1.bf16.msra.mxu0 %v2139
      %2159 = vmatprep.subr.bf16.mxu0 0
      %2160 = vmatpush2.bf16.msra.mxu0 0
      %2161 = vmatprep.subr.bf16.mxu0 0
      %2162 = vmatpush2.bf16.msra.mxu0 0
      %2163 = vmatprep.subr.bf16.mxu0 0
      %2164 = vmatpush2.bf16.msra.mxu0 0
      %2165 = vmatprep.subr.bf16.mxu0 0
      %2166 = vmatpush2.bf16.msra.mxu0 0
      %2167 = vmatprep.subr.bf16.mxu0 0
      %2168 = vmatpush2.bf16.msra.mxu0 0
      %2169 = vmatprep.subr.bf16.mxu0 0
      %2170 = vmatpush2.bf16.msra.mxu0 0
      %2171 = vmatprep.subr.bf16.mxu0 0
      %2172 = vmatpush2.bf16.msra.mxu0 0
      %2173 = vmatprep.subr.bf16.mxu0 0
      %2174 = vmatpush2.bf16.msra.mxu0 0
      %2175 = vmatprep.mubr.bf16.mxu0 0
      %2176 = vmatmul.mubr.bf16.gmra.mxu0 %v2141
      %v2177 = vpop.f32.mrf.mxu0
      %v2178 = vadd.f32 0.0, %v2177
      %v2179 = vpop.f32.mrf.mxu0
      %v2180 = vpop.f32.mrf.mxu0
      %v2181 = vadd.f32 0.0, %v2180
      %v2182 = vpop.f32.mrf.mxu0
      %2183 = vdwg.mxu0
      %v2185 = vsel %vm465, %v2066, 0
      %2187 = vmatprep.subr.bf16.mxu0 0
      %2188 = vmatpush1.bf16.msra.mxu0 0
      %2189 = vmatprep.subr.bf16.mxu0 0
      %2190 = vmatpush1.bf16.msra.mxu0 0
      %2191 = vmatprep.subr.bf16.mxu0 0
      %2192 = vmatpush1.bf16.msra.mxu0 0
      %2193 = vmatprep.subr.bf16.mxu0 0
      %2194 = vmatpush1.bf16.msra.mxu0 0
      %2195 = vmatprep.subr.bf16.mxu0 0
      %2196 = vmatpush1.bf16.msra.mxu0 0
      %2197 = vmatprep.subr.bf16.mxu0 0
      %2198 = vmatpush1.bf16.msra.mxu0 0
      %2199 = vmatprep.subr.bf16.mxu0 0
      %2200 = vmatpush1.bf16.msra.mxu0 0
      %2201 = vmatprep.subr.bf16.mxu0 0
      %2202 = vmatpush1.bf16.msra.mxu0 %v2069
      %2203 = vmatprep.subr.bf16.mxu0 0
      %2204 = vmatpush2.bf16.msra.mxu0 0
      %2205 = vmatprep.subr.bf16.mxu0 0
      %2206 = vmatpush2.bf16.msra.mxu0 0
      %2207 = vmatprep.subr.bf16.mxu0 0
      %2208 = vmatpush2.bf16.msra.mxu0 0
      %2209 = vmatprep.subr.bf16.mxu0 0
      %2210 = vmatpush2.bf16.msra.mxu0 0
      %2211 = vmatprep.subr.bf16.mxu0 0
      %2212 = vmatpush2.bf16.msra.mxu0 0
      %2213 = vmatprep.subr.bf16.mxu0 0
      %2214 = vmatpush2.bf16.msra.mxu0 0
      %2215 = vmatprep.subr.bf16.mxu0 0
      %2216 = vmatpush2.bf16.msra.mxu0 0
      %2217 = vmatprep.subr.bf16.mxu0 0
      %2218 = vmatpush2.bf16.msra.mxu0 0
      %2219 = vmatprep.mubr.bf16.mxu0 0
      %2220 = vmatmul.mubr.bf16.gmra.mxu0 %v2185
      %v2221 = vpop.f32.mrf.mxu0
      %v2222 = vadd.f32 %v2178, %v2221
      %v2223 = vpop.f32.mrf.mxu0
      %v2224 = vpop.f32.mrf.mxu0
      %v2225 = vadd.f32 %v2181, %v2224
      %v2226 = vpop.f32.mrf.mxu0
      %2227 = vdwg.mxu0
      %v2228 = vmul.f32 %v1886, %v377
      %v2229 = vmul.f32 %v1890, %v377
      %v2230 = vpack.c.bf16 %v2229, %v2228
      %2231 = vmatprep.subr.bf16.mxu0 0
      %2232 = vmatpush1.bf16.xpose.msra.mxu0 0
      %2233 = vmatprep.subr.bf16.mxu0 0
      %2234 = vmatpush1.bf16.xpose.msra.mxu0 0
      %2235 = vmatprep.subr.bf16.mxu0 0
      %2236 = vmatpush1.bf16.xpose.msra.mxu0 0
      %2237 = vmatprep.subr.bf16.mxu0 0
      %2238 = vmatpush1.bf16.xpose.msra.mxu0 0
      %2239 = vmatprep.subr.bf16.mxu0 0
      %2240 = vmatpush1.bf16.xpose.msra.mxu0 0
      %2241 = vmatprep.subr.bf16.mxu0 0
      %2242 = vmatpush1.bf16.xpose.msra.mxu0 0
      %2243 = vmatprep.subr.bf16.mxu0 0
      %2244 = vmatpush1.bf16.xpose.msra.mxu0 0
      %2245 = vmatprep.subr.bf16.mxu0 0
      %2246 = vmatpush1.bf16.xpose.msra.mxu0 %v1999
      %2247 = vmatprep.subr.bf16.mxu0 0
      %2248 = vmatpush2.bf16.xpose.msra.mxu0 0
      %2249 = vmatprep.subr.bf16.mxu0 0
      %2250 = vmatpush2.bf16.xpose.msra.mxu0 0
      %2251 = vmatprep.subr.bf16.mxu0 0
      %2252 = vmatpush2.bf16.xpose.msra.mxu0 0
      %2253 = vmatprep.subr.bf16.mxu0 0
      %2254 = vmatpush2.bf16.xpose.msra.mxu0 0
      %2255 = vmatprep.subr.bf16.mxu0 0
      %2256 = vmatpush2.bf16.xpose.msra.mxu0 0
      %2257 = vmatprep.subr.bf16.mxu0 0
      %2258 = vmatpush2.bf16.xpose.msra.mxu0 0
      %2259 = vmatprep.subr.bf16.mxu0 0
      %2260 = vmatpush2.bf16.xpose.msra.mxu0 0
      %2261 = vmatprep.subr.bf16.mxu0 0
      %2262 = vmatpush2.bf16.xpose.msra.mxu0 0
      %2263 = vmatprep.mubr.bf16.mxu0 0
      %2264 = vmatmul.mubr.bf16.gmra.mxu0 %v2230
      %v2265 = vpop.f32.mrf.mxu0
      %v2266 = vadd.f32 0.0, %v2265
      %v2267 = vpop.f32.mrf.mxu0
      %v2268 = vpop.f32.mrf.mxu0
      %v2269 = vadd.f32 0.0, %v2268
      %v2270 = vpop.f32.mrf.mxu0
      %2271 = vdwg.mxu0
      %v2272 = vsel %vm465, %v2266, -inf
      %2273 = vmax.xlane.f32.xlu0 %v2272
      %v2274 = vpop.xlane.xlu0 %2273
      %v2275 = vsel %vm465, %v2269, -inf
      %2276 = vmax.xlane.f32.xlu0 %v2275
      %v2277 = vpop.xlane.xlu0 %2276
      %v2278 = vsub.f32 %v2266, %v2274
      %v2279 = vsub.f32 %v2269, %v2277
      %v2280 = vmul.f32 %v2278, 1.442695
      %v2281 = vpow.pop %v2280
      %v2282 = vmul.f32 %v2279, 1.442695
      %v2283 = vpow.pop %v2282
      %v2284 = vsel %vm465, %v2281, 0.0
      %2285 = vadd.xlane.f32.xlu0 %v2284
      %v2286 = vpop.xlane.xlu0 %2285
      %v2287 = vsel %vm465, %v2283, 0.0
      %2288 = vadd.xlane.f32.xlu0 %v2287
      %v2289 = vpop.xlane.xlu0 %2288
      %v2290 = vrcp.pop %v2286
      %v2291 = vrcp.pop %v2289
      %v2292 = vmul.f32 %v2281, %v2290
      %v2293 = vmul.f32 %v2283, %v2291
      %v2294 = vpack.c.bf16 %v2293, %v2292
      %v2295 = vmul.f32 %v1993, %v377
      %v2296 = vmul.f32 %v1996, %v377
      %v2297 = vpack.c.bf16 %v2296, %v2295
      %v2299 = vsel %vm465, %v2294, 0
      %2301 = vmatprep.subr.bf16.mxu0 0
      %2302 = vmatpush1.bf16.msra.mxu0 0
      %2303 = vmatprep.subr.bf16.mxu0 0
      %2304 = vmatpush1.bf16.msra.mxu0 0
      %2305 = vmatprep.subr.bf16.mxu0 0
      %2306 = vmatpush1.bf16.msra.mxu0 0
      %2307 = vmatprep.subr.bf16.mxu0 0
      %2308 = vmatpush1.bf16.msra.mxu0 0
      %2309 = vmatprep.subr.bf16.mxu0 0
      %2310 = vmatpush1.bf16.msra.mxu0 0
      %2311 = vmatprep.subr.bf16.mxu0 0
      %2312 = vmatpush1.bf16.msra.mxu0 0
      %2313 = vmatprep.subr.bf16.mxu0 0
      %2314 = vmatpush1.bf16.msra.mxu0 0
      %2315 = vmatprep.subr.bf16.mxu0 0
      %2316 = vmatpush1.bf16.msra.mxu0 %v2297
      %2317 = vmatprep.subr.bf16.mxu0 0
      %2318 = vmatpush2.bf16.msra.mxu0 0
      %2319 = vmatprep.subr.bf16.mxu0 0
      %2320 = vmatpush2.bf16.msra.mxu0 0
      %2321 = vmatprep.subr.bf16.mxu0 0
      %2322 = vmatpush2.bf16.msra.mxu0 0
      %2323 = vmatprep.subr.bf16.mxu0 0
      %2324 = vmatpush2.bf16.msra.mxu0 0
      %2325 = vmatprep.subr.bf16.mxu0 0
      %2326 = vmatpush2.bf16.msra.mxu0 0
      %2327 = vmatprep.subr.bf16.mxu0 0
      %2328 = vmatpush2.bf16.msra.mxu0 0
      %2329 = vmatprep.subr.bf16.mxu0 0
      %2330 = vmatpush2.bf16.msra.mxu0 0
      %2331 = vmatprep.subr.bf16.mxu0 0
      %2332 = vmatpush2.bf16.msra.mxu0 0
      %2333 = vmatprep.mubr.bf16.mxu0 0
      %2334 = vmatmul.mubr.bf16.gmra.mxu0 %v2299
      %v2335 = vpop.f32.mrf.mxu0
      %v2336 = vadd.f32 0.0, %v2335
      %v2337 = vpop.f32.mrf.mxu0
      %v2338 = vpop.f32.mrf.mxu0
      %v2339 = vadd.f32 0.0, %v2338
      %v2340 = vpop.f32.mrf.mxu0
      %2341 = vdwg.mxu0
      %v2342 = vadd.f32 %v2222, %v2336
      %v2343 = vadd.f32 %v2225, %v2339
      %v2344 = vmul.f32 %v1886, %v382
      %v2345 = vmul.f32 %v1890, %v382
      %v2346 = vpack.c.bf16 %v2345, %v2344
      %2347 = vmatprep.subr.bf16.mxu0 0
      %2348 = vmatpush1.bf16.xpose.msra.mxu0 0
      %2349 = vmatprep.subr.bf16.mxu0 0
      %2350 = vmatpush1.bf16.xpose.msra.mxu0 0
      %2351 = vmatprep.subr.bf16.mxu0 0
      %2352 = vmatpush1.bf16.xpose.msra.mxu0 0
      %2353 = vmatprep.subr.bf16.mxu0 0
      %2354 = vmatpush1.bf16.xpose.msra.mxu0 0
      %2355 = vmatprep.subr.bf16.mxu0 0
      %2356 = vmatpush1.bf16.xpose.msra.mxu0 0
      %2357 = vmatprep.subr.bf16.mxu0 0
      %2358 = vmatpush1.bf16.xpose.msra.mxu0 0
      %2359 = vmatprep.subr.bf16.mxu0 0
      %2360 = vmatpush1.bf16.xpose.msra.mxu0 0
      %2361 = vmatprep.subr.bf16.mxu0 0
      %2362 = vmatpush1.bf16.xpose.msra.mxu0 %v1999
      %2363 = vmatprep.subr.bf16.mxu0 0
      %2364 = vmatpush2.bf16.xpose.msra.mxu0 0
      %2365 = vmatprep.subr.bf16.mxu0 0
      %2366 = vmatpush2.bf16.xpose.msra.mxu0 0
      %2367 = vmatprep.subr.bf16.mxu0 0
      %2368 = vmatpush2.bf16.xpose.msra.mxu0 0
      %2369 = vmatprep.subr.bf16.mxu0 0
      %2370 = vmatpush2.bf16.xpose.msra.mxu0 0
      %2371 = vmatprep.subr.bf16.mxu0 0
      %2372 = vmatpush2.bf16.xpose.msra.mxu0 0
      %2373 = vmatprep.subr.bf16.mxu0 0
      %2374 = vmatpush2.bf16.xpose.msra.mxu0 0
      %2375 = vmatprep.subr.bf16.mxu0 0
      %2376 = vmatpush2.bf16.xpose.msra.mxu0 0
      %2377 = vmatprep.subr.bf16.mxu0 0
      %2378 = vmatpush2.bf16.xpose.msra.mxu0 0
      %2379 = vmatprep.mubr.bf16.mxu0 0
      %2380 = vmatmul.mubr.bf16.gmra.mxu0 %v2346
      %v2381 = vpop.f32.mrf.mxu0
      %v2382 = vadd.f32 0.0, %v2381
      %v2383 = vpop.f32.mrf.mxu0
      %v2384 = vpop.f32.mrf.mxu0
      %v2385 = vadd.f32 0.0, %v2384
      %v2386 = vpop.f32.mrf.mxu0
      %2387 = vdwg.mxu0
      %v2388 = vsel %vm465, %v2382, -inf
      %2389 = vmax.xlane.f32.xlu0 %v2388
      %v2390 = vpop.xlane.xlu0 %2389
      %v2391 = vsel %vm465, %v2385, -inf
      %2392 = vmax.xlane.f32.xlu0 %v2391
      %v2393 = vpop.xlane.xlu0 %2392
      %v2394 = vsub.f32 %v2382, %v2390
      %v2395 = vsub.f32 %v2385, %v2393
      %v2396 = vmul.f32 %v2394, 1.442695
      %v2397 = vpow.pop %v2396
      %v2398 = vmul.f32 %v2395, 1.442695
      %v2399 = vpow.pop %v2398
      %v2400 = vsel %vm465, %v2397, 0.0
      %2401 = vadd.xlane.f32.xlu0 %v2400
      %v2402 = vpop.xlane.xlu0 %2401
      %v2403 = vsel %vm465, %v2399, 0.0
      %2404 = vadd.xlane.f32.xlu0 %v2403
      %v2405 = vpop.xlane.xlu0 %2404
      %v2406 = vrcp.pop %v2402
      %v2407 = vrcp.pop %v2405
      %v2408 = vmul.f32 %v2397, %v2406
      %v2409 = vmul.f32 %v2399, %v2407
      %v2410 = vpack.c.bf16 %v2409, %v2408
      %v2411 = vmul.f32 %v1993, %v382
      %v2412 = vmul.f32 %v1996, %v382
      %v2413 = vpack.c.bf16 %v2412, %v2411
      %v2415 = vsel %vm465, %v2410, 0
      %2417 = vmatprep.subr.bf16.mxu0 0
      %2418 = vmatpush1.bf16.msra.mxu0 0
      %2419 = vmatprep.subr.bf16.mxu0 0
      %2420 = vmatpush1.bf16.msra.mxu0 0
      %2421 = vmatprep.subr.bf16.mxu0 0
      %2422 = vmatpush1.bf16.msra.mxu0 0
      %2423 = vmatprep.subr.bf16.mxu0 0
      %2424 = vmatpush1.bf16.msra.mxu0 0
      %2425 = vmatprep.subr.bf16.mxu0 0
      %2426 = vmatpush1.bf16.msra.mxu0 0
      %2427 = vmatprep.subr.bf16.mxu0 0
      %2428 = vmatpush1.bf16.msra.mxu0 0
      %2429 = vmatprep.subr.bf16.mxu0 0
      %2430 = vmatpush1.bf16.msra.mxu0 0
      %2431 = vmatprep.subr.bf16.mxu0 0
      %2432 = vmatpush1.bf16.msra.mxu0 %v2413
      %2433 = vmatprep.subr.bf16.mxu0 0
      %2434 = vmatpush2.bf16.msra.mxu0 0
      %2435 = vmatprep.subr.bf16.mxu0 0
      %2436 = vmatpush2.bf16.msra.mxu0 0
      %2437 = vmatprep.subr.bf16.mxu0 0
      %2438 = vmatpush2.bf16.msra.mxu0 0
      %2439 = vmatprep.subr.bf16.mxu0 0
      %2440 = vmatpush2.bf16.msra.mxu0 0
      %2441 = vmatprep.subr.bf16.mxu0 0
      %2442 = vmatpush2.bf16.msra.mxu0 0
      %2443 = vmatprep.subr.bf16.mxu0 0
      %2444 = vmatpush2.bf16.msra.mxu0 0
      %2445 = vmatprep.subr.bf16.mxu0 0
      %2446 = vmatpush2.bf16.msra.mxu0 0
      %2447 = vmatprep.subr.bf16.mxu0 0
      %2448 = vmatpush2.bf16.msra.mxu0 0
      %2449 = vmatprep.mubr.bf16.mxu0 0
      %2450 = vmatmul.mubr.bf16.gmra.mxu0 %v2415
      %v2451 = vpop.f32.mrf.mxu0
      %v2452 = vadd.f32 0.0, %v2451
      %v2453 = vpop.f32.mrf.mxu0
      %v2454 = vpop.f32.mrf.mxu0
      %v2455 = vadd.f32 0.0, %v2454
      %v2456 = vpop.f32.mrf.mxu0
      %2457 = vdwg.mxu0
      %v2458 = vadd.f32 %v2342, %v2452
      %v2459 = vadd.f32 %v2343, %v2455
      %v2460 = vpack.c.bf16 %v2459, %v2458
      %v2461 = vld [vmem:[%s1743 + $0xc] sm:$0xf]
      %v2462 = vld [vmem:[%s1743 + $0x24] sm:$0xf]
      %v2463 = vld [vmem:[%s1743 + $0x3c] sm:$0xf]
      %v2464 = vld [vmem:[%s1743 + $0x54] sm:$0xf]
      %v2465 = vld [vmem:[%s1743 + $0x6c] sm:$0xf]
      %v2466 = vld [vmem:[%s1743 + $0x84] sm:$0xf]
      %v2467 = vld [vmem:[%s1743 + $0x9c] sm:$0xf]
      %v2468 = vld [vmem:[%s1743 + $0xb4] sm:$0xf]
      %v2469 = vld [vmem:[%s1743 + $0xcc] sm:$0xf]
      %v2470 = vld [vmem:[%s1743 + $0xe4] sm:$0xf]
      %v2471 = vld [vmem:[%s1743 + $0xfc] sm:$0xf]
      %v2472 = vld [vmem:[%s1743 + $0x114] sm:$0xf]
      %v2473 = vld [vmem:[%s1743 + $0x12c] sm:$0xf]
      %v2474 = vld [vmem:[%s1743 + $0x144] sm:$0xf]
      %v2475 = vld [vmem:[%s1743 + $0x15c] sm:$0xf]
      %v2476 = vld [vmem:[%s1743 + $0x174] sm:$0xf]
      %v2493 = vunpack.c.l.b16 %v2461
      %v2494 = vunpack.c.l.b16 %v2462
      %v2495 = vunpack.c.l.b16 %v2463
      %v2496 = vunpack.c.l.b16 %v2464
      %v2497 = vunpack.c.l.b16 %v2465
      %v2498 = vunpack.c.l.b16 %v2466
      %v2499 = vunpack.c.l.b16 %v2467
      %v2500 = vunpack.c.l.b16 %v2468
      %v2501 = vunpack.c.l.b16 %v2469
      %v2502 = vunpack.c.l.b16 %v2470
      %v2503 = vunpack.c.l.b16 %v2471
      %v2504 = vunpack.c.l.b16 %v2472
      %v2505 = vunpack.c.l.b16 %v2473
      %v2506 = vunpack.c.l.b16 %v2474
      %v2507 = vunpack.c.l.b16 %v2475
      %v2508 = vunpack.c.l.b16 %v2476
      %v2509 = vpack.c.b16 %v2494, %v2493
      %v2510 = vpack.c.b16 %v2496, %v2495
      %v2511 = vpack.c.b16 %v2498, %v2497
      %v2512 = vpack.c.b16 %v2500, %v2499
      %v2513 = vpack.c.b16 %v2502, %v2501
      %v2514 = vpack.c.b16 %v2504, %v2503
      %v2515 = vpack.c.b16 %v2506, %v2505
      %v2516 = vpack.c.b16 %v2508, %v2507
      %2525 = vmatprep.subr.bf16.mxu0 0
      %2526 = vmatpush1.bf16.msra.mxu0 %v2516
      %2527 = vmatprep.subr.bf16.mxu0 0
      %2528 = vmatpush1.bf16.msra.mxu0 %v2515
      %2529 = vmatprep.subr.bf16.mxu0 0
      %2530 = vmatpush1.bf16.msra.mxu0 %v2514
      %2531 = vmatprep.subr.bf16.mxu0 0
      %2532 = vmatpush1.bf16.msra.mxu0 %v2513
      %2533 = vmatprep.subr.bf16.mxu0 0
      %2534 = vmatpush1.bf16.msra.mxu0 %v2512
      %2535 = vmatprep.subr.bf16.mxu0 0
      %2536 = vmatpush1.bf16.msra.mxu0 %v2511
      %2537 = vmatprep.subr.bf16.mxu0 0
      %2538 = vmatpush1.bf16.msra.mxu0 %v2510
      %2539 = vmatprep.subr.bf16.mxu0 0
      %2540 = vmatpush1.bf16.msra.mxu0 %v2509
      %2541 = vmatprep.subr.bf16.mxu0 0
      %2542 = vmatpush2.bf16.msra.mxu0 0
      %2543 = vmatprep.subr.bf16.mxu0 0
      %2544 = vmatpush2.bf16.msra.mxu0 0
      %2545 = vmatprep.subr.bf16.mxu0 0
      %2546 = vmatpush2.bf16.msra.mxu0 0
      %2547 = vmatprep.subr.bf16.mxu0 0
      %2548 = vmatpush2.bf16.msra.mxu0 0
      %2549 = vmatprep.subr.bf16.mxu0 0
      %2550 = vmatpush2.bf16.msra.mxu0 0
      %2551 = vmatprep.subr.bf16.mxu0 0
      %2552 = vmatpush2.bf16.msra.mxu0 0
      %2553 = vmatprep.subr.bf16.mxu0 0
      %2554 = vmatpush2.bf16.msra.mxu0 0
      %2555 = vmatprep.subr.bf16.mxu0 0
      %2556 = vmatpush2.bf16.msra.mxu0 0
      %2557 = vmatprep.mubr.bf16.mxu0 0
      %2558 = vmatmul.mubr.bf16.gmra.mxu0 %v2460
      %v2559 = vpop.f32.mrf.mxu0
      %v2560 = vadd.f32 %v1732, %v2559
      %v2561 = vpop.f32.mrf.mxu0
      %v2562 = vpop.f32.mrf.mxu0
      %v2563 = vadd.f32 %v1732, %v2562
      %v2564 = vpop.f32.mrf.mxu0
      %2565 = vdwg.mxu0
      %v2566 = vadd.f32 %v1727, %v2560
      %v2567 = vadd.f32 %v1728, %v2563
      %2568 = vadd.xlane.f32.xlu0 %v2566
      %v2569 = vpop.xlane.xlu0 %2568
      %2570 = vadd.xlane.f32.xlu0 %v2567
      %v2571 = vpop.xlane.xlu0 %2570
      %v2572 = vmul.f32 %v2569, 0.015625
      %v2573 = vmul.f32 %v2571, 0.015625
      %v2574 = vsub.f32 %v2566, %v2572
      %v2575 = vsub.f32 %v2567, %v2573
      %v2576 = vmul.f32 %v2574, %v2574
      %v2577 = vmul.f32 %v2575, %v2575
      %v2578 = vmul.f32 %v2576, %v384
      %v2579 = vmul.f32 %v2577, %v384
      %2580 = vadd.xlane.f32.xlu0 %v2578
      %v2581 = vpop.xlane.xlu0 %2580
      %2582 = vadd.xlane.f32.xlu0 %v2579
      %v2583 = vpop.xlane.xlu0 %2582
      %v2584 = vmul.f32 %v2581, 0.015625
      %v2585 = vmul.f32 %v2583, 0.015625
      %v2586 = vadd.f32 %v2584, 1e-05
      %v2587 = vadd.f32 %v2585, 1e-05
      %v2588 = vrsqrt.pop %v2586
      %v2589 = vrsqrt.pop %v2587
      %v2590 = vmul.f32 %v2574, %v2588
      %v2591 = vmul.f32 %v2575, %v2589
      %v2592 = vmul.f32 %v2590, %v1733
      %v2593 = vmul.f32 %v2591, %v1733
      %v2594 = vadd.f32 %v2592, %v1734
      %v2595 = vadd.f32 %v2593, %v1734
      %v2596 = vpack.c.bf16 %v2595, %v2594
      %v2597 = vld [vmem:[%s1743 + $0x10] sm:$0xf]
      %v2598 = vld [vmem:[%s1743 + $0x28] sm:$0xf]
      %v2599 = vld [vmem:[%s1743 + $0x40] sm:$0xf]
      %v2600 = vld [vmem:[%s1743 + $0x58] sm:$0xf]
      %v2601 = vld [vmem:[%s1743 + $0x70] sm:$0xf]
      %v2602 = vld [vmem:[%s1743 + $0x88] sm:$0xf]
      %v2603 = vld [vmem:[%s1743 + $0xa0] sm:$0xf]
      %v2604 = vld [vmem:[%s1743 + $0xb8] sm:$0xf]
      %v2605 = vld [vmem:[%s1743 + $0xd0] sm:$0xf]
      %v2606 = vld [vmem:[%s1743 + $0xe8] sm:$0xf]
      %v2607 = vld [vmem:[%s1743 + $0x100] sm:$0xf]
      %v2608 = vld [vmem:[%s1743 + $0x118] sm:$0xf]
      %v2609 = vld [vmem:[%s1743 + $0x130] sm:$0xf]
      %v2610 = vld [vmem:[%s1743 + $0x148] sm:$0xf]
      %v2611 = vld [vmem:[%s1743 + $0x160] sm:$0xf]
      %v2612 = vld [vmem:[%s1743 + $0x178] sm:$0xf]
      %v2629 = vunpack.c.l.b16 %v2597
      %v2630 = vunpack.c.l.b16 %v2598
      %v2631 = vunpack.c.l.b16 %v2599
      %v2632 = vunpack.c.l.b16 %v2600
      %v2633 = vunpack.c.l.b16 %v2601
      %v2634 = vunpack.c.l.b16 %v2602
      %v2635 = vunpack.c.l.b16 %v2603
      %v2636 = vunpack.c.l.b16 %v2604
      %v2637 = vunpack.c.l.b16 %v2605
      %v2638 = vunpack.c.l.b16 %v2606
      %v2639 = vunpack.c.l.b16 %v2607
      %v2640 = vunpack.c.l.b16 %v2608
      %v2641 = vunpack.c.l.b16 %v2609
      %v2642 = vunpack.c.l.b16 %v2610
      %v2643 = vunpack.c.l.b16 %v2611
      %v2644 = vunpack.c.l.b16 %v2612
      %v2645 = vpack.c.b16 %v2630, %v2629
      %v2646 = vpack.c.b16 %v2632, %v2631
      %v2647 = vpack.c.b16 %v2634, %v2633
      %v2648 = vpack.c.b16 %v2636, %v2635
      %v2649 = vpack.c.b16 %v2638, %v2637
      %v2650 = vpack.c.b16 %v2640, %v2639
      %v2651 = vpack.c.b16 %v2642, %v2641
      %v2652 = vpack.c.b16 %v2644, %v2643
      %2661 = vmatprep.subr.bf16.mxu0 0
      %2662 = vmatpush1.bf16.msra.mxu0 %v2652
      %2663 = vmatprep.subr.bf16.mxu0 0
      %2664 = vmatpush1.bf16.msra.mxu0 %v2651
      %2665 = vmatprep.subr.bf16.mxu0 0
      %2666 = vmatpush1.bf16.msra.mxu0 %v2650
      %2667 = vmatprep.subr.bf16.mxu0 0
      %2668 = vmatpush1.bf16.msra.mxu0 %v2649
      %2669 = vmatprep.subr.bf16.mxu0 0
      %2670 = vmatpush1.bf16.msra.mxu0 %v2648
      %2671 = vmatprep.subr.bf16.mxu0 0
      %2672 = vmatpush1.bf16.msra.mxu0 %v2647
      %2673 = vmatprep.subr.bf16.mxu0 0
      %2674 = vmatpush1.bf16.msra.mxu0 %v2646
      %2675 = vmatprep.subr.bf16.mxu0 0
      %2676 = vmatpush1.bf16.msra.mxu0 %v2645
      %2677 = vmatprep.subr.bf16.mxu0 0
      %2678 = vmatpush2.bf16.msra.mxu0 0
      %2679 = vmatprep.subr.bf16.mxu0 0
      %2680 = vmatpush2.bf16.msra.mxu0 0
      %2681 = vmatprep.subr.bf16.mxu0 0
      %2682 = vmatpush2.bf16.msra.mxu0 0
      %2683 = vmatprep.subr.bf16.mxu0 0
      %2684 = vmatpush2.bf16.msra.mxu0 0
      %2685 = vmatprep.subr.bf16.mxu0 0
      %2686 = vmatpush2.bf16.msra.mxu0 0
      %2687 = vmatprep.subr.bf16.mxu0 0
      %2688 = vmatpush2.bf16.msra.mxu0 0
      %2689 = vmatprep.subr.bf16.mxu0 0
      %2690 = vmatpush2.bf16.msra.mxu0 0
      %2691 = vmatprep.subr.bf16.mxu0 0
      %2692 = vmatpush2.bf16.msra.mxu0 0
      %2693 = vmatprep.mubr.bf16.mxu0 0
      %2694 = vmatmul.mubr.bf16.gmra.mxu0 %v2596
      %v2695 = vpop.f32.mrf.mxu0
      %v2696 = vadd.f32 %v1735, %v2695
      %v2697 = vpop.f32.mrf.mxu0
      %v2698 = vpop.f32.mrf.mxu0
      %v2699 = vadd.f32 %v1735, %v2698
      %v2700 = vpop.f32.mrf.mxu0
      %2701 = vdwg.mxu0
      %v2702 = vmax.f32 %v2696, 0.0
      %v2703 = vmax.f32 %v2699, 0.0
      %v2704 = vpack.c.bf16 %v2703, %v2702
      %v2705 = vld [vmem:[%s1743 + $0x14] sm:$0xf]
      %v2706 = vld [vmem:[%s1743 + $0x2c] sm:$0xf]
      %v2707 = vld [vmem:[%s1743 + $0x44] sm:$0xf]
      %v2708 = vld [vmem:[%s1743 + $0x5c] sm:$0xf]
      %v2709 = vld [vmem:[%s1743 + $0x74] sm:$0xf]
      %v2710 = vld [vmem:[%s1743 + $0x8c] sm:$0xf]
      %v2711 = vld [vmem:[%s1743 + $0xa4] sm:$0xf]
      %v2712 = vld [vmem:[%s1743 + $0xbc] sm:$0xf]
      %v2713 = vld [vmem:[%s1743 + $0xd4] sm:$0xf]
      %v2714 = vld [vmem:[%s1743 + $0xec] sm:$0xf]
      %v2715 = vld [vmem:[%s1743 + $0x104] sm:$0xf]
      %v2716 = vld [vmem:[%s1743 + $0x11c] sm:$0xf]
      %v2717 = vld [vmem:[%s1743 + $0x134] sm:$0xf]
      %v2718 = vld [vmem:[%s1743 + $0x14c] sm:$0xf]
      %v2719 = vld [vmem:[%s1743 + $0x164] sm:$0xf]
      %v2720 = vld [vmem:[%s1743 + $0x17c] sm:$0xf]
      %v2737 = vunpack.c.l.b16 %v2705
      %v2738 = vunpack.c.l.b16 %v2706
      %v2739 = vunpack.c.l.b16 %v2707
      %v2740 = vunpack.c.l.b16 %v2708
      %v2741 = vunpack.c.l.b16 %v2709
      %v2742 = vunpack.c.l.b16 %v2710
      %v2743 = vunpack.c.l.b16 %v2711
      %v2744 = vunpack.c.l.b16 %v2712
      %v2745 = vunpack.c.l.b16 %v2713
      %v2746 = vunpack.c.l.b16 %v2714
      %v2747 = vunpack.c.l.b16 %v2715
      %v2748 = vunpack.c.l.b16 %v2716
      %v2749 = vunpack.c.l.b16 %v2717
      %v2750 = vunpack.c.l.b16 %v2718
      %v2751 = vunpack.c.l.b16 %v2719
      %v2752 = vunpack.c.l.b16 %v2720
      %v2753 = vpack.c.b16 %v2738, %v2737
      %v2754 = vpack.c.b16 %v2740, %v2739
      %v2755 = vpack.c.b16 %v2742, %v2741
      %v2756 = vpack.c.b16 %v2744, %v2743
      %v2757 = vpack.c.b16 %v2746, %v2745
      %v2758 = vpack.c.b16 %v2748, %v2747
      %v2759 = vpack.c.b16 %v2750, %v2749
      %v2760 = vpack.c.b16 %v2752, %v2751
      %2769 = vmatprep.subr.bf16.mxu0 0
      %2770 = vmatpush1.bf16.msra.mxu0 %v2760
      %2771 = vmatprep.subr.bf16.mxu0 0
      %2772 = vmatpush1.bf16.msra.mxu0 %v2759
      %2773 = vmatprep.subr.bf16.mxu0 0
      %2774 = vmatpush1.bf16.msra.mxu0 %v2758
      %2775 = vmatprep.subr.bf16.mxu0 0
      %2776 = vmatpush1.bf16.msra.mxu0 %v2757
      %2777 = vmatprep.subr.bf16.mxu0 0
      %2778 = vmatpush1.bf16.msra.mxu0 %v2756
      %2779 = vmatprep.subr.bf16.mxu0 0
      %2780 = vmatpush1.bf16.msra.mxu0 %v2755
      %2781 = vmatprep.subr.bf16.mxu0 0
      %2782 = vmatpush1.bf16.msra.mxu0 %v2754
      %2783 = vmatprep.subr.bf16.mxu0 0
      %2784 = vmatpush1.bf16.msra.mxu0 %v2753
      %2785 = vmatprep.subr.bf16.mxu0 0
      %2786 = vmatpush2.bf16.msra.mxu0 0
      %2787 = vmatprep.subr.bf16.mxu0 0
      %2788 = vmatpush2.bf16.msra.mxu0 0
      %2789 = vmatprep.subr.bf16.mxu0 0
      %2790 = vmatpush2.bf16.msra.mxu0 0
      %2791 = vmatprep.subr.bf16.mxu0 0
      %2792 = vmatpush2.bf16.msra.mxu0 0
      %2793 = vmatprep.subr.bf16.mxu0 0
      %2794 = vmatpush2.bf16.msra.mxu0 0
      %2795 = vmatprep.subr.bf16.mxu0 0
      %2796 = vmatpush2.bf16.msra.mxu0 0
      %2797 = vmatprep.subr.bf16.mxu0 0
      %2798 = vmatpush2.bf16.msra.mxu0 0
      %2799 = vmatprep.subr.bf16.mxu0 0
      %2800 = vmatpush2.bf16.msra.mxu0 0
      %2801 = vmatprep.mubr.bf16.mxu0 0
      %2802 = vmatmul.mubr.bf16.gmra.mxu0 %v2704
      %v2803 = vpop.f32.mrf.mxu0
      %v2804 = vadd.f32 %v1736, %v2803
      %v2805 = vpop.f32.mrf.mxu0
      %v2806 = vpop.f32.mrf.mxu0
      %v2807 = vadd.f32 %v1736, %v2806
      %v2808 = vpop.f32.mrf.mxu0
      %2809 = vdwg.mxu0
      %v2810 = vadd.f32 %v2594, %v2804
      %v2811 = vadd.f32 %v2595, %v2807
      %2812 = vadd.xlane.f32.xlu0 %v2810
      %v2813 = vpop.xlane.xlu0 %2812
      %2814 = vadd.xlane.f32.xlu0 %v2811
      %v2815 = vpop.xlane.xlu0 %2814
      %v2816 = vmul.f32 %v2813, 0.015625
      %v2817 = vmul.f32 %v2815, 0.015625
      %v2818 = vsub.f32 %v2810, %v2816
      %v2819 = vsub.f32 %v2811, %v2817
      %v2820 = vmul.f32 %v2818, %v2818
      %v2821 = vmul.f32 %v2819, %v2819
      %v2822 = vmul.f32 %v2820, %v384
      %v2823 = vmul.f32 %v2821, %v384
      %2824 = vadd.xlane.f32.xlu0 %v2822
      %v2825 = vpop.xlane.xlu0 %2824
      %2826 = vadd.xlane.f32.xlu0 %v2823
      %v2827 = vpop.xlane.xlu0 %2826
      %v2828 = vmul.f32 %v2825, 0.015625
      %v2829 = vmul.f32 %v2827, 0.015625
      %v2830 = vadd.f32 %v2828, 1e-05
      %v2831 = vadd.f32 %v2829, 1e-05
      %v2832 = vrsqrt.pop %v2830
      %v2833 = vrsqrt.pop %v2831
      %v2834 = vmul.f32 %v2818, %v2832
      %v2835 = vmul.f32 %v2819, %v2833
      %v2836 = vmul.f32 %v2834, %v1737
      %v2837 = vmul.f32 %v2835, %v1737
      %v2838 = vadd.f32 %v2836, %v1738
      %v2839 = vadd.f32 %v2837, %v1738
      %v2840 = vpack.c.bf16 %v2839, %v2838
      %v2841 = vadd.f32 %v2838, %v618
      %v2842 = vadd.f32 %v2839, %v619
      %v2843 = vpack.c.bf16 %v2842, %v2841
      %v2844 = vld [vmem:[%s2] sm:$0xff]
      %v2845 = vld [vmem:[%s2 + $0x8] sm:$0xff]
      %v2846 = vld [vmem:[%s8] ss:$8 sm:$0x3]
      %v2847 = vld [vmem:[%s8 + $0x1] ss:$0 sm:$0xff]
      %v2848 = vld [vmem:[%s8 + $0x2] ss:$0 sm:$0xff]
      %v2849 = vld [vmem:[%s8 + $0x3] ss:$0 sm:$0xff]
      %v2850 = vld [vmem:[%s8 + $0x4] ss:$0 sm:$0xff]
      %v2851 = vld [vmem:[%s8 + $0x5] ss:$0 sm:$0xff]
      %v2852 = vld [vmem:[%s8 + $0x6] ss:$0 sm:$0xff]
      %v2853 = vld [vmem:[%s8 + $0x7] ss:$0 sm:$0xff]
      %v2854 = vld [vmem:[%s8 + $0x10] ss:$0 sm:$0xff]
      %v2855 = vld [vmem:[%s8 + $0x11] ss:$0 sm:$0xff]
      %v2856 = vld [vmem:[%s8 + $0x12] ss:$0 sm:$0xff]
      %v2857 = vld [vmem:[%s8 + $0x13] ss:$0 sm:$0xff]
      %v2858 = vld [vmem:[%s8 + $0x14] ss:$0 sm:$0xff]
      %v2859 = vld [vmem:[%s8 + $0x15] ss:$0 sm:$0xff]
      %v2860 = vld [vmem:[%s8 + $0x16] ss:$0 sm:$0xff]
      %v2861 = vadd.f32 %v2844, 0.0
      %v2862 = vadd.f32 %v2845, 0.0
      %v2863 = vpack.c.bf16 %v2862, %v2861
      %v2864 = vld [vmem:[%s7] sm:$0xff]
      %v2865 = vld [vmem:[%s7 + $0x28] sm:$0xff]
      %v2866 = vld [vmem:[%s7 + $0x50] sm:$0xff]
      %v2867 = vld [vmem:[%s7 + $0x78] sm:$0xff]
      %v2868 = vld [vmem:[%s7 + $0xa0] sm:$0xff]
      %v2869 = vld [vmem:[%s7 + $0xc8] sm:$0xff]
      %v2870 = vld [vmem:[%s7 + $0xf0] sm:$0xff]
      %v2871 = vld [vmem:[%s7 + $0x118] sm:$0xff]
      %v2872 = vld [vmem:[%s7 + $0x140] sm:$0xff]
      %v2873 = vld [vmem:[%s7 + $0x168] sm:$0xff]
      %v2874 = vld [vmem:[%s7 + $0x190] sm:$0xff]
      %v2875 = vld [vmem:[%s7 + $0x1b8] sm:$0xff]
      %v2876 = vld [vmem:[%s7 + $0x1e0] sm:$0xff]
      %v2877 = vld [vmem:[%s7 + $0x208] sm:$0xff]
      %v2878 = vld [vmem:[%s7 + $0x230] sm:$0xff]
      %v2879 = vld [vmem:[%s7 + $0x258] sm:$0xff]
      %v2881 = vlaneseq
      %v2882 = vshrl.u32 %v2881, 7
      %v2883 = vsub.s32 0, %v2882
      %v2884 = vrot.slane %v2846, %v2883
      %v2885 = vlaneseq
      %v2886 = vshrl.u32 %v2885, 7
      %v2887 = vsub.s32 1, %v2886
      %v2888 = vrot.slane %v2846, %v2887
      %v2907 = vunpack.c.l.b16 %v2864
      %v2908 = vunpack.c.h.b16 %v2864
      %v2909 = vunpack.c.l.b16 %v2865
      %v2910 = vunpack.c.h.b16 %v2865
      %v2911 = vunpack.c.l.b16 %v2866
      %v2912 = vunpack.c.h.b16 %v2866
      %v2913 = vunpack.c.l.b16 %v2867
      %v2914 = vunpack.c.h.b16 %v2867
      %v2915 = vunpack.c.l.b16 %v2868
      %v2916 = vunpack.c.h.b16 %v2868
      %v2917 = vunpack.c.l.b16 %v2869
      %v2918 = vunpack.c.h.b16 %v2869
      %v2919 = vunpack.c.l.b16 %v2870
      %v2920 = vunpack.c.h.b16 %v2870
      %v2921 = vunpack.c.l.b16 %v2871
      %v2922 = vunpack.c.h.b16 %v2871
      %v2923 = vunpack.c.l.b16 %v2872
      %v2924 = vunpack.c.h.b16 %v2872
      %v2925 = vunpack.c.l.b16 %v2873
      %v2926 = vunpack.c.h.b16 %v2873
      %v2927 = vunpack.c.l.b16 %v2874
      %v2928 = vunpack.c.h.b16 %v2874
      %v2929 = vunpack.c.l.b16 %v2875
      %v2930 = vunpack.c.h.b16 %v2875
      %v2931 = vunpack.c.l.b16 %v2876
      %v2932 = vunpack.c.h.b16 %v2876
      %v2933 = vunpack.c.l.b16 %v2877
      %v2934 = vunpack.c.h.b16 %v2877
      %v2935 = vunpack.c.l.b16 %v2878
      %v2936 = vunpack.c.h.b16 %v2878
      %v2937 = vunpack.c.l.b16 %v2879
      %v2938 = vunpack.c.h.b16 %v2879
      %v2939 = vpack.c.b16 %v2909, %v2907
      %v2940 = vpack.c.b16 %v2910, %v2908
      %v2941 = vpack.c.b16 %v2913, %v2911
      %v2942 = vpack.c.b16 %v2914, %v2912
      %v2943 = vpack.c.b16 %v2917, %v2915
      %v2944 = vpack.c.b16 %v2918, %v2916
      %v2945 = vpack.c.b16 %v2921, %v2919
      %v2946 = vpack.c.b16 %v2922, %v2920
      %v2947 = vpack.c.b16 %v2925, %v2923
      %v2948 = vpack.c.b16 %v2926, %v2924
      %v2949 = vpack.c.b16 %v2929, %v2927
      %v2950 = vpack.c.b16 %v2930, %v2928
      %v2951 = vpack.c.b16 %v2933, %v2931
      %v2952 = vpack.c.b16 %v2934, %v2932
      %v2953 = vpack.c.b16 %v2937, %v2935
      %v2954 = vpack.c.b16 %v2938, %v2936
      %2971 = vmatprep.subr.bf16.mxu0 %v2954
      %2972 = vmatpush1.bf16.msra.mxu0 %v2953
      %2973 = vmatprep.subr.bf16.mxu0 %v2952
      %2974 = vmatpush1.bf16.msra.mxu0 %v2951
      %2975 = vmatprep.subr.bf16.mxu0 %v2950
      %2976 = vmatpush1.bf16.msra.mxu0 %v2949
      %2977 = vmatprep.subr.bf16.mxu0 %v2948
      %2978 = vmatpush1.bf16.msra.mxu0 %v2947
      %2979 = vmatprep.subr.bf16.mxu0 %v2946
      %2980 = vmatpush1.bf16.msra.mxu0 %v2945
      %2981 = vmatprep.subr.bf16.mxu0 %v2944
      %2982 = vmatpush1.bf16.msra.mxu0 %v2943
      %2983 = vmatprep.subr.bf16.mxu0 %v2942
      %2984 = vmatpush1.bf16.msra.mxu0 %v2941
      %2985 = vmatprep.subr.bf16.mxu0 %v2940
      %2986 = vmatpush1.bf16.msra.mxu0 %v2939
      %2987 = vmatprep.subr.bf16.mxu0 0
      %2988 = vmatpush2.bf16.msra.mxu0 0
      %2989 = vmatprep.subr.bf16.mxu0 0
      %2990 = vmatpush2.bf16.msra.mxu0 0
      %2991 = vmatprep.subr.bf16.mxu0 0
      %2992 = vmatpush2.bf16.msra.mxu0 0
      %2993 = vmatprep.subr.bf16.mxu0 0
      %2994 = vmatpush2.bf16.msra.mxu0 0
      %2995 = vmatprep.subr.bf16.mxu0 0
      %2996 = vmatpush2.bf16.msra.mxu0 0
      %2997 = vmatprep.subr.bf16.mxu0 0
      %2998 = vmatpush2.bf16.msra.mxu0 0
      %2999 = vmatprep.subr.bf16.mxu0 0
      %3000 = vmatpush2.bf16.msra.mxu0 0
      %3001 = vmatprep.subr.bf16.mxu0 0
      %3002 = vmatpush2.bf16.msra.mxu0 0
      %3003 = vmatprep.mubr.bf16.mxu0 0
      %3004 = vmatmul.mubr.bf16.gmra.mxu0 %v2863
      %v3005 = vpop.f32.mrf.mxu0
      %v3006 = vadd.f32 %v2884, %v3005
      %v3007 = vpop.f32.mrf.mxu0
      %v3008 = vadd.f32 %v2888, %v3007
      %v3009 = vpop.f32.mrf.mxu0
      %v3010 = vadd.f32 %v2884, %v3009
      %v3011 = vpop.f32.mrf.mxu0
      %v3012 = vadd.f32 %v2888, %v3011
      %3013 = vdwg.mxu0
      %v3014 = vld [vmem:[%s7 + $0x8] sm:$0xf]
      %v3015 = vld [vmem:[%s7 + $0x30] sm:$0xf]
      %v3016 = vld [vmem:[%s7 + $0x58] sm:$0xf]
      %v3017 = vld [vmem:[%s7 + $0x80] sm:$0xf]
      %v3018 = vld [vmem:[%s7 + $0xa8] sm:$0xf]
      %v3019 = vld [vmem:[%s7 + $0xd0] sm:$0xf]
      %v3020 = vld [vmem:[%s7 + $0xf8] sm:$0xf]
      %v3021 = vld [vmem:[%s7 + $0x120] sm:$0xf]
      %v3022 = vld [vmem:[%s7 + $0x148] sm:$0xf]
      %v3023 = vld [vmem:[%s7 + $0x170] sm:$0xf]
      %v3024 = vld [vmem:[%s7 + $0x198] sm:$0xf]
      %v3025 = vld [vmem:[%s7 + $0x1c0] sm:$0xf]
      %v3026 = vld [vmem:[%s7 + $0x1e8] sm:$0xf]
      %v3027 = vld [vmem:[%s7 + $0x210] sm:$0xf]
      %v3028 = vld [vmem:[%s7 + $0x238] sm:$0xf]
      %v3029 = vld [vmem:[%s7 + $0x260] sm:$0xf]
      %v3046 = vunpack.c.l.b16 %v3014
      %v3047 = vunpack.c.l.b16 %v3015
      %v3048 = vunpack.c.l.b16 %v3016
      %v3049 = vunpack.c.l.b16 %v3017
      %v3050 = vunpack.c.l.b16 %v3018
      %v3051 = vunpack.c.l.b16 %v3019
      %v3052 = vunpack.c.l.b16 %v3020
      %v3053 = vunpack.c.l.b16 %v3021
      %v3054 = vunpack.c.l.b16 %v3022
      %v3055 = vunpack.c.l.b16 %v3023
      %v3056 = vunpack.c.l.b16 %v3024
      %v3057 = vunpack.c.l.b16 %v3025
      %v3058 = vunpack.c.l.b16 %v3026
      %v3059 = vunpack.c.l.b16 %v3027
      %v3060 = vunpack.c.l.b16 %v3028
      %v3061 = vunpack.c.l.b16 %v3029
      %v3062 = vpack.c.b16 %v3047, %v3046
      %v3063 = vpack.c.b16 %v3049, %v3048
      %v3064 = vpack.c.b16 %v3051, %v3050
      %v3065 = vpack.c.b16 %v3053, %v3052
      %v3066 = vpack.c.b16 %v3055, %v3054
      %v3067 = vpack.c.b16 %v3057, %v3056
      %v3068 = vpack.c.b16 %v3059, %v3058
      %v3069 = vpack.c.b16 %v3061, %v3060
      %3078 = vmatprep.subr.bf16.mxu0 0
      %3079 = vmatpush1.bf16.msra.mxu0 %v3069
      %3080 = vmatprep.subr.bf16.mxu0 0
      %3081 = vmatpush1.bf16.msra.mxu0 %v3068
      %3082 = vmatprep.subr.bf16.mxu0 0
      %3083 = vmatpush1.bf16.msra.mxu0 %v3067
      %3084 = vmatprep.subr.bf16.mxu0 0
      %3085 = vmatpush1.bf16.msra.mxu0 %v3066
      %3086 = vmatprep.subr.bf16.mxu0 0
      %3087 = vmatpush1.bf16.msra.mxu0 %v3065
      %3088 = vmatprep.subr.bf16.mxu0 0
      %3089 = vmatpush1.bf16.msra.mxu0 %v3064
      %3090 = vmatprep.subr.bf16.mxu0 0
      %3091 = vmatpush1.bf16.msra.mxu0 %v3063
      %3092 = vmatprep.subr.bf16.mxu0 0
      %3093 = vmatpush1.bf16.msra.mxu0 %v3062
      %3094 = vmatprep.subr.bf16.mxu0 0
      %3095 = vmatpush2.bf16.msra.mxu0 0
      %3096 = vmatprep.subr.bf16.mxu0 0
      %3097 = vmatpush2.bf16.msra.mxu0 0
      %3098 = vmatprep.subr.bf16.mxu0 0
      %3099 = vmatpush2.bf16.msra.mxu0 0
      %3100 = vmatprep.subr.bf16.mxu0 0
      %3101 = vmatpush2.bf16.msra.mxu0 0
      %3102 = vmatprep.subr.bf16.mxu0 0
      %3103 = vmatpush2.bf16.msra.mxu0 0
      %3104 = vmatprep.subr.bf16.mxu0 0
      %3105 = vmatpush2.bf16.msra.mxu0 0
      %3106 = vmatprep.subr.bf16.mxu0 0
      %3107 = vmatpush2.bf16.msra.mxu0 0
      %3108 = vmatprep.subr.bf16.mxu0 0
      %3109 = vmatpush2.bf16.msra.mxu0 0
      %3110 = vmatprep.mubr.bf16.mxu0 0
      %3111 = vmatmul.mubr.bf16.gmra.mxu0 0
      %v3112 = vpop.f32.mrf.mxu0
      %v3113 = vadd.f32 %v2847, %v3112
      %v3114 = vpop.f32.mrf.mxu0
      %v3115 = vpop.f32.mrf.mxu0
      %v3116 = vadd.f32 %v2847, %v3115
      %v3117 = vpop.f32.mrf.mxu0
      %3118 = vdwg.mxu0
      %v3119 = vpack.c.bf16 %v3012, %v3008
      %v3120 = vmul.f32 %v3006, %v367
      %v3121 = vmul.f32 %v3010, %v367
      %v3122 = vpack.c.bf16 %v3121, %v3120
      %3123 = vmatprep.subr.bf16.mxu0 0
      %3124 = vmatpush1.bf16.xpose.msra.mxu0 0
      %3125 = vmatprep.subr.bf16.mxu0 0
      %3126 = vmatpush1.bf16.xpose.msra.mxu0 0
      %3127 = vmatprep.subr.bf16.mxu0 0
      %3128 = vmatpush1.bf16.xpose.msra.mxu0 0
      %3129 = vmatprep.subr.bf16.mxu0 0
      %3130 = vmatpush1.bf16.xpose.msra.mxu0 0
      %3131 = vmatprep.subr.bf16.mxu0 0
      %3132 = vmatpush1.bf16.xpose.msra.mxu0 0
      %3133 = vmatprep.subr.bf16.mxu0 0
      %3134 = vmatpush1.bf16.xpose.msra.mxu0 0
      %3135 = vmatprep.subr.bf16.mxu0 0
      %3136 = vmatpush1.bf16.xpose.msra.mxu0 0
      %3137 = vmatprep.subr.bf16.mxu0 0
      %3138 = vmatpush1.bf16.xpose.msra.mxu0 %v3119
      %3139 = vmatprep.subr.bf16.mxu0 0
      %3140 = vmatpush2.bf16.xpose.msra.mxu0 0
      %3141 = vmatprep.subr.bf16.mxu0 0
      %3142 = vmatpush2.bf16.xpose.msra.mxu0 0
      %3143 = vmatprep.subr.bf16.mxu0 0
      %3144 = vmatpush2.bf16.xpose.msra.mxu0 0
      %3145 = vmatprep.subr.bf16.mxu0 0
      %3146 = vmatpush2.bf16.xpose.msra.mxu0 0
      %3147 = vmatprep.subr.bf16.mxu0 0
      %3148 = vmatpush2.bf16.xpose.msra.mxu0 0
      %3149 = vmatprep.subr.bf16.mxu0 0
      %3150 = vmatpush2.bf16.xpose.msra.mxu0 0
      %3151 = vmatprep.subr.bf16.mxu0 0
      %3152 = vmatpush2.bf16.xpose.msra.mxu0 0
      %3153 = vmatprep.subr.bf16.mxu0 0
      %3154 = vmatpush2.bf16.xpose.msra.mxu0 0
      %3155 = vmatprep.mubr.bf16.mxu0 0
      %3156 = vmatmul.mubr.bf16.gmra.mxu0 %v3122
      %v3157 = vpop.f32.mrf.mxu0
      %v3158 = vadd.f32 0.0, %v3157
      %v3159 = vpop.f32.mrf.mxu0
      %v3160 = vpop.f32.mrf.mxu0
      %v3161 = vadd.f32 0.0, %v3160
      %v3162 = vpop.f32.mrf.mxu0
      %3163 = vdwg.mxu0
      %v3164 = vsel %vm465, %v3158, -inf
      %3165 = vmax.xlane.f32.xlu0 %v3164
      %v3166 = vpop.xlane.xlu0 %3165
      %v3167 = vsel %vm465, %v3161, -inf
      %3168 = vmax.xlane.f32.xlu0 %v3167
      %v3169 = vpop.xlane.xlu0 %3168
      %v3170 = vsub.f32 %v3158, %v3166
      %v3171 = vsub.f32 %v3161, %v3169
      %v3172 = vmul.f32 %v3170, 1.442695
      %v3173 = vpow.pop %v3172
      %v3174 = vmul.f32 %v3171, 1.442695
      %v3175 = vpow.pop %v3174
      %v3176 = vsel %vm465, %v3173, 0.0
      %3177 = vadd.xlane.f32.xlu0 %v3176
      %v3178 = vpop.xlane.xlu0 %3177
      %v3179 = vsel %vm465, %v3175, 0.0
      %3180 = vadd.xlane.f32.xlu0 %v3179
      %v3181 = vpop.xlane.xlu0 %3180
      %v3182 = vrcp.pop %v3178
      %v3183 = vrcp.pop %v3181
      %v3184 = vmul.f32 %v3173, %v3182
      %v3185 = vmul.f32 %v3175, %v3183
      %v3186 = vpack.c.bf16 %v3185, %v3184
      %v3187 = vmul.f32 %v3113, %v367
      %v3188 = vmul.f32 %v3116, %v367
      %v3189 = vpack.c.bf16 %v3188, %v3187
      %v3190 = vmul.f32 %v3006, %v372
      %v3191 = vmul.f32 %v3010, %v372
      %v3192 = vpack.c.bf16 %v3191, %v3190
      %3193 = vmatprep.subr.bf16.mxu0 0
      %3194 = vmatpush1.bf16.xpose.msra.mxu0 0
      %3195 = vmatprep.subr.bf16.mxu0 0
      %3196 = vmatpush1.bf16.xpose.msra.mxu0 0
      %3197 = vmatprep.subr.bf16.mxu0 0
      %3198 = vmatpush1.bf16.xpose.msra.mxu0 0
      %3199 = vmatprep.subr.bf16.mxu0 0
      %3200 = vmatpush1.bf16.xpose.msra.mxu0 0
      %3201 = vmatprep.subr.bf16.mxu0 0
      %3202 = vmatpush1.bf16.xpose.msra.mxu0 0
      %3203 = vmatprep.subr.bf16.mxu0 0
      %3204 = vmatpush1.bf16.xpose.msra.mxu0 0
      %3205 = vmatprep.subr.bf16.mxu0 0
      %3206 = vmatpush1.bf16.xpose.msra.mxu0 0
      %3207 = vmatprep.subr.bf16.mxu0 0
      %3208 = vmatpush1.bf16.xpose.msra.mxu0 %v3119
      %3209 = vmatprep.subr.bf16.mxu0 0
      %3210 = vmatpush2.bf16.xpose.msra.mxu0 0
      %3211 = vmatprep.subr.bf16.mxu0 0
      %3212 = vmatpush2.bf16.xpose.msra.mxu0 0
      %3213 = vmatprep.subr.bf16.mxu0 0
      %3214 = vmatpush2.bf16.xpose.msra.mxu0 0
      %3215 = vmatprep.subr.bf16.mxu0 0
      %3216 = vmatpush2.bf16.xpose.msra.mxu0 0
      %3217 = vmatprep.subr.bf16.mxu0 0
      %3218 = vmatpush2.bf16.xpose.msra.mxu0 0
      %3219 = vmatprep.subr.bf16.mxu0 0
      %3220 = vmatpush2.bf16.xpose.msra.mxu0 0
      %3221 = vmatprep.subr.bf16.mxu0 0
      %3222 = vmatpush2.bf16.xpose.msra.mxu0 0
      %3223 = vmatprep.subr.bf16.mxu0 0
      %3224 = vmatpush2.bf16.xpose.msra.mxu0 0
      %3225 = vmatprep.mubr.bf16.mxu0 0
      %3226 = vmatmul.mubr.bf16.gmra.mxu0 %v3192
      %v3227 = vpop.f32.mrf.mxu0
      %v3228 = vadd.f32 0.0, %v3227
      %v3229 = vpop.f32.mrf.mxu0
      %v3230 = vpop.f32.mrf.mxu0
      %v3231 = vadd.f32 0.0, %v3230
      %v3232 = vpop.f32.mrf.mxu0
      %3233 = vdwg.mxu0
      %v3234 = vsel %vm465, %v3228, -inf
      %3235 = vmax.xlane.f32.xlu0 %v3234
      %v3236 = vpop.xlane.xlu0 %3235
      %v3237 = vsel %vm465, %v3231, -inf
      %3238 = vmax.xlane.f32.xlu0 %v3237
      %v3239 = vpop.xlane.xlu0 %3238
      %v3240 = vsub.f32 %v3228, %v3236
      %v3241 = vsub.f32 %v3231, %v3239
      %v3242 = vmul.f32 %v3240, 1.442695
      %v3243 = vpow.pop %v3242
      %v3244 = vmul.f32 %v3241, 1.442695
      %v3245 = vpow.pop %v3244
      %v3246 = vsel %vm465, %v3243, 0.0
      %3247 = vadd.xlane.f32.xlu0 %v3246
      %v3248 = vpop.xlane.xlu0 %3247
      %v3249 = vsel %vm465, %v3245, 0.0
      %3250 = vadd.xlane.f32.xlu0 %v3249
      %v3251 = vpop.xlane.xlu0 %3250
      %v3252 = vrcp.pop %v3248
      %v3253 = vrcp.pop %v3251
      %v3254 = vmul.f32 %v3243, %v3252
      %v3255 = vmul.f32 %v3245, %v3253
      %v3256 = vpack.c.bf16 %v3255, %v3254
      %v3257 = vmul.f32 %v3113, %v372
      %v3258 = vmul.f32 %v3116, %v372
      %v3259 = vpack.c.bf16 %v3258, %v3257
      %v3261 = vsel %vm465, %v3256, 0
      %3263 = vmatprep.subr.bf16.mxu0 0
      %3264 = vmatpush1.bf16.msra.mxu0 0
      %3265 = vmatprep.subr.bf16.mxu0 0
      %3266 = vmatpush1.bf16.msra.mxu0 0
      %3267 = vmatprep.subr.bf16.mxu0 0
      %3268 = vmatpush1.bf16.msra.mxu0 0
      %3269 = vmatprep.subr.bf16.mxu0 0
      %3270 = vmatpush1.bf16.msra.mxu0 0
      %3271 = vmatprep.subr.bf16.mxu0 0
      %3272 = vmatpush1.bf16.msra.mxu0 0
      %3273 = vmatprep.subr.bf16.mxu0 0
      %3274 = vmatpush1.bf16.msra.mxu0 0
      %3275 = vmatprep.subr.bf16.mxu0 0
      %3276 = vmatpush1.bf16.msra.mxu0 0
      %3277 = vmatprep.subr.bf16.mxu0 0
      %3278 = vmatpush1.bf16.msra.mxu0 %v3259
      %3279 = vmatprep.subr.bf16.mxu0 0
      %3280 = vmatpush2.bf16.msra.mxu0 0
      %3281 = vmatprep.subr.bf16.mxu0 0
      %3282 = vmatpush2.bf16.msra.mxu0 0
      %3283 = vmatprep.subr.bf16.mxu0 0
      %3284 = vmatpush2.bf16.msra.mxu0 0
      %3285 = vmatprep.subr.bf16.mxu0 0
      %3286 = vmatpush2.bf16.msra.mxu0 0
      %3287 = vmatprep.subr.bf16.mxu0 0
      %3288 = vmatpush2.bf16.msra.mxu0 0
      %3289 = vmatprep.subr.bf16.mxu0 0
      %3290 = vmatpush2.bf16.msra.mxu0 0
      %3291 = vmatprep.subr.bf16.mxu0 0
      %3292 = vmatpush2.bf16.msra.mxu0 0
      %3293 = vmatprep.subr.bf16.mxu0 0
      %3294 = vmatpush2.bf16.msra.mxu0 0
      %3295 = vmatprep.mubr.bf16.mxu0 0
      %3296 = vmatmul.mubr.bf16.gmra.mxu0 %v3261
      %v3297 = vpop.f32.mrf.mxu0
      %v3298 = vadd.f32 0.0, %v3297
      %v3299 = vpop.f32.mrf.mxu0
      %v3300 = vpop.f32.mrf.mxu0
      %v3301 = vadd.f32 0.0, %v3300
      %v3302 = vpop.f32.mrf.mxu0
      %3303 = vdwg.mxu0
      %v3305 = vsel %vm465, %v3186, 0
      %3307 = vmatprep.subr.bf16.mxu0 0
      %3308 = vmatpush1.bf16.msra.mxu0 0
      %3309 = vmatprep.subr.bf16.mxu0 0
      %3310 = vmatpush1.bf16.msra.mxu0 0
      %3311 = vmatprep.subr.bf16.mxu0 0
      %3312 = vmatpush1.bf16.msra.mxu0 0
      %3313 = vmatprep.subr.bf16.mxu0 0
      %3314 = vmatpush1.bf16.msra.mxu0 0
      %3315 = vmatprep.subr.bf16.mxu0 0
      %3316 = vmatpush1.bf16.msra.mxu0 0
      %3317 = vmatprep.subr.bf16.mxu0 0
      %3318 = vmatpush1.bf16.msra.mxu0 0
      %3319 = vmatprep.subr.bf16.mxu0 0
      %3320 = vmatpush1.bf16.msra.mxu0 0
      %3321 = vmatprep.subr.bf16.mxu0 0
      %3322 = vmatpush1.bf16.msra.mxu0 %v3189
      %3323 = vmatprep.subr.bf16.mxu0 0
      %3324 = vmatpush2.bf16.msra.mxu0 0
      %3325 = vmatprep.subr.bf16.mxu0 0
      %3326 = vmatpush2.bf16.msra.mxu0 0
      %3327 = vmatprep.subr.bf16.mxu0 0
      %3328 = vmatpush2.bf16.msra.mxu0 0
      %3329 = vmatprep.subr.bf16.mxu0 0
      %3330 = vmatpush2.bf16.msra.mxu0 0
      %3331 = vmatprep.subr.bf16.mxu0 0
      %3332 = vmatpush2.bf16.msra.mxu0 0
      %3333 = vmatprep.subr.bf16.mxu0 0
      %3334 = vmatpush2.bf16.msra.mxu0 0
      %3335 = vmatprep.subr.bf16.mxu0 0
      %3336 = vmatpush2.bf16.msra.mxu0 0
      %3337 = vmatprep.subr.bf16.mxu0 0
      %3338 = vmatpush2.bf16.msra.mxu0 0
      %3339 = vmatprep.mubr.bf16.mxu0 0
      %3340 = vmatmul.mubr.bf16.gmra.mxu0 %v3305
      %v3341 = vpop.f32.mrf.mxu0
      %v3342 = vadd.f32 %v3298, %v3341
      %v3343 = vpop.f32.mrf.mxu0
      %v3344 = vpop.f32.mrf.mxu0
      %v3345 = vadd.f32 %v3301, %v3344
      %v3346 = vpop.f32.mrf.mxu0
      %3347 = vdwg.mxu0
      %v3348 = vmul.f32 %v3006, %v377
      %v3349 = vmul.f32 %v3010, %v377
      %v3350 = vpack.c.bf16 %v3349, %v3348
      %3351 = vmatprep.subr.bf16.mxu0 0
      %3352 = vmatpush1.bf16.xpose.msra.mxu0 0
      %3353 = vmatprep.subr.bf16.mxu0 0
      %3354 = vmatpush1.bf16.xpose.msra.mxu0 0
      %3355 = vmatprep.subr.bf16.mxu0 0
      %3356 = vmatpush1.bf16.xpose.msra.mxu0 0
      %3357 = vmatprep.subr.bf16.mxu0 0
      %3358 = vmatpush1.bf16.xpose.msra.mxu0 0
      %3359 = vmatprep.subr.bf16.mxu0 0
      %3360 = vmatpush1.bf16.xpose.msra.mxu0 0
      %3361 = vmatprep.subr.bf16.mxu0 0
      %3362 = vmatpush1.bf16.xpose.msra.mxu0 0
      %3363 = vmatprep.subr.bf16.mxu0 0
      %3364 = vmatpush1.bf16.xpose.msra.mxu0 0
      %3365 = vmatprep.subr.bf16.mxu0 0
      %3366 = vmatpush1.bf16.xpose.msra.mxu0 %v3119
      %3367 = vmatprep.subr.bf16.mxu0 0
      %3368 = vmatpush2.bf16.xpose.msra.mxu0 0
      %3369 = vmatprep.subr.bf16.mxu0 0
      %3370 = vmatpush2.bf16.xpose.msra.mxu0 0
      %3371 = vmatprep.subr.bf16.mxu0 0
      %3372 = vmatpush2.bf16.xpose.msra.mxu0 0
      %3373 = vmatprep.subr.bf16.mxu0 0
      %3374 = vmatpush2.bf16.xpose.msra.mxu0 0
      %3375 = vmatprep.subr.bf16.mxu0 0
      %3376 = vmatpush2.bf16.xpose.msra.mxu0 0
      %3377 = vmatprep.subr.bf16.mxu0 0
      %3378 = vmatpush2.bf16.xpose.msra.mxu0 0
      %3379 = vmatprep.subr.bf16.mxu0 0
      %3380 = vmatpush2.bf16.xpose.msra.mxu0 0
      %3381 = vmatprep.subr.bf16.mxu0 0
      %3382 = vmatpush2.bf16.xpose.msra.mxu0 0
      %3383 = vmatprep.mubr.bf16.mxu0 0
      %3384 = vmatmul.mubr.bf16.gmra.mxu0 %v3350
      %v3385 = vpop.f32.mrf.mxu0
      %v3386 = vadd.f32 0.0, %v3385
      %v3387 = vpop.f32.mrf.mxu0
      %v3388 = vpop.f32.mrf.mxu0
      %v3389 = vadd.f32 0.0, %v3388
      %v3390 = vpop.f32.mrf.mxu0
      %3391 = vdwg.mxu0
      %v3392 = vsel %vm465, %v3386, -inf
      %3393 = vmax.xlane.f32.xlu0 %v3392
      %v3394 = vpop.xlane.xlu0 %3393
      %v3395 = vsel %vm465, %v3389, -inf
      %3396 = vmax.xlane.f32.xlu0 %v3395
      %v3397 = vpop.xlane.xlu0 %3396
      %v3398 = vsub.f32 %v3386, %v3394
      %v3399 = vsub.f32 %v3389, %v3397
      %v3400 = vmul.f32 %v3398, 1.442695
      %v3401 = vpow.pop %v3400
      %v3402 = vmul.f32 %v3399, 1.442695
      %v3403 = vpow.pop %v3402
      %v3404 = vsel %vm465, %v3401, 0.0
      %3405 = vadd.xlane.f32.xlu0 %v3404
      %v3406 = vpop.xlane.xlu0 %3405
      %v3407 = vsel %vm465, %v3403, 0.0
      %3408 = vadd.xlane.f32.xlu0 %v3407
      %v3409 = vpop.xlane.xlu0 %3408
      %v3410 = vrcp.pop %v3406
      %v3411 = vrcp.pop %v3409
      %v3412 = vmul.f32 %v3401, %v3410
      %v3413 = vmul.f32 %v3403, %v3411
      %v3414 = vpack.c.bf16 %v3413, %v3412
      %v3415 = vmul.f32 %v3113, %v377
      %v3416 = vmul.f32 %v3116, %v377
      %v3417 = vpack.c.bf16 %v3416, %v3415
      %v3419 = vsel %vm465, %v3414, 0
      %3421 = vmatprep.subr.bf16.mxu0 0
      %3422 = vmatpush1.bf16.msra.mxu0 0
      %3423 = vmatprep.subr.bf16.mxu0 0
      %3424 = vmatpush1.bf16.msra.mxu0 0
      %3425 = vmatprep.subr.bf16.mxu0 0
      %3426 = vmatpush1.bf16.msra.mxu0 0
      %3427 = vmatprep.subr.bf16.mxu0 0
      %3428 = vmatpush1.bf16.msra.mxu0 0
      %3429 = vmatprep.subr.bf16.mxu0 0
      %3430 = vmatpush1.bf16.msra.mxu0 0
      %3431 = vmatprep.subr.bf16.mxu0 0
      %3432 = vmatpush1.bf16.msra.mxu0 0
      %3433 = vmatprep.subr.bf16.mxu0 0
      %3434 = vmatpush1.bf16.msra.mxu0 0
      %3435 = vmatprep.subr.bf16.mxu0 0
      %3436 = vmatpush1.bf16.msra.mxu0 %v3417
      %3437 = vmatprep.subr.bf16.mxu0 0
      %3438 = vmatpush2.bf16.msra.mxu0 0
      %3439 = vmatprep.subr.bf16.mxu0 0
      %3440 = vmatpush2.bf16.msra.mxu0 0
      %3441 = vmatprep.subr.bf16.mxu0 0
      %3442 = vmatpush2.bf16.msra.mxu0 0
      %3443 = vmatprep.subr.bf16.mxu0 0
      %3444 = vmatpush2.bf16.msra.mxu0 0
      %3445 = vmatprep.subr.bf16.mxu0 0
      %3446 = vmatpush2.bf16.msra.mxu0 0
      %3447 = vmatprep.subr.bf16.mxu0 0
      %3448 = vmatpush2.bf16.msra.mxu0 0
      %3449 = vmatprep.subr.bf16.mxu0 0
      %3450 = vmatpush2.bf16.msra.mxu0 0
      %3451 = vmatprep.subr.bf16.mxu0 0
      %3452 = vmatpush2.bf16.msra.mxu0 0
      %3453 = vmatprep.mubr.bf16.mxu0 0
      %3454 = vmatmul.mubr.bf16.gmra.mxu0 %v3419
      %v3455 = vpop.f32.mrf.mxu0
      %v3456 = vadd.f32 0.0, %v3455
      %v3457 = vpop.f32.mrf.mxu0
      %v3458 = vpop.f32.mrf.mxu0
      %v3459 = vadd.f32 0.0, %v3458
      %v3460 = vpop.f32.mrf.mxu0
      %3461 = vdwg.mxu0
      %v3462 = vadd.f32 %v3342, %v3456
      %v3463 = vadd.f32 %v3345, %v3459
      %v3464 = vmul.f32 %v3006, %v382
      %v3465 = vmul.f32 %v3010, %v382
      %v3466 = vpack.c.bf16 %v3465, %v3464
      %3467 = vmatprep.subr.bf16.mxu0 0
      %3468 = vmatpush1.bf16.xpose.msra.mxu0 0
      %3469 = vmatprep.subr.bf16.mxu0 0
      %3470 = vmatpush1.bf16.xpose.msra.mxu0 0
      %3471 = vmatprep.subr.bf16.mxu0 0
      %3472 = vmatpush1.bf16.xpose.msra.mxu0 0
      %3473 = vmatprep.subr.bf16.mxu0 0
      %3474 = vmatpush1.bf16.xpose.msra.mxu0 0
      %3475 = vmatprep.subr.bf16.mxu0 0
      %3476 = vmatpush1.bf16.xpose.msra.mxu0 0
      %3477 = vmatprep.subr.bf16.mxu0 0
      %3478 = vmatpush1.bf16.xpose.msra.mxu0 0
      %3479 = vmatprep.subr.bf16.mxu0 0
      %3480 = vmatpush1.bf16.xpose.msra.mxu0 0
      %3481 = vmatprep.subr.bf16.mxu0 0
      %3482 = vmatpush1.bf16.xpose.msra.mxu0 %v3119
      %3483 = vmatprep.subr.bf16.mxu0 0
      %3484 = vmatpush2.bf16.xpose.msra.mxu0 0
      %3485 = vmatprep.subr.bf16.mxu0 0
      %3486 = vmatpush2.bf16.xpose.msra.mxu0 0
      %3487 = vmatprep.subr.bf16.mxu0 0
      %3488 = vmatpush2.bf16.xpose.msra.mxu0 0
      %3489 = vmatprep.subr.bf16.mxu0 0
      %3490 = vmatpush2.bf16.xpose.msra.mxu0 0
      %3491 = vmatprep.subr.bf16.mxu0 0
      %3492 = vmatpush2.bf16.xpose.msra.mxu0 0
      %3493 = vmatprep.subr.bf16.mxu0 0
      %3494 = vmatpush2.bf16.xpose.msra.mxu0 0
      %3495 = vmatprep.subr.bf16.mxu0 0
      %3496 = vmatpush2.bf16.xpose.msra.mxu0 0
      %3497 = vmatprep.subr.bf16.mxu0 0
      %3498 = vmatpush2.bf16.xpose.msra.mxu0 0
      %3499 = vmatprep.mubr.bf16.mxu0 0
      %3500 = vmatmul.mubr.bf16.gmra.mxu0 %v3466
      %v3501 = vpop.f32.mrf.mxu0
      %v3502 = vadd.f32 0.0, %v3501
      %v3503 = vpop.f32.mrf.mxu0
      %v3504 = vpop.f32.mrf.mxu0
      %v3505 = vadd.f32 0.0, %v3504
      %v3506 = vpop.f32.mrf.mxu0
      %3507 = vdwg.mxu0
      %v3508 = vsel %vm465, %v3502, -inf
      %3509 = vmax.xlane.f32.xlu0 %v3508
      %v3510 = vpop.xlane.xlu0 %3509
      %v3511 = vsel %vm465, %v3505, -inf
      %3512 = vmax.xlane.f32.xlu0 %v3511
      %v3513 = vpop.xlane.xlu0 %3512
      %v3514 = vsub.f32 %v3502, %v3510
      %v3515 = vsub.f32 %v3505, %v3513
      %v3516 = vmul.f32 %v3514, 1.442695
      %v3517 = vpow.pop %v3516
      %v3518 = vmul.f32 %v3515, 1.442695
      %v3519 = vpow.pop %v3518
      %v3520 = vsel %vm465, %v3517, 0.0
      %3521 = vadd.xlane.f32.xlu0 %v3520
      %v3522 = vpop.xlane.xlu0 %3521
      %v3523 = vsel %vm465, %v3519, 0.0
      %3524 = vadd.xlane.f32.xlu0 %v3523
      %v3525 = vpop.xlane.xlu0 %3524
      %v3526 = vrcp.pop %v3522
      %v3527 = vrcp.pop %v3525
      %v3528 = vmul.f32 %v3517, %v3526
      %v3529 = vmul.f32 %v3519, %v3527
      %v3530 = vpack.c.bf16 %v3529, %v3528
      %v3531 = vmul.f32 %v3113, %v382
      %v3532 = vmul.f32 %v3116, %v382
      %v3533 = vpack.c.bf16 %v3532, %v3531
      %v3535 = vsel %vm465, %v3530, 0
      %3537 = vmatprep.subr.bf16.mxu0 0
      %3538 = vmatpush1.bf16.msra.mxu0 0
      %3539 = vmatprep.subr.bf16.mxu0 0
      %3540 = vmatpush1.bf16.msra.mxu0 0
      %3541 = vmatprep.subr.bf16.mxu0 0
      %3542 = vmatpush1.bf16.msra.mxu0 0
      %3543 = vmatprep.subr.bf16.mxu0 0
      %3544 = vmatpush1.bf16.msra.mxu0 0
      %3545 = vmatprep.subr.bf16.mxu0 0
      %3546 = vmatpush1.bf16.msra.mxu0 0
      %3547 = vmatprep.subr.bf16.mxu0 0
      %3548 = vmatpush1.bf16.msra.mxu0 0
      %3549 = vmatprep.subr.bf16.mxu0 0
      %3550 = vmatpush1.bf16.msra.mxu0 0
      %3551 = vmatprep.subr.bf16.mxu0 0
      %3552 = vmatpush1.bf16.msra.mxu0 %v3533
      %3553 = vmatprep.subr.bf16.mxu0 0
      %3554 = vmatpush2.bf16.msra.mxu0 0
      %3555 = vmatprep.subr.bf16.mxu0 0
      %3556 = vmatpush2.bf16.msra.mxu0 0
      %3557 = vmatprep.subr.bf16.mxu0 0
      %3558 = vmatpush2.bf16.msra.mxu0 0
      %3559 = vmatprep.subr.bf16.mxu0 0
      %3560 = vmatpush2.bf16.msra.mxu0 0
      %3561 = vmatprep.subr.bf16.mxu0 0
      %3562 = vmatpush2.bf16.msra.mxu0 0
      %3563 = vmatprep.subr.bf16.mxu0 0
      %3564 = vmatpush2.bf16.msra.mxu0 0
      %3565 = vmatprep.subr.bf16.mxu0 0
      %3566 = vmatpush2.bf16.msra.mxu0 0
      %3567 = vmatprep.subr.bf16.mxu0 0
      %3568 = vmatpush2.bf16.msra.mxu0 0
      %3569 = vmatprep.mubr.bf16.mxu0 0
      %3570 = vmatmul.mubr.bf16.gmra.mxu0 %v3535
      %v3571 = vpop.f32.mrf.mxu0
      %v3572 = vadd.f32 0.0, %v3571
      %v3573 = vpop.f32.mrf.mxu0
      %v3574 = vpop.f32.mrf.mxu0
      %v3575 = vadd.f32 0.0, %v3574
      %v3576 = vpop.f32.mrf.mxu0
      %3577 = vdwg.mxu0
      %v3578 = vadd.f32 %v3462, %v3572
      %v3579 = vadd.f32 %v3463, %v3575
      %v3580 = vpack.c.bf16 %v3579, %v3578
      %v3581 = vld [vmem:[%s7 + $0xc] sm:$0xf]
      %v3582 = vld [vmem:[%s7 + $0x34] sm:$0xf]
      %v3583 = vld [vmem:[%s7 + $0x5c] sm:$0xf]
      %v3584 = vld [vmem:[%s7 + $0x84] sm:$0xf]
      %v3585 = vld [vmem:[%s7 + $0xac] sm:$0xf]
      %v3586 = vld [vmem:[%s7 + $0xd4] sm:$0xf]
      %v3587 = vld [vmem:[%s7 + $0xfc] sm:$0xf]
      %v3588 = vld [vmem:[%s7 + $0x124] sm:$0xf]
      %v3589 = vld [vmem:[%s7 + $0x14c] sm:$0xf]
      %v3590 = vld [vmem:[%s7 + $0x174] sm:$0xf]
      %v3591 = vld [vmem:[%s7 + $0x19c] sm:$0xf]
      %v3592 = vld [vmem:[%s7 + $0x1c4] sm:$0xf]
      %v3593 = vld [vmem:[%s7 + $0x1ec] sm:$0xf]
      %v3594 = vld [vmem:[%s7 + $0x214] sm:$0xf]
      %v3595 = vld [vmem:[%s7 + $0x23c] sm:$0xf]
      %v3596 = vld [vmem:[%s7 + $0x264] sm:$0xf]
      %v3613 = vunpack.c.l.b16 %v3581
      %v3614 = vunpack.c.l.b16 %v3582
      %v3615 = vunpack.c.l.b16 %v3583
      %v3616 = vunpack.c.l.b16 %v3584
      %v3617 = vunpack.c.l.b16 %v3585
      %v3618 = vunpack.c.l.b16 %v3586
      %v3619 = vunpack.c.l.b16 %v3587
      %v3620 = vunpack.c.l.b16 %v3588
      %v3621 = vunpack.c.l.b16 %v3589
      %v3622 = vunpack.c.l.b16 %v3590
      %v3623 = vunpack.c.l.b16 %v3591
      %v3624 = vunpack.c.l.b16 %v3592
      %v3625 = vunpack.c.l.b16 %v3593
      %v3626 = vunpack.c.l.b16 %v3594
      %v3627 = vunpack.c.l.b16 %v3595
      %v3628 = vunpack.c.l.b16 %v3596
      %v3629 = vpack.c.b16 %v3614, %v3613
      %v3630 = vpack.c.b16 %v3616, %v3615
      %v3631 = vpack.c.b16 %v3618, %v3617
      %v3632 = vpack.c.b16 %v3620, %v3619
      %v3633 = vpack.c.b16 %v3622, %v3621
      %v3634 = vpack.c.b16 %v3624, %v3623
      %v3635 = vpack.c.b16 %v3626, %v3625
      %v3636 = vpack.c.b16 %v3628, %v3627
      %3645 = vmatprep.subr.bf16.mxu0 0
      %3646 = vmatpush1.bf16.msra.mxu0 %v3636
      %3647 = vmatprep.subr.bf16.mxu0 0
      %3648 = vmatpush1.bf16.msra.mxu0 %v3635
      %3649 = vmatprep.subr.bf16.mxu0 0
      %3650 = vmatpush1.bf16.msra.mxu0 %v3634
      %3651 = vmatprep.subr.bf16.mxu0 0
      %3652 = vmatpush1.bf16.msra.mxu0 %v3633
      %3653 = vmatprep.subr.bf16.mxu0 0
      %3654 = vmatpush1.bf16.msra.mxu0 %v3632
      %3655 = vmatprep.subr.bf16.mxu0 0
      %3656 = vmatpush1.bf16.msra.mxu0 %v3631
      %3657 = vmatprep.subr.bf16.mxu0 0
      %3658 = vmatpush1.bf16.msra.mxu0 %v3630
      %3659 = vmatprep.subr.bf16.mxu0 0
      %3660 = vmatpush1.bf16.msra.mxu0 %v3629
      %3661 = vmatprep.subr.bf16.mxu0 0
      %3662 = vmatpush2.bf16.msra.mxu0 0
      %3663 = vmatprep.subr.bf16.mxu0 0
      %3664 = vmatpush2.bf16.msra.mxu0 0
      %3665 = vmatprep.subr.bf16.mxu0 0
      %3666 = vmatpush2.bf16.msra.mxu0 0
      %3667 = vmatprep.subr.bf16.mxu0 0
      %3668 = vmatpush2.bf16.msra.mxu0 0
      %3669 = vmatprep.subr.bf16.mxu0 0
      %3670 = vmatpush2.bf16.msra.mxu0 0
      %3671 = vmatprep.subr.bf16.mxu0 0
      %3672 = vmatpush2.bf16.msra.mxu0 0
      %3673 = vmatprep.subr.bf16.mxu0 0
      %3674 = vmatpush2.bf16.msra.mxu0 0
      %3675 = vmatprep.subr.bf16.mxu0 0
      %3676 = vmatpush2.bf16.msra.mxu0 0
      %3677 = vmatprep.mubr.bf16.mxu0 0
      %3678 = vmatmul.mubr.bf16.gmra.mxu0 %v3580
      %v3679 = vpop.f32.mrf.mxu0
      %v3680 = vadd.f32 %v2848, %v3679
      %v3681 = vpop.f32.mrf.mxu0
      %v3682 = vpop.f32.mrf.mxu0
      %v3683 = vadd.f32 %v2848, %v3682
      %v3684 = vpop.f32.mrf.mxu0
      %3685 = vdwg.mxu0
      %v3686 = vadd.f32 %v3680, 0.0
      %v3687 = vadd.f32 %v3683, 0.0
      %3688 = vadd.xlane.f32.xlu0 %v3686
      %v3689 = vpop.xlane.xlu0 %3688
      %3690 = vadd.xlane.f32.xlu0 %v3687
      %v3691 = vpop.xlane.xlu0 %3690
      %v3692 = vmul.f32 %v3689, 0.015625
      %v3693 = vmul.f32 %v3691, 0.015625
      %v3694 = vsub.f32 %v3686, %v3692
      %v3695 = vsub.f32 %v3687, %v3693
      %v3696 = vmul.f32 %v3694, %v3694
      %v3697 = vmul.f32 %v3695, %v3695
      %v3698 = vmul.f32 %v3696, %v384
      %v3699 = vmul.f32 %v3697, %v384
      %3700 = vadd.xlane.f32.xlu0 %v3698
      %v3701 = vpop.xlane.xlu0 %3700
      %3702 = vadd.xlane.f32.xlu0 %v3699
      %v3703 = vpop.xlane.xlu0 %3702
      %v3704 = vmul.f32 %v3701, 0.015625
      %v3705 = vmul.f32 %v3703, 0.015625
      %v3706 = vadd.f32 %v3704, 1e-05
      %v3707 = vadd.f32 %v3705, 1e-05
      %v3708 = vrsqrt.pop %v3706
      %v3709 = vrsqrt.pop %v3707
      %v3710 = vmul.f32 %v3694, %v3708
      %v3711 = vmul.f32 %v3695, %v3709
      %v3712 = vmul.f32 %v3710, %v2849
      %v3713 = vmul.f32 %v3711, %v2849
      %v3714 = vadd.f32 %v3712, %v2850
      %v3715 = vadd.f32 %v3713, %v2850
      %v3716 = vadd.f32 %v3714, %v2844
      %v3717 = vadd.f32 %v3715, %v2845
      %v3718 = vpack.c.bf16 %v3717, %v3716
      %v3719 = vld [vmem:[%s7 + $0x10] sm:$0xf]
      %v3720 = vld [vmem:[%s7 + $0x38] sm:$0xf]
      %v3721 = vld [vmem:[%s7 + $0x60] sm:$0xf]
      %v3722 = vld [vmem:[%s7 + $0x88] sm:$0xf]
      %v3723 = vld [vmem:[%s7 + $0xb0] sm:$0xf]
      %v3724 = vld [vmem:[%s7 + $0xd8] sm:$0xf]
      %v3725 = vld [vmem:[%s7 + $0x100] sm:$0xf]
      %v3726 = vld [vmem:[%s7 + $0x128] sm:$0xf]
      %v3727 = vld [vmem:[%s7 + $0x150] sm:$0xf]
      %v3728 = vld [vmem:[%s7 + $0x178] sm:$0xf]
      %v3729 = vld [vmem:[%s7 + $0x1a0] sm:$0xf]
      %v3730 = vld [vmem:[%s7 + $0x1c8] sm:$0xf]
      %v3731 = vld [vmem:[%s7 + $0x1f0] sm:$0xf]
      %v3732 = vld [vmem:[%s7 + $0x218] sm:$0xf]
      %v3733 = vld [vmem:[%s7 + $0x240] sm:$0xf]
      %v3734 = vld [vmem:[%s7 + $0x268] sm:$0xf]
      %v3751 = vunpack.c.l.b16 %v3719
      %v3752 = vunpack.c.l.b16 %v3720
      %v3753 = vunpack.c.l.b16 %v3721
      %v3754 = vunpack.c.l.b16 %v3722
      %v3755 = vunpack.c.l.b16 %v3723
      %v3756 = vunpack.c.l.b16 %v3724
      %v3757 = vunpack.c.l.b16 %v3725
      %v3758 = vunpack.c.l.b16 %v3726
      %v3759 = vunpack.c.l.b16 %v3727
      %v3760 = vunpack.c.l.b16 %v3728
      %v3761 = vunpack.c.l.b16 %v3729
      %v3762 = vunpack.c.l.b16 %v3730
      %v3763 = vunpack.c.l.b16 %v3731
      %v3764 = vunpack.c.l.b16 %v3732
      %v3765 = vunpack.c.l.b16 %v3733
      %v3766 = vunpack.c.l.b16 %v3734
      %v3767 = vpack.c.b16 %v3752, %v3751
      %v3768 = vpack.c.b16 %v3754, %v3753
      %v3769 = vpack.c.b16 %v3756, %v3755
      %v3770 = vpack.c.b16 %v3758, %v3757
      %v3771 = vpack.c.b16 %v3760, %v3759
      %v3772 = vpack.c.b16 %v3762, %v3761
      %v3773 = vpack.c.b16 %v3764, %v3763
      %v3774 = vpack.c.b16 %v3766, %v3765
      %3783 = vmatprep.subr.bf16.mxu0 0
      %3784 = vmatpush1.bf16.msra.mxu0 %v3774
      %3785 = vmatprep.subr.bf16.mxu0 0
      %3786 = vmatpush1.bf16.msra.mxu0 %v3773
      %3787 = vmatprep.subr.bf16.mxu0 0
      %3788 = vmatpush1.bf16.msra.mxu0 %v3772
      %3789 = vmatprep.subr.bf16.mxu0 0
      %3790 = vmatpush1.bf16.msra.mxu0 %v3771
      %3791 = vmatprep.subr.bf16.mxu0 0
      %3792 = vmatpush1.bf16.msra.mxu0 %v3770
      %3793 = vmatprep.subr.bf16.mxu0 0
      %3794 = vmatpush1.bf16.msra.mxu0 %v3769
      %3795 = vmatprep.subr.bf16.mxu0 0
      %3796 = vmatpush1.bf16.msra.mxu0 %v3768
      %3797 = vmatprep.subr.bf16.mxu0 0
      %3798 = vmatpush1.bf16.msra.mxu0 %v3767
      %3799 = vmatprep.subr.bf16.mxu0 0
      %3800 = vmatpush2.bf16.msra.mxu0 0
      %3801 = vmatprep.subr.bf16.mxu0 0
      %3802 = vmatpush2.bf16.msra.mxu0 0
      %3803 = vmatprep.subr.bf16.mxu0 0
      %3804 = vmatpush2.bf16.msra.mxu0 0
      %3805 = vmatprep.subr.bf16.mxu0 0
      %3806 = vmatpush2.bf16.msra.mxu0 0
      %3807 = vmatprep.subr.bf16.mxu0 0
      %3808 = vmatpush2.bf16.msra.mxu0 0
      %3809 = vmatprep.subr.bf16.mxu0 0
      %3810 = vmatpush2.bf16.msra.mxu0 0
      %3811 = vmatprep.subr.bf16.mxu0 0
      %3812 = vmatpush2.bf16.msra.mxu0 0
      %3813 = vmatprep.subr.bf16.mxu0 0
      %3814 = vmatpush2.bf16.msra.mxu0 0
      %3815 = vmatprep.mubr.bf16.mxu0 0
      %3816 = vmatmul.mubr.bf16.gmra.mxu0 %v3718
      %v3817 = vpop.f32.mrf.mxu0
      %v3818 = vadd.f32 %v2851, %v3817
      %v3819 = vpop.f32.mrf.mxu0
      %v3820 = vpop.f32.mrf.mxu0
      %v3821 = vadd.f32 %v2851, %v3820
      %v3822 = vpop.f32.mrf.mxu0
      %3823 = vdwg.mxu0
      %v3824 = vld [vmem:[%s7 + $0x14] sm:$0xf]
      %v3825 = vld [vmem:[%s7 + $0x3c] sm:$0xf]
      %v3826 = vld [vmem:[%s7 + $0x64] sm:$0xf]
      %v3827 = vld [vmem:[%s7 + $0x8c] sm:$0xf]
      %v3828 = vld [vmem:[%s7 + $0xb4] sm:$0xf]
      %v3829 = vld [vmem:[%s7 + $0xdc] sm:$0xf]
      %v3830 = vld [vmem:[%s7 + $0x104] sm:$0xf]
      %v3831 = vld [vmem:[%s7 + $0x12c] sm:$0xf]
      %v3832 = vld [vmem:[%s7 + $0x154] sm:$0xf]
      %v3833 = vld [vmem:[%s7 + $0x17c] sm:$0xf]
      %v3834 = vld [vmem:[%s7 + $0x1a4] sm:$0xf]
      %v3835 = vld [vmem:[%s7 + $0x1cc] sm:$0xf]
      %v3836 = vld [vmem:[%s7 + $0x1f4] sm:$0xf]
      %v3837 = vld [vmem:[%s7 + $0x21c] sm:$0xf]
      %v3838 = vld [vmem:[%s7 + $0x244] sm:$0xf]
      %v3839 = vld [vmem:[%s7 + $0x26c] sm:$0xf]
      %v3856 = vunpack.c.l.b16 %v3824
      %v3857 = vunpack.c.l.b16 %v3825
      %v3858 = vunpack.c.l.b16 %v3826
      %v3859 = vunpack.c.l.b16 %v3827
      %v3860 = vunpack.c.l.b16 %v3828
      %v3861 = vunpack.c.l.b16 %v3829
      %v3862 = vunpack.c.l.b16 %v3830
      %v3863 = vunpack.c.l.b16 %v3831
      %v3864 = vunpack.c.l.b16 %v3832
      %v3865 = vunpack.c.l.b16 %v3833
      %v3866 = vunpack.c.l.b16 %v3834
      %v3867 = vunpack.c.l.b16 %v3835
      %v3868 = vunpack.c.l.b16 %v3836
      %v3869 = vunpack.c.l.b16 %v3837
      %v3870 = vunpack.c.l.b16 %v3838
      %v3871 = vunpack.c.l.b16 %v3839
      %v3872 = vpack.c.b16 %v3857, %v3856
      %v3873 = vpack.c.b16 %v3859, %v3858
      %v3874 = vpack.c.b16 %v3861, %v3860
      %v3875 = vpack.c.b16 %v3863, %v3862
      %v3876 = vpack.c.b16 %v3865, %v3864
      %v3877 = vpack.c.b16 %v3867, %v3866
      %v3878 = vpack.c.b16 %v3869, %v3868
      %v3879 = vpack.c.b16 %v3871, %v3870
      %3888 = vmatprep.subr.bf16.mxu0 0
      %3889 = vmatpush1.bf16.msra.mxu0 %v3879
      %3890 = vmatprep.subr.bf16.mxu0 0
      %3891 = vmatpush1.bf16.msra.mxu0 %v3878
      %3892 = vmatprep.subr.bf16.mxu0 0
      %3893 = vmatpush1.bf16.msra.mxu0 %v3877
      %3894 = vmatprep.subr.bf16.mxu0 0
      %3895 = vmatpush1.bf16.msra.mxu0 %v3876
      %3896 = vmatprep.subr.bf16.mxu0 0
      %3897 = vmatpush1.bf16.msra.mxu0 %v3875
      %3898 = vmatprep.subr.bf16.mxu0 0
      %3899 = vmatpush1.bf16.msra.mxu0 %v3874
      %3900 = vmatprep.subr.bf16.mxu0 0
      %3901 = vmatpush1.bf16.msra.mxu0 %v3873
      %3902 = vmatprep.subr.bf16.mxu0 0
      %3903 = vmatpush1.bf16.msra.mxu0 %v3872
      %3904 = vmatprep.subr.bf16.mxu0 0
      %3905 = vmatpush2.bf16.msra.mxu0 0
      %3906 = vmatprep.subr.bf16.mxu0 0
      %3907 = vmatpush2.bf16.msra.mxu0 0
      %3908 = vmatprep.subr.bf16.mxu0 0
      %3909 = vmatpush2.bf16.msra.mxu0 0
      %3910 = vmatprep.subr.bf16.mxu0 0
      %3911 = vmatpush2.bf16.msra.mxu0 0
      %3912 = vmatprep.subr.bf16.mxu0 0
      %3913 = vmatpush2.bf16.msra.mxu0 0
      %3914 = vmatprep.subr.bf16.mxu0 0
      %3915 = vmatpush2.bf16.msra.mxu0 0
      %3916 = vmatprep.subr.bf16.mxu0 0
      %3917 = vmatpush2.bf16.msra.mxu0 0
      %3918 = vmatprep.subr.bf16.mxu0 0
      %3919 = vmatpush2.bf16.msra.mxu0 0
      %3920 = vmatprep.mubr.bf16.mxu0 0
      %3921 = vmatmul.mubr.bf16.gmra.mxu0 %v2843
      %v3922 = vpop.f32.mrf.mxu0
      %v3923 = vadd.f32 %v2852, %v3922
      %v3924 = vpop.f32.mrf.mxu0
      %v3925 = vpop.f32.mrf.mxu0
      %v3926 = vadd.f32 %v2852, %v3925
      %v3927 = vpop.f32.mrf.mxu0
      %3928 = vdwg.mxu0
      %v3929 = vld [vmem:[%s7 + $0x18] sm:$0xf]
      %v3930 = vld [vmem:[%s7 + $0x40] sm:$0xf]
      %v3931 = vld [vmem:[%s7 + $0x68] sm:$0xf]
      %v3932 = vld [vmem:[%s7 + $0x90] sm:$0xf]
      %v3933 = vld [vmem:[%s7 + $0xb8] sm:$0xf]
      %v3934 = vld [vmem:[%s7 + $0xe0] sm:$0xf]
      %v3935 = vld [vmem:[%s7 + $0x108] sm:$0xf]
      %v3936 = vld [vmem:[%s7 + $0x130] sm:$0xf]
      %v3937 = vld [vmem:[%s7 + $0x158] sm:$0xf]
      %v3938 = vld [vmem:[%s7 + $0x180] sm:$0xf]
      %v3939 = vld [vmem:[%s7 + $0x1a8] sm:$0xf]
      %v3940 = vld [vmem:[%s7 + $0x1d0] sm:$0xf]
      %v3941 = vld [vmem:[%s7 + $0x1f8] sm:$0xf]
      %v3942 = vld [vmem:[%s7 + $0x220] sm:$0xf]
      %v3943 = vld [vmem:[%s7 + $0x248] sm:$0xf]
      %v3944 = vld [vmem:[%s7 + $0x270] sm:$0xf]
      %v3961 = vunpack.c.l.b16 %v3929
      %v3962 = vunpack.c.l.b16 %v3930
      %v3963 = vunpack.c.l.b16 %v3931
      %v3964 = vunpack.c.l.b16 %v3932
      %v3965 = vunpack.c.l.b16 %v3933
      %v3966 = vunpack.c.l.b16 %v3934
      %v3967 = vunpack.c.l.b16 %v3935
      %v3968 = vunpack.c.l.b16 %v3936
      %v3969 = vunpack.c.l.b16 %v3937
      %v3970 = vunpack.c.l.b16 %v3938
      %v3971 = vunpack.c.l.b16 %v3939
      %v3972 = vunpack.c.l.b16 %v3940
      %v3973 = vunpack.c.l.b16 %v3941
      %v3974 = vunpack.c.l.b16 %v3942
      %v3975 = vunpack.c.l.b16 %v3943
      %v3976 = vunpack.c.l.b16 %v3944
      %v3977 = vpack.c.b16 %v3962, %v3961
      %v3978 = vpack.c.b16 %v3964, %v3963
      %v3979 = vpack.c.b16 %v3966, %v3965
      %v3980 = vpack.c.b16 %v3968, %v3967
      %v3981 = vpack.c.b16 %v3970, %v3969
      %v3982 = vpack.c.b16 %v3972, %v3971
      %v3983 = vpack.c.b16 %v3974, %v3973
      %v3984 = vpack.c.b16 %v3976, %v3975
      %3993 = vmatprep.subr.bf16.mxu0 0
      %3994 = vmatpush1.bf16.msra.mxu0 %v3984
      %3995 = vmatprep.subr.bf16.mxu0 0
      %3996 = vmatpush1.bf16.msra.mxu0 %v3983
      %3997 = vmatprep.subr.bf16.mxu0 0
      %3998 = vmatpush1.bf16.msra.mxu0 %v3982
      %3999 = vmatprep.subr.bf16.mxu0 0
      %4000 = vmatpush1.bf16.msra.mxu0 %v3981
      %4001 = vmatprep.subr.bf16.mxu0 0
      %4002 = vmatpush1.bf16.msra.mxu0 %v3980
      %4003 = vmatprep.subr.bf16.mxu0 0
      %4004 = vmatpush1.bf16.msra.mxu0 %v3979
      %4005 = vmatprep.subr.bf16.mxu0 0
      %4006 = vmatpush1.bf16.msra.mxu0 %v3978
      %4007 = vmatprep.subr.bf16.mxu0 0
      %4008 = vmatpush1.bf16.msra.mxu0 %v3977
      %4009 = vmatprep.subr.bf16.mxu0 0
      %4010 = vmatpush2.bf16.msra.mxu0 0
      %4011 = vmatprep.subr.bf16.mxu0 0
      %4012 = vmatpush2.bf16.msra.mxu0 0
      %4013 = vmatprep.subr.bf16.mxu0 0
      %4014 = vmatpush2.bf16.msra.mxu0 0
      %4015 = vmatprep.subr.bf16.mxu0 0
      %4016 = vmatpush2.bf16.msra.mxu0 0
      %4017 = vmatprep.subr.bf16.mxu0 0
      %4018 = vmatpush2.bf16.msra.mxu0 0
      %4019 = vmatprep.subr.bf16.mxu0 0
      %4020 = vmatpush2.bf16.msra.mxu0 0
      %4021 = vmatprep.subr.bf16.mxu0 0
      %4022 = vmatpush2.bf16.msra.mxu0 0
      %4023 = vmatprep.subr.bf16.mxu0 0
      %4024 = vmatpush2.bf16.msra.mxu0 0
      %4025 = vmatprep.mubr.bf16.mxu0 0
      %4026 = vmatmul.mubr.bf16.gmra.mxu0 %v2840
      %v4027 = vpop.f32.mrf.mxu0
      %v4028 = vadd.f32 %v2853, %v4027
      %v4029 = vpop.f32.mrf.mxu0
      %v4030 = vpop.f32.mrf.mxu0
      %v4031 = vadd.f32 %v2853, %v4030
      %v4032 = vpop.f32.mrf.mxu0
      %4033 = vdwg.mxu0
      %v4034 = vpack.c.bf16 %v3926, %v3923
      %v4035 = vmul.f32 %v3818, %v367
      %v4036 = vmul.f32 %v3821, %v367
      %v4037 = vpack.c.bf16 %v4036, %v4035
      %4038 = vmatprep.subr.bf16.mxu0 0
      %4039 = vmatpush1.bf16.xpose.msra.mxu0 0
      %4040 = vmatprep.subr.bf16.mxu0 0
      %4041 = vmatpush1.bf16.xpose.msra.mxu0 0
      %4042 = vmatprep.subr.bf16.mxu0 0
      %4043 = vmatpush1.bf16.xpose.msra.mxu0 0
      %4044 = vmatprep.subr.bf16.mxu0 0
      %4045 = vmatpush1.bf16.xpose.msra.mxu0 0
      %4046 = vmatprep.subr.bf16.mxu0 0
      %4047 = vmatpush1.bf16.xpose.msra.mxu0 0
      %4048 = vmatprep.subr.bf16.mxu0 0
      %4049 = vmatpush1.bf16.xpose.msra.mxu0 0
      %4050 = vmatprep.subr.bf16.mxu0 0
      %4051 = vmatpush1.bf16.xpose.msra.mxu0 0
      %4052 = vmatprep.subr.bf16.mxu0 0
      %4053 = vmatpush1.bf16.xpose.msra.mxu0 %v4034
      %4054 = vmatprep.subr.bf16.mxu0 0
      %4055 = vmatpush2.bf16.xpose.msra.mxu0 0
      %4056 = vmatprep.subr.bf16.mxu0 0
      %4057 = vmatpush2.bf16.xpose.msra.mxu0 0
      %4058 = vmatprep.subr.bf16.mxu0 0
      %4059 = vmatpush2.bf16.xpose.msra.mxu0 0
      %4060 = vmatprep.subr.bf16.mxu0 0
      %4061 = vmatpush2.bf16.xpose.msra.mxu0 0
      %4062 = vmatprep.subr.bf16.mxu0 0
      %4063 = vmatpush2.bf16.xpose.msra.mxu0 0
      %4064 = vmatprep.subr.bf16.mxu0 0
      %4065 = vmatpush2.bf16.xpose.msra.mxu0 0
      %4066 = vmatprep.subr.bf16.mxu0 0
      %4067 = vmatpush2.bf16.xpose.msra.mxu0 0
      %4068 = vmatprep.subr.bf16.mxu0 0
      %4069 = vmatpush2.bf16.xpose.msra.mxu0 0
      %4070 = vmatprep.mubr.bf16.mxu0 0
      %4071 = vmatmul.mubr.bf16.gmra.mxu0 %v4037
      %v4072 = vpop.f32.mrf.mxu0
      %v4073 = vadd.f32 0.0, %v4072
      %v4074 = vpop.f32.mrf.mxu0
      %v4075 = vpop.f32.mrf.mxu0
      %v4076 = vadd.f32 0.0, %v4075
      %v4077 = vpop.f32.mrf.mxu0
      %4078 = vdwg.mxu0
      %v4079 = vsel %vm465, %v4073, -inf
      %4080 = vmax.xlane.f32.xlu0 %v4079
      %v4081 = vpop.xlane.xlu0 %4080
      %v4082 = vsel %vm465, %v4076, -inf
      %4083 = vmax.xlane.f32.xlu0 %v4082
      %v4084 = vpop.xlane.xlu0 %4083
      %v4085 = vsub.f32 %v4073, %v4081
      %v4086 = vsub.f32 %v4076, %v4084
      %v4087 = vmul.f32 %v4085, 1.442695
      %v4088 = vpow.pop %v4087
      %v4089 = vmul.f32 %v4086, 1.442695
      %v4090 = vpow.pop %v4089
      %v4091 = vsel %vm465, %v4088, 0.0
      %4092 = vadd.xlane.f32.xlu0 %v4091
      %v4093 = vpop.xlane.xlu0 %4092
      %v4094 = vsel %vm465, %v4090, 0.0
      %4095 = vadd.xlane.f32.xlu0 %v4094
      %v4096 = vpop.xlane.xlu0 %4095
      %v4097 = vrcp.pop %v4093
      %v4098 = vrcp.pop %v4096
      %v4099 = vmul.f32 %v4088, %v4097
      %v4100 = vmul.f32 %v4090, %v4098
      %v4101 = vpack.c.bf16 %v4100, %v4099
      %v4102 = vmul.f32 %v4028, %v367
      %v4103 = vmul.f32 %v4031, %v367
      %v4104 = vpack.c.bf16 %v4103, %v4102
      %v4105 = vmul.f32 %v3818, %v372
      %v4106 = vmul.f32 %v3821, %v372
      %v4107 = vpack.c.bf16 %v4106, %v4105
      %4108 = vmatprep.subr.bf16.mxu0 0
      %4109 = vmatpush1.bf16.xpose.msra.mxu0 0
      %4110 = vmatprep.subr.bf16.mxu0 0
      %4111 = vmatpush1.bf16.xpose.msra.mxu0 0
      %4112 = vmatprep.subr.bf16.mxu0 0
      %4113 = vmatpush1.bf16.xpose.msra.mxu0 0
      %4114 = vmatprep.subr.bf16.mxu0 0
      %4115 = vmatpush1.bf16.xpose.msra.mxu0 0
      %4116 = vmatprep.subr.bf16.mxu0 0
      %4117 = vmatpush1.bf16.xpose.msra.mxu0 0
      %4118 = vmatprep.subr.bf16.mxu0 0
      %4119 = vmatpush1.bf16.xpose.msra.mxu0 0
      %4120 = vmatprep.subr.bf16.mxu0 0
      %4121 = vmatpush1.bf16.xpose.msra.mxu0 0
      %4122 = vmatprep.subr.bf16.mxu0 0
      %4123 = vmatpush1.bf16.xpose.msra.mxu0 %v4034
      %4124 = vmatprep.subr.bf16.mxu0 0
      %4125 = vmatpush2.bf16.xpose.msra.mxu0 0
      %4126 = vmatprep.subr.bf16.mxu0 0
      %4127 = vmatpush2.bf16.xpose.msra.mxu0 0
      %4128 = vmatprep.subr.bf16.mxu0 0
      %4129 = vmatpush2.bf16.xpose.msra.mxu0 0
      %4130 = vmatprep.subr.bf16.mxu0 0
      %4131 = vmatpush2.bf16.xpose.msra.mxu0 0
      %4132 = vmatprep.subr.bf16.mxu0 0
      %4133 = vmatpush2.bf16.xpose.msra.mxu0 0
      %4134 = vmatprep.subr.bf16.mxu0 0
      %4135 = vmatpush2.bf16.xpose.msra.mxu0 0
      %4136 = vmatprep.subr.bf16.mxu0 0
      %4137 = vmatpush2.bf16.xpose.msra.mxu0 0
      %4138 = vmatprep.subr.bf16.mxu0 0
      %4139 = vmatpush2.bf16.xpose.msra.mxu0 0
      %4140 = vmatprep.mubr.bf16.mxu0 0
      %4141 = vmatmul.mubr.bf16.gmra.mxu0 %v4107
      %v4142 = vpop.f32.mrf.mxu0
      %v4143 = vadd.f32 0.0, %v4142
      %v4144 = vpop.f32.mrf.mxu0
      %v4145 = vpop.f32.mrf.mxu0
      %v4146 = vadd.f32 0.0, %v4145
      %v4147 = vpop.f32.mrf.mxu0
      %4148 = vdwg.mxu0
      %v4149 = vsel %vm465, %v4143, -inf
      %4150 = vmax.xlane.f32.xlu0 %v4149
      %v4151 = vpop.xlane.xlu0 %4150
      %v4152 = vsel %vm465, %v4146, -inf
      %4153 = vmax.xlane.f32.xlu0 %v4152
      %v4154 = vpop.xlane.xlu0 %4153
      %v4155 = vsub.f32 %v4143, %v4151
      %v4156 = vsub.f32 %v4146, %v4154
      %v4157 = vmul.f32 %v4155, 1.442695
      %v4158 = vpow.pop %v4157
      %v4159 = vmul.f32 %v4156, 1.442695
      %v4160 = vpow.pop %v4159
      %v4161 = vsel %vm465, %v4158, 0.0
      %4162 = vadd.xlane.f32.xlu0 %v4161
      %v4163 = vpop.xlane.xlu0 %4162
      %v4164 = vsel %vm465, %v4160, 0.0
      %4165 = vadd.xlane.f32.xlu0 %v4164
      %v4166 = vpop.xlane.xlu0 %4165
      %v4167 = vrcp.pop %v4163
      %v4168 = vrcp.pop %v4166
      %v4169 = vmul.f32 %v4158, %v4167
      %v4170 = vmul.f32 %v4160, %v4168
      %v4171 = vpack.c.bf16 %v4170, %v4169
      %v4172 = vmul.f32 %v4028, %v372
      %v4173 = vmul.f32 %v4031, %v372
      %v4174 = vpack.c.bf16 %v4173, %v4172
      %v4176 = vsel %vm465, %v4171, 0
      %4178 = vmatprep.subr.bf16.mxu0 0
      %4179 = vmatpush1.bf16.msra.mxu0 0
      %4180 = vmatprep.subr.bf16.mxu0 0
      %4181 = vmatpush1.bf16.msra.mxu0 0
      %4182 = vmatprep.subr.bf16.mxu0 0
      %4183 = vmatpush1.bf16.msra.mxu0 0
      %4184 = vmatprep.subr.bf16.mxu0 0
      %4185 = vmatpush1.bf16.msra.mxu0 0
      %4186 = vmatprep.subr.bf16.mxu0 0
      %4187 = vmatpush1.bf16.msra.mxu0 0
      %4188 = vmatprep.subr.bf16.mxu0 0
      %4189 = vmatpush1.bf16.msra.mxu0 0
      %4190 = vmatprep.subr.bf16.mxu0 0
      %4191 = vmatpush1.bf16.msra.mxu0 0
      %4192 = vmatprep.subr.bf16.mxu0 0
      %4193 = vmatpush1.bf16.msra.mxu0 %v4174
      %4194 = vmatprep.subr.bf16.mxu0 0
      %4195 = vmatpush2.bf16.msra.mxu0 0
      %4196 = vmatprep.subr.bf16.mxu0 0
      %4197 = vmatpush2.bf16.msra.mxu0 0
      %4198 = vmatprep.subr.bf16.mxu0 0
      %4199 = vmatpush2.bf16.msra.mxu0 0
      %4200 = vmatprep.subr.bf16.mxu0 0
      %4201 = vmatpush2.bf16.msra.mxu0 0
      %4202 = vmatprep.subr.bf16.mxu0 0
      %4203 = vmatpush2.bf16.msra.mxu0 0
      %4204 = vmatprep.subr.bf16.mxu0 0
      %4205 = vmatpush2.bf16.msra.mxu0 0
      %4206 = vmatprep.subr.bf16.mxu0 0
      %4207 = vmatpush2.bf16.msra.mxu0 0
      %4208 = vmatprep.subr.bf16.mxu0 0
      %4209 = vmatpush2.bf16.msra.mxu0 0
      %4210 = vmatprep.mubr.bf16.mxu0 0
      %4211 = vmatmul.mubr.bf16.gmra.mxu0 %v4176
      %v4212 = vpop.f32.mrf.mxu0
      %v4213 = vadd.f32 0.0, %v4212
      %v4214 = vpop.f32.mrf.mxu0
      %v4215 = vpop.f32.mrf.mxu0
      %v4216 = vadd.f32 0.0, %v4215
      %v4217 = vpop.f32.mrf.mxu0
      %4218 = vdwg.mxu0
      %v4220 = vsel %vm465, %v4101, 0
      %4222 = vmatprep.subr.bf16.mxu0 0
      %4223 = vmatpush1.bf16.msra.mxu0 0
      %4224 = vmatprep.subr.bf16.mxu0 0
      %4225 = vmatpush1.bf16.msra.mxu0 0
      %4226 = vmatprep.subr.bf16.mxu0 0
      %4227 = vmatpush1.bf16.msra.mxu0 0
      %4228 = vmatprep.subr.bf16.mxu0 0
      %4229 = vmatpush1.bf16.msra.mxu0 0
      %4230 = vmatprep.subr.bf16.mxu0 0
      %4231 = vmatpush1.bf16.msra.mxu0 0
      %4232 = vmatprep.subr.bf16.mxu0 0
      %4233 = vmatpush1.bf16.msra.mxu0 0
      %4234 = vmatprep.subr.bf16.mxu0 0
      %4235 = vmatpush1.bf16.msra.mxu0 0
      %4236 = vmatprep.subr.bf16.mxu0 0
      %4237 = vmatpush1.bf16.msra.mxu0 %v4104
      %4238 = vmatprep.subr.bf16.mxu0 0
      %4239 = vmatpush2.bf16.msra.mxu0 0
      %4240 = vmatprep.subr.bf16.mxu0 0
      %4241 = vmatpush2.bf16.msra.mxu0 0
      %4242 = vmatprep.subr.bf16.mxu0 0
      %4243 = vmatpush2.bf16.msra.mxu0 0
      %4244 = vmatprep.subr.bf16.mxu0 0
      %4245 = vmatpush2.bf16.msra.mxu0 0
      %4246 = vmatprep.subr.bf16.mxu0 0
      %4247 = vmatpush2.bf16.msra.mxu0 0
      %4248 = vmatprep.subr.bf16.mxu0 0
      %4249 = vmatpush2.bf16.msra.mxu0 0
      %4250 = vmatprep.subr.bf16.mxu0 0
      %4251 = vmatpush2.bf16.msra.mxu0 0
      %4252 = vmatprep.subr.bf16.mxu0 0
      %4253 = vmatpush2.bf16.msra.mxu0 0
      %4254 = vmatprep.mubr.bf16.mxu0 0
      %4255 = vmatmul.mubr.bf16.gmra.mxu0 %v4220
      %v4256 = vpop.f32.mrf.mxu0
      %v4257 = vadd.f32 %v4213, %v4256
      %v4258 = vpop.f32.mrf.mxu0
      %v4259 = vpop.f32.mrf.mxu0
      %v4260 = vadd.f32 %v4216, %v4259
      %v4261 = vpop.f32.mrf.mxu0
      %4262 = vdwg.mxu0
      %v4263 = vmul.f32 %v3818, %v377
      %v4264 = vmul.f32 %v3821, %v377
      %v4265 = vpack.c.bf16 %v4264, %v4263
      %4266 = vmatprep.subr.bf16.mxu0 0
      %4267 = vmatpush1.bf16.xpose.msra.mxu0 0
      %4268 = vmatprep.subr.bf16.mxu0 0
      %4269 = vmatpush1.bf16.xpose.msra.mxu0 0
      %4270 = vmatprep.subr.bf16.mxu0 0
      %4271 = vmatpush1.bf16.xpose.msra.mxu0 0
      %4272 = vmatprep.subr.bf16.mxu0 0
      %4273 = vmatpush1.bf16.xpose.msra.mxu0 0
      %4274 = vmatprep.subr.bf16.mxu0 0
      %4275 = vmatpush1.bf16.xpose.msra.mxu0 0
      %4276 = vmatprep.subr.bf16.mxu0 0
      %4277 = vmatpush1.bf16.xpose.msra.mxu0 0
      %4278 = vmatprep.subr.bf16.mxu0 0
      %4279 = vmatpush1.bf16.xpose.msra.mxu0 0
      %4280 = vmatprep.subr.bf16.mxu0 0
      %4281 = vmatpush1.bf16.xpose.msra.mxu0 %v4034
      %4282 = vmatprep.subr.bf16.mxu0 0
      %4283 = vmatpush2.bf16.xpose.msra.mxu0 0
      %4284 = vmatprep.subr.bf16.mxu0 0
      %4285 = vmatpush2.bf16.xpose.msra.mxu0 0
      %4286 = vmatprep.subr.bf16.mxu0 0
      %4287 = vmatpush2.bf16.xpose.msra.mxu0 0
      %4288 = vmatprep.subr.bf16.mxu0 0
      %4289 = vmatpush2.bf16.xpose.msra.mxu0 0
      %4290 = vmatprep.subr.bf16.mxu0 0
      %4291 = vmatpush2.bf16.xpose.msra.mxu0 0
      %4292 = vmatprep.subr.bf16.mxu0 0
      %4293 = vmatpush2.bf16.xpose.msra.mxu0 0
      %4294 = vmatprep.subr.bf16.mxu0 0
      %4295 = vmatpush2.bf16.xpose.msra.mxu0 0
      %4296 = vmatprep.subr.bf16.mxu0 0
      %4297 = vmatpush2.bf16.xpose.msra.mxu0 0
      %4298 = vmatprep.mubr.bf16.mxu0 0
      %4299 = vmatmul.mubr.bf16.gmra.mxu0 %v4265
      %v4300 = vpop.f32.mrf.mxu0
      %v4301 = vadd.f32 0.0, %v4300
      %v4302 = vpop.f32.mrf.mxu0
      %v4303 = vpop.f32.mrf.mxu0
      %v4304 = vadd.f32 0.0, %v4303
      %v4305 = vpop.f32.mrf.mxu0
      %4306 = vdwg.mxu0
      %v4307 = vsel %vm465, %v4301, -inf
      %4308 = vmax.xlane.f32.xlu0 %v4307
      %v4309 = vpop.xlane.xlu0 %4308
      %v4310 = vsel %vm465, %v4304, -inf
      %4311 = vmax.xlane.f32.xlu0 %v4310
      %v4312 = vpop.xlane.xlu0 %4311
      %v4313 = vsub.f32 %v4301, %v4309
      %v4314 = vsub.f32 %v4304, %v4312
      %v4315 = vmul.f32 %v4313, 1.442695
      %v4316 = vpow.pop %v4315
      %v4317 = vmul.f32 %v4314, 1.442695
      %v4318 = vpow.pop %v4317
      %v4319 = vsel %vm465, %v4316, 0.0
      %4320 = vadd.xlane.f32.xlu0 %v4319
      %v4321 = vpop.xlane.xlu0 %4320
      %v4322 = vsel %vm465, %v4318, 0.0
      %4323 = vadd.xlane.f32.xlu0 %v4322
      %v4324 = vpop.xlane.xlu0 %4323
      %v4325 = vrcp.pop %v4321
      %v4326 = vrcp.pop %v4324
      %v4327 = vmul.f32 %v4316, %v4325
      %v4328 = vmul.f32 %v4318, %v4326
      %v4329 = vpack.c.bf16 %v4328, %v4327
      %v4330 = vmul.f32 %v4028, %v377
      %v4331 = vmul.f32 %v4031, %v377
      %v4332 = vpack.c.bf16 %v4331, %v4330
      %v4334 = vsel %vm465, %v4329, 0
      %4336 = vmatprep.subr.bf16.mxu0 0
      %4337 = vmatpush1.bf16.msra.mxu0 0
      %4338 = vmatprep.subr.bf16.mxu0 0
      %4339 = vmatpush1.bf16.msra.mxu0 0
      %4340 = vmatprep.subr.bf16.mxu0 0
      %4341 = vmatpush1.bf16.msra.mxu0 0
      %4342 = vmatprep.subr.bf16.mxu0 0
      %4343 = vmatpush1.bf16.msra.mxu0 0
      %4344 = vmatprep.subr.bf16.mxu0 0
      %4345 = vmatpush1.bf16.msra.mxu0 0
      %4346 = vmatprep.subr.bf16.mxu0 0
      %4347 = vmatpush1.bf16.msra.mxu0 0
      %4348 = vmatprep.subr.bf16.mxu0 0
      %4349 = vmatpush1.bf16.msra.mxu0 0
      %4350 = vmatprep.subr.bf16.mxu0 0
      %4351 = vmatpush1.bf16.msra.mxu0 %v4332
      %4352 = vmatprep.subr.bf16.mxu0 0
      %4353 = vmatpush2.bf16.msra.mxu0 0
      %4354 = vmatprep.subr.bf16.mxu0 0
      %4355 = vmatpush2.bf16.msra.mxu0 0
      %4356 = vmatprep.subr.bf16.mxu0 0
      %4357 = vmatpush2.bf16.msra.mxu0 0
      %4358 = vmatprep.subr.bf16.mxu0 0
      %4359 = vmatpush2.bf16.msra.mxu0 0
      %4360 = vmatprep.subr.bf16.mxu0 0
      %4361 = vmatpush2.bf16.msra.mxu0 0
      %4362 = vmatprep.subr.bf16.mxu0 0
      %4363 = vmatpush2.bf16.msra.mxu0 0
      %4364 = vmatprep.subr.bf16.mxu0 0
      %4365 = vmatpush2.bf16.msra.mxu0 0
      %4366 = vmatprep.subr.bf16.mxu0 0
      %4367 = vmatpush2.bf16.msra.mxu0 0
      %4368 = vmatprep.mubr.bf16.mxu0 0
      %4369 = vmatmul.mubr.bf16.gmra.mxu0 %v4334
      %v4370 = vpop.f32.mrf.mxu0
      %v4371 = vadd.f32 0.0, %v4370
      %v4372 = vpop.f32.mrf.mxu0
      %v4373 = vpop.f32.mrf.mxu0
      %v4374 = vadd.f32 0.0, %v4373
      %v4375 = vpop.f32.mrf.mxu0
      %4376 = vdwg.mxu0
      %v4377 = vadd.f32 %v4257, %v4371
      %v4378 = vadd.f32 %v4260, %v4374
      %v4379 = vmul.f32 %v3818, %v382
      %v4380 = vmul.f32 %v3821, %v382
      %v4381 = vpack.c.bf16 %v4380, %v4379
      %4382 = vmatprep.subr.bf16.mxu0 0
      %4383 = vmatpush1.bf16.xpose.msra.mxu0 0
      %4384 = vmatprep.subr.bf16.mxu0 0
      %4385 = vmatpush1.bf16.xpose.msra.mxu0 0
      %4386 = vmatprep.subr.bf16.mxu0 0
      %4387 = vmatpush1.bf16.xpose.msra.mxu0 0
      %4388 = vmatprep.subr.bf16.mxu0 0
      %4389 = vmatpush1.bf16.xpose.msra.mxu0 0
      %4390 = vmatprep.subr.bf16.mxu0 0
      %4391 = vmatpush1.bf16.xpose.msra.mxu0 0
      %4392 = vmatprep.subr.bf16.mxu0 0
      %4393 = vmatpush1.bf16.xpose.msra.mxu0 0
      %4394 = vmatprep.subr.bf16.mxu0 0
      %4395 = vmatpush1.bf16.xpose.msra.mxu0 0
      %4396 = vmatprep.subr.bf16.mxu0 0
      %4397 = vmatpush1.bf16.xpose.msra.mxu0 %v4034
      %4398 = vmatprep.subr.bf16.mxu0 0
      %4399 = vmatpush2.bf16.xpose.msra.mxu0 0
      %4400 = vmatprep.subr.bf16.mxu0 0
      %4401 = vmatpush2.bf16.xpose.msra.mxu0 0
      %4402 = vmatprep.subr.bf16.mxu0 0
      %4403 = vmatpush2.bf16.xpose.msra.mxu0 0
      %4404 = vmatprep.subr.bf16.mxu0 0
      %4405 = vmatpush2.bf16.xpose.msra.mxu0 0
      %4406 = vmatprep.subr.bf16.mxu0 0
      %4407 = vmatpush2.bf16.xpose.msra.mxu0 0
      %4408 = vmatprep.subr.bf16.mxu0 0
      %4409 = vmatpush2.bf16.xpose.msra.mxu0 0
      %4410 = vmatprep.subr.bf16.mxu0 0
      %4411 = vmatpush2.bf16.xpose.msra.mxu0 0
      %4412 = vmatprep.subr.bf16.mxu0 0
      %4413 = vmatpush2.bf16.xpose.msra.mxu0 0
      %4414 = vmatprep.mubr.bf16.mxu0 0
      %4415 = vmatmul.mubr.bf16.gmra.mxu0 %v4381
      %v4416 = vpop.f32.mrf.mxu0
      %v4417 = vadd.f32 0.0, %v4416
      %v4418 = vpop.f32.mrf.mxu0
      %v4419 = vpop.f32.mrf.mxu0
      %v4420 = vadd.f32 0.0, %v4419
      %v4421 = vpop.f32.mrf.mxu0
      %4422 = vdwg.mxu0
      %v4423 = vsel %vm465, %v4417, -inf
      %4424 = vmax.xlane.f32.xlu0 %v4423
      %v4425 = vpop.xlane.xlu0 %4424
      %v4426 = vsel %vm465, %v4420, -inf
      %4427 = vmax.xlane.f32.xlu0 %v4426
      %v4428 = vpop.xlane.xlu0 %4427
      %v4429 = vsub.f32 %v4417, %v4425
      %v4430 = vsub.f32 %v4420, %v4428
      %v4431 = vmul.f32 %v4429, 1.442695
      %v4432 = vpow.pop %v4431
      %v4433 = vmul.f32 %v4430, 1.442695
      %v4434 = vpow.pop %v4433
      %v4435 = vsel %vm465, %v4432, 0.0
      %4436 = vadd.xlane.f32.xlu0 %v4435
      %v4437 = vpop.xlane.xlu0 %4436
      %v4438 = vsel %vm465, %v4434, 0.0
      %4439 = vadd.xlane.f32.xlu0 %v4438
      %v4440 = vpop.xlane.xlu0 %4439
      %v4441 = vrcp.pop %v4437
      %v4442 = vrcp.pop %v4440
      %v4443 = vmul.f32 %v4432, %v4441
      %v4444 = vmul.f32 %v4434, %v4442
      %v4445 = vpack.c.bf16 %v4444, %v4443
      %v4446 = vmul.f32 %v4028, %v382
      %v4447 = vmul.f32 %v4031, %v382
      %v4448 = vpack.c.bf16 %v4447, %v4446
      %v4450 = vsel %vm465, %v4445, 0
      %4452 = vmatprep.subr.bf16.mxu0 0
      %4453 = vmatpush1.bf16.msra.mxu0 0
      %4454 = vmatprep.subr.bf16.mxu0 0
      %4455 = vmatpush1.bf16.msra.mxu0 0
      %4456 = vmatprep.subr.bf16.mxu0 0
      %4457 = vmatpush1.bf16.msra.mxu0 0
      %4458 = vmatprep.subr.bf16.mxu0 0
      %4459 = vmatpush1.bf16.msra.mxu0 0
      %4460 = vmatprep.subr.bf16.mxu0 0
      %4461 = vmatpush1.bf16.msra.mxu0 0
      %4462 = vmatprep.subr.bf16.mxu0 0
      %4463 = vmatpush1.bf16.msra.mxu0 0
      %4464 = vmatprep.subr.bf16.mxu0 0
      %4465 = vmatpush1.bf16.msra.mxu0 0
      %4466 = vmatprep.subr.bf16.mxu0 0
      %4467 = vmatpush1.bf16.msra.mxu0 %v4448
      %4468 = vmatprep.subr.bf16.mxu0 0
      %4469 = vmatpush2.bf16.msra.mxu0 0
      %4470 = vmatprep.subr.bf16.mxu0 0
      %4471 = vmatpush2.bf16.msra.mxu0 0
      %4472 = vmatprep.subr.bf16.mxu0 0
      %4473 = vmatpush2.bf16.msra.mxu0 0
      %4474 = vmatprep.subr.bf16.mxu0 0
      %4475 = vmatpush2.bf16.msra.mxu0 0
      %4476 = vmatprep.subr.bf16.mxu0 0
      %4477 = vmatpush2.bf16.msra.mxu0 0
      %4478 = vmatprep.subr.bf16.mxu0 0
      %4479 = vmatpush2.bf16.msra.mxu0 0
      %4480 = vmatprep.subr.bf16.mxu0 0
      %4481 = vmatpush2.bf16.msra.mxu0 0
      %4482 = vmatprep.subr.bf16.mxu0 0
      %4483 = vmatpush2.bf16.msra.mxu0 0
      %4484 = vmatprep.mubr.bf16.mxu0 0
      %4485 = vmatmul.mubr.bf16.gmra.mxu0 %v4450
      %v4486 = vpop.f32.mrf.mxu0
      %v4487 = vadd.f32 0.0, %v4486
      %v4488 = vpop.f32.mrf.mxu0
      %v4489 = vpop.f32.mrf.mxu0
      %v4490 = vadd.f32 0.0, %v4489
      %v4491 = vpop.f32.mrf.mxu0
      %4492 = vdwg.mxu0
      %v4493 = vadd.f32 %v4377, %v4487
      %v4494 = vadd.f32 %v4378, %v4490
      %v4495 = vpack.c.bf16 %v4494, %v4493
      %v4496 = vld [vmem:[%s7 + $0x1c] sm:$0xf]
      %v4497 = vld [vmem:[%s7 + $0x44] sm:$0xf]
      %v4498 = vld [vmem:[%s7 + $0x6c] sm:$0xf]
      %v4499 = vld [vmem:[%s7 + $0x94] sm:$0xf]
      %v4500 = vld [vmem:[%s7 + $0xbc] sm:$0xf]
      %v4501 = vld [vmem:[%s7 + $0xe4] sm:$0xf]
      %v4502 = vld [vmem:[%s7 + $0x10c] sm:$0xf]
      %v4503 = vld [vmem:[%s7 + $0x134] sm:$0xf]
      %v4504 = vld [vmem:[%s7 + $0x15c] sm:$0xf]
      %v4505 = vld [vmem:[%s7 + $0x184] sm:$0xf]
      %v4506 = vld [vmem:[%s7 + $0x1ac] sm:$0xf]
      %v4507 = vld [vmem:[%s7 + $0x1d4] sm:$0xf]
      %v4508 = vld [vmem:[%s7 + $0x1fc] sm:$0xf]
      %v4509 = vld [vmem:[%s7 + $0x224] sm:$0xf]
      %v4510 = vld [vmem:[%s7 + $0x24c] sm:$0xf]
      %v4511 = vld [vmem:[%s7 + $0x274] sm:$0xf]
      %v4528 = vunpack.c.l.b16 %v4496
      %v4529 = vunpack.c.l.b16 %v4497
      %v4530 = vunpack.c.l.b16 %v4498
      %v4531 = vunpack.c.l.b16 %v4499
      %v4532 = vunpack.c.l.b16 %v4500
      %v4533 = vunpack.c.l.b16 %v4501
      %v4534 = vunpack.c.l.b16 %v4502
      %v4535 = vunpack.c.l.b16 %v4503
      %v4536 = vunpack.c.l.b16 %v4504
      %v4537 = vunpack.c.l.b16 %v4505
      %v4538 = vunpack.c.l.b16 %v4506
      %v4539 = vunpack.c.l.b16 %v4507
      %v4540 = vunpack.c.l.b16 %v4508
      %v4541 = vunpack.c.l.b16 %v4509
      %v4542 = vunpack.c.l.b16 %v4510
      %v4543 = vunpack.c.l.b16 %v4511
      %v4544 = vpack.c.b16 %v4529, %v4528
      %v4545 = vpack.c.b16 %v4531, %v4530
      %v4546 = vpack.c.b16 %v4533, %v4532
      %v4547 = vpack.c.b16 %v4535, %v4534
      %v4548 = vpack.c.b16 %v4537, %v4536
      %v4549 = vpack.c.b16 %v4539, %v4538
      %v4550 = vpack.c.b16 %v4541, %v4540
      %v4551 = vpack.c.b16 %v4543, %v4542
      %4560 = vmatprep.subr.bf16.mxu0 0
      %4561 = vmatpush1.bf16.msra.mxu0 %v4551
      %4562 = vmatprep.subr.bf16.mxu0 0
      %4563 = vmatpush1.bf16.msra.mxu0 %v4550
      %4564 = vmatprep.subr.bf16.mxu0 0
      %4565 = vmatpush1.bf16.msra.mxu0 %v4549
      %4566 = vmatprep.subr.bf16.mxu0 0
      %4567 = vmatpush1.bf16.msra.mxu0 %v4548
      %4568 = vmatprep.subr.bf16.mxu0 0
      %4569 = vmatpush1.bf16.msra.mxu0 %v4547
      %4570 = vmatprep.subr.bf16.mxu0 0
      %4571 = vmatpush1.bf16.msra.mxu0 %v4546
      %4572 = vmatprep.subr.bf16.mxu0 0
      %4573 = vmatpush1.bf16.msra.mxu0 %v4545
      %4574 = vmatprep.subr.bf16.mxu0 0
      %4575 = vmatpush1.bf16.msra.mxu0 %v4544
      %4576 = vmatprep.subr.bf16.mxu0 0
      %4577 = vmatpush2.bf16.msra.mxu0 0
      %4578 = vmatprep.subr.bf16.mxu0 0
      %4579 = vmatpush2.bf16.msra.mxu0 0
      %4580 = vmatprep.subr.bf16.mxu0 0
      %4581 = vmatpush2.bf16.msra.mxu0 0
      %4582 = vmatprep.subr.bf16.mxu0 0
      %4583 = vmatpush2.bf16.msra.mxu0 0
      %4584 = vmatprep.subr.bf16.mxu0 0
      %4585 = vmatpush2.bf16.msra.mxu0 0
      %4586 = vmatprep.subr.bf16.mxu0 0
      %4587 = vmatpush2.bf16.msra.mxu0 0
      %4588 = vmatprep.subr.bf16.mxu0 0
      %4589 = vmatpush2.bf16.msra.mxu0 0
      %4590 = vmatprep.subr.bf16.mxu0 0
      %4591 = vmatpush2.bf16.msra.mxu0 0
      %4592 = vmatprep.mubr.bf16.mxu0 0
      %4593 = vmatmul.mubr.bf16.gmra.mxu0 %v4495
      %v4594 = vpop.f32.mrf.mxu0
      %v4595 = vadd.f32 %v2854, %v4594
      %v4596 = vpop.f32.mrf.mxu0
      %v4597 = vpop.f32.mrf.mxu0
      %v4598 = vadd.f32 %v2854, %v4597
      %v4599 = vpop.f32.mrf.mxu0
      %4600 = vdwg.mxu0
      %v4601 = vadd.f32 %v3714, %v4595
      %v4602 = vadd.f32 %v3715, %v4598
      %4603 = vadd.xlane.f32.xlu0 %v4601
      %v4604 = vpop.xlane.xlu0 %4603
      %4605 = vadd.xlane.f32.xlu0 %v4602
      %v4606 = vpop.xlane.xlu0 %4605
      %v4607 = vmul.f32 %v4604, 0.015625
      %v4608 = vmul.f32 %v4606, 0.015625
      %v4609 = vsub.f32 %v4601, %v4607
      %v4610 = vsub.f32 %v4602, %v4608
      %v4611 = vmul.f32 %v4609, %v4609
      %v4612 = vmul.f32 %v4610, %v4610
      %v4613 = vmul.f32 %v4611, %v384
      %v4614 = vmul.f32 %v4612, %v384
      %4615 = vadd.xlane.f32.xlu0 %v4613
      %v4616 = vpop.xlane.xlu0 %4615
      %4617 = vadd.xlane.f32.xlu0 %v4614
      %v4618 = vpop.xlane.xlu0 %4617
      %v4619 = vmul.f32 %v4616, 0.015625
      %v4620 = vmul.f32 %v4618, 0.015625
      %v4621 = vadd.f32 %v4619, 1e-05
      %v4622 = vadd.f32 %v4620, 1e-05
      %v4623 = vrsqrt.pop %v4621
      %v4624 = vrsqrt.pop %v4622
      %v4625 = vmul.f32 %v4609, %v4623
      %v4626 = vmul.f32 %v4610, %v4624
      %v4627 = vmul.f32 %v4625, %v2855
      %v4628 = vmul.f32 %v4626, %v2855
      %v4629 = vadd.f32 %v4627, %v2856
      %v4630 = vadd.f32 %v4628, %v2856
      %v4631 = vpack.c.bf16 %v4630, %v4629
      %v4632 = vld [vmem:[%s7 + $0x20] sm:$0xf]
      %v4633 = vld [vmem:[%s7 + $0x48] sm:$0xf]
      %v4634 = vld [vmem:[%s7 + $0x70] sm:$0xf]
      %v4635 = vld [vmem:[%s7 + $0x98] sm:$0xf]
      %v4636 = vld [vmem:[%s7 + $0xc0] sm:$0xf]
      %v4637 = vld [vmem:[%s7 + $0xe8] sm:$0xf]
      %v4638 = vld [vmem:[%s7 + $0x110] sm:$0xf]
      %v4639 = vld [vmem:[%s7 + $0x138] sm:$0xf]
      %v4640 = vld [vmem:[%s7 + $0x160] sm:$0xf]
      %v4641 = vld [vmem:[%s7 + $0x188] sm:$0xf]
      %v4642 = vld [vmem:[%s7 + $0x1b0] sm:$0xf]
      %v4643 = vld [vmem:[%s7 + $0x1d8] sm:$0xf]
      %v4644 = vld [vmem:[%s7 + $0x200] sm:$0xf]
      %v4645 = vld [vmem:[%s7 + $0x228] sm:$0xf]
      %v4646 = vld [vmem:[%s7 + $0x250] sm:$0xf]
      %v4647 = vld [vmem:[%s7 + $0x278] sm:$0xf]
      %v4664 = vunpack.c.l.b16 %v4632
      %v4665 = vunpack.c.l.b16 %v4633
      %v4666 = vunpack.c.l.b16 %v4634
      %v4667 = vunpack.c.l.b16 %v4635
      %v4668 = vunpack.c.l.b16 %v4636
      %v4669 = vunpack.c.l.b16 %v4637
      %v4670 = vunpack.c.l.b16 %v4638
      %v4671 = vunpack.c.l.b16 %v4639
      %v4672 = vunpack.c.l.b16 %v4640
      %v4673 = vunpack.c.l.b16 %v4641
      %v4674 = vunpack.c.l.b16 %v4642
      %v4675 = vunpack.c.l.b16 %v4643
      %v4676 = vunpack.c.l.b16 %v4644
      %v4677 = vunpack.c.l.b16 %v4645
      %v4678 = vunpack.c.l.b16 %v4646
      %v4679 = vunpack.c.l.b16 %v4647
      %v4680 = vpack.c.b16 %v4665, %v4664
      %v4681 = vpack.c.b16 %v4667, %v4666
      %v4682 = vpack.c.b16 %v4669, %v4668
      %v4683 = vpack.c.b16 %v4671, %v4670
      %v4684 = vpack.c.b16 %v4673, %v4672
      %v4685 = vpack.c.b16 %v4675, %v4674
      %v4686 = vpack.c.b16 %v4677, %v4676
      %v4687 = vpack.c.b16 %v4679, %v4678
      %4696 = vmatprep.subr.bf16.mxu0 0
      %4697 = vmatpush1.bf16.msra.mxu0 %v4687
      %4698 = vmatprep.subr.bf16.mxu0 0
      %4699 = vmatpush1.bf16.msra.mxu0 %v4686
      %4700 = vmatprep.subr.bf16.mxu0 0
      %4701 = vmatpush1.bf16.msra.mxu0 %v4685
      %4702 = vmatprep.subr.bf16.mxu0 0
      %4703 = vmatpush1.bf16.msra.mxu0 %v4684
      %4704 = vmatprep.subr.bf16.mxu0 0
      %4705 = vmatpush1.bf16.msra.mxu0 %v4683
      %4706 = vmatprep.subr.bf16.mxu0 0
      %4707 = vmatpush1.bf16.msra.mxu0 %v4682
      %4708 = vmatprep.subr.bf16.mxu0 0
      %4709 = vmatpush1.bf16.msra.mxu0 %v4681
      %4710 = vmatprep.subr.bf16.mxu0 0
      %4711 = vmatpush1.bf16.msra.mxu0 %v4680
      %4712 = vmatprep.subr.bf16.mxu0 0
      %4713 = vmatpush2.bf16.msra.mxu0 0
      %4714 = vmatprep.subr.bf16.mxu0 0
      %4715 = vmatpush2.bf16.msra.mxu0 0
      %4716 = vmatprep.subr.bf16.mxu0 0
      %4717 = vmatpush2.bf16.msra.mxu0 0
      %4718 = vmatprep.subr.bf16.mxu0 0
      %4719 = vmatpush2.bf16.msra.mxu0 0
      %4720 = vmatprep.subr.bf16.mxu0 0
      %4721 = vmatpush2.bf16.msra.mxu0 0
      %4722 = vmatprep.subr.bf16.mxu0 0
      %4723 = vmatpush2.bf16.msra.mxu0 0
      %4724 = vmatprep.subr.bf16.mxu0 0
      %4725 = vmatpush2.bf16.msra.mxu0 0
      %4726 = vmatprep.subr.bf16.mxu0 0
      %4727 = vmatpush2.bf16.msra.mxu0 0
      %4728 = vmatprep.mubr.bf16.mxu0 0
      %4729 = vmatmul.mubr.bf16.gmra.mxu0 %v4631
      %v4730 = vpop.f32.mrf.mxu0
      %v4731 = vadd.f32 %v2857, %v4730
      %v4732 = vpop.f32.mrf.mxu0
      %v4733 = vpop.f32.mrf.mxu0
      %v4734 = vadd.f32 %v2857, %v4733
      %v4735 = vpop.f32.mrf.mxu0
      %4736 = vdwg.mxu0
      %v4737 = vmax.f32 %v4731, 0.0
      %v4738 = vmax.f32 %v4734, 0.0
      %v4739 = vpack.c.bf16 %v4738, %v4737
      %v4740 = vld [vmem:[%s7 + $0x24] sm:$0xf]
      %v4741 = vld [vmem:[%s7 + $0x4c] sm:$0xf]
      %v4742 = vld [vmem:[%s7 + $0x74] sm:$0xf]
      %v4743 = vld [vmem:[%s7 + $0x9c] sm:$0xf]
      %v4744 = vld [vmem:[%s7 + $0xc4] sm:$0xf]
      %v4745 = vld [vmem:[%s7 + $0xec] sm:$0xf]
      %v4746 = vld [vmem:[%s7 + $0x114] sm:$0xf]
      %v4747 = vld [vmem:[%s7 + $0x13c] sm:$0xf]
      %v4748 = vld [vmem:[%s7 + $0x164] sm:$0xf]
      %v4749 = vld [vmem:[%s7 + $0x18c] sm:$0xf]
      %v4750 = vld [vmem:[%s7 + $0x1b4] sm:$0xf]
      %v4751 = vld [vmem:[%s7 + $0x1dc] sm:$0xf]
      %v4752 = vld [vmem:[%s7 + $0x204] sm:$0xf]
      %v4753 = vld [vmem:[%s7 + $0x22c] sm:$0xf]
      %v4754 = vld [vmem:[%s7 + $0x254] sm:$0xf]
      %v4755 = vld [vmem:[%s7 + $0x27c] sm:$0xf]
      %v4772 = vunpack.c.l.b16 %v4740
      %v4773 = vunpack.c.l.b16 %v4741
      %v4774 = vunpack.c.l.b16 %v4742
      %v4775 = vunpack.c.l.b16 %v4743
      %v4776 = vunpack.c.l.b16 %v4744
      %v4777 = vunpack.c.l.b16 %v4745
      %v4778 = vunpack.c.l.b16 %v4746
      %v4779 = vunpack.c.l.b16 %v4747
      %v4780 = vunpack.c.l.b16 %v4748
      %v4781 = vunpack.c.l.b16 %v4749
      %v4782 = vunpack.c.l.b16 %v4750
      %v4783 = vunpack.c.l.b16 %v4751
      %v4784 = vunpack.c.l.b16 %v4752
      %v4785 = vunpack.c.l.b16 %v4753
      %v4786 = vunpack.c.l.b16 %v4754
      %v4787 = vunpack.c.l.b16 %v4755
      %v4788 = vpack.c.b16 %v4773, %v4772
      %v4789 = vpack.c.b16 %v4775, %v4774
      %v4790 = vpack.c.b16 %v4777, %v4776
      %v4791 = vpack.c.b16 %v4779, %v4778
      %v4792 = vpack.c.b16 %v4781, %v4780
      %v4793 = vpack.c.b16 %v4783, %v4782
      %v4794 = vpack.c.b16 %v4785, %v4784
      %v4795 = vpack.c.b16 %v4787, %v4786
      %4804 = vmatprep.subr.bf16.mxu0 0
      %4805 = vmatpush1.bf16.msra.mxu0 %v4795
      %4806 = vmatprep.subr.bf16.mxu0 0
      %4807 = vmatpush1.bf16.msra.mxu0 %v4794
      %4808 = vmatprep.subr.bf16.mxu0 0
      %4809 = vmatpush1.bf16.msra.mxu0 %v4793
      %4810 = vmatprep.subr.bf16.mxu0 0
      %4811 = vmatpush1.bf16.msra.mxu0 %v4792
      %4812 = vmatprep.subr.bf16.mxu0 0
      %4813 = vmatpush1.bf16.msra.mxu0 %v4791
      %4814 = vmatprep.subr.bf16.mxu0 0
      %4815 = vmatpush1.bf16.msra.mxu0 %v4790
      %4816 = vmatprep.subr.bf16.mxu0 0
      %4817 = vmatpush1.bf16.msra.mxu0 %v4789
      %4818 = vmatprep.subr.bf16.mxu0 0
      %4819 = vmatpush1.bf16.msra.mxu0 %v4788
      %4820 = vmatprep.subr.bf16.mxu0 0
      %4821 = vmatpush2.bf16.msra.mxu0 0
      %4822 = vmatprep.subr.bf16.mxu0 0
      %4823 = vmatpush2.bf16.msra.mxu0 0
      %4824 = vmatprep.subr.bf16.mxu0 0
      %4825 = vmatpush2.bf16.msra.mxu0 0
      %4826 = vmatprep.subr.bf16.mxu0 0
      %4827 = vmatpush2.bf16.msra.mxu0 0
      %4828 = vmatprep.subr.bf16.mxu0 0
      %4829 = vmatpush2.bf16.msra.mxu0 0
      %4830 = vmatprep.subr.bf16.mxu0 0
      %4831 = vmatpush2.bf16.msra.mxu0 0
      %4832 = vmatprep.subr.bf16.mxu0 0
      %4833 = vmatpush2.bf16.msra.mxu0 0
      %4834 = vmatprep.subr.bf16.mxu0 0
      %4835 = vmatpush2.bf16.msra.mxu0 0
      %4836 = vmatprep.mubr.bf16.mxu0 0
      %4837 = vmatmul.mubr.bf16.gmra.mxu0 %v4739
      %v4838 = vpop.f32.mrf.mxu0
      %v4839 = vadd.f32 %v2858, %v4838
      %v4840 = vpop.f32.mrf.mxu0
      %v4841 = vpop.f32.mrf.mxu0
      %v4842 = vadd.f32 %v2858, %v4841
      %v4843 = vpop.f32.mrf.mxu0
      %4844 = vdwg.mxu0
      %v4845 = vadd.f32 %v4629, %v4839
      %v4846 = vadd.f32 %v4630, %v4842
      %4847 = vadd.xlane.f32.xlu0 %v4845
      %v4848 = vpop.xlane.xlu0 %4847
      %4849 = vadd.xlane.f32.xlu0 %v4846
      %v4850 = vpop.xlane.xlu0 %4849
      %v4851 = vmul.f32 %v4848, 0.015625
      %v4852 = vmul.f32 %v4850, 0.015625
      %v4853 = vsub.f32 %v4845, %v4851
      %v4854 = vsub.f32 %v4846, %v4852
      %v4855 = vmul.f32 %v4853, %v4853
      %v4856 = vmul.f32 %v4854, %v4854
      %v4857 = vmul.f32 %v4855, %v384
      %v4858 = vmul.f32 %v4856, %v384
      %4859 = vadd.xlane.f32.xlu0 %v4857
      %v4860 = vpop.xlane.xlu0 %4859
      %4861 = vadd.xlane.f32.xlu0 %v4858
      %v4862 = vpop.xlane.xlu0 %4861
      %v4863 = vmul.f32 %v4860, 0.015625
      %v4864 = vmul.f32 %v4862, 0.015625
      %v4865 = vadd.f32 %v4863, 1e-05
      %v4866 = vadd.f32 %v4864, 1e-05
      %v4867 = vrsqrt.pop %v4865
      %v4868 = vrsqrt.pop %v4866
      %v4869 = vmul.f32 %v4853, %v4867
      %v4870 = vmul.f32 %v4854, %v4868
      %v4871 = vmul.f32 %v4869, %v2859
      %v4872 = vmul.f32 %v4870, %v2859
      %v4873 = vadd.f32 %v4871, %v2860
      %v4874 = vadd.f32 %v4872, %v2860
      %s4875 = scalar_lea.vmem %s8, 32
      %v4876 = vld [vmem:[%s4875] ss:$8 sm:$0x3]
      %v4877 = vld [vmem:[%s4875 + $0x1] ss:$0 sm:$0xff]
      %v4878 = vld [vmem:[%s4875 + $0x2] ss:$0 sm:$0xff]
      %v4879 = vld [vmem:[%s4875 + $0x3] ss:$0 sm:$0xff]
      %v4880 = vld [vmem:[%s4875 + $0x4] ss:$0 sm:$0xff]
      %v4881 = vld [vmem:[%s4875 + $0x5] ss:$0 sm:$0xff]
      %v4882 = vld [vmem:[%s4875 + $0x6] ss:$0 sm:$0xff]
      %v4883 = vld [vmem:[%s4875 + $0x7] ss:$0 sm:$0xff]
      %v4884 = vld [vmem:[%s4875 + $0x10] ss:$0 sm:$0xff]
      %v4885 = vld [vmem:[%s4875 + $0x11] ss:$0 sm:$0xff]
      %v4886 = vld [vmem:[%s4875 + $0x12] ss:$0 sm:$0xff]
      %v4887 = vld [vmem:[%s4875 + $0x13] ss:$0 sm:$0xff]
      %v4888 = vld [vmem:[%s4875 + $0x14] ss:$0 sm:$0xff]
      %v4889 = vld [vmem:[%s4875 + $0x15] ss:$0 sm:$0xff]
      %v4890 = vld [vmem:[%s4875 + $0x16] ss:$0 sm:$0xff]
      %v4891 = vadd.f32 %v4873, %v2844
      %v4892 = vadd.f32 %v4874, %v2845
      %v4893 = vpack.c.bf16 %v4892, %v4891
      %v4894 = vpack.c.bf16 %v4874, %v4873
      %s4895 = scalar_lea.vmem %s7, 640
      %v4896 = vld [vmem:[%s4895] sm:$0xff]
      %v4897 = vld [vmem:[%s4895 + $0x28] sm:$0xff]
      %v4898 = vld [vmem:[%s4895 + $0x50] sm:$0xff]
      %v4899 = vld [vmem:[%s4895 + $0x78] sm:$0xff]
      %v4900 = vld [vmem:[%s4895 + $0xa0] sm:$0xff]
      %v4901 = vld [vmem:[%s4895 + $0xc8] sm:$0xff]
      %v4902 = vld [vmem:[%s4895 + $0xf0] sm:$0xff]
      %v4903 = vld [vmem:[%s4895 + $0x118] sm:$0xff]
      %v4904 = vld [vmem:[%s4895 + $0x140] sm:$0xff]
      %v4905 = vld [vmem:[%s4895 + $0x168] sm:$0xff]
      %v4906 = vld [vmem:[%s4895 + $0x190] sm:$0xff]
      %v4907 = vld [vmem:[%s4895 + $0x1b8] sm:$0xff]
      %v4908 = vld [vmem:[%s4895 + $0x1e0] sm:$0xff]
      %v4909 = vld [vmem:[%s4895 + $0x208] sm:$0xff]
      %v4910 = vld [vmem:[%s4895 + $0x230] sm:$0xff]
      %v4911 = vld [vmem:[%s4895 + $0x258] sm:$0xff]
      %v4913 = vlaneseq
      %v4914 = vshrl.u32 %v4913, 7
      %v4915 = vsub.s32 0, %v4914
      %v4916 = vrot.slane %v4876, %v4915
      %v4917 = vlaneseq
      %v4918 = vshrl.u32 %v4917, 7
      %v4919 = vsub.s32 1, %v4918
      %v4920 = vrot.slane %v4876, %v4919
      %v4939 = vunpack.c.l.b16 %v4896
      %v4940 = vunpack.c.h.b16 %v4896
      %v4941 = vunpack.c.l.b16 %v4897
      %v4942 = vunpack.c.h.b16 %v4897
      %v4943 = vunpack.c.l.b16 %v4898
      %v4944 = vunpack.c.h.b16 %v4898
      %v4945 = vunpack.c.l.b16 %v4899
      %v4946 = vunpack.c.h.b16 %v4899
      %v4947 = vunpack.c.l.b16 %v4900
      %v4948 = vunpack.c.h.b16 %v4900
      %v4949 = vunpack.c.l.b16 %v4901
      %v4950 = vunpack.c.h.b16 %v4901
      %v4951 = vunpack.c.l.b16 %v4902
      %v4952 = vunpack.c.h.b16 %v4902
      %v4953 = vunpack.c.l.b16 %v4903
      %v4954 = vunpack.c.h.b16 %v4903
      %v4955 = vunpack.c.l.b16 %v4904
      %v4956 = vunpack.c.h.b16 %v4904
      %v4957 = vunpack.c.l.b16 %v4905
      %v4958 = vunpack.c.h.b16 %v4905
      %v4959 = vunpack.c.l.b16 %v4906
      %v4960 = vunpack.c.h.b16 %v4906
      %v4961 = vunpack.c.l.b16 %v4907
      %v4962 = vunpack.c.h.b16 %v4907
      %v4963 = vunpack.c.l.b16 %v4908
      %v4964 = vunpack.c.h.b16 %v4908
      %v4965 = vunpack.c.l.b16 %v4909
      %v4966 = vunpack.c.h.b16 %v4909
      %v4967 = vunpack.c.l.b16 %v4910
      %v4968 = vunpack.c.h.b16 %v4910
      %v4969 = vunpack.c.l.b16 %v4911
      %v4970 = vunpack.c.h.b16 %v4911
      %v4971 = vpack.c.b16 %v4941, %v4939
      %v4972 = vpack.c.b16 %v4942, %v4940
      %v4973 = vpack.c.b16 %v4945, %v4943
      %v4974 = vpack.c.b16 %v4946, %v4944
      %v4975 = vpack.c.b16 %v4949, %v4947
      %v4976 = vpack.c.b16 %v4950, %v4948
      %v4977 = vpack.c.b16 %v4953, %v4951
      %v4978 = vpack.c.b16 %v4954, %v4952
      %v4979 = vpack.c.b16 %v4957, %v4955
      %v4980 = vpack.c.b16 %v4958, %v4956
      %v4981 = vpack.c.b16 %v4961, %v4959
      %v4982 = vpack.c.b16 %v4962, %v4960
      %v4983 = vpack.c.b16 %v4965, %v4963
      %v4984 = vpack.c.b16 %v4966, %v4964
      %v4985 = vpack.c.b16 %v4969, %v4967
      %v4986 = vpack.c.b16 %v4970, %v4968
      %5003 = vmatprep.subr.bf16.mxu0 %v4986
      %5004 = vmatpush1.bf16.msra.mxu0 %v4985
      %5005 = vmatprep.subr.bf16.mxu0 %v4984
      %5006 = vmatpush1.bf16.msra.mxu0 %v4983
      %5007 = vmatprep.subr.bf16.mxu0 %v4982
      %5008 = vmatpush1.bf16.msra.mxu0 %v4981
      %5009 = vmatprep.subr.bf16.mxu0 %v4980
      %5010 = vmatpush1.bf16.msra.mxu0 %v4979
      %5011 = vmatprep.subr.bf16.mxu0 %v4978
      %5012 = vmatpush1.bf16.msra.mxu0 %v4977
      %5013 = vmatprep.subr.bf16.mxu0 %v4976
      %5014 = vmatpush1.bf16.msra.mxu0 %v4975
      %5015 = vmatprep.subr.bf16.mxu0 %v4974
      %5016 = vmatpush1.bf16.msra.mxu0 %v4973
      %5017 = vmatprep.subr.bf16.mxu0 %v4972
      %5018 = vmatpush1.bf16.msra.mxu0 %v4971
      %5019 = vmatprep.subr.bf16.mxu0 0
      %5020 = vmatpush2.bf16.msra.mxu0 0
      %5021 = vmatprep.subr.bf16.mxu0 0
      %5022 = vmatpush2.bf16.msra.mxu0 0
      %5023 = vmatprep.subr.bf16.mxu0 0
      %5024 = vmatpush2.bf16.msra.mxu0 0
      %5025 = vmatprep.subr.bf16.mxu0 0
      %5026 = vmatpush2.bf16.msra.mxu0 0
      %5027 = vmatprep.subr.bf16.mxu0 0
      %5028 = vmatpush2.bf16.msra.mxu0 0
      %5029 = vmatprep.subr.bf16.mxu0 0
      %5030 = vmatpush2.bf16.msra.mxu0 0
      %5031 = vmatprep.subr.bf16.mxu0 0
      %5032 = vmatpush2.bf16.msra.mxu0 0
      %5033 = vmatprep.subr.bf16.mxu0 0
      %5034 = vmatpush2.bf16.msra.mxu0 0
      %5035 = vmatprep.mubr.bf16.mxu0 0
      %5036 = vmatmul.mubr.bf16.gmra.mxu0 %v4893
      %v5037 = vpop.f32.mrf.mxu0
      %v5038 = vadd.f32 %v4916, %v5037
      %v5039 = vpop.f32.mrf.mxu0
      %v5040 = vadd.f32 %v4920, %v5039
      %v5041 = vpop.f32.mrf.mxu0
      %v5042 = vadd.f32 %v4916, %v5041
      %v5043 = vpop.f32.mrf.mxu0
      %v5044 = vadd.f32 %v4920, %v5043
      %5045 = vdwg.mxu0
      %v5046 = vld [vmem:[%s4895 + $0x8] sm:$0xf]
      %v5047 = vld [vmem:[%s4895 + $0x30] sm:$0xf]
      %v5048 = vld [vmem:[%s4895 + $0x58] sm:$0xf]
      %v5049 = vld [vmem:[%s4895 + $0x80] sm:$0xf]
      %v5050 = vld [vmem:[%s4895 + $0xa8] sm:$0xf]
      %v5051 = vld [vmem:[%s4895 + $0xd0] sm:$0xf]
      %v5052 = vld [vmem:[%s4895 + $0xf8] sm:$0xf]
      %v5053 = vld [vmem:[%s4895 + $0x120] sm:$0xf]
      %v5054 = vld [vmem:[%s4895 + $0x148] sm:$0xf]
      %v5055 = vld [vmem:[%s4895 + $0x170] sm:$0xf]
      %v5056 = vld [vmem:[%s4895 + $0x198] sm:$0xf]
      %v5057 = vld [vmem:[%s4895 + $0x1c0] sm:$0xf]
      %v5058 = vld [vmem:[%s4895 + $0x1e8] sm:$0xf]
      %v5059 = vld [vmem:[%s4895 + $0x210] sm:$0xf]
      %v5060 = vld [vmem:[%s4895 + $0x238] sm:$0xf]
      %v5061 = vld [vmem:[%s4895 + $0x260] sm:$0xf]
      %v5078 = vunpack.c.l.b16 %v5046
      %v5079 = vunpack.c.l.b16 %v5047
      %v5080 = vunpack.c.l.b16 %v5048
      %v5081 = vunpack.c.l.b16 %v5049
      %v5082 = vunpack.c.l.b16 %v5050
      %v5083 = vunpack.c.l.b16 %v5051
      %v5084 = vunpack.c.l.b16 %v5052
      %v5085 = vunpack.c.l.b16 %v5053
      %v5086 = vunpack.c.l.b16 %v5054
      %v5087 = vunpack.c.l.b16 %v5055
      %v5088 = vunpack.c.l.b16 %v5056
      %v5089 = vunpack.c.l.b16 %v5057
      %v5090 = vunpack.c.l.b16 %v5058
      %v5091 = vunpack.c.l.b16 %v5059
      %v5092 = vunpack.c.l.b16 %v5060
      %v5093 = vunpack.c.l.b16 %v5061
      %v5094 = vpack.c.b16 %v5079, %v5078
      %v5095 = vpack.c.b16 %v5081, %v5080
      %v5096 = vpack.c.b16 %v5083, %v5082
      %v5097 = vpack.c.b16 %v5085, %v5084
      %v5098 = vpack.c.b16 %v5087, %v5086
      %v5099 = vpack.c.b16 %v5089, %v5088
      %v5100 = vpack.c.b16 %v5091, %v5090
      %v5101 = vpack.c.b16 %v5093, %v5092
      %5110 = vmatprep.subr.bf16.mxu0 0
      %5111 = vmatpush1.bf16.msra.mxu0 %v5101
      %5112 = vmatprep.subr.bf16.mxu0 0
      %5113 = vmatpush1.bf16.msra.mxu0 %v5100
      %5114 = vmatprep.subr.bf16.mxu0 0
      %5115 = vmatpush1.bf16.msra.mxu0 %v5099
      %5116 = vmatprep.subr.bf16.mxu0 0
      %5117 = vmatpush1.bf16.msra.mxu0 %v5098
      %5118 = vmatprep.subr.bf16.mxu0 0
      %5119 = vmatpush1.bf16.msra.mxu0 %v5097
      %5120 = vmatprep.subr.bf16.mxu0 0
      %5121 = vmatpush1.bf16.msra.mxu0 %v5096
      %5122 = vmatprep.subr.bf16.mxu0 0
      %5123 = vmatpush1.bf16.msra.mxu0 %v5095
      %5124 = vmatprep.subr.bf16.mxu0 0
      %5125 = vmatpush1.bf16.msra.mxu0 %v5094
      %5126 = vmatprep.subr.bf16.mxu0 0
      %5127 = vmatpush2.bf16.msra.mxu0 0
      %5128 = vmatprep.subr.bf16.mxu0 0
      %5129 = vmatpush2.bf16.msra.mxu0 0
      %5130 = vmatprep.subr.bf16.mxu0 0
      %5131 = vmatpush2.bf16.msra.mxu0 0
      %5132 = vmatprep.subr.bf16.mxu0 0
      %5133 = vmatpush2.bf16.msra.mxu0 0
      %5134 = vmatprep.subr.bf16.mxu0 0
      %5135 = vmatpush2.bf16.msra.mxu0 0
      %5136 = vmatprep.subr.bf16.mxu0 0
      %5137 = vmatpush2.bf16.msra.mxu0 0
      %5138 = vmatprep.subr.bf16.mxu0 0
      %5139 = vmatpush2.bf16.msra.mxu0 0
      %5140 = vmatprep.subr.bf16.mxu0 0
      %5141 = vmatpush2.bf16.msra.mxu0 0
      %5142 = vmatprep.mubr.bf16.mxu0 0
      %5143 = vmatmul.mubr.bf16.gmra.mxu0 %v4894
      %v5144 = vpop.f32.mrf.mxu0
      %v5145 = vadd.f32 %v4877, %v5144
      %v5146 = vpop.f32.mrf.mxu0
      %v5147 = vpop.f32.mrf.mxu0
      %v5148 = vadd.f32 %v4877, %v5147
      %v5149 = vpop.f32.mrf.mxu0
      %5150 = vdwg.mxu0
      %v5151 = vpack.c.bf16 %v5044, %v5040
      %v5152 = vmul.f32 %v5038, %v367
      %v5153 = vmul.f32 %v5042, %v367
      %v5154 = vpack.c.bf16 %v5153, %v5152
      %5155 = vmatprep.subr.bf16.mxu0 0
      %5156 = vmatpush1.bf16.xpose.msra.mxu0 0
      %5157 = vmatprep.subr.bf16.mxu0 0
      %5158 = vmatpush1.bf16.xpose.msra.mxu0 0
      %5159 = vmatprep.subr.bf16.mxu0 0
      %5160 = vmatpush1.bf16.xpose.msra.mxu0 0
      %5161 = vmatprep.subr.bf16.mxu0 0
      %5162 = vmatpush1.bf16.xpose.msra.mxu0 0
      %5163 = vmatprep.subr.bf16.mxu0 0
      %5164 = vmatpush1.bf16.xpose.msra.mxu0 0
      %5165 = vmatprep.subr.bf16.mxu0 0
      %5166 = vmatpush1.bf16.xpose.msra.mxu0 0
      %5167 = vmatprep.subr.bf16.mxu0 0
      %5168 = vmatpush1.bf16.xpose.msra.mxu0 0
      %5169 = vmatprep.subr.bf16.mxu0 0
      %5170 = vmatpush1.bf16.xpose.msra.mxu0 %v5151
      %5171 = vmatprep.subr.bf16.mxu0 0
      %5172 = vmatpush2.bf16.xpose.msra.mxu0 0
      %5173 = vmatprep.subr.bf16.mxu0 0
      %5174 = vmatpush2.bf16.xpose.msra.mxu0 0
      %5175 = vmatprep.subr.bf16.mxu0 0
      %5176 = vmatpush2.bf16.xpose.msra.mxu0 0
      %5177 = vmatprep.subr.bf16.mxu0 0
      %5178 = vmatpush2.bf16.xpose.msra.mxu0 0
      %5179 = vmatprep.subr.bf16.mxu0 0
      %5180 = vmatpush2.bf16.xpose.msra.mxu0 0
      %5181 = vmatprep.subr.bf16.mxu0 0
      %5182 = vmatpush2.bf16.xpose.msra.mxu0 0
      %5183 = vmatprep.subr.bf16.mxu0 0
      %5184 = vmatpush2.bf16.xpose.msra.mxu0 0
      %5185 = vmatprep.subr.bf16.mxu0 0
      %5186 = vmatpush2.bf16.xpose.msra.mxu0 0
      %5187 = vmatprep.mubr.bf16.mxu0 0
      %5188 = vmatmul.mubr.bf16.gmra.mxu0 %v5154
      %v5189 = vpop.f32.mrf.mxu0
      %v5190 = vadd.f32 0.0, %v5189
      %v5191 = vpop.f32.mrf.mxu0
      %v5192 = vpop.f32.mrf.mxu0
      %v5193 = vadd.f32 0.0, %v5192
      %v5194 = vpop.f32.mrf.mxu0
      %5195 = vdwg.mxu0
      %v5196 = vsel %vm465, %v5190, -inf
      %5197 = vmax.xlane.f32.xlu0 %v5196
      %v5198 = vpop.xlane.xlu0 %5197
      %v5199 = vsel %vm465, %v5193, -inf
      %5200 = vmax.xlane.f32.xlu0 %v5199
      %v5201 = vpop.xlane.xlu0 %5200
      %v5202 = vsub.f32 %v5190, %v5198
      %v5203 = vsub.f32 %v5193, %v5201
      %v5204 = vmul.f32 %v5202, 1.442695
      %v5205 = vpow.pop %v5204
      %v5206 = vmul.f32 %v5203, 1.442695
      %v5207 = vpow.pop %v5206
      %v5208 = vsel %vm465, %v5205, 0.0
      %5209 = vadd.xlane.f32.xlu0 %v5208
      %v5210 = vpop.xlane.xlu0 %5209
      %v5211 = vsel %vm465, %v5207, 0.0
      %5212 = vadd.xlane.f32.xlu0 %v5211
      %v5213 = vpop.xlane.xlu0 %5212
      %v5214 = vrcp.pop %v5210
      %v5215 = vrcp.pop %v5213
      %v5216 = vmul.f32 %v5205, %v5214
      %v5217 = vmul.f32 %v5207, %v5215
      %v5218 = vpack.c.bf16 %v5217, %v5216
      %v5219 = vmul.f32 %v5145, %v367
      %v5220 = vmul.f32 %v5148, %v367
      %v5221 = vpack.c.bf16 %v5220, %v5219
      %v5222 = vmul.f32 %v5038, %v372
      %v5223 = vmul.f32 %v5042, %v372
      %v5224 = vpack.c.bf16 %v5223, %v5222
      %5225 = vmatprep.subr.bf16.mxu0 0
      %5226 = vmatpush1.bf16.xpose.msra.mxu0 0
      %5227 = vmatprep.subr.bf16.mxu0 0
      %5228 = vmatpush1.bf16.xpose.msra.mxu0 0
      %5229 = vmatprep.subr.bf16.mxu0 0
      %5230 = vmatpush1.bf16.xpose.msra.mxu0 0
      %5231 = vmatprep.subr.bf16.mxu0 0
      %5232 = vmatpush1.bf16.xpose.msra.mxu0 0
      %5233 = vmatprep.subr.bf16.mxu0 0
      %5234 = vmatpush1.bf16.xpose.msra.mxu0 0
      %5235 = vmatprep.subr.bf16.mxu0 0
      %5236 = vmatpush1.bf16.xpose.msra.mxu0 0
      %5237 = vmatprep.subr.bf16.mxu0 0
      %5238 = vmatpush1.bf16.xpose.msra.mxu0 0
      %5239 = vmatprep.subr.bf16.mxu0 0
      %5240 = vmatpush1.bf16.xpose.msra.mxu0 %v5151
      %5241 = vmatprep.subr.bf16.mxu0 0
      %5242 = vmatpush2.bf16.xpose.msra.mxu0 0
      %5243 = vmatprep.subr.bf16.mxu0 0
      %5244 = vmatpush2.bf16.xpose.msra.mxu0 0
      %5245 = vmatprep.subr.bf16.mxu0 0
      %5246 = vmatpush2.bf16.xpose.msra.mxu0 0
      %5247 = vmatprep.subr.bf16.mxu0 0
      %5248 = vmatpush2.bf16.xpose.msra.mxu0 0
      %5249 = vmatprep.subr.bf16.mxu0 0
      %5250 = vmatpush2.bf16.xpose.msra.mxu0 0
      %5251 = vmatprep.subr.bf16.mxu0 0
      %5252 = vmatpush2.bf16.xpose.msra.mxu0 0
      %5253 = vmatprep.subr.bf16.mxu0 0
      %5254 = vmatpush2.bf16.xpose.msra.mxu0 0
      %5255 = vmatprep.subr.bf16.mxu0 0
      %5256 = vmatpush2.bf16.xpose.msra.mxu0 0
      %5257 = vmatprep.mubr.bf16.mxu0 0
      %5258 = vmatmul.mubr.bf16.gmra.mxu0 %v5224
      %v5259 = vpop.f32.mrf.mxu0
      %v5260 = vadd.f32 0.0, %v5259
      %v5261 = vpop.f32.mrf.mxu0
      %v5262 = vpop.f32.mrf.mxu0
      %v5263 = vadd.f32 0.0, %v5262
      %v5264 = vpop.f32.mrf.mxu0
      %5265 = vdwg.mxu0
      %v5266 = vsel %vm465, %v5260, -inf
      %5267 = vmax.xlane.f32.xlu0 %v5266
      %v5268 = vpop.xlane.xlu0 %5267
      %v5269 = vsel %vm465, %v5263, -inf
      %5270 = vmax.xlane.f32.xlu0 %v5269
      %v5271 = vpop.xlane.xlu0 %5270
      %v5272 = vsub.f32 %v5260, %v5268
      %v5273 = vsub.f32 %v5263, %v5271
      %v5274 = vmul.f32 %v5272, 1.442695
      %v5275 = vpow.pop %v5274
      %v5276 = vmul.f32 %v5273, 1.442695
      %v5277 = vpow.pop %v5276
      %v5278 = vsel %vm465, %v5275, 0.0
      %5279 = vadd.xlane.f32.xlu0 %v5278
      %v5280 = vpop.xlane.xlu0 %5279
      %v5281 = vsel %vm465, %v5277, 0.0
      %5282 = vadd.xlane.f32.xlu0 %v5281
      %v5283 = vpop.xlane.xlu0 %5282
      %v5284 = vrcp.pop %v5280
      %v5285 = vrcp.pop %v5283
      %v5286 = vmul.f32 %v5275, %v5284
      %v5287 = vmul.f32 %v5277, %v5285
      %v5288 = vpack.c.bf16 %v5287, %v5286
      %v5289 = vmul.f32 %v5145, %v372
      %v5290 = vmul.f32 %v5148, %v372
      %v5291 = vpack.c.bf16 %v5290, %v5289
      %v5293 = vsel %vm465, %v5288, 0
      %5295 = vmatprep.subr.bf16.mxu0 0
      %5296 = vmatpush1.bf16.msra.mxu0 0
      %5297 = vmatprep.subr.bf16.mxu0 0
      %5298 = vmatpush1.bf16.msra.mxu0 0
      %5299 = vmatprep.subr.bf16.mxu0 0
      %5300 = vmatpush1.bf16.msra.mxu0 0
      %5301 = vmatprep.subr.bf16.mxu0 0
      %5302 = vmatpush1.bf16.msra.mxu0 0
      %5303 = vmatprep.subr.bf16.mxu0 0
      %5304 = vmatpush1.bf16.msra.mxu0 0
      %5305 = vmatprep.subr.bf16.mxu0 0
      %5306 = vmatpush1.bf16.msra.mxu0 0
      %5307 = vmatprep.subr.bf16.mxu0 0
      %5308 = vmatpush1.bf16.msra.mxu0 0
      %5309 = vmatprep.subr.bf16.mxu0 0
      %5310 = vmatpush1.bf16.msra.mxu0 %v5291
      %5311 = vmatprep.subr.bf16.mxu0 0
      %5312 = vmatpush2.bf16.msra.mxu0 0
      %5313 = vmatprep.subr.bf16.mxu0 0
      %5314 = vmatpush2.bf16.msra.mxu0 0
      %5315 = vmatprep.subr.bf16.mxu0 0
      %5316 = vmatpush2.bf16.msra.mxu0 0
      %5317 = vmatprep.subr.bf16.mxu0 0
      %5318 = vmatpush2.bf16.msra.mxu0 0
      %5319 = vmatprep.subr.bf16.mxu0 0
      %5320 = vmatpush2.bf16.msra.mxu0 0
      %5321 = vmatprep.subr.bf16.mxu0 0
      %5322 = vmatpush2.bf16.msra.mxu0 0
      %5323 = vmatprep.subr.bf16.mxu0 0
      %5324 = vmatpush2.bf16.msra.mxu0 0
      %5325 = vmatprep.subr.bf16.mxu0 0
      %5326 = vmatpush2.bf16.msra.mxu0 0
      %5327 = vmatprep.mubr.bf16.mxu0 0
      %5328 = vmatmul.mubr.bf16.gmra.mxu0 %v5293
      %v5329 = vpop.f32.mrf.mxu0
      %v5330 = vadd.f32 0.0, %v5329
      %v5331 = vpop.f32.mrf.mxu0
      %v5332 = vpop.f32.mrf.mxu0
      %v5333 = vadd.f32 0.0, %v5332
      %v5334 = vpop.f32.mrf.mxu0
      %5335 = vdwg.mxu0
      %v5337 = vsel %vm465, %v5218, 0
      %5339 = vmatprep.subr.bf16.mxu0 0
      %5340 = vmatpush1.bf16.msra.mxu0 0
      %5341 = vmatprep.subr.bf16.mxu0 0
      %5342 = vmatpush1.bf16.msra.mxu0 0
      %5343 = vmatprep.subr.bf16.mxu0 0
      %5344 = vmatpush1.bf16.msra.mxu0 0
      %5345 = vmatprep.subr.bf16.mxu0 0
      %5346 = vmatpush1.bf16.msra.mxu0 0
      %5347 = vmatprep.subr.bf16.mxu0 0
      %5348 = vmatpush1.bf16.msra.mxu0 0
      %5349 = vmatprep.subr.bf16.mxu0 0
      %5350 = vmatpush1.bf16.msra.mxu0 0
      %5351 = vmatprep.subr.bf16.mxu0 0
      %5352 = vmatpush1.bf16.msra.mxu0 0
      %5353 = vmatprep.subr.bf16.mxu0 0
      %5354 = vmatpush1.bf16.msra.mxu0 %v5221
      %5355 = vmatprep.subr.bf16.mxu0 0
      %5356 = vmatpush2.bf16.msra.mxu0 0
      %5357 = vmatprep.subr.bf16.mxu0 0
      %5358 = vmatpush2.bf16.msra.mxu0 0
      %5359 = vmatprep.subr.bf16.mxu0 0
      %5360 = vmatpush2.bf16.msra.mxu0 0
      %5361 = vmatprep.subr.bf16.mxu0 0
      %5362 = vmatpush2.bf16.msra.mxu0 0
      %5363 = vmatprep.subr.bf16.mxu0 0
      %5364 = vmatpush2.bf16.msra.mxu0 0
      %5365 = vmatprep.subr.bf16.mxu0 0
      %5366 = vmatpush2.bf16.msra.mxu0 0
      %5367 = vmatprep.subr.bf16.mxu0 0
      %5368 = vmatpush2.bf16.msra.mxu0 0
      %5369 = vmatprep.subr.bf16.mxu0 0
      %5370 = vmatpush2.bf16.msra.mxu0 0
      %5371 = vmatprep.mubr.bf16.mxu0 0
      %5372 = vmatmul.mubr.bf16.gmra.mxu0 %v5337
      %v5373 = vpop.f32.mrf.mxu0
      %v5374 = vadd.f32 %v5330, %v5373
      %v5375 = vpop.f32.mrf.mxu0
      %v5376 = vpop.f32.mrf.mxu0
      %v5377 = vadd.f32 %v5333, %v5376
      %v5378 = vpop.f32.mrf.mxu0
      %5379 = vdwg.mxu0
      %v5380 = vmul.f32 %v5038, %v377
      %v5381 = vmul.f32 %v5042, %v377
      %v5382 = vpack.c.bf16 %v5381, %v5380
      %5383 = vmatprep.subr.bf16.mxu0 0
      %5384 = vmatpush1.bf16.xpose.msra.mxu0 0
      %5385 = vmatprep.subr.bf16.mxu0 0
      %5386 = vmatpush1.bf16.xpose.msra.mxu0 0
      %5387 = vmatprep.subr.bf16.mxu0 0
      %5388 = vmatpush1.bf16.xpose.msra.mxu0 0
      %5389 = vmatprep.subr.bf16.mxu0 0
      %5390 = vmatpush1.bf16.xpose.msra.mxu0 0
      %5391 = vmatprep.subr.bf16.mxu0 0
      %5392 = vmatpush1.bf16.xpose.msra.mxu0 0
      %5393 = vmatprep.subr.bf16.mxu0 0
      %5394 = vmatpush1.bf16.xpose.msra.mxu0 0
      %5395 = vmatprep.subr.bf16.mxu0 0
      %5396 = vmatpush1.bf16.xpose.msra.mxu0 0
      %5397 = vmatprep.subr.bf16.mxu0 0
      %5398 = vmatpush1.bf16.xpose.msra.mxu0 %v5151
      %5399 = vmatprep.subr.bf16.mxu0 0
      %5400 = vmatpush2.bf16.xpose.msra.mxu0 0
      %5401 = vmatprep.subr.bf16.mxu0 0
      %5402 = vmatpush2.bf16.xpose.msra.mxu0 0
      %5403 = vmatprep.subr.bf16.mxu0 0
      %5404 = vmatpush2.bf16.xpose.msra.mxu0 0
      %5405 = vmatprep.subr.bf16.mxu0 0
      %5406 = vmatpush2.bf16.xpose.msra.mxu0 0
      %5407 = vmatprep.subr.bf16.mxu0 0
      %5408 = vmatpush2.bf16.xpose.msra.mxu0 0
      %5409 = vmatprep.subr.bf16.mxu0 0
      %5410 = vmatpush2.bf16.xpose.msra.mxu0 0
      %5411 = vmatprep.subr.bf16.mxu0 0
      %5412 = vmatpush2.bf16.xpose.msra.mxu0 0
      %5413 = vmatprep.subr.bf16.mxu0 0
      %5414 = vmatpush2.bf16.xpose.msra.mxu0 0
      %5415 = vmatprep.mubr.bf16.mxu0 0
      %5416 = vmatmul.mubr.bf16.gmra.mxu0 %v5382
      %v5417 = vpop.f32.mrf.mxu0
      %v5418 = vadd.f32 0.0, %v5417
      %v5419 = vpop.f32.mrf.mxu0
      %v5420 = vpop.f32.mrf.mxu0
      %v5421 = vadd.f32 0.0, %v5420
      %v5422 = vpop.f32.mrf.mxu0
      %5423 = vdwg.mxu0
      %v5424 = vsel %vm465, %v5418, -inf
      %5425 = vmax.xlane.f32.xlu0 %v5424
      %v5426 = vpop.xlane.xlu0 %5425
      %v5427 = vsel %vm465, %v5421, -inf
      %5428 = vmax.xlane.f32.xlu0 %v5427
      %v5429 = vpop.xlane.xlu0 %5428
      %v5430 = vsub.f32 %v5418, %v5426
      %v5431 = vsub.f32 %v5421, %v5429
      %v5432 = vmul.f32 %v5430, 1.442695
      %v5433 = vpow.pop %v5432
      %v5434 = vmul.f32 %v5431, 1.442695
      %v5435 = vpow.pop %v5434
      %v5436 = vsel %vm465, %v5433, 0.0
      %5437 = vadd.xlane.f32.xlu0 %v5436
      %v5438 = vpop.xlane.xlu0 %5437
      %v5439 = vsel %vm465, %v5435, 0.0
      %5440 = vadd.xlane.f32.xlu0 %v5439
      %v5441 = vpop.xlane.xlu0 %5440
      %v5442 = vrcp.pop %v5438
      %v5443 = vrcp.pop %v5441
      %v5444 = vmul.f32 %v5433, %v5442
      %v5445 = vmul.f32 %v5435, %v5443
      %v5446 = vpack.c.bf16 %v5445, %v5444
      %v5447 = vmul.f32 %v5145, %v377
      %v5448 = vmul.f32 %v5148, %v377
      %v5449 = vpack.c.bf16 %v5448, %v5447
      %v5451 = vsel %vm465, %v5446, 0
      %5453 = vmatprep.subr.bf16.mxu0 0
      %5454 = vmatpush1.bf16.msra.mxu0 0
      %5455 = vmatprep.subr.bf16.mxu0 0
      %5456 = vmatpush1.bf16.msra.mxu0 0
      %5457 = vmatprep.subr.bf16.mxu0 0
      %5458 = vmatpush1.bf16.msra.mxu0 0
      %5459 = vmatprep.subr.bf16.mxu0 0
      %5460 = vmatpush1.bf16.msra.mxu0 0
      %5461 = vmatprep.subr.bf16.mxu0 0
      %5462 = vmatpush1.bf16.msra.mxu0 0
      %5463 = vmatprep.subr.bf16.mxu0 0
      %5464 = vmatpush1.bf16.msra.mxu0 0
      %5465 = vmatprep.subr.bf16.mxu0 0
      %5466 = vmatpush1.bf16.msra.mxu0 0
      %5467 = vmatprep.subr.bf16.mxu0 0
      %5468 = vmatpush1.bf16.msra.mxu0 %v5449
      %5469 = vmatprep.subr.bf16.mxu0 0
      %5470 = vmatpush2.bf16.msra.mxu0 0
      %5471 = vmatprep.subr.bf16.mxu0 0
      %5472 = vmatpush2.bf16.msra.mxu0 0
      %5473 = vmatprep.subr.bf16.mxu0 0
      %5474 = vmatpush2.bf16.msra.mxu0 0
      %5475 = vmatprep.subr.bf16.mxu0 0
      %5476 = vmatpush2.bf16.msra.mxu0 0
      %5477 = vmatprep.subr.bf16.mxu0 0
      %5478 = vmatpush2.bf16.msra.mxu0 0
      %5479 = vmatprep.subr.bf16.mxu0 0
      %5480 = vmatpush2.bf16.msra.mxu0 0
      %5481 = vmatprep.subr.bf16.mxu0 0
      %5482 = vmatpush2.bf16.msra.mxu0 0
      %5483 = vmatprep.subr.bf16.mxu0 0
      %5484 = vmatpush2.bf16.msra.mxu0 0
      %5485 = vmatprep.mubr.bf16.mxu0 0
      %5486 = vmatmul.mubr.bf16.gmra.mxu0 %v5451
      %v5487 = vpop.f32.mrf.mxu0
      %v5488 = vadd.f32 0.0, %v5487
      %v5489 = vpop.f32.mrf.mxu0
      %v5490 = vpop.f32.mrf.mxu0
      %v5491 = vadd.f32 0.0, %v5490
      %v5492 = vpop.f32.mrf.mxu0
      %5493 = vdwg.mxu0
      %v5494 = vadd.f32 %v5374, %v5488
      %v5495 = vadd.f32 %v5377, %v5491
      %v5496 = vmul.f32 %v5038, %v382
      %v5497 = vmul.f32 %v5042, %v382
      %v5498 = vpack.c.bf16 %v5497, %v5496
      %5499 = vmatprep.subr.bf16.mxu0 0
      %5500 = vmatpush1.bf16.xpose.msra.mxu0 0
      %5501 = vmatprep.subr.bf16.mxu0 0
      %5502 = vmatpush1.bf16.xpose.msra.mxu0 0
      %5503 = vmatprep.subr.bf16.mxu0 0
      %5504 = vmatpush1.bf16.xpose.msra.mxu0 0
      %5505 = vmatprep.subr.bf16.mxu0 0
      %5506 = vmatpush1.bf16.xpose.msra.mxu0 0
      %5507 = vmatprep.subr.bf16.mxu0 0
      %5508 = vmatpush1.bf16.xpose.msra.mxu0 0
      %5509 = vmatprep.subr.bf16.mxu0 0
      %5510 = vmatpush1.bf16.xpose.msra.mxu0 0
      %5511 = vmatprep.subr.bf16.mxu0 0
      %5512 = vmatpush1.bf16.xpose.msra.mxu0 0
      %5513 = vmatprep.subr.bf16.mxu0 0
      %5514 = vmatpush1.bf16.xpose.msra.mxu0 %v5151
      %5515 = vmatprep.subr.bf16.mxu0 0
      %5516 = vmatpush2.bf16.xpose.msra.mxu0 0
      %5517 = vmatprep.subr.bf16.mxu0 0
      %5518 = vmatpush2.bf16.xpose.msra.mxu0 0
      %5519 = vmatprep.subr.bf16.mxu0 0
      %5520 = vmatpush2.bf16.xpose.msra.mxu0 0
      %5521 = vmatprep.subr.bf16.mxu0 0
      %5522 = vmatpush2.bf16.xpose.msra.mxu0 0
      %5523 = vmatprep.subr.bf16.mxu0 0
      %5524 = vmatpush2.bf16.xpose.msra.mxu0 0
      %5525 = vmatprep.subr.bf16.mxu0 0
      %5526 = vmatpush2.bf16.xpose.msra.mxu0 0
      %5527 = vmatprep.subr.bf16.mxu0 0
      %5528 = vmatpush2.bf16.xpose.msra.mxu0 0
      %5529 = vmatprep.subr.bf16.mxu0 0
      %5530 = vmatpush2.bf16.xpose.msra.mxu0 0
      %5531 = vmatprep.mubr.bf16.mxu0 0
      %5532 = vmatmul.mubr.bf16.gmra.mxu0 %v5498
      %v5533 = vpop.f32.mrf.mxu0
      %v5534 = vadd.f32 0.0, %v5533
      %v5535 = vpop.f32.mrf.mxu0
      %v5536 = vpop.f32.mrf.mxu0
      %v5537 = vadd.f32 0.0, %v5536
      %v5538 = vpop.f32.mrf.mxu0
      %5539 = vdwg.mxu0
      %v5540 = vsel %vm465, %v5534, -inf
      %5541 = vmax.xlane.f32.xlu0 %v5540
      %v5542 = vpop.xlane.xlu0 %5541
      %v5543 = vsel %vm465, %v5537, -inf
      %5544 = vmax.xlane.f32.xlu0 %v5543
      %v5545 = vpop.xlane.xlu0 %5544
      %v5546 = vsub.f32 %v5534, %v5542
      %v5547 = vsub.f32 %v5537, %v5545
      %v5548 = vmul.f32 %v5546, 1.442695
      %v5549 = vpow.pop %v5548
      %v5550 = vmul.f32 %v5547, 1.442695
      %v5551 = vpow.pop %v5550
      %v5552 = vsel %vm465, %v5549, 0.0
      %5553 = vadd.xlane.f32.xlu0 %v5552
      %v5554 = vpop.xlane.xlu0 %5553
      %v5555 = vsel %vm465, %v5551, 0.0
      %5556 = vadd.xlane.f32.xlu0 %v5555
      %v5557 = vpop.xlane.xlu0 %5556
      %v5558 = vrcp.pop %v5554
      %v5559 = vrcp.pop %v5557
      %v5560 = vmul.f32 %v5549, %v5558
      %v5561 = vmul.f32 %v5551, %v5559
      %v5562 = vpack.c.bf16 %v5561, %v5560
      %v5563 = vmul.f32 %v5145, %v382
      %v5564 = vmul.f32 %v5148, %v382
      %v5565 = vpack.c.bf16 %v5564, %v5563
      %v5567 = vsel %vm465, %v5562, 0
      %5569 = vmatprep.subr.bf16.mxu0 0
      %5570 = vmatpush1.bf16.msra.mxu0 0
      %5571 = vmatprep.subr.bf16.mxu0 0
      %5572 = vmatpush1.bf16.msra.mxu0 0
      %5573 = vmatprep.subr.bf16.mxu0 0
      %5574 = vmatpush1.bf16.msra.mxu0 0
      %5575 = vmatprep.subr.bf16.mxu0 0
      %5576 = vmatpush1.bf16.msra.mxu0 0
      %5577 = vmatprep.subr.bf16.mxu0 0
      %5578 = vmatpush1.bf16.msra.mxu0 0
      %5579 = vmatprep.subr.bf16.mxu0 0
      %5580 = vmatpush1.bf16.msra.mxu0 0
      %5581 = vmatprep.subr.bf16.mxu0 0
      %5582 = vmatpush1.bf16.msra.mxu0 0
      %5583 = vmatprep.subr.bf16.mxu0 0
      %5584 = vmatpush1.bf16.msra.mxu0 %v5565
      %5585 = vmatprep.subr.bf16.mxu0 0
      %5586 = vmatpush2.bf16.msra.mxu0 0
      %5587 = vmatprep.subr.bf16.mxu0 0
      %5588 = vmatpush2.bf16.msra.mxu0 0
      %5589 = vmatprep.subr.bf16.mxu0 0
      %5590 = vmatpush2.bf16.msra.mxu0 0
      %5591 = vmatprep.subr.bf16.mxu0 0
      %5592 = vmatpush2.bf16.msra.mxu0 0
      %5593 = vmatprep.subr.bf16.mxu0 0
      %5594 = vmatpush2.bf16.msra.mxu0 0
      %5595 = vmatprep.subr.bf16.mxu0 0
      %5596 = vmatpush2.bf16.msra.mxu0 0
      %5597 = vmatprep.subr.bf16.mxu0 0
      %5598 = vmatpush2.bf16.msra.mxu0 0
      %5599 = vmatprep.subr.bf16.mxu0 0
      %5600 = vmatpush2.bf16.msra.mxu0 0
      %5601 = vmatprep.mubr.bf16.mxu0 0
      %5602 = vmatmul.mubr.bf16.gmra.mxu0 %v5567
      %v5603 = vpop.f32.mrf.mxu0
      %v5604 = vadd.f32 0.0, %v5603
      %v5605 = vpop.f32.mrf.mxu0
      %v5606 = vpop.f32.mrf.mxu0
      %v5607 = vadd.f32 0.0, %v5606
      %v5608 = vpop.f32.mrf.mxu0
      %5609 = vdwg.mxu0
      %v5610 = vadd.f32 %v5494, %v5604
      %v5611 = vadd.f32 %v5495, %v5607
      %v5612 = vpack.c.bf16 %v5611, %v5610
      %v5613 = vld [vmem:[%s4895 + $0xc] sm:$0xf]
      %v5614 = vld [vmem:[%s4895 + $0x34] sm:$0xf]
      %v5615 = vld [vmem:[%s4895 + $0x5c] sm:$0xf]
      %v5616 = vld [vmem:[%s4895 + $0x84] sm:$0xf]
      %v5617 = vld [vmem:[%s4895 + $0xac] sm:$0xf]
      %v5618 = vld [vmem:[%s4895 + $0xd4] sm:$0xf]
      %v5619 = vld [vmem:[%s4895 + $0xfc] sm:$0xf]
      %v5620 = vld [vmem:[%s4895 + $0x124] sm:$0xf]
      %v5621 = vld [vmem:[%s4895 + $0x14c] sm:$0xf]
      %v5622 = vld [vmem:[%s4895 + $0x174] sm:$0xf]
      %v5623 = vld [vmem:[%s4895 + $0x19c] sm:$0xf]
      %v5624 = vld [vmem:[%s4895 + $0x1c4] sm:$0xf]
      %v5625 = vld [vmem:[%s4895 + $0x1ec] sm:$0xf]
      %v5626 = vld [vmem:[%s4895 + $0x214] sm:$0xf]
      %v5627 = vld [vmem:[%s4895 + $0x23c] sm:$0xf]
      %v5628 = vld [vmem:[%s4895 + $0x264] sm:$0xf]
      %v5645 = vunpack.c.l.b16 %v5613
      %v5646 = vunpack.c.l.b16 %v5614
      %v5647 = vunpack.c.l.b16 %v5615
      %v5648 = vunpack.c.l.b16 %v5616
      %v5649 = vunpack.c.l.b16 %v5617
      %v5650 = vunpack.c.l.b16 %v5618
      %v5651 = vunpack.c.l.b16 %v5619
      %v5652 = vunpack.c.l.b16 %v5620
      %v5653 = vunpack.c.l.b16 %v5621
      %v5654 = vunpack.c.l.b16 %v5622
      %v5655 = vunpack.c.l.b16 %v5623
      %v5656 = vunpack.c.l.b16 %v5624
      %v5657 = vunpack.c.l.b16 %v5625
      %v5658 = vunpack.c.l.b16 %v5626
      %v5659 = vunpack.c.l.b16 %v5627
      %v5660 = vunpack.c.l.b16 %v5628
      %v5661 = vpack.c.b16 %v5646, %v5645
      %v5662 = vpack.c.b16 %v5648, %v5647
      %v5663 = vpack.c.b16 %v5650, %v5649
      %v5664 = vpack.c.b16 %v5652, %v5651
      %v5665 = vpack.c.b16 %v5654, %v5653
      %v5666 = vpack.c.b16 %v5656, %v5655
      %v5667 = vpack.c.b16 %v5658, %v5657
      %v5668 = vpack.c.b16 %v5660, %v5659
      %5677 = vmatprep.subr.bf16.mxu0 0
      %5678 = vmatpush1.bf16.msra.mxu0 %v5668
      %5679 = vmatprep.subr.bf16.mxu0 0
      %5680 = vmatpush1.bf16.msra.mxu0 %v5667
      %5681 = vmatprep.subr.bf16.mxu0 0
      %5682 = vmatpush1.bf16.msra.mxu0 %v5666
      %5683 = vmatprep.subr.bf16.mxu0 0
      %5684 = vmatpush1.bf16.msra.mxu0 %v5665
      %5685 = vmatprep.subr.bf16.mxu0 0
      %5686 = vmatpush1.bf16.msra.mxu0 %v5664
      %5687 = vmatprep.subr.bf16.mxu0 0
      %5688 = vmatpush1.bf16.msra.mxu0 %v5663
      %5689 = vmatprep.subr.bf16.mxu0 0
      %5690 = vmatpush1.bf16.msra.mxu0 %v5662
      %5691 = vmatprep.subr.bf16.mxu0 0
      %5692 = vmatpush1.bf16.msra.mxu0 %v5661
      %5693 = vmatprep.subr.bf16.mxu0 0
      %5694 = vmatpush2.bf16.msra.mxu0 0
      %5695 = vmatprep.subr.bf16.mxu0 0
      %5696 = vmatpush2.bf16.msra.mxu0 0
      %5697 = vmatprep.subr.bf16.mxu0 0
      %5698 = vmatpush2.bf16.msra.mxu0 0
      %5699 = vmatprep.subr.bf16.mxu0 0
      %5700 = vmatpush2.bf16.msra.mxu0 0
      %5701 = vmatprep.subr.bf16.mxu0 0
      %5702 = vmatpush2.bf16.msra.mxu0 0
      %5703 = vmatprep.subr.bf16.mxu0 0
      %5704 = vmatpush2.bf16.msra.mxu0 0
      %5705 = vmatprep.subr.bf16.mxu0 0
      %5706 = vmatpush2.bf16.msra.mxu0 0
      %5707 = vmatprep.subr.bf16.mxu0 0
      %5708 = vmatpush2.bf16.msra.mxu0 0
      %5709 = vmatprep.mubr.bf16.mxu0 0
      %5710 = vmatmul.mubr.bf16.gmra.mxu0 %v5612
      %v5711 = vpop.f32.mrf.mxu0
      %v5712 = vadd.f32 %v4878, %v5711
      %v5713 = vpop.f32.mrf.mxu0
      %v5714 = vpop.f32.mrf.mxu0
      %v5715 = vadd.f32 %v4878, %v5714
      %v5716 = vpop.f32.mrf.mxu0
      %5717 = vdwg.mxu0
      %v5718 = vadd.f32 %v4873, %v5712
      %v5719 = vadd.f32 %v4874, %v5715
      %5720 = vadd.xlane.f32.xlu0 %v5718
      %v5721 = vpop.xlane.xlu0 %5720
      %5722 = vadd.xlane.f32.xlu0 %v5719
      %v5723 = vpop.xlane.xlu0 %5722
      %v5724 = vmul.f32 %v5721, 0.015625
      %v5725 = vmul.f32 %v5723, 0.015625
      %v5726 = vsub.f32 %v5718, %v5724
      %v5727 = vsub.f32 %v5719, %v5725
      %v5728 = vmul.f32 %v5726, %v5726
      %v5729 = vmul.f32 %v5727, %v5727
      %v5730 = vmul.f32 %v5728, %v384
      %v5731 = vmul.f32 %v5729, %v384
      %5732 = vadd.xlane.f32.xlu0 %v5730
      %v5733 = vpop.xlane.xlu0 %5732
      %5734 = vadd.xlane.f32.xlu0 %v5731
      %v5735 = vpop.xlane.xlu0 %5734
      %v5736 = vmul.f32 %v5733, 0.015625
      %v5737 = vmul.f32 %v5735, 0.015625
      %v5738 = vadd.f32 %v5736, 1e-05
      %v5739 = vadd.f32 %v5737, 1e-05
      %v5740 = vrsqrt.pop %v5738
      %v5741 = vrsqrt.pop %v5739
      %v5742 = vmul.f32 %v5726, %v5740
      %v5743 = vmul.f32 %v5727, %v5741
      %v5744 = vmul.f32 %v5742, %v4879
      %v5745 = vmul.f32 %v5743, %v4879
      %v5746 = vadd.f32 %v5744, %v4880
      %v5747 = vadd.f32 %v5745, %v4880
      %v5748 = vadd.f32 %v5746, %v2844
      %v5749 = vadd.f32 %v5747, %v2845
      %v5750 = vpack.c.bf16 %v5749, %v5748
      %v5751 = vld [vmem:[%s4895 + $0x10] sm:$0xf]
      %v5752 = vld [vmem:[%s4895 + $0x38] sm:$0xf]
      %v5753 = vld [vmem:[%s4895 + $0x60] sm:$0xf]
      %v5754 = vld [vmem:[%s4895 + $0x88] sm:$0xf]
      %v5755 = vld [vmem:[%s4895 + $0xb0] sm:$0xf]
      %v5756 = vld [vmem:[%s4895 + $0xd8] sm:$0xf]
      %v5757 = vld [vmem:[%s4895 + $0x100] sm:$0xf]
      %v5758 = vld [vmem:[%s4895 + $0x128] sm:$0xf]
      %v5759 = vld [vmem:[%s4895 + $0x150] sm:$0xf]
      %v5760 = vld [vmem:[%s4895 + $0x178] sm:$0xf]
      %v5761 = vld [vmem:[%s4895 + $0x1a0] sm:$0xf]
      %v5762 = vld [vmem:[%s4895 + $0x1c8] sm:$0xf]
      %v5763 = vld [vmem:[%s4895 + $0x1f0] sm:$0xf]
      %v5764 = vld [vmem:[%s4895 + $0x218] sm:$0xf]
      %v5765 = vld [vmem:[%s4895 + $0x240] sm:$0xf]
      %v5766 = vld [vmem:[%s4895 + $0x268] sm:$0xf]
      %v5783 = vunpack.c.l.b16 %v5751
      %v5784 = vunpack.c.l.b16 %v5752
      %v5785 = vunpack.c.l.b16 %v5753
      %v5786 = vunpack.c.l.b16 %v5754
      %v5787 = vunpack.c.l.b16 %v5755
      %v5788 = vunpack.c.l.b16 %v5756
      %v5789 = vunpack.c.l.b16 %v5757
      %v5790 = vunpack.c.l.b16 %v5758
      %v5791 = vunpack.c.l.b16 %v5759
      %v5792 = vunpack.c.l.b16 %v5760
      %v5793 = vunpack.c.l.b16 %v5761
      %v5794 = vunpack.c.l.b16 %v5762
      %v5795 = vunpack.c.l.b16 %v5763
      %v5796 = vunpack.c.l.b16 %v5764
      %v5797 = vunpack.c.l.b16 %v5765
      %v5798 = vunpack.c.l.b16 %v5766
      %v5799 = vpack.c.b16 %v5784, %v5783
      %v5800 = vpack.c.b16 %v5786, %v5785
      %v5801 = vpack.c.b16 %v5788, %v5787
      %v5802 = vpack.c.b16 %v5790, %v5789
      %v5803 = vpack.c.b16 %v5792, %v5791
      %v5804 = vpack.c.b16 %v5794, %v5793
      %v5805 = vpack.c.b16 %v5796, %v5795
      %v5806 = vpack.c.b16 %v5798, %v5797
      %5815 = vmatprep.subr.bf16.mxu0 0
      %5816 = vmatpush1.bf16.msra.mxu0 %v5806
      %5817 = vmatprep.subr.bf16.mxu0 0
      %5818 = vmatpush1.bf16.msra.mxu0 %v5805
      %5819 = vmatprep.subr.bf16.mxu0 0
      %5820 = vmatpush1.bf16.msra.mxu0 %v5804
      %5821 = vmatprep.subr.bf16.mxu0 0
      %5822 = vmatpush1.bf16.msra.mxu0 %v5803
      %5823 = vmatprep.subr.bf16.mxu0 0
      %5824 = vmatpush1.bf16.msra.mxu0 %v5802
      %5825 = vmatprep.subr.bf16.mxu0 0
      %5826 = vmatpush1.bf16.msra.mxu0 %v5801
      %5827 = vmatprep.subr.bf16.mxu0 0
      %5828 = vmatpush1.bf16.msra.mxu0 %v5800
      %5829 = vmatprep.subr.bf16.mxu0 0
      %5830 = vmatpush1.bf16.msra.mxu0 %v5799
      %5831 = vmatprep.subr.bf16.mxu0 0
      %5832 = vmatpush2.bf16.msra.mxu0 0
      %5833 = vmatprep.subr.bf16.mxu0 0
      %5834 = vmatpush2.bf16.msra.mxu0 0
      %5835 = vmatprep.subr.bf16.mxu0 0
      %5836 = vmatpush2.bf16.msra.mxu0 0
      %5837 = vmatprep.subr.bf16.mxu0 0
      %5838 = vmatpush2.bf16.msra.mxu0 0
      %5839 = vmatprep.subr.bf16.mxu0 0
      %5840 = vmatpush2.bf16.msra.mxu0 0
      %5841 = vmatprep.subr.bf16.mxu0 0
      %5842 = vmatpush2.bf16.msra.mxu0 0
      %5843 = vmatprep.subr.bf16.mxu0 0
      %5844 = vmatpush2.bf16.msra.mxu0 0
      %5845 = vmatprep.subr.bf16.mxu0 0
      %5846 = vmatpush2.bf16.msra.mxu0 0
      %5847 = vmatprep.mubr.bf16.mxu0 0
      %5848 = vmatmul.mubr.bf16.gmra.mxu0 %v5750
      %v5849 = vpop.f32.mrf.mxu0
      %v5850 = vadd.f32 %v4881, %v5849
      %v5851 = vpop.f32.mrf.mxu0
      %v5852 = vpop.f32.mrf.mxu0
      %v5853 = vadd.f32 %v4881, %v5852
      %v5854 = vpop.f32.mrf.mxu0
      %5855 = vdwg.mxu0
      %v5856 = vld [vmem:[%s4895 + $0x14] sm:$0xf]
      %v5857 = vld [vmem:[%s4895 + $0x3c] sm:$0xf]
      %v5858 = vld [vmem:[%s4895 + $0x64] sm:$0xf]
      %v5859 = vld [vmem:[%s4895 + $0x8c] sm:$0xf]
      %v5860 = vld [vmem:[%s4895 + $0xb4] sm:$0xf]
      %v5861 = vld [vmem:[%s4895 + $0xdc] sm:$0xf]
      %v5862 = vld [vmem:[%s4895 + $0x104] sm:$0xf]
      %v5863 = vld [vmem:[%s4895 + $0x12c] sm:$0xf]
      %v5864 = vld [vmem:[%s4895 + $0x154] sm:$0xf]
      %v5865 = vld [vmem:[%s4895 + $0x17c] sm:$0xf]
      %v5866 = vld [vmem:[%s4895 + $0x1a4] sm:$0xf]
      %v5867 = vld [vmem:[%s4895 + $0x1cc] sm:$0xf]
      %v5868 = vld [vmem:[%s4895 + $0x1f4] sm:$0xf]
      %v5869 = vld [vmem:[%s4895 + $0x21c] sm:$0xf]
      %v5870 = vld [vmem:[%s4895 + $0x244] sm:$0xf]
      %v5871 = vld [vmem:[%s4895 + $0x26c] sm:$0xf]
      %v5888 = vunpack.c.l.b16 %v5856
      %v5889 = vunpack.c.l.b16 %v5857
      %v5890 = vunpack.c.l.b16 %v5858
      %v5891 = vunpack.c.l.b16 %v5859
      %v5892 = vunpack.c.l.b16 %v5860
      %v5893 = vunpack.c.l.b16 %v5861
      %v5894 = vunpack.c.l.b16 %v5862
      %v5895 = vunpack.c.l.b16 %v5863
      %v5896 = vunpack.c.l.b16 %v5864
      %v5897 = vunpack.c.l.b16 %v5865
      %v5898 = vunpack.c.l.b16 %v5866
      %v5899 = vunpack.c.l.b16 %v5867
      %v5900 = vunpack.c.l.b16 %v5868
      %v5901 = vunpack.c.l.b16 %v5869
      %v5902 = vunpack.c.l.b16 %v5870
      %v5903 = vunpack.c.l.b16 %v5871
      %v5904 = vpack.c.b16 %v5889, %v5888
      %v5905 = vpack.c.b16 %v5891, %v5890
      %v5906 = vpack.c.b16 %v5893, %v5892
      %v5907 = vpack.c.b16 %v5895, %v5894
      %v5908 = vpack.c.b16 %v5897, %v5896
      %v5909 = vpack.c.b16 %v5899, %v5898
      %v5910 = vpack.c.b16 %v5901, %v5900
      %v5911 = vpack.c.b16 %v5903, %v5902
      %5920 = vmatprep.subr.bf16.mxu0 0
      %5921 = vmatpush1.bf16.msra.mxu0 %v5911
      %5922 = vmatprep.subr.bf16.mxu0 0
      %5923 = vmatpush1.bf16.msra.mxu0 %v5910
      %5924 = vmatprep.subr.bf16.mxu0 0
      %5925 = vmatpush1.bf16.msra.mxu0 %v5909
      %5926 = vmatprep.subr.bf16.mxu0 0
      %5927 = vmatpush1.bf16.msra.mxu0 %v5908
      %5928 = vmatprep.subr.bf16.mxu0 0
      %5929 = vmatpush1.bf16.msra.mxu0 %v5907
      %5930 = vmatprep.subr.bf16.mxu0 0
      %5931 = vmatpush1.bf16.msra.mxu0 %v5906
      %5932 = vmatprep.subr.bf16.mxu0 0
      %5933 = vmatpush1.bf16.msra.mxu0 %v5905
      %5934 = vmatprep.subr.bf16.mxu0 0
      %5935 = vmatpush1.bf16.msra.mxu0 %v5904
      %5936 = vmatprep.subr.bf16.mxu0 0
      %5937 = vmatpush2.bf16.msra.mxu0 0
      %5938 = vmatprep.subr.bf16.mxu0 0
      %5939 = vmatpush2.bf16.msra.mxu0 0
      %5940 = vmatprep.subr.bf16.mxu0 0
      %5941 = vmatpush2.bf16.msra.mxu0 0
      %5942 = vmatprep.subr.bf16.mxu0 0
      %5943 = vmatpush2.bf16.msra.mxu0 0
      %5944 = vmatprep.subr.bf16.mxu0 0
      %5945 = vmatpush2.bf16.msra.mxu0 0
      %5946 = vmatprep.subr.bf16.mxu0 0
      %5947 = vmatpush2.bf16.msra.mxu0 0
      %5948 = vmatprep.subr.bf16.mxu0 0
      %5949 = vmatpush2.bf16.msra.mxu0 0
      %5950 = vmatprep.subr.bf16.mxu0 0
      %5951 = vmatpush2.bf16.msra.mxu0 0
      %5952 = vmatprep.mubr.bf16.mxu0 0
      %5953 = vmatmul.mubr.bf16.gmra.mxu0 %v2843
      %v5954 = vpop.f32.mrf.mxu0
      %v5955 = vadd.f32 %v4882, %v5954
      %v5956 = vpop.f32.mrf.mxu0
      %v5957 = vpop.f32.mrf.mxu0
      %v5958 = vadd.f32 %v4882, %v5957
      %v5959 = vpop.f32.mrf.mxu0
      %5960 = vdwg.mxu0
      %v5961 = vld [vmem:[%s4895 + $0x18] sm:$0xf]
      %v5962 = vld [vmem:[%s4895 + $0x40] sm:$0xf]
      %v5963 = vld [vmem:[%s4895 + $0x68] sm:$0xf]
      %v5964 = vld [vmem:[%s4895 + $0x90] sm:$0xf]
      %v5965 = vld [vmem:[%s4895 + $0xb8] sm:$0xf]
      %v5966 = vld [vmem:[%s4895 + $0xe0] sm:$0xf]
      %v5967 = vld [vmem:[%s4895 + $0x108] sm:$0xf]
      %v5968 = vld [vmem:[%s4895 + $0x130] sm:$0xf]
      %v5969 = vld [vmem:[%s4895 + $0x158] sm:$0xf]
      %v5970 = vld [vmem:[%s4895 + $0x180] sm:$0xf]
      %v5971 = vld [vmem:[%s4895 + $0x1a8] sm:$0xf]
      %v5972 = vld [vmem:[%s4895 + $0x1d0] sm:$0xf]
      %v5973 = vld [vmem:[%s4895 + $0x1f8] sm:$0xf]
      %v5974 = vld [vmem:[%s4895 + $0x220] sm:$0xf]
      %v5975 = vld [vmem:[%s4895 + $0x248] sm:$0xf]
      %v5976 = vld [vmem:[%s4895 + $0x270] sm:$0xf]
      %v5993 = vunpack.c.l.b16 %v5961
      %v5994 = vunpack.c.l.b16 %v5962
      %v5995 = vunpack.c.l.b16 %v5963
      %v5996 = vunpack.c.l.b16 %v5964
      %v5997 = vunpack.c.l.b16 %v5965
      %v5998 = vunpack.c.l.b16 %v5966
      %v5999 = vunpack.c.l.b16 %v5967
      %v6000 = vunpack.c.l.b16 %v5968
      %v6001 = vunpack.c.l.b16 %v5969
      %v6002 = vunpack.c.l.b16 %v5970
      %v6003 = vunpack.c.l.b16 %v5971
      %v6004 = vunpack.c.l.b16 %v5972
      %v6005 = vunpack.c.l.b16 %v5973
      %v6006 = vunpack.c.l.b16 %v5974
      %v6007 = vunpack.c.l.b16 %v5975
      %v6008 = vunpack.c.l.b16 %v5976
      %v6009 = vpack.c.b16 %v5994, %v5993
      %v6010 = vpack.c.b16 %v5996, %v5995
      %v6011 = vpack.c.b16 %v5998, %v5997
      %v6012 = vpack.c.b16 %v6000, %v5999
      %v6013 = vpack.c.b16 %v6002, %v6001
      %v6014 = vpack.c.b16 %v6004, %v6003
      %v6015 = vpack.c.b16 %v6006, %v6005
      %v6016 = vpack.c.b16 %v6008, %v6007
      %6025 = vmatprep.subr.bf16.mxu0 0
      %6026 = vmatpush1.bf16.msra.mxu0 %v6016
      %6027 = vmatprep.subr.bf16.mxu0 0
      %6028 = vmatpush1.bf16.msra.mxu0 %v6015
      %6029 = vmatprep.subr.bf16.mxu0 0
      %6030 = vmatpush1.bf16.msra.mxu0 %v6014
      %6031 = vmatprep.subr.bf16.mxu0 0
      %6032 = vmatpush1.bf16.msra.mxu0 %v6013
      %6033 = vmatprep.subr.bf16.mxu0 0
      %6034 = vmatpush1.bf16.msra.mxu0 %v6012
      %6035 = vmatprep.subr.bf16.mxu0 0
      %6036 = vmatpush1.bf16.msra.mxu0 %v6011
      %6037 = vmatprep.subr.bf16.mxu0 0
      %6038 = vmatpush1.bf16.msra.mxu0 %v6010
      %6039 = vmatprep.subr.bf16.mxu0 0
      %6040 = vmatpush1.bf16.msra.mxu0 %v6009
      %6041 = vmatprep.subr.bf16.mxu0 0
      %6042 = vmatpush2.bf16.msra.mxu0 0
      %6043 = vmatprep.subr.bf16.mxu0 0
      %6044 = vmatpush2.bf16.msra.mxu0 0
      %6045 = vmatprep.subr.bf16.mxu0 0
      %6046 = vmatpush2.bf16.msra.mxu0 0
      %6047 = vmatprep.subr.bf16.mxu0 0
      %6048 = vmatpush2.bf16.msra.mxu0 0
      %6049 = vmatprep.subr.bf16.mxu0 0
      %6050 = vmatpush2.bf16.msra.mxu0 0
      %6051 = vmatprep.subr.bf16.mxu0 0
      %6052 = vmatpush2.bf16.msra.mxu0 0
      %6053 = vmatprep.subr.bf16.mxu0 0
      %6054 = vmatpush2.bf16.msra.mxu0 0
      %6055 = vmatprep.subr.bf16.mxu0 0
      %6056 = vmatpush2.bf16.msra.mxu0 0
      %6057 = vmatprep.mubr.bf16.mxu0 0
      %6058 = vmatmul.mubr.bf16.gmra.mxu0 %v2840
      %v6059 = vpop.f32.mrf.mxu0
      %v6060 = vadd.f32 %v4883, %v6059
      %v6061 = vpop.f32.mrf.mxu0
      %v6062 = vpop.f32.mrf.mxu0
      %v6063 = vadd.f32 %v4883, %v6062
      %v6064 = vpop.f32.mrf.mxu0
      %6065 = vdwg.mxu0
      %v6066 = vpack.c.bf16 %v5958, %v5955
      %v6067 = vmul.f32 %v5850, %v367
      %v6068 = vmul.f32 %v5853, %v367
      %v6069 = vpack.c.bf16 %v6068, %v6067
      %6070 = vmatprep.subr.bf16.mxu0 0
      %6071 = vmatpush1.bf16.xpose.msra.mxu0 0
      %6072 = vmatprep.subr.bf16.mxu0 0
      %6073 = vmatpush1.bf16.xpose.msra.mxu0 0
      %6074 = vmatprep.subr.bf16.mxu0 0
      %6075 = vmatpush1.bf16.xpose.msra.mxu0 0
      %6076 = vmatprep.subr.bf16.mxu0 0
      %6077 = vmatpush1.bf16.xpose.msra.mxu0 0
      %6078 = vmatprep.subr.bf16.mxu0 0
      %6079 = vmatpush1.bf16.xpose.msra.mxu0 0
      %6080 = vmatprep.subr.bf16.mxu0 0
      %6081 = vmatpush1.bf16.xpose.msra.mxu0 0
      %6082 = vmatprep.subr.bf16.mxu0 0
      %6083 = vmatpush1.bf16.xpose.msra.mxu0 0
      %6084 = vmatprep.subr.bf16.mxu0 0
      %6085 = vmatpush1.bf16.xpose.msra.mxu0 %v6066
      %6086 = vmatprep.subr.bf16.mxu0 0
      %6087 = vmatpush2.bf16.xpose.msra.mxu0 0
      %6088 = vmatprep.subr.bf16.mxu0 0
      %6089 = vmatpush2.bf16.xpose.msra.mxu0 0
      %6090 = vmatprep.subr.bf16.mxu0 0
      %6091 = vmatpush2.bf16.xpose.msra.mxu0 0
      %6092 = vmatprep.subr.bf16.mxu0 0
      %6093 = vmatpush2.bf16.xpose.msra.mxu0 0
      %6094 = vmatprep.subr.bf16.mxu0 0
      %6095 = vmatpush2.bf16.xpose.msra.mxu0 0
      %6096 = vmatprep.subr.bf16.mxu0 0
      %6097 = vmatpush2.bf16.xpose.msra.mxu0 0
      %6098 = vmatprep.subr.bf16.mxu0 0
      %6099 = vmatpush2.bf16.xpose.msra.mxu0 0
      %6100 = vmatprep.subr.bf16.mxu0 0
      %6101 = vmatpush2.bf16.xpose.msra.mxu0 0
      %6102 = vmatprep.mubr.bf16.mxu0 0
      %6103 = vmatmul.mubr.bf16.gmra.mxu0 %v6069
      %v6104 = vpop.f32.mrf.mxu0
      %v6105 = vadd.f32 0.0, %v6104
      %v6106 = vpop.f32.mrf.mxu0
      %v6107 = vpop.f32.mrf.mxu0
      %v6108 = vadd.f32 0.0, %v6107
      %v6109 = vpop.f32.mrf.mxu0
      %6110 = vdwg.mxu0
      %v6111 = vsel %vm465, %v6105, -inf
      %6112 = vmax.xlane.f32.xlu0 %v6111
      %v6113 = vpop.xlane.xlu0 %6112
      %v6114 = vsel %vm465, %v6108, -inf
      %6115 = vmax.xlane.f32.xlu0 %v6114
      %v6116 = vpop.xlane.xlu0 %6115
      %v6117 = vsub.f32 %v6105, %v6113
      %v6118 = vsub.f32 %v6108, %v6116
      %v6119 = vmul.f32 %v6117, 1.442695
      %v6120 = vpow.pop %v6119
      %v6121 = vmul.f32 %v6118, 1.442695
      %v6122 = vpow.pop %v6121
      %v6123 = vsel %vm465, %v6120, 0.0
      %6124 = vadd.xlane.f32.xlu0 %v6123
      %v6125 = vpop.xlane.xlu0 %6124
      %v6126 = vsel %vm465, %v6122, 0.0
      %6127 = vadd.xlane.f32.xlu0 %v6126
      %v6128 = vpop.xlane.xlu0 %6127
      %v6129 = vrcp.pop %v6125
      %v6130 = vrcp.pop %v6128
      %v6131 = vmul.f32 %v6120, %v6129
      %v6132 = vmul.f32 %v6122, %v6130
      %v6133 = vpack.c.bf16 %v6132, %v6131
      %v6134 = vmul.f32 %v6060, %v367
      %v6135 = vmul.f32 %v6063, %v367
      %v6136 = vpack.c.bf16 %v6135, %v6134
      %v6137 = vmul.f32 %v5850, %v372
      %v6138 = vmul.f32 %v5853, %v372
      %v6139 = vpack.c.bf16 %v6138, %v6137
      %6140 = vmatprep.subr.bf16.mxu0 0
      %6141 = vmatpush1.bf16.xpose.msra.mxu0 0
      %6142 = vmatprep.subr.bf16.mxu0 0
      %6143 = vmatpush1.bf16.xpose.msra.mxu0 0
      %6144 = vmatprep.subr.bf16.mxu0 0
      %6145 = vmatpush1.bf16.xpose.msra.mxu0 0
      %6146 = vmatprep.subr.bf16.mxu0 0
      %6147 = vmatpush1.bf16.xpose.msra.mxu0 0
      %6148 = vmatprep.subr.bf16.mxu0 0
      %6149 = vmatpush1.bf16.xpose.msra.mxu0 0
      %6150 = vmatprep.subr.bf16.mxu0 0
      %6151 = vmatpush1.bf16.xpose.msra.mxu0 0
      %6152 = vmatprep.subr.bf16.mxu0 0
      %6153 = vmatpush1.bf16.xpose.msra.mxu0 0
      %6154 = vmatprep.subr.bf16.mxu0 0
      %6155 = vmatpush1.bf16.xpose.msra.mxu0 %v6066
      %6156 = vmatprep.subr.bf16.mxu0 0
      %6157 = vmatpush2.bf16.xpose.msra.mxu0 0
      %6158 = vmatprep.subr.bf16.mxu0 0
      %6159 = vmatpush2.bf16.xpose.msra.mxu0 0
      %6160 = vmatprep.subr.bf16.mxu0 0
      %6161 = vmatpush2.bf16.xpose.msra.mxu0 0
      %6162 = vmatprep.subr.bf16.mxu0 0
      %6163 = vmatpush2.bf16.xpose.msra.mxu0 0
      %6164 = vmatprep.subr.bf16.mxu0 0
      %6165 = vmatpush2.bf16.xpose.msra.mxu0 0
      %6166 = vmatprep.subr.bf16.mxu0 0
      %6167 = vmatpush2.bf16.xpose.msra.mxu0 0
      %6168 = vmatprep.subr.bf16.mxu0 0
      %6169 = vmatpush2.bf16.xpose.msra.mxu0 0
      %6170 = vmatprep.subr.bf16.mxu0 0
      %6171 = vmatpush2.bf16.xpose.msra.mxu0 0
      %6172 = vmatprep.mubr.bf16.mxu0 0
      %6173 = vmatmul.mubr.bf16.gmra.mxu0 %v6139
      %v6174 = vpop.f32.mrf.mxu0
      %v6175 = vadd.f32 0.0, %v6174
      %v6176 = vpop.f32.mrf.mxu0
      %v6177 = vpop.f32.mrf.mxu0
      %v6178 = vadd.f32 0.0, %v6177
      %v6179 = vpop.f32.mrf.mxu0
      %6180 = vdwg.mxu0
      %v6181 = vsel %vm465, %v6175, -inf
      %6182 = vmax.xlane.f32.xlu0 %v6181
      %v6183 = vpop.xlane.xlu0 %6182
      %v6184 = vsel %vm465, %v6178, -inf
      %6185 = vmax.xlane.f32.xlu0 %v6184
      %v6186 = vpop.xlane.xlu0 %6185
      %v6187 = vsub.f32 %v6175, %v6183
      %v6188 = vsub.f32 %v6178, %v6186
      %v6189 = vmul.f32 %v6187, 1.442695
      %v6190 = vpow.pop %v6189
      %v6191 = vmul.f32 %v6188, 1.442695
      %v6192 = vpow.pop %v6191
      %v6193 = vsel %vm465, %v6190, 0.0
      %6194 = vadd.xlane.f32.xlu0 %v6193
      %v6195 = vpop.xlane.xlu0 %6194
      %v6196 = vsel %vm465, %v6192, 0.0
      %6197 = vadd.xlane.f32.xlu0 %v6196
      %v6198 = vpop.xlane.xlu0 %6197
      %v6199 = vrcp.pop %v6195
      %v6200 = vrcp.pop %v6198
      %v6201 = vmul.f32 %v6190, %v6199
      %v6202 = vmul.f32 %v6192, %v6200
      %v6203 = vpack.c.bf16 %v6202, %v6201
      %v6204 = vmul.f32 %v6060, %v372
      %v6205 = vmul.f32 %v6063, %v372
      %v6206 = vpack.c.bf16 %v6205, %v6204
      %v6208 = vsel %vm465, %v6203, 0
      %6210 = vmatprep.subr.bf16.mxu0 0
      %6211 = vmatpush1.bf16.msra.mxu0 0
      %6212 = vmatprep.subr.bf16.mxu0 0
      %6213 = vmatpush1.bf16.msra.mxu0 0
      %6214 = vmatprep.subr.bf16.mxu0 0
      %6215 = vmatpush1.bf16.msra.mxu0 0
      %6216 = vmatprep.subr.bf16.mxu0 0
      %6217 = vmatpush1.bf16.msra.mxu0 0
      %6218 = vmatprep.subr.bf16.mxu0 0
      %6219 = vmatpush1.bf16.msra.mxu0 0
      %6220 = vmatprep.subr.bf16.mxu0 0
      %6221 = vmatpush1.bf16.msra.mxu0 0
      %6222 = vmatprep.subr.bf16.mxu0 0
      %6223 = vmatpush1.bf16.msra.mxu0 0
      %6224 = vmatprep.subr.bf16.mxu0 0
      %6225 = vmatpush1.bf16.msra.mxu0 %v6206
      %6226 = vmatprep.subr.bf16.mxu0 0
      %6227 = vmatpush2.bf16.msra.mxu0 0
      %6228 = vmatprep.subr.bf16.mxu0 0
      %6229 = vmatpush2.bf16.msra.mxu0 0
      %6230 = vmatprep.subr.bf16.mxu0 0
      %6231 = vmatpush2.bf16.msra.mxu0 0
      %6232 = vmatprep.subr.bf16.mxu0 0
      %6233 = vmatpush2.bf16.msra.mxu0 0
      %6234 = vmatprep.subr.bf16.mxu0 0
      %6235 = vmatpush2.bf16.msra.mxu0 0
      %6236 = vmatprep.subr.bf16.mxu0 0
      %6237 = vmatpush2.bf16.msra.mxu0 0
      %6238 = vmatprep.subr.bf16.mxu0 0
      %6239 = vmatpush2.bf16.msra.mxu0 0
      %6240 = vmatprep.subr.bf16.mxu0 0
      %6241 = vmatpush2.bf16.msra.mxu0 0
      %6242 = vmatprep.mubr.bf16.mxu0 0
      %6243 = vmatmul.mubr.bf16.gmra.mxu0 %v6208
      %v6244 = vpop.f32.mrf.mxu0
      %v6245 = vadd.f32 0.0, %v6244
      %v6246 = vpop.f32.mrf.mxu0
      %v6247 = vpop.f32.mrf.mxu0
      %v6248 = vadd.f32 0.0, %v6247
      %v6249 = vpop.f32.mrf.mxu0
      %6250 = vdwg.mxu0
      %v6252 = vsel %vm465, %v6133, 0
      %6254 = vmatprep.subr.bf16.mxu0 0
      %6255 = vmatpush1.bf16.msra.mxu0 0
      %6256 = vmatprep.subr.bf16.mxu0 0
      %6257 = vmatpush1.bf16.msra.mxu0 0
      %6258 = vmatprep.subr.bf16.mxu0 0
      %6259 = vmatpush1.bf16.msra.mxu0 0
      %6260 = vmatprep.subr.bf16.mxu0 0
      %6261 = vmatpush1.bf16.msra.mxu0 0
      %6262 = vmatprep.subr.bf16.mxu0 0
      %6263 = vmatpush1.bf16.msra.mxu0 0
      %6264 = vmatprep.subr.bf16.mxu0 0
      %6265 = vmatpush1.bf16.msra.mxu0 0
      %6266 = vmatprep.subr.bf16.mxu0 0
      %6267 = vmatpush1.bf16.msra.mxu0 0
      %6268 = vmatprep.subr.bf16.mxu0 0
      %6269 = vmatpush1.bf16.msra.mxu0 %v6136
      %6270 = vmatprep.subr.bf16.mxu0 0
      %6271 = vmatpush2.bf16.msra.mxu0 0
      %6272 = vmatprep.subr.bf16.mxu0 0
      %6273 = vmatpush2.bf16.msra.mxu0 0
      %6274 = vmatprep.subr.bf16.mxu0 0
      %6275 = vmatpush2.bf16.msra.mxu0 0
      %6276 = vmatprep.subr.bf16.mxu0 0
      %6277 = vmatpush2.bf16.msra.mxu0 0
      %6278 = vmatprep.subr.bf16.mxu0 0
      %6279 = vmatpush2.bf16.msra.mxu0 0
      %6280 = vmatprep.subr.bf16.mxu0 0
      %6281 = vmatpush2.bf16.msra.mxu0 0
      %6282 = vmatprep.subr.bf16.mxu0 0
      %6283 = vmatpush2.bf16.msra.mxu0 0
      %6284 = vmatprep.subr.bf16.mxu0 0
      %6285 = vmatpush2.bf16.msra.mxu0 0
      %6286 = vmatprep.mubr.bf16.mxu0 0
      %6287 = vmatmul.mubr.bf16.gmra.mxu0 %v6252
      %v6288 = vpop.f32.mrf.mxu0
      %v6289 = vadd.f32 %v6245, %v6288
      %v6290 = vpop.f32.mrf.mxu0
      %v6291 = vpop.f32.mrf.mxu0
      %v6292 = vadd.f32 %v6248, %v6291
      %v6293 = vpop.f32.mrf.mxu0
      %6294 = vdwg.mxu0
      %v6295 = vmul.f32 %v5850, %v377
      %v6296 = vmul.f32 %v5853, %v377
      %v6297 = vpack.c.bf16 %v6296, %v6295
      %6298 = vmatprep.subr.bf16.mxu0 0
      %6299 = vmatpush1.bf16.xpose.msra.mxu0 0
      %6300 = vmatprep.subr.bf16.mxu0 0
      %6301 = vmatpush1.bf16.xpose.msra.mxu0 0
      %6302 = vmatprep.subr.bf16.mxu0 0
      %6303 = vmatpush1.bf16.xpose.msra.mxu0 0
      %6304 = vmatprep.subr.bf16.mxu0 0
      %6305 = vmatpush1.bf16.xpose.msra.mxu0 0
      %6306 = vmatprep.subr.bf16.mxu0 0
      %6307 = vmatpush1.bf16.xpose.msra.mxu0 0
      %6308 = vmatprep.subr.bf16.mxu0 0
      %6309 = vmatpush1.bf16.xpose.msra.mxu0 0
      %6310 = vmatprep.subr.bf16.mxu0 0
      %6311 = vmatpush1.bf16.xpose.msra.mxu0 0
      %6312 = vmatprep.subr.bf16.mxu0 0
      %6313 = vmatpush1.bf16.xpose.msra.mxu0 %v6066
      %6314 = vmatprep.subr.bf16.mxu0 0
      %6315 = vmatpush2.bf16.xpose.msra.mxu0 0
      %6316 = vmatprep.subr.bf16.mxu0 0
      %6317 = vmatpush2.bf16.xpose.msra.mxu0 0
      %6318 = vmatprep.subr.bf16.mxu0 0
      %6319 = vmatpush2.bf16.xpose.msra.mxu0 0
      %6320 = vmatprep.subr.bf16.mxu0 0
      %6321 = vmatpush2.bf16.xpose.msra.mxu0 0
      %6322 = vmatprep.subr.bf16.mxu0 0
      %6323 = vmatpush2.bf16.xpose.msra.mxu0 0
      %6324 = vmatprep.subr.bf16.mxu0 0
      %6325 = vmatpush2.bf16.xpose.msra.mxu0 0
      %6326 = vmatprep.subr.bf16.mxu0 0
      %6327 = vmatpush2.bf16.xpose.msra.mxu0 0
      %6328 = vmatprep.subr.bf16.mxu0 0
      %6329 = vmatpush2.bf16.xpose.msra.mxu0 0
      %6330 = vmatprep.mubr.bf16.mxu0 0
      %6331 = vmatmul.mubr.bf16.gmra.mxu0 %v6297
      %v6332 = vpop.f32.mrf.mxu0
      %v6333 = vadd.f32 0.0, %v6332
      %v6334 = vpop.f32.mrf.mxu0
      %v6335 = vpop.f32.mrf.mxu0
      %v6336 = vadd.f32 0.0, %v6335
      %v6337 = vpop.f32.mrf.mxu0
      %6338 = vdwg.mxu0
      %v6339 = vsel %vm465, %v6333, -inf
      %6340 = vmax.xlane.f32.xlu0 %v6339
      %v6341 = vpop.xlane.xlu0 %6340
      %v6342 = vsel %vm465, %v6336, -inf
      %6343 = vmax.xlane.f32.xlu0 %v6342
      %v6344 = vpop.xlane.xlu0 %6343
      %v6345 = vsub.f32 %v6333, %v6341
      %v6346 = vsub.f32 %v6336, %v6344
      %v6347 = vmul.f32 %v6345, 1.442695
      %v6348 = vpow.pop %v6347
      %v6349 = vmul.f32 %v6346, 1.442695
      %v6350 = vpow.pop %v6349
      %v6351 = vsel %vm465, %v6348, 0.0
      %6352 = vadd.xlane.f32.xlu0 %v6351
      %v6353 = vpop.xlane.xlu0 %6352
      %v6354 = vsel %vm465, %v6350, 0.0
      %6355 = vadd.xlane.f32.xlu0 %v6354
      %v6356 = vpop.xlane.xlu0 %6355
      %v6357 = vrcp.pop %v6353
      %v6358 = vrcp.pop %v6356
      %v6359 = vmul.f32 %v6348, %v6357
      %v6360 = vmul.f32 %v6350, %v6358
      %v6361 = vpack.c.bf16 %v6360, %v6359
      %v6362 = vmul.f32 %v6060, %v377
      %v6363 = vmul.f32 %v6063, %v377
      %v6364 = vpack.c.bf16 %v6363, %v6362
      %v6366 = vsel %vm465, %v6361, 0
      %6368 = vmatprep.subr.bf16.mxu0 0
      %6369 = vmatpush1.bf16.msra.mxu0 0
      %6370 = vmatprep.subr.bf16.mxu0 0
      %6371 = vmatpush1.bf16.msra.mxu0 0
      %6372 = vmatprep.subr.bf16.mxu0 0
      %6373 = vmatpush1.bf16.msra.mxu0 0
      %6374 = vmatprep.subr.bf16.mxu0 0
      %6375 = vmatpush1.bf16.msra.mxu0 0
      %6376 = vmatprep.subr.bf16.mxu0 0
      %6377 = vmatpush1.bf16.msra.mxu0 0
      %6378 = vmatprep.subr.bf16.mxu0 0
      %6379 = vmatpush1.bf16.msra.mxu0 0
      %6380 = vmatprep.subr.bf16.mxu0 0
      %6381 = vmatpush1.bf16.msra.mxu0 0
      %6382 = vmatprep.subr.bf16.mxu0 0
      %6383 = vmatpush1.bf16.msra.mxu0 %v6364
      %6384 = vmatprep.subr.bf16.mxu0 0
      %6385 = vmatpush2.bf16.msra.mxu0 0
      %6386 = vmatprep.subr.bf16.mxu0 0
      %6387 = vmatpush2.bf16.msra.mxu0 0
      %6388 = vmatprep.subr.bf16.mxu0 0
      %6389 = vmatpush2.bf16.msra.mxu0 0
      %6390 = vmatprep.subr.bf16.mxu0 0
      %6391 = vmatpush2.bf16.msra.mxu0 0
      %6392 = vmatprep.subr.bf16.mxu0 0
      %6393 = vmatpush2.bf16.msra.mxu0 0
      %6394 = vmatprep.subr.bf16.mxu0 0
      %6395 = vmatpush2.bf16.msra.mxu0 0
      %6396 = vmatprep.subr.bf16.mxu0 0
      %6397 = vmatpush2.bf16.msra.mxu0 0
      %6398 = vmatprep.subr.bf16.mxu0 0
      %6399 = vmatpush2.bf16.msra.mxu0 0
      %6400 = vmatprep.mubr.bf16.mxu0 0
      %6401 = vmatmul.mubr.bf16.gmra.mxu0 %v6366
      %v6402 = vpop.f32.mrf.mxu0
      %v6403 = vadd.f32 0.0, %v6402
      %v6404 = vpop.f32.mrf.mxu0
      %v6405 = vpop.f32.mrf.mxu0
      %v6406 = vadd.f32 0.0, %v6405
      %v6407 = vpop.f32.mrf.mxu0
      %6408 = vdwg.mxu0
      %v6409 = vadd.f32 %v6289, %v6403
      %v6410 = vadd.f32 %v6292, %v6406
      %v6411 = vmul.f32 %v5850, %v382
      %v6412 = vmul.f32 %v5853, %v382
      %v6413 = vpack.c.bf16 %v6412, %v6411
      %6414 = vmatprep.subr.bf16.mxu0 0
      %6415 = vmatpush1.bf16.xpose.msra.mxu0 0
      %6416 = vmatprep.subr.bf16.mxu0 0
      %6417 = vmatpush1.bf16.xpose.msra.mxu0 0
      %6418 = vmatprep.subr.bf16.mxu0 0
      %6419 = vmatpush1.bf16.xpose.msra.mxu0 0
      %6420 = vmatprep.subr.bf16.mxu0 0
      %6421 = vmatpush1.bf16.xpose.msra.mxu0 0
      %6422 = vmatprep.subr.bf16.mxu0 0
      %6423 = vmatpush1.bf16.xpose.msra.mxu0 0
      %6424 = vmatprep.subr.bf16.mxu0 0
      %6425 = vmatpush1.bf16.xpose.msra.mxu0 0
      %6426 = vmatprep.subr.bf16.mxu0 0
      %6427 = vmatpush1.bf16.xpose.msra.mxu0 0
      %6428 = vmatprep.subr.bf16.mxu0 0
      %6429 = vmatpush1.bf16.xpose.msra.mxu0 %v6066
      %6430 = vmatprep.subr.bf16.mxu0 0
      %6431 = vmatpush2.bf16.xpose.msra.mxu0 0
      %6432 = vmatprep.subr.bf16.mxu0 0
      %6433 = vmatpush2.bf16.xpose.msra.mxu0 0
      %6434 = vmatprep.subr.bf16.mxu0 0
      %6435 = vmatpush2.bf16.xpose.msra.mxu0 0
      %6436 = vmatprep.subr.bf16.mxu0 0
      %6437 = vmatpush2.bf16.xpose.msra.mxu0 0
      %6438 = vmatprep.subr.bf16.mxu0 0
      %6439 = vmatpush2.bf16.xpose.msra.mxu0 0
      %6440 = vmatprep.subr.bf16.mxu0 0
      %6441 = vmatpush2.bf16.xpose.msra.mxu0 0
      %6442 = vmatprep.subr.bf16.mxu0 0
      %6443 = vmatpush2.bf16.xpose.msra.mxu0 0
      %6444 = vmatprep.subr.bf16.mxu0 0
      %6445 = vmatpush2.bf16.xpose.msra.mxu0 0
      %6446 = vmatprep.mubr.bf16.mxu0 0
      %6447 = vmatmul.mubr.bf16.gmra.mxu0 %v6413
      %v6448 = vpop.f32.mrf.mxu0
      %v6449 = vadd.f32 0.0, %v6448
      %v6450 = vpop.f32.mrf.mxu0
      %v6451 = vpop.f32.mrf.mxu0
      %v6452 = vadd.f32 0.0, %v6451
      %v6453 = vpop.f32.mrf.mxu0
      %6454 = vdwg.mxu0
      %v6455 = vsel %vm465, %v6449, -inf
      %6456 = vmax.xlane.f32.xlu0 %v6455
      %v6457 = vpop.xlane.xlu0 %6456
      %v6458 = vsel %vm465, %v6452, -inf
      %6459 = vmax.xlane.f32.xlu0 %v6458
      %v6460 = vpop.xlane.xlu0 %6459
      %v6461 = vsub.f32 %v6449, %v6457
      %v6462 = vsub.f32 %v6452, %v6460
      %v6463 = vmul.f32 %v6461, 1.442695
      %v6464 = vpow.pop %v6463
      %v6465 = vmul.f32 %v6462, 1.442695
      %v6466 = vpow.pop %v6465
      %v6467 = vsel %vm465, %v6464, 0.0
      %6468 = vadd.xlane.f32.xlu0 %v6467
      %v6469 = vpop.xlane.xlu0 %6468
      %v6470 = vsel %vm465, %v6466, 0.0
      %6471 = vadd.xlane.f32.xlu0 %v6470
      %v6472 = vpop.xlane.xlu0 %6471
      %v6473 = vrcp.pop %v6469
      %v6474 = vrcp.pop %v6472
      %v6475 = vmul.f32 %v6464, %v6473
      %v6476 = vmul.f32 %v6466, %v6474
      %v6477 = vpack.c.bf16 %v6476, %v6475
      %v6478 = vmul.f32 %v6060, %v382
      %v6479 = vmul.f32 %v6063, %v382
      %v6480 = vpack.c.bf16 %v6479, %v6478
      %v6482 = vsel %vm465, %v6477, 0
      %6484 = vmatprep.subr.bf16.mxu0 0
      %6485 = vmatpush1.bf16.msra.mxu0 0
      %6486 = vmatprep.subr.bf16.mxu0 0
      %6487 = vmatpush1.bf16.msra.mxu0 0
      %6488 = vmatprep.subr.bf16.mxu0 0
      %6489 = vmatpush1.bf16.msra.mxu0 0
      %6490 = vmatprep.subr.bf16.mxu0 0
      %6491 = vmatpush1.bf16.msra.mxu0 0
      %6492 = vmatprep.subr.bf16.mxu0 0
      %6493 = vmatpush1.bf16.msra.mxu0 0
      %6494 = vmatprep.subr.bf16.mxu0 0
      %6495 = vmatpush1.bf16.msra.mxu0 0
      %6496 = vmatprep.subr.bf16.mxu0 0
      %6497 = vmatpush1.bf16.msra.mxu0 0
      %6498 = vmatprep.subr.bf16.mxu0 0
      %6499 = vmatpush1.bf16.msra.mxu0 %v6480
      %6500 = vmatprep.subr.bf16.mxu0 0
      %6501 = vmatpush2.bf16.msra.mxu0 0
      %6502 = vmatprep.subr.bf16.mxu0 0
      %6503 = vmatpush2.bf16.msra.mxu0 0
      %6504 = vmatprep.subr.bf16.mxu0 0
      %6505 = vmatpush2.bf16.msra.mxu0 0
      %6506 = vmatprep.subr.bf16.mxu0 0
      %6507 = vmatpush2.bf16.msra.mxu0 0
      %6508 = vmatprep.subr.bf16.mxu0 0
      %6509 = vmatpush2.bf16.msra.mxu0 0
      %6510 = vmatprep.subr.bf16.mxu0 0
      %6511 = vmatpush2.bf16.msra.mxu0 0
      %6512 = vmatprep.subr.bf16.mxu0 0
      %6513 = vmatpush2.bf16.msra.mxu0 0
      %6514 = vmatprep.subr.bf16.mxu0 0
      %6515 = vmatpush2.bf16.msra.mxu0 0
      %6516 = vmatprep.mubr.bf16.mxu0 0
      %6517 = vmatmul.mubr.bf16.gmra.mxu0 %v6482
      %v6518 = vpop.f32.mrf.mxu0
      %v6519 = vadd.f32 0.0, %v6518
      %v6520 = vpop.f32.mrf.mxu0
      %v6521 = vpop.f32.mrf.mxu0
      %v6522 = vadd.f32 0.0, %v6521
      %v6523 = vpop.f32.mrf.mxu0
      %6524 = vdwg.mxu0
      %v6525 = vadd.f32 %v6409, %v6519
      %v6526 = vadd.f32 %v6410, %v6522
      %v6527 = vpack.c.bf16 %v6526, %v6525
      %v6528 = vld [vmem:[%s4895 + $0x1c] sm:$0xf]
      %v6529 = vld [vmem:[%s4895 + $0x44] sm:$0xf]
      %v6530 = vld [vmem:[%s4895 + $0x6c] sm:$0xf]
      %v6531 = vld [vmem:[%s4895 + $0x94] sm:$0xf]
      %v6532 = vld [vmem:[%s4895 + $0xbc] sm:$0xf]
      %v6533 = vld [vmem:[%s4895 + $0xe4] sm:$0xf]
      %v6534 = vld [vmem:[%s4895 + $0x10c] sm:$0xf]
      %v6535 = vld [vmem:[%s4895 + $0x134] sm:$0xf]
      %v6536 = vld [vmem:[%s4895 + $0x15c] sm:$0xf]
      %v6537 = vld [vmem:[%s4895 + $0x184] sm:$0xf]
      %v6538 = vld [vmem:[%s4895 + $0x1ac] sm:$0xf]
      %v6539 = vld [vmem:[%s4895 + $0x1d4] sm:$0xf]
      %v6540 = vld [vmem:[%s4895 + $0x1fc] sm:$0xf]
      %v6541 = vld [vmem:[%s4895 + $0x224] sm:$0xf]
      %v6542 = vld [vmem:[%s4895 + $0x24c] sm:$0xf]
      %v6543 = vld [vmem:[%s4895 + $0x274] sm:$0xf]
      %v6560 = vunpack.c.l.b16 %v6528
      %v6561 = vunpack.c.l.b16 %v6529
      %v6562 = vunpack.c.l.b16 %v6530
      %v6563 = vunpack.c.l.b16 %v6531
      %v6564 = vunpack.c.l.b16 %v6532
      %v6565 = vunpack.c.l.b16 %v6533
      %v6566 = vunpack.c.l.b16 %v6534
      %v6567 = vunpack.c.l.b16 %v6535
      %v6568 = vunpack.c.l.b16 %v6536
      %v6569 = vunpack.c.l.b16 %v6537
      %v6570 = vunpack.c.l.b16 %v6538
      %v6571 = vunpack.c.l.b16 %v6539
      %v6572 = vunpack.c.l.b16 %v6540
      %v6573 = vunpack.c.l.b16 %v6541
      %v6574 = vunpack.c.l.b16 %v6542
      %v6575 = vunpack.c.l.b16 %v6543
      %v6576 = vpack.c.b16 %v6561, %v6560
      %v6577 = vpack.c.b16 %v6563, %v6562
      %v6578 = vpack.c.b16 %v6565, %v6564
      %v6579 = vpack.c.b16 %v6567, %v6566
      %v6580 = vpack.c.b16 %v6569, %v6568
      %v6581 = vpack.c.b16 %v6571, %v6570
      %v6582 = vpack.c.b16 %v6573, %v6572
      %v6583 = vpack.c.b16 %v6575, %v6574
      %6592 = vmatprep.subr.bf16.mxu0 0
      %6593 = vmatpush1.bf16.msra.mxu0 %v6583
      %6594 = vmatprep.subr.bf16.mxu0 0
      %6595 = vmatpush1.bf16.msra.mxu0 %v6582
      %6596 = vmatprep.subr.bf16.mxu0 0
      %6597 = vmatpush1.bf16.msra.mxu0 %v6581
      %6598 = vmatprep.subr.bf16.mxu0 0
      %6599 = vmatpush1.bf16.msra.mxu0 %v6580
      %6600 = vmatprep.subr.bf16.mxu0 0
      %6601 = vmatpush1.bf16.msra.mxu0 %v6579
      %6602 = vmatprep.subr.bf16.mxu0 0
      %6603 = vmatpush1.bf16.msra.mxu0 %v6578
      %6604 = vmatprep.subr.bf16.mxu0 0
      %6605 = vmatpush1.bf16.msra.mxu0 %v6577
      %6606 = vmatprep.subr.bf16.mxu0 0
      %6607 = vmatpush1.bf16.msra.mxu0 %v6576
      %6608 = vmatprep.subr.bf16.mxu0 0
      %6609 = vmatpush2.bf16.msra.mxu0 0
      %6610 = vmatprep.subr.bf16.mxu0 0
      %6611 = vmatpush2.bf16.msra.mxu0 0
      %6612 = vmatprep.subr.bf16.mxu0 0
      %6613 = vmatpush2.bf16.msra.mxu0 0
      %6614 = vmatprep.subr.bf16.mxu0 0
      %6615 = vmatpush2.bf16.msra.mxu0 0
      %6616 = vmatprep.subr.bf16.mxu0 0
      %6617 = vmatpush2.bf16.msra.mxu0 0
      %6618 = vmatprep.subr.bf16.mxu0 0
      %6619 = vmatpush2.bf16.msra.mxu0 0
      %6620 = vmatprep.subr.bf16.mxu0 0
      %6621 = vmatpush2.bf16.msra.mxu0 0
      %6622 = vmatprep.subr.bf16.mxu0 0
      %6623 = vmatpush2.bf16.msra.mxu0 0
      %6624 = vmatprep.mubr.bf16.mxu0 0
      %6625 = vmatmul.mubr.bf16.gmra.mxu0 %v6527
      %v6626 = vpop.f32.mrf.mxu0
      %v6627 = vadd.f32 %v4884, %v6626
      %v6628 = vpop.f32.mrf.mxu0
      %v6629 = vpop.f32.mrf.mxu0
      %v6630 = vadd.f32 %v4884, %v6629
      %v6631 = vpop.f32.mrf.mxu0
      %6632 = vdwg.mxu0
      %v6633 = vadd.f32 %v5746, %v6627
      %v6634 = vadd.f32 %v5747, %v6630
      %6635 = vadd.xlane.f32.xlu0 %v6633
      %v6636 = vpop.xlane.xlu0 %6635
      %6637 = vadd.xlane.f32.xlu0 %v6634
      %v6638 = vpop.xlane.xlu0 %6637
      %v6639 = vmul.f32 %v6636, 0.015625
      %v6640 = vmul.f32 %v6638, 0.015625
      %v6641 = vsub.f32 %v6633, %v6639
      %v6642 = vsub.f32 %v6634, %v6640
      %v6643 = vmul.f32 %v6641, %v6641
      %v6644 = vmul.f32 %v6642, %v6642
      %v6645 = vmul.f32 %v6643, %v384
      %v6646 = vmul.f32 %v6644, %v384
      %6647 = vadd.xlane.f32.xlu0 %v6645
      %v6648 = vpop.xlane.xlu0 %6647
      %6649 = vadd.xlane.f32.xlu0 %v6646
      %v6650 = vpop.xlane.xlu0 %6649
      %v6651 = vmul.f32 %v6648, 0.015625
      %v6652 = vmul.f32 %v6650, 0.015625
      %v6653 = vadd.f32 %v6651, 1e-05
      %v6654 = vadd.f32 %v6652, 1e-05
      %v6655 = vrsqrt.pop %v6653
      %v6656 = vrsqrt.pop %v6654
      %v6657 = vmul.f32 %v6641, %v6655
      %v6658 = vmul.f32 %v6642, %v6656
      %v6659 = vmul.f32 %v6657, %v4885
      %v6660 = vmul.f32 %v6658, %v4885
      %v6661 = vadd.f32 %v6659, %v4886
      %v6662 = vadd.f32 %v6660, %v4886
      %v6663 = vpack.c.bf16 %v6662, %v6661
      %v6664 = vld [vmem:[%s4895 + $0x20] sm:$0xf]
      %v6665 = vld [vmem:[%s4895 + $0x48] sm:$0xf]
      %v6666 = vld [vmem:[%s4895 + $0x70] sm:$0xf]
      %v6667 = vld [vmem:[%s4895 + $0x98] sm:$0xf]
      %v6668 = vld [vmem:[%s4895 + $0xc0] sm:$0xf]
      %v6669 = vld [vmem:[%s4895 + $0xe8] sm:$0xf]
      %v6670 = vld [vmem:[%s4895 + $0x110] sm:$0xf]
      %v6671 = vld [vmem:[%s4895 + $0x138] sm:$0xf]
      %v6672 = vld [vmem:[%s4895 + $0x160] sm:$0xf]
      %v6673 = vld [vmem:[%s4895 + $0x188] sm:$0xf]
      %v6674 = vld [vmem:[%s4895 + $0x1b0] sm:$0xf]
      %v6675 = vld [vmem:[%s4895 + $0x1d8] sm:$0xf]
      %v6676 = vld [vmem:[%s4895 + $0x200] sm:$0xf]
      %v6677 = vld [vmem:[%s4895 + $0x228] sm:$0xf]
      %v6678 = vld [vmem:[%s4895 + $0x250] sm:$0xf]
      %v6679 = vld [vmem:[%s4895 + $0x278] sm:$0xf]
      %v6696 = vunpack.c.l.b16 %v6664
      %v6697 = vunpack.c.l.b16 %v6665
      %v6698 = vunpack.c.l.b16 %v6666
      %v6699 = vunpack.c.l.b16 %v6667
      %v6700 = vunpack.c.l.b16 %v6668
      %v6701 = vunpack.c.l.b16 %v6669
      %v6702 = vunpack.c.l.b16 %v6670
      %v6703 = vunpack.c.l.b16 %v6671
      %v6704 = vunpack.c.l.b16 %v6672
      %v6705 = vunpack.c.l.b16 %v6673
      %v6706 = vunpack.c.l.b16 %v6674
      %v6707 = vunpack.c.l.b16 %v6675
      %v6708 = vunpack.c.l.b16 %v6676
      %v6709 = vunpack.c.l.b16 %v6677
      %v6710 = vunpack.c.l.b16 %v6678
      %v6711 = vunpack.c.l.b16 %v6679
      %v6712 = vpack.c.b16 %v6697, %v6696
      %v6713 = vpack.c.b16 %v6699, %v6698
      %v6714 = vpack.c.b16 %v6701, %v6700
      %v6715 = vpack.c.b16 %v6703, %v6702
      %v6716 = vpack.c.b16 %v6705, %v6704
      %v6717 = vpack.c.b16 %v6707, %v6706
      %v6718 = vpack.c.b16 %v6709, %v6708
      %v6719 = vpack.c.b16 %v6711, %v6710
      %6728 = vmatprep.subr.bf16.mxu0 0
      %6729 = vmatpush1.bf16.msra.mxu0 %v6719
      %6730 = vmatprep.subr.bf16.mxu0 0
      %6731 = vmatpush1.bf16.msra.mxu0 %v6718
      %6732 = vmatprep.subr.bf16.mxu0 0
      %6733 = vmatpush1.bf16.msra.mxu0 %v6717
      %6734 = vmatprep.subr.bf16.mxu0 0
      %6735 = vmatpush1.bf16.msra.mxu0 %v6716
      %6736 = vmatprep.subr.bf16.mxu0 0
      %6737 = vmatpush1.bf16.msra.mxu0 %v6715
      %6738 = vmatprep.subr.bf16.mxu0 0
      %6739 = vmatpush1.bf16.msra.mxu0 %v6714
      %6740 = vmatprep.subr.bf16.mxu0 0
      %6741 = vmatpush1.bf16.msra.mxu0 %v6713
      %6742 = vmatprep.subr.bf16.mxu0 0
      %6743 = vmatpush1.bf16.msra.mxu0 %v6712
      %6744 = vmatprep.subr.bf16.mxu0 0
      %6745 = vmatpush2.bf16.msra.mxu0 0
      %6746 = vmatprep.subr.bf16.mxu0 0
      %6747 = vmatpush2.bf16.msra.mxu0 0
      %6748 = vmatprep.subr.bf16.mxu0 0
      %6749 = vmatpush2.bf16.msra.mxu0 0
      %6750 = vmatprep.subr.bf16.mxu0 0
      %6751 = vmatpush2.bf16.msra.mxu0 0
      %6752 = vmatprep.subr.bf16.mxu0 0
      %6753 = vmatpush2.bf16.msra.mxu0 0
      %6754 = vmatprep.subr.bf16.mxu0 0
      %6755 = vmatpush2.bf16.msra.mxu0 0
      %6756 = vmatprep.subr.bf16.mxu0 0
      %6757 = vmatpush2.bf16.msra.mxu0 0
      %6758 = vmatprep.subr.bf16.mxu0 0
      %6759 = vmatpush2.bf16.msra.mxu0 0
      %6760 = vmatprep.mubr.bf16.mxu0 0
      %6761 = vmatmul.mubr.bf16.gmra.mxu0 %v6663
      %v6762 = vpop.f32.mrf.mxu0
      %v6763 = vadd.f32 %v4887, %v6762
      %v6764 = vpop.f32.mrf.mxu0
      %v6765 = vpop.f32.mrf.mxu0
      %v6766 = vadd.f32 %v4887, %v6765
      %v6767 = vpop.f32.mrf.mxu0
      %6768 = vdwg.mxu0
      %v6769 = vmax.f32 %v6763, 0.0
      %v6770 = vmax.f32 %v6766, 0.0
      %v6771 = vpack.c.bf16 %v6770, %v6769
      %v6772 = vld [vmem:[%s4895 + $0x24] sm:$0xf]
      %v6773 = vld [vmem:[%s4895 + $0x4c] sm:$0xf]
      %v6774 = vld [vmem:[%s4895 + $0x74] sm:$0xf]
      %v6775 = vld [vmem:[%s4895 + $0x9c] sm:$0xf]
      %v6776 = vld [vmem:[%s4895 + $0xc4] sm:$0xf]
      %v6777 = vld [vmem:[%s4895 + $0xec] sm:$0xf]
      %v6778 = vld [vmem:[%s4895 + $0x114] sm:$0xf]
      %v6779 = vld [vmem:[%s4895 + $0x13c] sm:$0xf]
      %v6780 = vld [vmem:[%s4895 + $0x164] sm:$0xf]
      %v6781 = vld [vmem:[%s4895 + $0x18c] sm:$0xf]
      %v6782 = vld [vmem:[%s4895 + $0x1b4] sm:$0xf]
      %v6783 = vld [vmem:[%s4895 + $0x1dc] sm:$0xf]
      %v6784 = vld [vmem:[%s4895 + $0x204] sm:$0xf]
      %v6785 = vld [vmem:[%s4895 + $0x22c] sm:$0xf]
      %v6786 = vld [vmem:[%s4895 + $0x254] sm:$0xf]
      %v6787 = vld [vmem:[%s4895 + $0x27c] sm:$0xf]
      %v6804 = vunpack.c.l.b16 %v6772
      %v6805 = vunpack.c.l.b16 %v6773
      %v6806 = vunpack.c.l.b16 %v6774
      %v6807 = vunpack.c.l.b16 %v6775
      %v6808 = vunpack.c.l.b16 %v6776
      %v6809 = vunpack.c.l.b16 %v6777
      %v6810 = vunpack.c.l.b16 %v6778
      %v6811 = vunpack.c.l.b16 %v6779
      %v6812 = vunpack.c.l.b16 %v6780
      %v6813 = vunpack.c.l.b16 %v6781
      %v6814 = vunpack.c.l.b16 %v6782
      %v6815 = vunpack.c.l.b16 %v6783
      %v6816 = vunpack.c.l.b16 %v6784
      %v6817 = vunpack.c.l.b16 %v6785
      %v6818 = vunpack.c.l.b16 %v6786
      %v6819 = vunpack.c.l.b16 %v6787
      %v6820 = vpack.c.b16 %v6805, %v6804
      %v6821 = vpack.c.b16 %v6807, %v6806
      %v6822 = vpack.c.b16 %v6809, %v6808
      %v6823 = vpack.c.b16 %v6811, %v6810
      %v6824 = vpack.c.b16 %v6813, %v6812
      %v6825 = vpack.c.b16 %v6815, %v6814
      %v6826 = vpack.c.b16 %v6817, %v6816
      %v6827 = vpack.c.b16 %v6819, %v6818
      %6836 = vmatprep.subr.bf16.mxu0 0
      %6837 = vmatpush1.bf16.msra.mxu0 %v6827
      %6838 = vmatprep.subr.bf16.mxu0 0
      %6839 = vmatpush1.bf16.msra.mxu0 %v6826
      %6840 = vmatprep.subr.bf16.mxu0 0
      %6841 = vmatpush1.bf16.msra.mxu0 %v6825
      %6842 = vmatprep.subr.bf16.mxu0 0
      %6843 = vmatpush1.bf16.msra.mxu0 %v6824
      %6844 = vmatprep.subr.bf16.mxu0 0
      %6845 = vmatpush1.bf16.msra.mxu0 %v6823
      %6846 = vmatprep.subr.bf16.mxu0 0
      %6847 = vmatpush1.bf16.msra.mxu0 %v6822
      %6848 = vmatprep.subr.bf16.mxu0 0
      %6849 = vmatpush1.bf16.msra.mxu0 %v6821
      %6850 = vmatprep.subr.bf16.mxu0 0
      %6851 = vmatpush1.bf16.msra.mxu0 %v6820
      %6852 = vmatprep.subr.bf16.mxu0 0
      %6853 = vmatpush2.bf16.msra.mxu0 0
      %6854 = vmatprep.subr.bf16.mxu0 0
      %6855 = vmatpush2.bf16.msra.mxu0 0
      %6856 = vmatprep.subr.bf16.mxu0 0
      %6857 = vmatpush2.bf16.msra.mxu0 0
      %6858 = vmatprep.subr.bf16.mxu0 0
      %6859 = vmatpush2.bf16.msra.mxu0 0
      %6860 = vmatprep.subr.bf16.mxu0 0
      %6861 = vmatpush2.bf16.msra.mxu0 0
      %6862 = vmatprep.subr.bf16.mxu0 0
      %6863 = vmatpush2.bf16.msra.mxu0 0
      %6864 = vmatprep.subr.bf16.mxu0 0
      %6865 = vmatpush2.bf16.msra.mxu0 0
      %6866 = vmatprep.subr.bf16.mxu0 0
      %6867 = vmatpush2.bf16.msra.mxu0 0
      %6868 = vmatprep.mubr.bf16.mxu0 0
      %6869 = vmatmul.mubr.bf16.gmra.mxu0 %v6771
      %v6870 = vpop.f32.mrf.mxu0
      %v6871 = vadd.f32 %v4888, %v6870
      %v6872 = vpop.f32.mrf.mxu0
      %v6873 = vpop.f32.mrf.mxu0
      %v6874 = vadd.f32 %v4888, %v6873
      %v6875 = vpop.f32.mrf.mxu0
      %6876 = vdwg.mxu0
      %v6877 = vadd.f32 %v6661, %v6871
      %v6878 = vadd.f32 %v6662, %v6874
      %6879 = vadd.xlane.f32.xlu0 %v6877
      %v6880 = vpop.xlane.xlu0 %6879
      %6881 = vadd.xlane.f32.xlu0 %v6878
      %v6882 = vpop.xlane.xlu0 %6881
      %v6883 = vmul.f32 %v6880, 0.015625
      %v6884 = vmul.f32 %v6882, 0.015625
      %v6885 = vsub.f32 %v6877, %v6883
      %v6886 = vsub.f32 %v6878, %v6884
      %v6887 = vmul.f32 %v6885, %v6885
      %v6888 = vmul.f32 %v6886, %v6886
      %v6889 = vmul.f32 %v6887, %v384
      %v6890 = vmul.f32 %v6888, %v384
      %6891 = vadd.xlane.f32.xlu0 %v6889
      %v6892 = vpop.xlane.xlu0 %6891
      %6893 = vadd.xlane.f32.xlu0 %v6890
      %v6894 = vpop.xlane.xlu0 %6893
      %v6895 = vmul.f32 %v6892, 0.015625
      %v6896 = vmul.f32 %v6894, 0.015625
      %v6897 = vadd.f32 %v6895, 1e-05
      %v6898 = vadd.f32 %v6896, 1e-05
      %v6899 = vrsqrt.pop %v6897
      %v6900 = vrsqrt.pop %v6898
      %v6901 = vmul.f32 %v6885, %v6899
      %v6902 = vmul.f32 %v6886, %v6900
      %v6903 = vmul.f32 %v6901, %v4889
      %v6904 = vmul.f32 %v6902, %v4889
      %v6905 = vadd.f32 %v6903, %v4890
      %v6906 = vadd.f32 %v6904, %v4890
      %v6907 = vld [vmem:[%s9 + $0x2] ss:$0 sm:$0xff]
      %v6908 = vld [vmem:[%s9 + $0x3] ss:$0 sm:$0xff]
      %v6909 = vld [vmem:[%s9 + $0x4] ss:$0 sm:$0xff]
      %v6910 = vld [vmem:[%s9 + $0x5] ss:$0 sm:$0xff]
      %v6911 = vld [vmem:[%s9 + $0x6] ss:$0 sm:$0xff]
      %6912 = vadd.xlane.f32.xlu0 %v6905
      %v6913 = vpop.xlane.xlu0 %6912
      %6914 = vadd.xlane.f32.xlu0 %v6906
      %v6915 = vpop.xlane.xlu0 %6914
      %v6916 = vmul.f32 %v6913, 0.015625
      %v6917 = vmul.f32 %v6915, 0.015625
      %v6918 = vsub.f32 %v6905, %v6916
      %v6919 = vsub.f32 %v6906, %v6917
      %v6920 = vmul.f32 %v6918, %v6918
      %v6921 = vmul.f32 %v6919, %v6919
      %v6922 = vmul.f32 %v6920, %v384
      %v6923 = vmul.f32 %v6921, %v384
      %6924 = vadd.xlane.f32.xlu0 %v6922
      %v6925 = vpop.xlane.xlu0 %6924
      %6926 = vadd.xlane.f32.xlu0 %v6923
      %v6927 = vpop.xlane.xlu0 %6926
      %v6928 = vmul.f32 %v6925, 0.015625
      %v6929 = vmul.f32 %v6927, 0.015625
      %v6930 = vadd.f32 %v6928, 1e-05
      %v6931 = vadd.f32 %v6929, 1e-05
      %v6932 = vrsqrt.pop %v6930
      %v6933 = vrsqrt.pop %v6931
      %v6934 = vmul.f32 %v6918, %v6932
      %v6935 = vmul.f32 %v6919, %v6933
      %v6936 = vmul.f32 %v6934, %v6907
      %v6937 = vmul.f32 %v6935, %v6907
      %v6938 = vadd.f32 %v6936, %v6908
      %v6939 = vadd.f32 %v6937, %v6908
      %v6940 = vpack.c.bf16 %v6939, %v6938
      %v6941 = vld [vmem:[%s4 + $0x40] sm:$0xf]
      %v6942 = vld [vmem:[%s4 + $0x44] sm:$0xf]
      %v6943 = vld [vmem:[%s4 + $0x48] sm:$0xf]
      %v6944 = vld [vmem:[%s4 + $0x4c] sm:$0xf]
      %v6945 = vld [vmem:[%s4 + $0x50] sm:$0xf]
      %v6946 = vld [vmem:[%s4 + $0x54] sm:$0xf]
      %v6947 = vld [vmem:[%s4 + $0x58] sm:$0xf]
      %v6948 = vld [vmem:[%s4 + $0x5c] sm:$0xf]
      %v6949 = vld [vmem:[%s4 + $0x60] sm:$0xf]
      %v6950 = vld [vmem:[%s4 + $0x64] sm:$0xf]
      %v6951 = vld [vmem:[%s4 + $0x68] sm:$0xf]
      %v6952 = vld [vmem:[%s4 + $0x6c] sm:$0xf]
      %v6953 = vld [vmem:[%s4 + $0x70] sm:$0xf]
      %v6954 = vld [vmem:[%s4 + $0x74] sm:$0xf]
      %v6955 = vld [vmem:[%s4 + $0x78] sm:$0xf]
      %v6956 = vld [vmem:[%s4 + $0x7c] sm:$0xf]
      %v6973 = vunpack.c.l.b16 %v6941
      %v6974 = vunpack.c.l.b16 %v6942
      %v6975 = vunpack.c.l.b16 %v6943
      %v6976 = vunpack.c.l.b16 %v6944
      %v6977 = vunpack.c.l.b16 %v6945
      %v6978 = vunpack.c.l.b16 %v6946
      %v6979 = vunpack.c.l.b16 %v6947
      %v6980 = vunpack.c.l.b16 %v6948
      %v6981 = vunpack.c.l.b16 %v6949
      %v6982 = vunpack.c.l.b16 %v6950
      %v6983 = vunpack.c.l.b16 %v6951
      %v6984 = vunpack.c.l.b16 %v6952
      %v6985 = vunpack.c.l.b16 %v6953
      %v6986 = vunpack.c.l.b16 %v6954
      %v6987 = vunpack.c.l.b16 %v6955
      %v6988 = vunpack.c.l.b16 %v6956
      %v6989 = vpack.c.b16 %v6974, %v6973
      %v6990 = vpack.c.b16 %v6976, %v6975
      %v6991 = vpack.c.b16 %v6978, %v6977
      %v6992 = vpack.c.b16 %v6980, %v6979
      %v6993 = vpack.c.b16 %v6982, %v6981
      %v6994 = vpack.c.b16 %v6984, %v6983
      %v6995 = vpack.c.b16 %v6986, %v6985
      %v6996 = vpack.c.b16 %v6988, %v6987
      %7005 = vmatprep.subr.bf16.mxu0 0
      %7006 = vmatpush1.bf16.msra.mxu0 %v6996
      %7007 = vmatprep.subr.bf16.mxu0 0
      %7008 = vmatpush1.bf16.msra.mxu0 %v6995
      %7009 = vmatprep.subr.bf16.mxu0 0
      %7010 = vmatpush1.bf16.msra.mxu0 %v6994
      %7011 = vmatprep.subr.bf16.mxu0 0
      %7012 = vmatpush1.bf16.msra.mxu0 %v6993
      %7013 = vmatprep.subr.bf16.mxu0 0
      %7014 = vmatpush1.bf16.msra.mxu0 %v6992
      %7015 = vmatprep.subr.bf16.mxu0 0
      %7016 = vmatpush1.bf16.msra.mxu0 %v6991
      %7017 = vmatprep.subr.bf16.mxu0 0
      %7018 = vmatpush1.bf16.msra.mxu0 %v6990
      %7019 = vmatprep.subr.bf16.mxu0 0
      %7020 = vmatpush1.bf16.msra.mxu0 %v6989
      %7021 = vmatprep.subr.bf16.mxu0 0
      %7022 = vmatpush2.bf16.msra.mxu0 0
      %7023 = vmatprep.subr.bf16.mxu0 0
      %7024 = vmatpush2.bf16.msra.mxu0 0
      %7025 = vmatprep.subr.bf16.mxu0 0
      %7026 = vmatpush2.bf16.msra.mxu0 0
      %7027 = vmatprep.subr.bf16.mxu0 0
      %7028 = vmatpush2.bf16.msra.mxu0 0
      %7029 = vmatprep.subr.bf16.mxu0 0
      %7030 = vmatpush2.bf16.msra.mxu0 0
      %7031 = vmatprep.subr.bf16.mxu0 0
      %7032 = vmatpush2.bf16.msra.mxu0 0
      %7033 = vmatprep.subr.bf16.mxu0 0
      %7034 = vmatpush2.bf16.msra.mxu0 0
      %7035 = vmatprep.subr.bf16.mxu0 0
      %7036 = vmatpush2.bf16.msra.mxu0 0
      %7037 = vmatprep.mubr.bf16.mxu0 0
      %7038 = vmatmul.mubr.bf16.gmra.mxu0 %v6940
      %v7039 = vpop.f32.mrf.mxu0
      %v7040 = vadd.f32 %v6909, %v7039
      %v7041 = vpop.f32.mrf.mxu0
      %v7042 = vpop.f32.mrf.mxu0
      %v7043 = vadd.f32 %v6909, %v7042
      %v7044 = vpop.f32.mrf.mxu0
      %7045 = vdwg.mxu0
      %v7046 = vmax.f32 %v7040, 0.0
      %v7047 = vmax.f32 %v7043, 0.0
      %v7048 = vpack.c.bf16 %v7047, %v7046
      %v7049 = vld [vmem:[%s4 + $0x80] sm:$0xf]
      %v7050 = vld [vmem:[%s4 + $0x84] sm:$0xf]
      %v7051 = vld [vmem:[%s4 + $0x88] sm:$0xf]
      %v7052 = vld [vmem:[%s4 + $0x8c] sm:$0xf]
      %v7053 = vld [vmem:[%s4 + $0x90] sm:$0xf]
      %v7054 = vld [vmem:[%s4 + $0x94] sm:$0xf]
      %v7055 = vld [vmem:[%s4 + $0x98] sm:$0xf]
      %v7056 = vld [vmem:[%s4 + $0x9c] sm:$0xf]
      %v7057 = vld [vmem:[%s4 + $0xa0] sm:$0xf]
      %v7058 = vld [vmem:[%s4 + $0xa4] sm:$0xf]
      %v7059 = vld [vmem:[%s4 + $0xa8] sm:$0xf]
      %v7060 = vld [vmem:[%s4 + $0xac] sm:$0xf]
      %v7061 = vld [vmem:[%s4 + $0xb0] sm:$0xf]
      %v7062 = vld [vmem:[%s4 + $0xb4] sm:$0xf]
      %v7063 = vld [vmem:[%s4 + $0xb8] sm:$0xf]
      %v7064 = vld [vmem:[%s4 + $0xbc] sm:$0xf]
      %v7081 = vunpack.c.l.b16 %v7049
      %v7082 = vunpack.c.l.b16 %v7050
      %v7083 = vunpack.c.l.b16 %v7051
      %v7084 = vunpack.c.l.b16 %v7052
      %v7085 = vunpack.c.l.b16 %v7053
      %v7086 = vunpack.c.l.b16 %v7054
      %v7087 = vunpack.c.l.b16 %v7055
      %v7088 = vunpack.c.l.b16 %v7056
      %v7089 = vunpack.c.l.b16 %v7057
      %v7090 = vunpack.c.l.b16 %v7058
      %v7091 = vunpack.c.l.b16 %v7059
      %v7092 = vunpack.c.l.b16 %v7060
      %v7093 = vunpack.c.l.b16 %v7061
      %v7094 = vunpack.c.l.b16 %v7062
      %v7095 = vunpack.c.l.b16 %v7063
      %v7096 = vunpack.c.l.b16 %v7064
      %v7097 = vpack.c.b16 %v7082, %v7081
      %v7098 = vpack.c.b16 %v7084, %v7083
      %v7099 = vpack.c.b16 %v7086, %v7085
      %v7100 = vpack.c.b16 %v7088, %v7087
      %v7101 = vpack.c.b16 %v7090, %v7089
      %v7102 = vpack.c.b16 %v7092, %v7091
      %v7103 = vpack.c.b16 %v7094, %v7093
      %v7104 = vpack.c.b16 %v7096, %v7095
      %7113 = vmatprep.subr.bf16.mxu0 0
      %7114 = vmatpush1.bf16.msra.mxu0 %v7104
      %7115 = vmatprep.subr.bf16.mxu0 0
      %7116 = vmatpush1.bf16.msra.mxu0 %v7103
      %7117 = vmatprep.subr.bf16.mxu0 0
      %7118 = vmatpush1.bf16.msra.mxu0 %v7102
      %7119 = vmatprep.subr.bf16.mxu0 0
      %7120 = vmatpush1.bf16.msra.mxu0 %v7101
      %7121 = vmatprep.subr.bf16.mxu0 0
      %7122 = vmatpush1.bf16.msra.mxu0 %v7100
      %7123 = vmatprep.subr.bf16.mxu0 0
      %7124 = vmatpush1.bf16.msra.mxu0 %v7099
      %7125 = vmatprep.subr.bf16.mxu0 0
      %7126 = vmatpush1.bf16.msra.mxu0 %v7098
      %7127 = vmatprep.subr.bf16.mxu0 0
      %7128 = vmatpush1.bf16.msra.mxu0 %v7097
      %7129 = vmatprep.subr.bf16.mxu0 0
      %7130 = vmatpush2.bf16.msra.mxu0 0
      %7131 = vmatprep.subr.bf16.mxu0 0
      %7132 = vmatpush2.bf16.msra.mxu0 0
      %7133 = vmatprep.subr.bf16.mxu0 0
      %7134 = vmatpush2.bf16.msra.mxu0 0
      %7135 = vmatprep.subr.bf16.mxu0 0
      %7136 = vmatpush2.bf16.msra.mxu0 0
      %7137 = vmatprep.subr.bf16.mxu0 0
      %7138 = vmatpush2.bf16.msra.mxu0 0
      %7139 = vmatprep.subr.bf16.mxu0 0
      %7140 = vmatpush2.bf16.msra.mxu0 0
      %7141 = vmatprep.subr.bf16.mxu0 0
      %7142 = vmatpush2.bf16.msra.mxu0 0
      %7143 = vmatprep.subr.bf16.mxu0 0
      %7144 = vmatpush2.bf16.msra.mxu0 0
      %7145 = vmatprep.mubr.bf16.mxu0 0
      %7146 = vmatmul.mubr.bf16.gmra.mxu0 %v7048
      %v7147 = vpop.f32.mrf.mxu0
      %v7148 = vadd.f32 %v6910, %v7147
      %v7149 = vpop.f32.mrf.mxu0
      %v7150 = vpop.f32.mrf.mxu0
      %v7151 = vadd.f32 %v6910, %v7150
      %v7152 = vpop.f32.mrf.mxu0
      %7153 = vdwg.mxu0
      %v7154 = vmax.f32 %v7148, 0.0
      %v7155 = vmax.f32 %v7151, 0.0
      %v7156 = vld [vmem:[%s4 + $0xc0] sm:$0xf]
      %v7157 = vld [vmem:[%s4 + $0xc4] sm:$0xf]
      %v7158 = vld [vmem:[%s4 + $0xc8] sm:$0xf]
      %v7159 = vld [vmem:[%s4 + $0xcc] sm:$0xf]
      %v7160 = vld [vmem:[%s4 + $0xd0] sm:$0xf]
      %v7161 = vld [vmem:[%s4 + $0xd4] sm:$0xf]
      %v7162 = vld [vmem:[%s4 + $0xd8] sm:$0xf]
      %v7163 = vld [vmem:[%s4 + $0xdc] sm:$0xf]
      %v7164 = vld [vmem:[%s4 + $0xe0] sm:$0xf]
      %v7165 = vld [vmem:[%s4 + $0xe4] sm:$0xf]
      %v7166 = vld [vmem:[%s4 + $0xe8] sm:$0xf]
      %v7167 = vld [vmem:[%s4 + $0xec] sm:$0xf]
      %v7168 = vld [vmem:[%s4 + $0xf0] sm:$0xf]
      %v7169 = vld [vmem:[%s4 + $0xf4] sm:$0xf]
      %v7170 = vld [vmem:[%s4 + $0xf8] sm:$0xf]
      %v7171 = vld [vmem:[%s4 + $0xfc] sm:$0xf]
      %v7172 = vpack.c.bf16 %v7155, %v7154
      %v7173 = vld [vmem:[%s4 + $0x100] sm:$0xf]
      %v7174 = vld [vmem:[%s4 + $0x104] sm:$0xf]
      %v7175 = vld [vmem:[%s4 + $0x108] sm:$0xf]
      %v7176 = vld [vmem:[%s4 + $0x10c] sm:$0xf]
      %v7177 = vld [vmem:[%s4 + $0x110] sm:$0xf]
      %v7178 = vld [vmem:[%s4 + $0x114] sm:$0xf]
      %v7179 = vld [vmem:[%s4 + $0x118] sm:$0xf]
      %v7180 = vld [vmem:[%s4 + $0x11c] sm:$0xf]
      %v7181 = vld [vmem:[%s4 + $0x120] sm:$0xf]
      %v7182 = vld [vmem:[%s4 + $0x124] sm:$0xf]
      %v7183 = vld [vmem:[%s4 + $0x128] sm:$0xf]
      %v7184 = vld [vmem:[%s4 + $0x12c] sm:$0xf]
      %v7185 = vld [vmem:[%s4 + $0x130] sm:$0xf]
      %v7186 = vld [vmem:[%s4 + $0x134] sm:$0xf]
      %v7187 = vld [vmem:[%s4 + $0x138] sm:$0xf]
      %v7188 = vld [vmem:[%s4 + $0x13c] sm:$0xf]
      %v7205 = vunpack.c.l.b16 %v7173
      %v7206 = vunpack.c.l.b16 %v7174
      %v7207 = vunpack.c.l.b16 %v7175
      %v7208 = vunpack.c.l.b16 %v7176
      %v7209 = vunpack.c.l.b16 %v7177
      %v7210 = vunpack.c.l.b16 %v7178
      %v7211 = vunpack.c.l.b16 %v7179
      %v7212 = vunpack.c.l.b16 %v7180
      %v7213 = vunpack.c.l.b16 %v7181
      %v7214 = vunpack.c.l.b16 %v7182
      %v7215 = vunpack.c.l.b16 %v7183
      %v7216 = vunpack.c.l.b16 %v7184
      %v7217 = vunpack.c.l.b16 %v7185
      %v7218 = vunpack.c.l.b16 %v7186
      %v7219 = vunpack.c.l.b16 %v7187
      %v7220 = vunpack.c.l.b16 %v7188
      %v7221 = vpack.c.b16 %v7206, %v7205
      %v7222 = vpack.c.b16 %v7208, %v7207
      %v7223 = vpack.c.b16 %v7210, %v7209
      %v7224 = vpack.c.b16 %v7212, %v7211
      %v7225 = vpack.c.b16 %v7214, %v7213
      %v7226 = vpack.c.b16 %v7216, %v7215
      %v7227 = vpack.c.b16 %v7218, %v7217
      %v7228 = vpack.c.b16 %v7220, %v7219
      %7237 = vmatprep.subr.bf16.mxu0 0
      %7238 = vmatpush1.bf16.msra.mxu0 %v7228
      %7239 = vmatprep.subr.bf16.mxu0 0
      %7240 = vmatpush1.bf16.msra.mxu0 %v7227
      %7241 = vmatprep.subr.bf16.mxu0 0
      %7242 = vmatpush1.bf16.msra.mxu0 %v7226
      %7243 = vmatprep.subr.bf16.mxu0 0
      %7244 = vmatpush1.bf16.msra.mxu0 %v7225
      %7245 = vmatprep.subr.bf16.mxu0 0
      %7246 = vmatpush1.bf16.msra.mxu0 %v7224
      %7247 = vmatprep.subr.bf16.mxu0 0
      %7248 = vmatpush1.bf16.msra.mxu0 %v7223
      %7249 = vmatprep.subr.bf16.mxu0 0
      %7250 = vmatpush1.bf16.msra.mxu0 %v7222
      %7251 = vmatprep.subr.bf16.mxu0 0
      %7252 = vmatpush1.bf16.msra.mxu0 %v7221
      %7253 = vmatprep.subr.bf16.mxu0 0
      %7254 = vmatpush2.bf16.msra.mxu0 0
      %7255 = vmatprep.subr.bf16.mxu0 0
      %7256 = vmatpush2.bf16.msra.mxu0 0
      %7257 = vmatprep.subr.bf16.mxu0 0
      %7258 = vmatpush2.bf16.msra.mxu0 0
      %7259 = vmatprep.subr.bf16.mxu0 0
      %7260 = vmatpush2.bf16.msra.mxu0 0
      %7261 = vmatprep.subr.bf16.mxu0 0
      %7262 = vmatpush2.bf16.msra.mxu0 0
      %7263 = vmatprep.subr.bf16.mxu0 0
      %7264 = vmatpush2.bf16.msra.mxu0 0
      %7265 = vmatprep.subr.bf16.mxu0 0
      %7266 = vmatpush2.bf16.msra.mxu0 0
      %7267 = vmatprep.subr.bf16.mxu0 0
      %7268 = vmatpush2.bf16.msra.mxu0 0
      %7269 = vmatprep.mubr.bf16.mxu0 0
      %7270 = vmatmul.mubr.bf16.gmra.mxu0 %v7172
      %v7271 = vpop.f32.mrf.mxu0
      %v7272 = vadd.f32 0.0, %v7271
      %v7273 = vpop.f32.mrf.mxu0
      %v7274 = vpop.f32.mrf.mxu0
      %v7275 = vadd.f32 0.0, %v7274
      %v7276 = vpop.f32.mrf.mxu0
      %7277 = vdwg.mxu0
      %v7294 = vunpack.c.l.b16 %v7156
      %v7295 = vunpack.c.l.b16 %v7157
      %v7296 = vunpack.c.l.b16 %v7158
      %v7297 = vunpack.c.l.b16 %v7159
      %v7298 = vunpack.c.l.b16 %v7160
      %v7299 = vunpack.c.l.b16 %v7161
      %v7300 = vunpack.c.l.b16 %v7162
      %v7301 = vunpack.c.l.b16 %v7163
      %v7302 = vunpack.c.l.b16 %v7164
      %v7303 = vunpack.c.l.b16 %v7165
      %v7304 = vunpack.c.l.b16 %v7166
      %v7305 = vunpack.c.l.b16 %v7167
      %v7306 = vunpack.c.l.b16 %v7168
      %v7307 = vunpack.c.l.b16 %v7169
      %v7308 = vunpack.c.l.b16 %v7170
      %v7309 = vunpack.c.l.b16 %v7171
      %v7310 = vpack.c.b16 %v7295, %v7294
      %v7311 = vpack.c.b16 %v7297, %v7296
      %v7312 = vpack.c.b16 %v7299, %v7298
      %v7313 = vpack.c.b16 %v7301, %v7300
      %v7314 = vpack.c.b16 %v7303, %v7302
      %v7315 = vpack.c.b16 %v7305, %v7304
      %v7316 = vpack.c.b16 %v7307, %v7306
      %v7317 = vpack.c.b16 %v7309, %v7308
      %7326 = vmatprep.subr.bf16.mxu0 0
      %7327 = vmatpush1.bf16.msra.mxu0 %v7317
      %7328 = vmatprep.subr.bf16.mxu0 0
      %7329 = vmatpush1.bf16.msra.mxu0 %v7316
      %7330 = vmatprep.subr.bf16.mxu0 0
      %7331 = vmatpush1.bf16.msra.mxu0 %v7315
      %7332 = vmatprep.subr.bf16.mxu0 0
      %7333 = vmatpush1.bf16.msra.mxu0 %v7314
      %7334 = vmatprep.subr.bf16.mxu0 0
      %7335 = vmatpush1.bf16.msra.mxu0 %v7313
      %7336 = vmatprep.subr.bf16.mxu0 0
      %7337 = vmatpush1.bf16.msra.mxu0 %v7312
      %7338 = vmatprep.subr.bf16.mxu0 0
      %7339 = vmatpush1.bf16.msra.mxu0 %v7311
      %7340 = vmatprep.subr.bf16.mxu0 0
      %7341 = vmatpush1.bf16.msra.mxu0 %v7310
      %7342 = vmatprep.subr.bf16.mxu0 0
      %7343 = vmatpush2.bf16.msra.mxu0 0
      %7344 = vmatprep.subr.bf16.mxu0 0
      %7345 = vmatpush2.bf16.msra.mxu0 0
      %7346 = vmatprep.subr.bf16.mxu0 0
      %7347 = vmatpush2.bf16.msra.mxu0 0
      %7348 = vmatprep.subr.bf16.mxu0 0
      %7349 = vmatpush2.bf16.msra.mxu0 0
      %7350 = vmatprep.subr.bf16.mxu0 0
      %7351 = vmatpush2.bf16.msra.mxu0 0
      %7352 = vmatprep.subr.bf16.mxu0 0
      %7353 = vmatpush2.bf16.msra.mxu0 0
      %7354 = vmatprep.subr.bf16.mxu0 0
      %7355 = vmatpush2.bf16.msra.mxu0 0
      %7356 = vmatprep.subr.bf16.mxu0 0
      %7357 = vmatpush2.bf16.msra.mxu0 0
      %7358 = vmatprep.mubr.bf16.mxu0 0
      %7359 = vmatmul.mubr.bf16.gmra.mxu0 %v6940
      %v7360 = vpop.f32.mrf.mxu0
      %v7361 = vadd.f32 %v7272, %v7360
      %v7362 = vpop.f32.mrf.mxu0
      %v7363 = vpop.f32.mrf.mxu0
      %v7364 = vadd.f32 %v7275, %v7363
      %v7365 = vpop.f32.mrf.mxu0
      %7366 = vdwg.mxu0
      %v7367 = vadd.f32 %v7361, %v6911
      %v7368 = vadd.f32 %v7364, %v6911
      %vm7369 = vcmp.ge.s32.totalorder %v362, 3
      %vm7370 = vcmp.lt.s32.totalorder %v362, 7
      %vm7371 = vmand %vm7369, %vm7370
      %v7372 = vxor.u32 %v7367, 2147483648
      %v7373 = vxor.u32 %v7368, 2147483648
      %v7374 = vmul.f32 %v7372, 1.442695
      %v7375 = vpow.pop %v7374
      %v7376 = vmul.f32 %v7373, 1.442695
      %v7377 = vpow.pop %v7376
      %v7378 = vadd.f32 %v7375, 1.0
      %v7379 = vadd.f32 %v7377, 1.0
      %v7380 = vrcp.pop %v7378
      %v7381 = vmul.f32 1.0, %v7380
      %v7382 = vrcp.pop %v7379
      %v7383 = vmul.f32 1.0, %v7382
      %v7384 = vsel %vm7371, %v7381, %v7367
      %v7385 = vsel %vm7371, %v7383, %v7368
      %7386 = vst [vmem:[%s359] sm:$0xff] %v7384
      %7387 = vst [vmem:[%s359 + $0x8] sm:$0xff] %v7385
      %p7388 = scmp.lt.s32.totalorder %s21, 1
      %s7389 = scalar_select %p7388, %s21, 1
      %s7390 = smul.addr %s7389, 2
      %s7391 = smul.addr %s7390, 8
      %s7392 = scalar_lea.vmem %s10, %s7391
      // Predicated region
      $region61: #{detr_forward.3} parent=59 // pred_check
        %p7393 = pneg %p254
      $region62: #{detr_forward.3} parent=59 // pred_check_branch
        %7395 = sbr.rel (%p7393) target = $region64
      $region63: #{detr_forward.3} parent=59 // pred_region
        _
      $region64: #{detr_forward.3} parent=59 // pred_fallthru
        _
    $region60: #{detr_forward.3} parent=5 // pred_fallthru
      _
    %p7396 = scmp.le.s32.totalorder 2, %s16
    // Predicated region
    $region65: #{detr_forward.3} parent=5 // pred_check
      %p7397 = pneg %p7396
    $region66: #{detr_forward.3} parent=5 // pred_check_branch
      %7399 = sbr.rel (%p7397) target = $region68
    $region67: #{detr_forward.3} parent=5 // pred_region
      %s7400 = ssub.s32 %s16, 2
      // Predicated region
      $region69: #{detr_forward.3} parent=67 // pred_check
        %p7401 = pneg %p260
      $region70: #{detr_forward.3} parent=67 // pred_check_branch
        %7403 = sbr.rel (%p7401) target = $region72
      $region71: #{detr_forward.3} parent=67 // pred_region
        %p7404 = scmp.lt.s32.totalorder %s22, 1
        %s7405 = scalar_select %p7404, %s22, 1
        %s7406 = smul.addr %s7405, 2
        %s7407 = smul.addr %s7406, 8
        %s7408 = scalar_lea.vmem %s10, %s7407
      $region72: #{detr_forward.3} parent=67 // pred_fallthru
        _
    $region68: #{detr_forward.3} parent=5 // pred_fallthru
      _
  $region6: #{detr_forward.3} parent=0 // loop_footer
    %s20 = sadd.s32 1, %s16
  $region7: #{detr_forward.3} parent=0 // loop_footer_branch
    %15 = sbr.rel target = $region3
  $region8: #{detr_forward.3} parent=0 // loop_exit
    _

</llo_original>
